<compile_context>
chip_gen: v6e
topology: v6e:2x2x1
jax: 0.10.0
libtpu: 0.0.40
codegen_flags: <defaults>
</compile_context>

<pallas_src>
import functools
import math

import jax
import jax.numpy as jnp
from jax.experimental import pallas as pl
from jax.experimental.pallas import tpu as pltpu

_EPS = 1e-5  # torch BatchNorm2d default


# ------------------------------ small helpers ------------------------------

def _rup(x, m):
    return (x + m - 1) // m * m


def _row_tile(m, c, bytes_per_el=2, budget=1 << 21):
    """Row tile for (M, C) slabs: multiple-of-8 divisor of M under a per-block
    byte budget (keeps double-buffered blocks inside every chip's scoped VMEM)."""
    cap = max(8, budget // max(1, c * bytes_per_el))
    if m <= cap:
        return m
    t = cap - (cap % 8)
    while t >= 8:
        if m % t == 0:
            return t
        t -= 8
    return m


def _co_tile(coutp, max_tile=512):
    """Output-channel tile: multiple of 128 dividing the padded channel count."""
    for t in range(min(coutp, max_tile), 0, -128):
        if coutp % t == 0:
            return t
    return coutp


def _pad_channels(x, cp):
    c = x.shape[-1]
    if c == cp:
        return x
    pad = [(0, 0)] * (x.ndim - 1) + [(0, cp - c)]
    return jnp.pad(x, pad)


def _pairwise_reduce(producers, op):
    """Short-dependency-chain reduction over lazily produced terms."""
    acc = None
    i, n = 0, len(producers)
    while i < n:
        if i + 1 < n:
            term = op(producers[i](), producers[i + 1]())
            i += 2
        else:
            term = producers[i]()
            i += 1
        acc = term if acc is None else op(acc, term)
    return acc


def _bn_params(stats, count, gamma, beta):
    """stats: (G, 2, C) partial (sum, sumsq) -> per-channel scale/shift."""
    tot = jnp.sum(stats, axis=0)                      # (2, C)
    mean = tot[0] / count
    var = jnp.maximum(tot[1] / count - mean * mean, 0.0)
    scale = gamma * jax.lax.rsqrt(var + _EPS)
    shift = beta - mean * scale
    return scale, shift


# -------------------- tiled matmul with fused BN statistics -----------------

def _matmul_kernel(a_ref, b_ref, o_ref, st_ref, acc_ref):
    k = pl.program_id(2)

    @pl.when(k == 0)
    def _():
        acc_ref[...] = jnp.zeros_like(acc_ref)

    acc_ref[...] += jnp.dot(a_ref[...], b_ref[...],
                            preferred_element_type=jnp.float32)

    @pl.when(k == pl.num_programs(2) - 1)
    def _():
        acc = acc_ref[...]
        o_ref[...] = acc.astype(o_ref.dtype)                      # bf16 out
        st_ref[0, 0:1, :] = jnp.sum(acc, axis=0, keepdims=True)   # f32 stats
        st_ref[0, 1:2, :] = jnp.sum(acc * acc, axis=0, keepdims=True)


def matmul_bn_stats(x, w, *, tm=256, tn=256, tk=256):
    """bf16 matmul (f32 accumulate) emitting (sum, sumsq) per output column.
    Returns (out bf16 (M,N), stats f32 (M_blocks, 2, N))."""
    M, K = x.shape
    _, N = w.shape
    x = x.astype(jnp.bfloat16)
    w = w.astype(jnp.bfloat16)
    tm = min(tm, _rup(M, 128))
    tn = min(tn, _rup(N, 128))
    tk = min(tk, _rup(K, 128))
    Mp, Kp, Np = _rup(M, tm), _rup(K, tk), _rup(N, tn)
    if (Mp, Kp) != (M, K):
        x = jnp.pad(x, ((0, Mp - M), (0, Kp - K)))
    if (Kp, Np) != (K, N):
        w = jnp.pad(w, ((0, Kp - K), (0, Np - N)))
    out, stats = pl.pallas_call(
        _matmul_kernel,
        out_shape=(jax.ShapeDtypeStruct((Mp, Np), jnp.bfloat16),
                   jax.ShapeDtypeStruct((Mp // tm, 2, Np), jnp.float32)),
        grid=(Mp // tm, Np // tn, Kp // tk),
        in_specs=[pl.BlockSpec((tm, tk), lambda i, j, k: (i, k)),
                  pl.BlockSpec((tk, tn), lambda i, j, k: (k, j))],
        out_specs=(pl.BlockSpec((tm, tn), lambda i, j, k: (i, j)),
                   pl.BlockSpec((1, 2, tn), lambda i, j, k: (i, 0, j))),
        scratch_shapes=[pltpu.VMEM((tm, tn), jnp.float32)],
        compiler_params=pltpu.CompilerParams(
            dimension_semantics=("parallel", "parallel", "arbitrary")),
    )(x, w)
    if (Mp, Np) != (M, N):
        out = out[:M, :N]
        stats = stats[:, :, :N]
    return out, stats


# ------------------------ fused separable convolution ----------------------

def _sepconv_kernel(x_ref, sc_ref, sh_ref, dw_ref, pw_ref, o_ref, st_ref,
                    pad_ref, *dwa_scr, H, W, relu, n_co, strip):
    C = pad_ref.shape[-1]

    def build_planes():
        # previous layer's BN affine (f32) -> optional ReLU, from bf16 input
        y = x_ref[0].astype(jnp.float32) * sc_ref[...] + sh_ref[...]
        if relu:
            y = jnp.maximum(y, 0.0)
        # halo-only fill (rows 0, H+1 and 8-wide column strips), then interior
        zrow = jnp.zeros((1, W + 16, C), jnp.float32)
        pad_ref[0:1] = zrow
        pad_ref[H + 1:H + 2] = zrow
        zcol = jnp.zeros((H, 8, C), jnp.float32)
        pad_ref[1:H + 1, 0:8, :] = zcol
        pad_ref[1:H + 1, W + 8:W + 16, :] = zcol
        pad_ref[1:H + 1, 8:8 + W, :] = y
        # One hoisted column extraction per horizontal tap offset (3 planes,
        # only 2 of them sublane-misaligned) instead of 9 misaligned slices.
        return [pad_ref[:, 7 + dw:7 + dw + W, :] for dw in range(3)]

    def dw_strip(planes, r0, rows):
        def tap(k):
            dh, dw = divmod(k, 3)
            return planes[dw][r0 + dh:r0 + dh + rows] * dw_ref[k]
        acc = _pairwise_reduce([lambda k=k: tap(k) for k in range(9)], jnp.add)
        return acc.reshape(rows * W, C).astype(jnp.bfloat16)

    if n_co == 1:
        # Single output-channel tile: interleave depthwise (VPU) and pointwise
        # (MXU) by row strips, no dwa VMEM round trip; BN stats fused.
        planes = build_planes()
        pw = pw_ref[...]
        ssum = None
        ssq = None
        for r0 in range(0, H, strip):
            dwa = dw_strip(planes, r0, strip)
            part = jnp.dot(dwa, pw, preferred_element_type=jnp.float32)
            o_ref[0, r0 * W:(r0 + strip) * W, :] = part.astype(o_ref.dtype)
            s = jnp.sum(part, axis=0, keepdims=True)
            q = jnp.sum(part * part, axis=0, keepdims=True)
            ssum = s if ssum is None else ssum + s
            ssq = q if ssq is None else ssq + q
        st_ref[0, 0:1, :] = ssum
        st_ref[0, 1:2, :] = ssq
    else:
        # Multiple co tiles: compute depthwise once (co == 0), reuse from VMEM.
        dwa_ref = dwa_scr[0]

        @pl.when(pl.program_id(1) == 0)
        def _():
            dwa_ref[...] = dw_strip(build_planes(), 0, H)

        part = jnp.dot(dwa_ref[...], pw_ref[...],
                       preferred_element_type=jnp.float32)
        o_ref[0] = part.astype(o_ref.dtype)
        st_ref[0, 0:1, :] = jnp.sum(part, axis=0, keepdims=True)
        st_ref[0, 1:2, :] = jnp.sum(part * part, axis=0, keepdims=True)


def fused_sepconv(x, scale, shift, dww, pww, relu):
    """[BN affine] -> [ReLU] -> depthwise 3x3 (pad 1) -> 1x1 pointwise,
    emitting bf16 output plus fused f32 BN partial statistics."""
    N, H, W, C = x.shape
    coutp = pww.shape[1]
    tco = _co_tile(coutp)
    n_co = coutp // tco
    strip = 8 if H % 8 == 0 else H
    kernel = functools.partial(_sepconv_kernel, H=H, W=W, relu=relu,
                               n_co=n_co, strip=strip)
    scratch = [pltpu.VMEM((H + 2, W + 16, C), jnp.float32)]
    if n_co > 1:
        scratch.append(pltpu.VMEM((H * W, C), jnp.bfloat16))
    out, stats = pl.pallas_call(
        kernel,
        out_shape=(jax.ShapeDtypeStruct((N, H * W, coutp), jnp.bfloat16),
                   jax.ShapeDtypeStruct((N, 2, coutp), jnp.float32)),
        grid=(N, n_co),
        in_specs=[
            pl.BlockSpec((1, H, W, C), lambda n, co: (n, 0, 0, 0)),
            pl.BlockSpec((1, 1, C), lambda n, co: (0, 0, 0)),
            pl.BlockSpec((1, 1, C), lambda n, co: (0, 0, 0)),
            pl.BlockSpec((9, 1, 1, C), lambda n, co: (0, 0, 0, 0)),
            pl.BlockSpec((C, tco), lambda n, co: (0, co)),
        ],
        out_specs=(pl.BlockSpec((1, H * W, tco), lambda n, co: (n, 0, co)),
                   pl.BlockSpec((1, 2, tco), lambda n, co: (n, 0, co))),
        scratch_shapes=scratch,
        compiler_params=pltpu.CompilerParams(
            dimension_semantics=("parallel", "arbitrary")),
    )(x, scale.reshape(1, 1, C), shift.reshape(1, 1, C), dww, pww)
    return out, stats


# ------------------------- BN apply (+ fused residual) ----------------------

def _bn_apply_kernel(*refs, has_res, has_aff):
    if has_aff:
        x_ref, sc_ref, sh_ref, r_ref, rsc_ref, rsh_ref, o_ref = refs
    elif has_res:
        x_ref, sc_ref, sh_ref, r_ref, o_ref = refs
    else:
        x_ref, sc_ref, sh_ref, o_ref = refs
    y = x_ref[...].astype(jnp.float32) * sc_ref[...] + sh_ref[...]
    if has_aff:
        y = y + (r_ref[...].astype(jnp.float32) * rsc_ref[...] + rsh_ref[...])
    elif has_res:
        y = y + r_ref[...].astype(jnp.float32)
    o_ref[...] = y.astype(o_ref.dtype)


def bn_apply(x2d, scale, shift, residual=None, res_scale=None, res_shift=None):
    """out = x*scale+shift [+ residual*res_scale+res_shift | + residual], bf16."""
    M, C = x2d.shape
    tm = _row_tile(M, C)
    has_res = residual is not None
    has_aff = res_scale is not None
    args = [x2d, scale.reshape(1, C), shift.reshape(1, C)]
    in_specs = [pl.BlockSpec((tm, C), lambda i: (i, 0)),
                pl.BlockSpec((1, C), lambda i: (0, 0)),
                pl.BlockSpec((1, C), lambda i: (0, 0))]
    if has_res:
        args.append(residual)
        in_specs.append(pl.BlockSpec((tm, C), lambda i: (i, 0)))
    if has_aff:
        args += [res_scale.reshape(1, C), res_shift.reshape(1, C)]
        in_specs += [pl.BlockSpec((1, C), lambda i: (0, 0)),
                     pl.BlockSpec((1, C), lambda i: (0, 0))]
    kernel = functools.partial(_bn_apply_kernel, has_res=has_res,
                               has_aff=has_aff)
    return pl.pallas_call(
        kernel,
        out_shape=jax.ShapeDtypeStruct((M, C), jnp.bfloat16),
        grid=(M // tm,),
        in_specs=in_specs,
        out_specs=pl.BlockSpec((tm, C), lambda i: (i, 0)),
        compiler_params=pltpu.CompilerParams(
            dimension_semantics=("parallel",)),
    )(*args)


# ------------------------------ BN + max pool -------------------------------

def _bn_maxpool_kernel(x_ref, sc_ref, sh_ref, o_ref, pad_ref, *, H, W, stride):
    C = pad_ref.shape[-1]
    y = x_ref[0].astype(jnp.float32) * sc_ref[...] + sh_ref[...]
    # halo-only -inf fill, then interior
    nrow = jnp.full((1, W + 16, C), -jnp.inf, jnp.float32)
    pad_ref[0:1] = nrow
    pad_ref[H + 1:H + 2] = nrow
    ncol = jnp.full((H, 8, C), -jnp.inf, jnp.float32)
    pad_ref[1:H + 1, 0:8, :] = ncol
    pad_ref[1:H + 1, W + 8:W + 16, :] = ncol
    pad_ref[1:H + 1, 8:8 + W, :] = y
    pcols = [pad_ref[:, 7 + dw:7 + dw + W, :] for dw in range(3)]
    hm = jnp.maximum(jnp.maximum(pcols[0], pcols[1]), pcols[2])  # (H+2, W, C)
    Ho = o_ref.shape[1]
    for ho in range(Ho):                 # emit only the H-strided output rows
        r = stride * ho
        row = jnp.maximum(jnp.maximum(hm[r], hm[r + 1]), hm[r + 2])
        o_ref[0, ho, :, :] = row.astype(o_ref.dtype)


def bn_maxpool(x, scale, shift, stride):
    """BN affine fused with a 3x3/pad-1 max pool, strided along H in-kernel.
    Caller does the cheap W subsample y[:, :, ::stride, :] in XLA."""
    N, H, W, C = x.shape
    Ho = (H - 1) // stride + 1
    return pl.pallas_call(
        functools.partial(_bn_maxpool_kernel, H=H, W=W, stride=stride),
        out_shape=jax.ShapeDtypeStruct((N, Ho, W, C), jnp.bfloat16),
        grid=(N,),
        in_specs=[pl.BlockSpec((1, H, W, C), lambda n: (n, 0, 0, 0)),
                  pl.BlockSpec((1, 1, C), lambda n: (0, 0, 0)),
                  pl.BlockSpec((1, 1, C), lambda n: (0, 0, 0))],
        out_specs=pl.BlockSpec((1, Ho, W, C), lambda n: (n, 0, 0, 0)),
        scratch_shapes=[pltpu.VMEM((H + 2, W + 16, C), jnp.float32)],
        compiler_params=pltpu.CompilerParams(
            dimension_semantics=("parallel",)),
    )(x, scale.reshape(1, 1, C), shift.reshape(1, 1, C))


# ------------------------------ parameter init ------------------------------

def _conv_init(key, cout, cin, kh, kw):
    n = kh * kw * cout  # matches the reference module family's init convention
    return (jax.random.normal(key, (cout, cin, kh, kw), dtype=jnp.float32)
            * math.sqrt(2.0 / n))


def _make_sep_layer(key, cin, cout):
    k1, k2 = jax.random.split(key)
    cin_p, cout_p = _rup(cin, 128), _rup(cout, 128)
    dw = _conv_init(k1, cin, 1, 3, 3)            # depthwise (cin, 1, 3, 3)
    pw = _conv_init(k2, cout, cin, 1, 1)         # pointwise (cout, cin, 1, 1)
    dww = jnp.transpose(dw[:, 0], (1, 2, 0)).reshape(9, cin)
    dww = jnp.pad(dww, ((0, 0), (0, cin_p - cin))).reshape(9, 1, 1, cin_p)
    pww = jnp.pad(pw.reshape(cout, cin).T,
                  ((0, cin_p - cin), (0, cout_p - cout))).astype(jnp.bfloat16)
    gamma = jnp.pad(jnp.ones((cout,), jnp.float32), (0, cout_p - cout))
    beta = jnp.zeros((cout_p,), jnp.float32)
    return {'relu': True, 'dww': dww, 'pww': pww, 'gamma': gamma, 'beta': beta,
            'cout_p': cout_p}


def _make_skip(key, cin, cout):
    cin_p, cout_p = _rup(cin, 128), _rup(cout, 128)
    w = _conv_init(key, cout, cin, 1, 1)
    wk = jnp.pad(w.reshape(cout, cin).T,
                 ((0, cin_p - cin), (0, cout_p - cout))).astype(jnp.bfloat16)
    gamma = jnp.pad(jnp.ones((cout,), jnp.float32), (0, cout_p - cout))
    beta = jnp.zeros((cout_p,), jnp.float32)
    return {'w': wk, 'gamma': gamma, 'beta': beta}


def init_block(key, in_f, out_f, reps, strides=1, start_with_relu=True,
               grow_first=True):
    keys = jax.random.split(key, reps + 1)
    layers = []
    ki = 0
    filters = in_f
    if grow_first:
        layers.append(_make_sep_layer(keys[ki], in_f, out_f))
        ki += 1
        filters = out_f
    for _ in range(reps - 1):
        layers.append(_make_sep_layer(keys[ki], filters, filters))
        ki += 1
    if not grow_first:
        layers.append(_make_sep_layer(keys[ki], in_f, out_f))
        ki += 1
    if not start_with_relu:
        layers[0]['relu'] = False
    params = {'layers': layers, 'strides': strides, 'maxpool': strides != 1,
              'in_f': in_f, 'out_f': out_f,
              'cin_p': _rup(in_f, 128), 'cout_p': _rup(out_f, 128)}
    if out_f != in_f or strides != 1:
        params['skip'] = _make_skip(keys[-1], in_f, out_f)
    else:
        params['skip'] = None
    return params


# --------------------------------- forward ----------------------------------

def block_forward_nhwc(x, p):
    """x: (N, H, W, cin_p) NHWC, channel-padded, bf16.  Returns NHWC bf16."""
    N, H, W, _ = x.shape
    assert x.shape[-1] == p['cin_p']
    assert W % 8 == 0, "fused depthwise path requires W % 8 == 0"
    # TODO(synk): very large H/W/C need a halo-tiled spatial grid (per-chip
    # VMEM budget) instead of one full image per block; not needed here.
    inp = x
    a = inp
    C = p['cin_p']
    scale = jnp.ones((C,), jnp.float32)
    shift = jnp.zeros((C,), jnp.float32)

    # rep: [ReLU -> SeparableConv -> BN] x k.  Layer i's BN-apply is folded
    # into layer i+1's fused kernel; its statistics come out of layer i's
    # kernel directly (no separate stats pass).
    for layer in p['layers']:
        c, stats = fused_sepconv(a, scale, shift, layer['dww'], layer['pww'],
                                 relu=layer['relu'])   # (N, H*W, coutp) bf16
        C = layer['cout_p']
        scale, shift = _bn_params(stats, float(N * H * W),
                                  layer['gamma'], layer['beta'])
        a = c.reshape(N, H, W, C)

    if p['skip'] is None:
        # out = BN(last conv) + inp, one fused pass.
        out2d = bn_apply(a.reshape(-1, C), scale, shift,
                         residual=inp.reshape(-1, C))
        return out2d.reshape(N, H, W, C)

    st = p['strides']
    si = inp[:, ::st, ::st, :]
    Ns, Hs, Ws, _ = si.shape
    Ms = Ns * Hs * Ws
    # 1x1 skip conv on the MXU with fused BN statistics.
    sraw, sstats = matmul_bn_stats(si.reshape(Ms, p['cin_p']), p['skip']['w'])
    sscale, sshift = _bn_params(sstats, float(Ms),
                                p['skip']['gamma'], p['skip']['beta'])
    if p['maxpool']:
        xm = bn_maxpool(a, scale, shift, st)[:, :, ::st, :]   # (N, Hs, Ws, C)
        out2d = bn_apply(sraw, sscale, sshift, residual=xm.reshape(Ms, C))
    else:
        # BN(skip) + BN(main) fused in a single pass (residual affine).
        out2d = bn_apply(sraw, sscale, sshift, residual=a.reshape(-1, C),
                         res_scale=scale, res_shift=shift)
    return out2d.reshape(Ns, Hs, Ws, C)


def block_forward(x_nchw, p):
    """PyTorch-compatible wrapper: NCHW f32 in, NCHW f32 out (single block)."""
    x = jnp.transpose(x_nchw, (0, 2, 3, 1)).astype(jnp.float32)
    x = _pad_channels(x, p['cin_p']).astype(jnp.bfloat16)
    y = block_forward_nhwc(x, p)
    y = y[..., :p['out_f']].astype(jnp.float32)
    return jnp.transpose(y, (0, 3, 1, 2))


# ----------------------------------- main ------------------------------------

if __name__ == "__main__":
    root = jax.random.PRNGKey(0)
    kx, k1, k2, k3 = jax.random.split(root, 4)

    x = jax.random.normal(kx, (2, 64, 16, 16), dtype=jnp.float32)

    # Block(64, 128, reps=2, strides=2, start_with_relu=False, grow_first=True)
    p1 = init_block(k1, 64, 128, 2, strides=2, start_with_relu=False,
                    grow_first=True)
    # Identity-skip block: Block(128, 128, reps=3, strides=1)
    p2 = init_block(k2, 128, 128, 3, strides=1, start_with_relu=True,
                    grow_first=True)
    # 1x1-skip, no maxpool: Block(128, 256, reps=2, strides=1, grow_first=False)
    p3 = init_block(k3, 128, 256, 2, strides=1, start_with_relu=True,
                    grow_first=False)

    @jax.jit
    def run_chain(v):
        # NCHW -> NHWC / channel pad / bf16 once at the network edge; blocks
        # chain in padded NHWC bf16 (no per-block transpose / pad round trips).
        h = jnp.transpose(v, (0, 2, 3, 1))
        h = _pad_channels(h, p1['cin_p']).astype(jnp.bfloat16)
        y1 = block_forward_nhwc(h, p1)
        y2 = block_forward_nhwc(y1, p2)
        y3 = block_forward_nhwc(y2, p3)
        out = jnp.transpose(y3[..., :p3['out_f']].astype(jnp.float32),
                            (0, 3, 1, 2))
        return y1, y2, out

    y1, y2, y3 = jax.block_until_ready(run_chain(x))
    assert y1.shape == (2, 8, 8, 128), y1.shape      # NHWC, channel-padded
    assert y2.shape == (2, 8, 8, 128), y2.shape
    assert y3.shape == (2, 256, 8, 8), y3.shape      # NCHW at the network edge

    ok = bool(jnp.all(jnp.isfinite(y1.astype(jnp.float32)))
              & jnp.all(jnp.isfinite(y2.astype(jnp.float32)))
              & jnp.all(jnp.isfinite(y3)))
    assert ok
    print("KERNEL_OK")
</pallas_src>

<mosaic_0001>
module attributes {stable_mosaic.version = 11 : i64} {
  func.func @_matmul_kernel(%arg0: i32, %arg1: i32, %arg2: i32, %arg3: memref<128x128xbf16, #tpu.memory_space<vmem>>, %arg4: memref<128x128xbf16, #tpu.memory_space<vmem>>, %arg5: memref<128x128xbf16, #tpu.memory_space<vmem>>, %arg6: memref<1x2x128xf32, #tpu.memory_space<vmem>>, %arg7: memref<128x128xf32, #tpu.memory_space<vmem>>) attributes {dimension_semantics = [#tpu.dimension_semantics<parallel>, #tpu.dimension_semantics<parallel>, #tpu.dimension_semantics<arbitrary>], iteration_bounds = array<i64: 1, 1, 1>, scalar_prefetch = 0 : i64, scratch_operands = 1 : i64, tpu.core_type = #tpu.core_type<tc>, window_params = [{transform_indices = @transform_0, window_bounds = array<i64: 128, 128>}, {transform_indices = @transform_1, window_bounds = array<i64: 128, 128>}, {transform_indices = @transform_2, window_bounds = array<i64: 128, 128>}, {transform_indices = @transform_3, window_bounds = array<i64: 1, 2, 128>}]} {
    %c0_i32 = arith.constant 0 : i32
    %0 = arith.cmpi eq, %arg2, %c0_i32 : i32
    %1 = arith.extui %0 : i1 to i32
    %c0_i32_0 = arith.constant 0 : i32
    %2 = arith.cmpi ne, %1, %c0_i32_0 : i32
    scf.if %2 {
      %cst_10 = arith.constant 0.000000e+00 : f32
      %12 = vector.broadcast %cst_10 : f32 to vector<128x128xf32>
      %c0_11 = arith.constant 0 : index
      %c0_12 = arith.constant 0 : index
      %13 = vector.load %arg7[%c0_11, %c0_12] : memref<128x128xf32, #tpu.memory_space<vmem>>, vector<128x128xf32>
      tpu.vector_store %arg7[%c0_11, %c0_12], %12 {strides = array<i32>} : memref<128x128xf32, #tpu.memory_space<vmem>>, vector<128x128xf32>,
    } else {
    }
    %c0 = arith.constant 0 : index
    %c0_1 = arith.constant 0 : index
    %3 = vector.load %arg7[%c0, %c0_1] : memref<128x128xf32, #tpu.memory_space<vmem>>, vector<128x128xf32>
    %c0_2 = arith.constant 0 : index
    %c0_3 = arith.constant 0 : index
    %4 = vector.load %arg3[%c0_2, %c0_3] : memref<128x128xbf16, #tpu.memory_space<vmem>>, vector<128x128xbf16>
    %c0_4 = arith.constant 0 : index
    %c0_5 = arith.constant 0 : index
    %5 = vector.load %arg4[%c0_4, %c0_5] : memref<128x128xbf16, #tpu.memory_space<vmem>>, vector<128x128xbf16>
    %cst = arith.constant dense<0.000000e+00> : vector<128x128xf32>
    %6 = tpu.matmul %4, %5, %cst {dimension_numbers = #tpu.dot_dimension_numbers<[1], [0], [0], [1], [0, 0, 1, 1], [], []>} : vector<128x128xbf16>, vector<128x128xbf16>, vector<128x128xf32> -> vector<128x128xf32>
    %7 = arith.addf %3, %6 : vector<128x128xf32>
    %c0_6 = arith.constant 0 : index
    %c0_7 = arith.constant 0 : index
    %8 = vector.load %arg7[%c0_6, %c0_7] : memref<128x128xf32, #tpu.memory_space<vmem>>, vector<128x128xf32>
    tpu.vector_store %arg7[%c0_6, %c0_7], %7 {strides = array<i32>} : memref<128x128xf32, #tpu.memory_space<vmem>>, vector<128x128xf32>,
    %c0_i32_8 = arith.constant 0 : i32
    %9 = arith.cmpi eq, %arg2, %c0_i32_8 : i32
    %10 = arith.extui %9 : i1 to i32
    %c0_i32_9 = arith.constant 0 : i32
    %11 = arith.cmpi ne, %10, %c0_i32_9 : i32
    scf.if %11 {
      %c0_10 = arith.constant 0 : index
      %c0_11 = arith.constant 0 : index
      %12 = vector.load %arg7[%c0_10, %c0_11] : memref<128x128xf32, #tpu.memory_space<vmem>>, vector<128x128xf32>
      %13 = arith.truncf %12 : vector<128x128xf32> to vector<128x128xbf16>
      %c0_12 = arith.constant 0 : index
      %c0_13 = arith.constant 0 : index
      %14 = vector.load %arg5[%c0_12, %c0_13] : memref<128x128xbf16, #tpu.memory_space<vmem>>, vector<128x128xbf16>
      tpu.vector_store %arg5[%c0_12, %c0_13], %13 {strides = array<i32>} : memref<128x128xbf16, #tpu.memory_space<vmem>>, vector<128x128xbf16>,
      %cst_14 = arith.constant dense<0.000000e+00> : vector<128xf32>
      %15 = vector.multi_reduction <add>, %12, %cst_14 [0] : vector<128x128xf32> to vector<128xf32>
      %16 = vector.shape_cast %15 : vector<128xf32> to vector<1x128xf32>
      %c0_15 = arith.constant 0 : index
      %c0_16 = arith.constant 0 : index
      %c0_17 = arith.constant 0 : index
      %17 = vector.load %arg6[%c0_15, %c0_16, %c0_17] : memref<1x2x128xf32, #tpu.memory_space<vmem>>, vector<1x1x128xf32>
      %18 = vector.shape_cast %17 : vector<1x1x128xf32> to vector<1x128xf32>
      %19 = vector.shape_cast %16 : vector<1x128xf32> to vector<1x1x128xf32>
      tpu.vector_store %arg6[%c0_15, %c0_16, %c0_17], %19 {strides = array<i32>} : memref<1x2x128xf32, #tpu.memory_space<vmem>>, vector<1x1x128xf32>,
      %20 = arith.mulf %12, %12 : vector<128x128xf32>
      %cst_18 = arith.constant dense<0.000000e+00> : vector<128xf32>
      %21 = vector.multi_reduction <add>, %20, %cst_18 [0] : vector<128x128xf32> to vector<128xf32>
      %22 = vector.shape_cast %21 : vector<128xf32> to vector<1x128xf32>
      %c0_19 = arith.constant 0 : index
      %c1 = arith.constant 1 : index
      %c0_20 = arith.constant 0 : index
      %23 = vector.load %arg6[%c0_19, %c1, %c0_20] : memref<1x2x128xf32, #tpu.memory_space<vmem>>, vector<1x1x128xf32>
      %24 = vector.shape_cast %23 : vector<1x1x128xf32> to vector<1x128xf32>
      %25 = vector.shape_cast %22 : vector<1x128xf32> to vector<1x1x128xf32>
      tpu.vector_store %arg6[%c0_19, %c1, %c0_20], %25 {strides = array<i32>} : memref<1x2x128xf32, #tpu.memory_space<vmem>>, vector<1x1x128xf32>,
    } else {
    }
    return
  }
  func.func @transform_0(%arg0: i32, %arg1: i32, %arg2: i32) -> (i32, i32) {
    %c0_i32 = arith.constant 0 : i32
    return %arg0, %arg2 : i32, i32
  }
  func.func @transform_1(%arg0: i32, %arg1: i32, %arg2: i32) -> (i32, i32) {
    %c0_i32 = arith.constant 0 : i32
    return %arg2, %arg1 : i32, i32
  }
  func.func @transform_2(%arg0: i32, %arg1: i32, %arg2: i32) -> (i32, i32) {
    %c0_i32 = arith.constant 0 : i32
    return %arg0, %arg1 : i32, i32
  }
  func.func @transform_3(%arg0: i32, %arg1: i32, %arg2: i32) -> (i32, i32, i32) {
    %c0_i32 = arith.constant 0 : i32
    %c0_i32_0 = arith.constant 0 : i32
    return %arg0, %c0_i32, %arg1 : i32, i32, i32
  }
}

module attributes {stable_mosaic.version = 11 : i64} {
  func.func @_sepconv_kernel(%arg0: i32, %arg1: i32, %arg2: memref<1x16x16x128xbf16, #tpu.memory_space<vmem>>, %arg3: memref<1x1x128xf32, #tpu.memory_space<vmem>>, %arg4: memref<1x1x128xf32, #tpu.memory_space<vmem>>, %arg5: memref<9x1x1x128xf32, #tpu.memory_space<vmem>>, %arg6: memref<128x128xbf16, #tpu.memory_space<vmem>>, %arg7: memref<1x256x128xbf16, #tpu.memory_space<vmem>>, %arg8: memref<1x2x128xf32, #tpu.memory_space<vmem>>, %arg9: memref<18x32x128xf32, #tpu.memory_space<vmem>>) attributes {dimension_semantics = [#tpu.dimension_semantics<parallel>, #tpu.dimension_semantics<arbitrary>], iteration_bounds = array<i64: 2, 1>, scalar_prefetch = 0 : i64, scratch_operands = 1 : i64, tpu.core_type = #tpu.core_type<tc>, window_params = [{transform_indices = @transform_0, window_bounds = array<i64: 1, 16, 16, 128>}, {pipeline_mode = #tpu.pipeline_mode<synchronous>, transform_indices = @transform_1, window_bounds = array<i64: 1, 1, 128>}, {pipeline_mode = #tpu.pipeline_mode<synchronous>, transform_indices = @transform_2, window_bounds = array<i64: 1, 1, 128>}, {pipeline_mode = #tpu.pipeline_mode<synchronous>, transform_indices = @transform_3, window_bounds = array<i64: 9, 1, 1, 128>}, {transform_indices = @transform_4, window_bounds = array<i64: 128, 128>}, {transform_indices = @transform_5, window_bounds = array<i64: 1, 256, 128>}, {transform_indices = @transform_6, window_bounds = array<i64: 1, 2, 128>}]} {
    %c0 = arith.constant 0 : index
    %c0_0 = arith.constant 0 : index
    %c0_1 = arith.constant 0 : index
    %c0_2 = arith.constant 0 : index
    %0 = vector.load %arg2[%c0, %c0_0, %c0_1, %c0_2] : memref<1x16x16x128xbf16, #tpu.memory_space<vmem>>, vector<1x16x16x128xbf16>
    %1 = vector.shape_cast %0 : vector<1x16x16x128xbf16> to vector<16x16x128xbf16>
    %2 = arith.extf %1 : vector<16x16x128xbf16> to vector<16x16x128xf32>
    %c0_3 = arith.constant 0 : index
    %c0_4 = arith.constant 0 : index
    %c0_5 = arith.constant 0 : index
    %3 = vector.load %arg3[%c0_3, %c0_4, %c0_5] : memref<1x1x128xf32, #tpu.memory_space<vmem>>, vector<1x1x128xf32>
    %4 = vector.broadcast %3 : vector<1x1x128xf32> to vector<16x16x128xf32>
    %5 = arith.mulf %2, %4 : vector<16x16x128xf32>
    %c0_6 = arith.constant 0 : index
    %c0_7 = arith.constant 0 : index
    %c0_8 = arith.constant 0 : index
    %6 = vector.load %arg4[%c0_6, %c0_7, %c0_8] : memref<1x1x128xf32, #tpu.memory_space<vmem>>, vector<1x1x128xf32>
    %7 = vector.broadcast %6 : vector<1x1x128xf32> to vector<16x16x128xf32>
    %8 = arith.addf %5, %7 : vector<16x16x128xf32>
    %cst = arith.constant 0.000000e+00 : f32
    %9 = vector.broadcast %cst : f32 to vector<1x32x128xf32>
    %c0_9 = arith.constant 0 : index
    %c0_10 = arith.constant 0 : index
    %c0_11 = arith.constant 0 : index
    %10 = vector.load %arg9[%c0_9, %c0_10, %c0_11] : memref<18x32x128xf32, #tpu.memory_space<vmem>>, vector<1x32x128xf32>
    tpu.vector_store %arg9[%c0_9, %c0_10, %c0_11], %9 {strides = array<i32>} : memref<18x32x128xf32, #tpu.memory_space<vmem>>, vector<1x32x128xf32>,
    %c17 = arith.constant 17 : index
    %c0_12 = arith.constant 0 : index
    %c0_13 = arith.constant 0 : index
    %11 = vector.load %arg9[%c17, %c0_12, %c0_13] : memref<18x32x128xf32, #tpu.memory_space<vmem>>, vector<1x32x128xf32>
    tpu.vector_store %arg9[%c17, %c0_12, %c0_13], %9 {strides = array<i32>} : memref<18x32x128xf32, #tpu.memory_space<vmem>>, vector<1x32x128xf32>,
    %cst_14 = arith.constant 0.000000e+00 : f32
    %12 = vector.broadcast %cst_14 : f32 to vector<16x8x128xf32>
    %c1 = arith.constant 1 : index
    %c0_15 = arith.constant 0 : index
    %c0_16 = arith.constant 0 : index
    %13 = vector.load %arg9[%c1, %c0_15, %c0_16] : memref<18x32x128xf32, #tpu.memory_space<vmem>>, vector<16x8x128xf32>
    tpu.vector_store %arg9[%c1, %c0_15, %c0_16], %12 {strides = array<i32>} : memref<18x32x128xf32, #tpu.memory_space<vmem>>, vector<16x8x128xf32>,
    %c1_17 = arith.constant 1 : index
    %c24 = arith.constant 24 : index
    %c0_18 = arith.constant 0 : index
    %14 = vector.load %arg9[%c1_17, %c24, %c0_18] : memref<18x32x128xf32, #tpu.memory_space<vmem>>, vector<16x8x128xf32>
    tpu.vector_store %arg9[%c1_17, %c24, %c0_18], %12 {strides = array<i32>} : memref<18x32x128xf32, #tpu.memory_space<vmem>>, vector<16x8x128xf32>,
    %c1_19 = arith.constant 1 : index
    %c8 = arith.constant 8 : index
    %c0_20 = arith.constant 0 : index
    %15 = vector.load %arg9[%c1_19, %c8, %c0_20] : memref<18x32x128xf32, #tpu.memory_space<vmem>>, vector<16x16x128xf32>
    tpu.vector_store %arg9[%c1_19, %c8, %c0_20], %8 {strides = array<i32>} : memref<18x32x128xf32, #tpu.memory_space<vmem>>, vector<16x16x128xf32>,
    %c0_21 = arith.constant 0 : index
    %c7 = arith.constant 7 : index
    %c0_22 = arith.constant 0 : index
    %16 = vector.load %arg9[%c0_21, %c7, %c0_22] : memref<18x32x128xf32, #tpu.memory_space<vmem>>, vector<18x16x128xf32>
    %c0_23 = arith.constant 0 : index
    %c8_24 = arith.constant 8 : index
    %c0_25 = arith.constant 0 : index
    %17 = vector.load %arg9[%c0_23, %c8_24, %c0_25] : memref<18x32x128xf32, #tpu.memory_space<vmem>>, vector<18x16x128xf32>
    %c0_26 = arith.constant 0 : index
    %c9 = arith.constant 9 : index
    %c0_27 = arith.constant 0 : index
    %18 = vector.load %arg9[%c0_26, %c9, %c0_27] : memref<18x32x128xf32, #tpu.memory_space<vmem>>, vector<18x16x128xf32>
    %c0_28 = arith.constant 0 : index
    %c0_29 = arith.constant 0 : index
    %19 = vector.load %arg6[%c0_28, %c0_29] : memref<128x128xbf16, #tpu.memory_space<vmem>>, vector<128x128xbf16>
    %20 = vector.extract_strided_slice %16 {offsets = [0, 0, 0], sizes = [8, 16, 128], strides = [1, 1, 1]} : vector<18x16x128xf32> to vector<8x16x128xf32>
    %c0_30 = arith.constant 0 : index
    %c0_31 = arith.constant 0 : index
    %c0_32 = arith.constant 0 : index
    %c0_33 = arith.constant 0 : index
    %21 = vector.load %arg5[%c0_30, %c0_31, %c0_32, %c0_33] : memref<9x1x1x128xf32, #tpu.memory_space<vmem>>, vector<1x1x1x128xf32>
    %22 = vector.shape_cast %21 : vector<1x1x1x128xf32> to vector<1x1x128xf32>
    %23 = vector.broadcast %22 : vector<1x1x128xf32> to vector<8x16x128xf32>
    %24 = arith.mulf %20, %23 : vector<8x16x128xf32>
    %25 = vector.extract_strided_slice %17 {offsets = [0, 0, 0], sizes = [8, 16, 128], strides = [1, 1, 1]} : vector<18x16x128xf32> to vector<8x16x128xf32>
    %c1_34 = arith.constant 1 : index
    %c0_35 = arith.constant 0 : index
    %c0_36 = arith.constant 0 : index
    %c0_37 = arith.constant 0 : index
    %26 = vector.load %arg5[%c1_34, %c0_35, %c0_36, %c0_37] : memref<9x1x1x128xf32, #tpu.memory_space<vmem>>, vector<1x1x1x128xf32>
    %27 = vector.shape_cast %26 : vector<1x1x1x128xf32> to vector<1x1x128xf32>
    %28 = vector.broadcast %27 : vector<1x1x128xf32> to vector<8x16x128xf32>
    %29 = arith.mulf %25, %28 : vector<8x16x128xf32>
    %30 = arith.addf %24, %29 : vector<8x16x128xf32>
    %31 = vector.extract_strided_slice %18 {offsets = [0, 0, 0], sizes = [8, 16, 128], strides = [1, 1, 1]} : vector<18x16x128xf32> to vector<8x16x128xf32>
    %c2 = arith.constant 2 : index
    %c0_38 = arith.constant 0 : index
    %c0_39 = arith.constant 0 : index
    %c0_40 = arith.constant 0 : index
    %32 = vector.load %arg5[%c2, %c0_38, %c0_39, %c0_40] : memref<9x1x1x128xf32, #tpu.memory_space<vmem>>, vector<1x1x1x128xf32>
    %33 = vector.shape_cast %32 : vector<1x1x1x128xf32> to vector<1x1x128xf32>
    %34 = vector.broadcast %33 : vector<1x1x128xf32> to vector<8x16x128xf32>
    %35 = arith.mulf %31, %34 : vector<8x16x128xf32>
    %36 = vector.extract_strided_slice %16 {offsets = [1, 0, 0], sizes = [8, 16, 128], strides = [1, 1, 1]} : vector<18x16x128xf32> to vector<8x16x128xf32>
    %c3 = arith.constant 3 : index
    %c0_41 = arith.constant 0 : index
    %c0_42 = arith.constant 0 : index
    %c0_43 = arith.constant 0 : index
    %37 = vector.load %arg5[%c3, %c0_41, %c0_42, %c0_43] : memref<9x1x1x128xf32, #tpu.memory_space<vmem>>, vector<1x1x1x128xf32>
    %38 = vector.shape_cast %37 : vector<1x1x1x128xf32> to vector<1x1x128xf32>
    %39 = vector.broadcast %38 : vector<1x1x128xf32> to vector<8x16x128xf32>
    %40 = arith.mulf %36, %39 : vector<8x16x128xf32>
    %41 = arith.addf %35, %40 : vector<8x16x128xf32>
    %42 = arith.addf %30, %41 : vector<8x16x128xf32>
    %43 = vector.extract_strided_slice %17 {offsets = [1, 0, 0], sizes = [8, 16, 128], strides = [1, 1, 1]} : vector<18x16x128xf32> to vector<8x16x128xf32>
    %c4 = arith.constant 4 : index
    %c0_44 = arith.constant 0 : index
    %c0_45 = arith.constant 0 : index
    %c0_46 = arith.constant 0 : index
    %44 = vector.load %arg5[%c4, %c0_44, %c0_45, %c0_46] : memref<9x1x1x128xf32, #tpu.memory_space<vmem>>, vector<1x1x1x128xf32>
    %45 = vector.shape_cast %44 : vector<1x1x1x128xf32> to vector<1x1x128xf32>
    %46 = vector.broadcast %45 : vector<1x1x128xf32> to vector<8x16x128xf32>
    %47 = arith.mulf %43, %46 : vector<8x16x128xf32>
    %48 = vector.extract_strided_slice %18 {offsets = [1, 0, 0], sizes = [8, 16, 128], strides = [1, 1, 1]} : vector<18x16x128xf32> to vector<8x16x128xf32>
    %c5 = arith.constant 5 : index
    %c0_47 = arith.constant 0 : index
    %c0_48 = arith.constant 0 : index
    %c0_49 = arith.constant 0 : index
    %49 = vector.load %arg5[%c5, %c0_47, %c0_48, %c0_49] : memref<9x1x1x128xf32, #tpu.memory_space<vmem>>, vector<1x1x1x128xf32>
    %50 = vector.shape_cast %49 : vector<1x1x1x128xf32> to vector<1x1x128xf32>
    %51 = vector.broadcast %50 : vector<1x1x128xf32> to vector<8x16x128xf32>
    %52 = arith.mulf %48, %51 : vector<8x16x128xf32>
    %53 = arith.addf %47, %52 : vector<8x16x128xf32>
    %54 = arith.addf %42, %53 : vector<8x16x128xf32>
    %55 = vector.extract_strided_slice %16 {offsets = [2, 0, 0], sizes = [8, 16, 128], strides = [1, 1, 1]} : vector<18x16x128xf32> to vector<8x16x128xf32>
    %c6 = arith.constant 6 : index
    %c0_50 = arith.constant 0 : index
    %c0_51 = arith.constant 0 : index
    %c0_52 = arith.constant 0 : index
    %56 = vector.load %arg5[%c6, %c0_50, %c0_51, %c0_52] : memref<9x1x1x128xf32, #tpu.memory_space<vmem>>, vector<1x1x1x128xf32>
    %57 = vector.shape_cast %56 : vector<1x1x1x128xf32> to vector<1x1x128xf32>
    %58 = vector.broadcast %57 : vector<1x1x128xf32> to vector<8x16x128xf32>
    %59 = arith.mulf %55, %58 : vector<8x16x128xf32>
    %60 = vector.extract_strided_slice %17 {offsets = [2, 0, 0], sizes = [8, 16, 128], strides = [1, 1, 1]} : vector<18x16x128xf32> to vector<8x16x128xf32>
    %c7_53 = arith.constant 7 : index
    %c0_54 = arith.constant 0 : index
    %c0_55 = arith.constant 0 : index
    %c0_56 = arith.constant 0 : index
    %61 = vector.load %arg5[%c7_53, %c0_54, %c0_55, %c0_56] : memref<9x1x1x128xf32, #tpu.memory_space<vmem>>, vector<1x1x1x128xf32>
    %62 = vector.shape_cast %61 : vector<1x1x1x128xf32> to vector<1x1x128xf32>
    %63 = vector.broadcast %62 : vector<1x1x128xf32> to vector<8x16x128xf32>
    %64 = arith.mulf %60, %63 : vector<8x16x128xf32>
    %65 = arith.addf %59, %64 : vector<8x16x128xf32>
    %66 = arith.addf %54, %65 : vector<8x16x128xf32>
    %67 = vector.extract_strided_slice %18 {offsets = [2, 0, 0], sizes = [8, 16, 128], strides = [1, 1, 1]} : vector<18x16x128xf32> to vector<8x16x128xf32>
    %c8_57 = arith.constant 8 : index
    %c0_58 = arith.constant 0 : index
    %c0_59 = arith.constant 0 : index
    %c0_60 = arith.constant 0 : index
    %68 = vector.load %arg5[%c8_57, %c0_58, %c0_59, %c0_60] : memref<9x1x1x128xf32, #tpu.memory_space<vmem>>, vector<1x1x1x128xf32>
    %69 = vector.shape_cast %68 : vector<1x1x1x128xf32> to vector<1x1x128xf32>
    %70 = vector.broadcast %69 : vector<1x1x128xf32> to vector<8x16x128xf32>
    %71 = arith.mulf %67, %70 : vector<8x16x128xf32>
    %72 = arith.addf %66, %71 : vector<8x16x128xf32>
    %73 = vector.shape_cast %72 : vector<8x16x128xf32> to vector<128x128xf32>
    %74 = arith.truncf %73 : vector<128x128xf32> to vector<128x128xbf16>
    %cst_61 = arith.constant dense<0.000000e+00> : vector<128x128xf32>
    %75 = tpu.matmul %74, %19, %cst_61 {dimension_numbers = #tpu.dot_dimension_numbers<[1], [0], [0], [1], [0, 0, 1, 1], [], []>} : vector<128x128xbf16>, vector<128x128xbf16>, vector<128x128xf32> -> vector<128x128xf32>
    %76 = arith.truncf %75 : vector<128x128xf32> to vector<128x128xbf16>
    %c0_62 = arith.constant 0 : index
    %c0_63 = arith.constant 0 : index
    %c0_64 = arith.constant 0 : index
    %77 = vector.load %arg7[%c0_62, %c0_63, %c0_64] : memref<1x256x128xbf16, #tpu.memory_space<vmem>>, vector<1x128x128xbf16>
    %78 = vector.shape_cast %77 : vector<1x128x128xbf16> to vector<128x128xbf16>
    %79 = vector.shape_cast %76 : vector<128x128xbf16> to vector<1x128x128xbf16>
    tpu.vector_store %arg7[%c0_62, %c0_63, %c0_64], %79 {strides = array<i32>} : memref<1x256x128xbf16, #tpu.memory_space<vmem>>, vector<1x128x128xbf16>,
    %cst_65 = arith.constant dense<0.000000e+00> : vector<128xf32>
    %80 = vector.multi_reduction <add>, %75, %cst_65 [0] : vector<128x128xf32> to vector<128xf32>
    %81 = vector.shape_cast %80 : vector<128xf32> to vector<1x128xf32>
    %82 = arith.mulf %75, %75 : vector<128x128xf32>
    %cst_66 = arith.constant dense<0.000000e+00> : vector<128xf32>
    %83 = vector.multi_reduction <add>, %82, %cst_66 [0] : vector<128x128xf32> to vector<128xf32>
    %84 = vector.shape_cast %83 : vector<128xf32> to vector<1x128xf32>
    %85 = vector.extract_strided_slice %16 {offsets = [8, 0, 0], sizes = [8, 16, 128], strides = [1, 1, 1]} : vector<18x16x128xf32> to vector<8x16x128xf32>
    %c0_67 = arith.constant 0 : index
    %c0_68 = arith.constant 0 : index
    %c0_69 = arith.constant 0 : index
    %c0_70 = arith.constant 0 : index
    %86 = vector.load %arg5[%c0_67, %c0_68, %c0_69, %c0_70] : memref<9x1x1x128xf32, #tpu.memory_space<vmem>>, vector<1x1x1x128xf32>
    %87 = vector.shape_cast %86 : vector<1x1x1x128xf32> to vector<1x1x128xf32>
    %88 = vector.broadcast %87 : vector<1x1x128xf32> to vector<8x16x128xf32>
    %89 = arith.mulf %85, %88 : vector<8x16x128xf32>
    %90 = vector.extract_strided_slice %17 {offsets = [8, 0, 0], sizes = [8, 16, 128], strides = [1, 1, 1]} : vector<18x16x128xf32> to vector<8x16x128xf32>
    %c1_71 = arith.constant 1 : index
    %c0_72 = arith.constant 0 : index
    %c0_73 = arith.constant 0 : index
    %c0_74 = arith.constant 0 : index
    %91 = vector.load %arg5[%c1_71, %c0_72, %c0_73, %c0_74] : memref<9x1x1x128xf32, #tpu.memory_space<vmem>>, vector<1x1x1x128xf32>
    %92 = vector.shape_cast %91 : vector<1x1x1x128xf32> to vector<1x1x128xf32>
    %93 = vector.broadcast %92 : vector<1x1x128xf32> to vector<8x16x128xf32>
    %94 = arith.mulf %90, %93 : vector<8x16x128xf32>
    %95 = arith.addf %89, %94 : vector<8x16x128xf32>
    %96 = vector.extract_strided_slice %18 {offsets = [8, 0, 0], sizes = [8, 16, 128], strides = [1, 1, 1]} : vector<18x16x128xf32> to vector<8x16x128xf32>
    %c2_75 = arith.constant 2 : index
    %c0_76 = arith.constant 0 : index
    %c0_77 = arith.constant 0 : index
    %c0_78 = arith.constant 0 : index
    %97 = vector.load %arg5[%c2_75, %c0_76, %c0_77, %c0_78] : memref<9x1x1x128xf32, #tpu.memory_space<vmem>>, vector<1x1x1x128xf32>
    %98 = vector.shape_cast %97 : vector<1x1x1x128xf32> to vector<1x1x128xf32>
    %99 = vector.broadcast %98 : vector<1x1x128xf32> to vector<8x16x128xf32>
    %100 = arith.mulf %96, %99 : vector<8x16x128xf32>
    %101 = vector.extract_strided_slice %16 {offsets = [9, 0, 0], sizes = [8, 16, 128], strides = [1, 1, 1]} : vector<18x16x128xf32> to vector<8x16x128xf32>
    %c3_79 = arith.constant 3 : index
    %c0_80 = arith.constant 0 : index
    %c0_81 = arith.constant 0 : index
    %c0_82 = arith.constant 0 : index
    %102 = vector.load %arg5[%c3_79, %c0_80, %c0_81, %c0_82] : memref<9x1x1x128xf32, #tpu.memory_space<vmem>>, vector<1x1x1x128xf32>
    %103 = vector.shape_cast %102 : vector<1x1x1x128xf32> to vector<1x1x128xf32>
    %104 = vector.broadcast %103 : vector<1x1x128xf32> to vector<8x16x128xf32>
    %105 = arith.mulf %101, %104 : vector<8x16x128xf32>
    %106 = arith.addf %100, %105 : vector<8x16x128xf32>
    %107 = arith.addf %95, %106 : vector<8x16x128xf32>
    %108 = vector.extract_strided_slice %17 {offsets = [9, 0, 0], sizes = [8, 16, 128], strides = [1, 1, 1]} : vector<18x16x128xf32> to vector<8x16x128xf32>
    %c4_83 = arith.constant 4 : index
    %c0_84 = arith.constant 0 : index
    %c0_85 = arith.constant 0 : index
    %c0_86 = arith.constant 0 : index
    %109 = vector.load %arg5[%c4_83, %c0_84, %c0_85, %c0_86] : memref<9x1x1x128xf32, #tpu.memory_space<vmem>>, vector<1x1x1x128xf32>
    %110 = vector.shape_cast %109 : vector<1x1x1x128xf32> to vector<1x1x128xf32>
    %111 = vector.broadcast %110 : vector<1x1x128xf32> to vector<8x16x128xf32>
    %112 = arith.mulf %108, %111 : vector<8x16x128xf32>
    %113 = vector.extract_strided_slice %18 {offsets = [9, 0, 0], sizes = [8, 16, 128], strides = [1, 1, 1]} : vector<18x16x128xf32> to vector<8x16x128xf32>
    %c5_87 = arith.constant 5 : index
    %c0_88 = arith.constant 0 : index
    %c0_89 = arith.constant 0 : index
    %c0_90 = arith.constant 0 : index
    %114 = vector.load %arg5[%c5_87, %c0_88, %c0_89, %c0_90] : memref<9x1x1x128xf32, #tpu.memory_space<vmem>>, vector<1x1x1x128xf32>
    %115 = vector.shape_cast %114 : vector<1x1x1x128xf32> to vector<1x1x128xf32>
    %116 = vector.broadcast %115 : vector<1x1x128xf32> to vector<8x16x128xf32>
    %117 = arith.mulf %113, %116 : vector<8x16x128xf32>
    %118 = arith.addf %112, %117 : vector<8x16x128xf32>
    %119 = arith.addf %107, %118 : vector<8x16x128xf32>
    %120 = vector.extract_strided_slice %16 {offsets = [10, 0, 0], sizes = [8, 16, 128], strides = [1, 1, 1]} : vector<18x16x128xf32> to vector<8x16x128xf32>
    %c6_91 = arith.constant 6 : index
    %c0_92 = arith.constant 0 : index
    %c0_93 = arith.constant 0 : index
    %c0_94 = arith.constant 0 : index
    %121 = vector.load %arg5[%c6_91, %c0_92, %c0_93, %c0_94] : memref<9x1x1x128xf32, #tpu.memory_space<vmem>>, vector<1x1x1x128xf32>
    %122 = vector.shape_cast %121 : vector<1x1x1x128xf32> to vector<1x1x128xf32>
    %123 = vector.broadcast %122 : vector<1x1x128xf32> to vector<8x16x128xf32>
    %124 = arith.mulf %120, %123 : vector<8x16x128xf32>
    %125 = vector.extract_strided_slice %17 {offsets = [10, 0, 0], sizes = [8, 16, 128], strides = [1, 1, 1]} : vector<18x16x128xf32> to vector<8x16x128xf32>
    %c7_95 = arith.constant 7 : index
    %c0_96 = arith.constant 0 : index
    %c0_97 = arith.constant 0 : index
    %c0_98 = arith.constant 0 : index
    %126 = vector.load %arg5[%c7_95, %c0_96, %c0_97, %c0_98] : memref<9x1x1x128xf32, #tpu.memory_space<vmem>>, vector<1x1x1x128xf32>
    %127 = vector.shape_cast %126 : vector<1x1x1x128xf32> to vector<1x1x128xf32>
    %128 = vector.broadcast %127 : vector<1x1x128xf32> to vector<8x16x128xf32>
    %129 = arith.mulf %125, %128 : vector<8x16x128xf32>
    %130 = arith.addf %124, %129 : vector<8x16x128xf32>
    %131 = arith.addf %119, %130 : vector<8x16x128xf32>
    %132 = vector.extract_strided_slice %18 {offsets = [10, 0, 0], sizes = [8, 16, 128], strides = [1, 1, 1]} : vector<18x16x128xf32> to vector<8x16x128xf32>
    %c8_99 = arith.constant 8 : index
    %c0_100 = arith.constant 0 : index
    %c0_101 = arith.constant 0 : index
    %c0_102 = arith.constant 0 : index
    %133 = vector.load %arg5[%c8_99, %c0_100, %c0_101, %c0_102] : memref<9x1x1x128xf32, #tpu.memory_space<vmem>>, vector<1x1x1x128xf32>
    %134 = vector.shape_cast %133 : vector<1x1x1x128xf32> to vector<1x1x128xf32>
    %135 = vector.broadcast %134 : vector<1x1x128xf32> to vector<8x16x128xf32>
    %136 = arith.mulf %132, %135 : vector<8x16x128xf32>
    %137 = arith.addf %131, %136 : vector<8x16x128xf32>
    %138 = vector.shape_cast %137 : vector<8x16x128xf32> to vector<128x128xf32>
    %139 = arith.truncf %138 : vector<128x128xf32> to vector<128x128xbf16>
    %cst_103 = arith.constant dense<0.000000e+00> : vector<128x128xf32>
    %140 = tpu.matmul %139, %19, %cst_103 {dimension_numbers = #tpu.dot_dimension_numbers<[1], [0], [0], [1], [0, 0, 1, 1], [], []>} : vector<128x128xbf16>, vector<128x128xbf16>, vector<128x128xf32> -> vector<128x128xf32>
    %141 = arith.truncf %140 : vector<128x128xf32> to vector<128x128xbf16>
    %c0_104 = arith.constant 0 : index
    %c128 = arith.constant 128 : index
    %c0_105 = arith.constant 0 : index
    %142 = vector.load %arg7[%c0_104, %c128, %c0_105] : memref<1x256x128xbf16, #tpu.memory_space<vmem>>, vector<1x128x128xbf16>
    %143 = vector.shape_cast %142 : vector<1x128x128xbf16> to vector<128x128xbf16>
    %144 = vector.shape_cast %141 : vector<128x128xbf16> to vector<1x128x128xbf16>
    tpu.vector_store %arg7[%c0_104, %c128, %c0_105], %144 {strides = array<i32>} : memref<1x256x128xbf16, #tpu.memory_space<vmem>>, vector<1x128x128xbf16>,
    %cst_106 = arith.constant dense<0.000000e+00> : vector<128xf32>
    %145 = vector.multi_reduction <add>, %140, %cst_106 [0] : vector<128x128xf32> to vector<128xf32>
    %146 = vector.shape_cast %145 : vector<128xf32> to vector<1x128xf32>
    %147 = arith.mulf %140, %140 : vector<128x128xf32>
    %cst_107 = arith.constant dense<0.000000e+00> : vector<128xf32>
    %148 = vector.multi_reduction <add>, %147, %cst_107 [0] : vector<128x128xf32> to vector<128xf32>
    %149 = vector.shape_cast %148 : vector<128xf32> to vector<1x128xf32>
    %150 = arith.addf %81, %146 : vector<1x128xf32>
    %151 = arith.addf %84, %149 : vector<1x128xf32>
    %c0_108 = arith.constant 0 : index
    %c0_109 = arith.constant 0 : index
    %c0_110 = arith.constant 0 : index
    %152 = vector.load %arg8[%c0_108, %c0_109, %c0_110] : memref<1x2x128xf32, #tpu.memory_space<vmem>>, vector<1x1x128xf32>
    %153 = vector.shape_cast %152 : vector<1x1x128xf32> to vector<1x128xf32>
    %154 = vector.shape_cast %150 : vector<1x128xf32> to vector<1x1x128xf32>
    tpu.vector_store %arg8[%c0_108, %c0_109, %c0_110], %154 {strides = array<i32>} : memref<1x2x128xf32, #tpu.memory_space<vmem>>, vector<1x1x128xf32>,
    %c0_111 = arith.constant 0 : index
    %c1_112 = arith.constant 1 : index
    %c0_113 = arith.constant 0 : index
    %155 = vector.load %arg8[%c0_111, %c1_112, %c0_113] : memref<1x2x128xf32, #tpu.memory_space<vmem>>, vector<1x1x128xf32>
    %156 = vector.shape_cast %155 : vector<1x1x128xf32> to vector<1x128xf32>
    %157 = vector.shape_cast %151 : vector<1x128xf32> to vector<1x1x128xf32>
    tpu.vector_store %arg8[%c0_111, %c1_112, %c0_113], %157 {strides = array<i32>} : memref<1x2x128xf32, #tpu.memory_space<vmem>>, vector<1x1x128xf32>,
    return
  }
  func.func @transform_0(%arg0: i32, %arg1: i32) -> (i32, i32, i32, i32) {
    %c0_i32 = arith.constant 0 : i32
    %c0_i32_0 = arith.constant 0 : i32
    %c0_i32_1 = arith.constant 0 : i32
    %c0_i32_2 = arith.constant 0 : i32
    return %arg0, %c0_i32, %c0_i32_0, %c0_i32_1 : i32, i32, i32, i32
  }
  func.func @transform_1(%arg0: i32, %arg1: i32) -> (i32, i32, i32) {
    %c0_i32 = arith.constant 0 : i32
    %c0_i32_0 = arith.constant 0 : i32
    %c0_i32_1 = arith.constant 0 : i32
    %c0_i32_2 = arith.constant 0 : i32
    return %c0_i32, %c0_i32_0, %c0_i32_1 : i32, i32, i32
  }
  func.func @transform_2(%arg0: i32, %arg1: i32) -> (i32, i32, i32) {
    %c0_i32 = arith.constant 0 : i32
    %c0_i32_0 = arith.constant 0 : i32
    %c0_i32_1 = arith.constant 0 : i32
    %c0_i32_2 = arith.constant 0 : i32
    return %c0_i32, %c0_i32_0, %c0_i32_1 : i32, i32, i32
  }
  func.func @transform_3(%arg0: i32, %arg1: i32) -> (i32, i32, i32, i32) {
    %c0_i32 = arith.constant 0 : i32
    %c0_i32_0 = arith.constant 0 : i32
    %c0_i32_1 = arith.constant 0 : i32
    %c0_i32_2 = arith.constant 0 : i32
    %c0_i32_3 = arith.constant 0 : i32
    return %c0_i32, %c0_i32_0, %c0_i32_1, %c0_i32_2 : i32, i32, i32, i32
  }
  func.func @transform_4(%arg0: i32, %arg1: i32) -> (i32, i32) {
    %c0_i32 = arith.constant 0 : i32
    %c0_i32_0 = arith.constant 0 : i32
    return %c0_i32, %arg1 : i32, i32
  }
  func.func @transform_5(%arg0: i32, %arg1: i32) -> (i32, i32, i32) {
    %c0_i32 = arith.constant 0 : i32
    %c0_i32_0 = arith.constant 0 : i32
    return %arg0, %c0_i32, %arg1 : i32, i32, i32
  }
  func.func @transform_6(%arg0: i32, %arg1: i32) -> (i32, i32, i32) {
    %c0_i32 = arith.constant 0 : i32
    %c0_i32_0 = arith.constant 0 : i32
    return %arg0, %c0_i32, %arg1 : i32, i32, i32
  }
}

module attributes {stable_mosaic.version = 11 : i64} {
  func.func @_bn_maxpool_kernel(%arg0: i32, %arg1: memref<1x16x16x128xbf16, #tpu.memory_space<vmem>>, %arg2: memref<1x1x128xf32, #tpu.memory_space<vmem>>, %arg3: memref<1x1x128xf32, #tpu.memory_space<vmem>>, %arg4: memref<1x8x16x128xbf16, #tpu.memory_space<vmem>>, %arg5: memref<18x32x128xf32, #tpu.memory_space<vmem>>) attributes {dimension_semantics = [#tpu.dimension_semantics<parallel>], iteration_bounds = array<i64: 2>, scalar_prefetch = 0 : i64, scratch_operands = 1 : i64, tpu.core_type = #tpu.core_type<tc>, window_params = [{transform_indices = @transform_0, window_bounds = array<i64: 1, 16, 16, 128>}, {pipeline_mode = #tpu.pipeline_mode<synchronous>, transform_indices = @transform_1, window_bounds = array<i64: 1, 1, 128>}, {pipeline_mode = #tpu.pipeline_mode<synchronous>, transform_indices = @transform_2, window_bounds = array<i64: 1, 1, 128>}, {transform_indices = @transform_3, window_bounds = array<i64: 1, 8, 16, 128>}]} {
    %c0 = arith.constant 0 : index
    %c0_0 = arith.constant 0 : index
    %c0_1 = arith.constant 0 : index
    %c0_2 = arith.constant 0 : index
    %0 = vector.load %arg1[%c0, %c0_0, %c0_1, %c0_2] : memref<1x16x16x128xbf16, #tpu.memory_space<vmem>>, vector<1x16x16x128xbf16>
    %1 = vector.shape_cast %0 : vector<1x16x16x128xbf16> to vector<16x16x128xbf16>
    %2 = arith.extf %1 : vector<16x16x128xbf16> to vector<16x16x128xf32>
    %c0_3 = arith.constant 0 : index
    %c0_4 = arith.constant 0 : index
    %c0_5 = arith.constant 0 : index
    %3 = vector.load %arg2[%c0_3, %c0_4, %c0_5] : memref<1x1x128xf32, #tpu.memory_space<vmem>>, vector<1x1x128xf32>
    %4 = vector.broadcast %3 : vector<1x1x128xf32> to vector<16x16x128xf32>
    %5 = arith.mulf %2, %4 : vector<16x16x128xf32>
    %c0_6 = arith.constant 0 : index
    %c0_7 = arith.constant 0 : index
    %c0_8 = arith.constant 0 : index
    %6 = vector.load %arg3[%c0_6, %c0_7, %c0_8] : memref<1x1x128xf32, #tpu.memory_space<vmem>>, vector<1x1x128xf32>
    %7 = vector.broadcast %6 : vector<1x1x128xf32> to vector<16x16x128xf32>
    %8 = arith.addf %5, %7 : vector<16x16x128xf32>
    %cst = arith.constant 0xFF800000 : f32
    %9 = vector.broadcast %cst : f32 to vector<1x32x128xf32>
    %c0_9 = arith.constant 0 : index
    %c0_10 = arith.constant 0 : index
    %c0_11 = arith.constant 0 : index
    %10 = vector.load %arg5[%c0_9, %c0_10, %c0_11] : memref<18x32x128xf32, #tpu.memory_space<vmem>>, vector<1x32x128xf32>
    tpu.vector_store %arg5[%c0_9, %c0_10, %c0_11], %9 {strides = array<i32>} : memref<18x32x128xf32, #tpu.memory_space<vmem>>, vector<1x32x128xf32>,
    %c17 = arith.constant 17 : index
    %c0_12 = arith.constant 0 : index
    %c0_13 = arith.constant 0 : index
    %11 = vector.load %arg5[%c17, %c0_12, %c0_13] : memref<18x32x128xf32, #tpu.memory_space<vmem>>, vector<1x32x128xf32>
    tpu.vector_store %arg5[%c17, %c0_12, %c0_13], %9 {strides = array<i32>} : memref<18x32x128xf32, #tpu.memory_space<vmem>>, vector<1x32x128xf32>,
    %cst_14 = arith.constant 0xFF800000 : f32
    %12 = vector.broadcast %cst_14 : f32 to vector<16x8x128xf32>
    %c1 = arith.constant 1 : index
    %c0_15 = arith.constant 0 : index
    %c0_16 = arith.constant 0 : index
    %13 = vector.load %arg5[%c1, %c0_15, %c0_16] : memref<18x32x128xf32, #tpu.memory_space<vmem>>, vector<16x8x128xf32>
    tpu.vector_store %arg5[%c1, %c0_15, %c0_16], %12 {strides = array<i32>} : memref<18x32x128xf32, #tpu.memory_space<vmem>>, vector<16x8x128xf32>,
    %c1_17 = arith.constant 1 : index
    %c24 = arith.constant 24 : index
    %c0_18 = arith.constant 0 : index
    %14 = vector.load %arg5[%c1_17, %c24, %c0_18] : memref<18x32x128xf32, #tpu.memory_space<vmem>>, vector<16x8x128xf32>
    tpu.vector_store %arg5[%c1_17, %c24, %c0_18], %12 {strides = array<i32>} : memref<18x32x128xf32, #tpu.memory_space<vmem>>, vector<16x8x128xf32>,
    %c1_19 = arith.constant 1 : index
    %c8 = arith.constant 8 : index
    %c0_20 = arith.constant 0 : index
    %15 = vector.load %arg5[%c1_19, %c8, %c0_20] : memref<18x32x128xf32, #tpu.memory_space<vmem>>, vector<16x16x128xf32>
    tpu.vector_store %arg5[%c1_19, %c8, %c0_20], %8 {strides = array<i32>} : memref<18x32x128xf32, #tpu.memory_space<vmem>>, vector<16x16x128xf32>,
    %c0_21 = arith.constant 0 : index
    %c7 = arith.constant 7 : index
    %c0_22 = arith.constant 0 : index
    %16 = vector.load %arg5[%c0_21, %c7, %c0_22] : memref<18x32x128xf32, #tpu.memory_space<vmem>>, vector<18x16x128xf32>
    %c0_23 = arith.constant 0 : index
    %c8_24 = arith.constant 8 : index
    %c0_25 = arith.constant 0 : index
    %17 = vector.load %arg5[%c0_23, %c8_24, %c0_25] : memref<18x32x128xf32, #tpu.memory_space<vmem>>, vector<18x16x128xf32>
    %c0_26 = arith.constant 0 : index
    %c9 = arith.constant 9 : index
    %c0_27 = arith.constant 0 : index
    %18 = vector.load %arg5[%c0_26, %c9, %c0_27] : memref<18x32x128xf32, #tpu.memory_space<vmem>>, vector<18x16x128xf32>
    %19 = arith.maximumf %16, %17 : vector<18x16x128xf32>
    %20 = arith.maximumf %19, %18 : vector<18x16x128xf32>
    %21 = vector.extract_strided_slice %20 {offsets = [0, 0, 0], sizes = [1, 16, 128], strides = [1, 1, 1]} : vector<18x16x128xf32> to vector<1x16x128xf32>
    %22 = vector.shape_cast %21 : vector<1x16x128xf32> to vector<16x128xf32>
    %23 = vector.extract_strided_slice %20 {offsets = [1, 0, 0], sizes = [1, 16, 128], strides = [1, 1, 1]} : vector<18x16x128xf32> to vector<1x16x128xf32>
    %24 = vector.shape_cast %23 : vector<1x16x128xf32> to vector<16x128xf32>
    %25 = arith.maximumf %22, %24 : vector<16x128xf32>
    %26 = vector.extract_strided_slice %20 {offsets = [2, 0, 0], sizes = [1, 16, 128], strides = [1, 1, 1]} : vector<18x16x128xf32> to vector<1x16x128xf32>
    %27 = vector.shape_cast %26 : vector<1x16x128xf32> to vector<16x128xf32>
    %28 = arith.maximumf %25, %27 : vector<16x128xf32>
    %29 = arith.truncf %28 : vector<16x128xf32> to vector<16x128xbf16>
    %c0_28 = arith.constant 0 : index
    %c0_29 = arith.constant 0 : index
    %c0_30 = arith.constant 0 : index
    %c0_31 = arith.constant 0 : index
    %30 = vector.load %arg4[%c0_28, %c0_29, %c0_30, %c0_31] : memref<1x8x16x128xbf16, #tpu.memory_space<vmem>>, vector<1x1x16x128xbf16>
    %31 = vector.shape_cast %30 : vector<1x1x16x128xbf16> to vector<16x128xbf16>
    %32 = vector.shape_cast %29 : vector<16x128xbf16> to vector<1x1x16x128xbf16>
    tpu.vector_store %arg4[%c0_28, %c0_29, %c0_30, %c0_31], %32 {strides = array<i32>} : memref<1x8x16x128xbf16, #tpu.memory_space<vmem>>, vector<1x1x16x128xbf16>,
    %33 = vector.extract_strided_slice %20 {offsets = [2, 0, 0], sizes = [1, 16, 128], strides = [1, 1, 1]} : vector<18x16x128xf32> to vector<1x16x128xf32>
    %34 = vector.shape_cast %33 : vector<1x16x128xf32> to vector<16x128xf32>
    %35 = vector.extract_strided_slice %20 {offsets = [3, 0, 0], sizes = [1, 16, 128], strides = [1, 1, 1]} : vector<18x16x128xf32> to vector<1x16x128xf32>
    %36 = vector.shape_cast %35 : vector<1x16x128xf32> to vector<16x128xf32>
    %37 = arith.maximumf %34, %36 : vector<16x128xf32>
    %38 = vector.extract_strided_slice %20 {offsets = [4, 0, 0], sizes = [1, 16, 128], strides = [1, 1, 1]} : vector<18x16x128xf32> to vector<1x16x128xf32>
    %39 = vector.shape_cast %38 : vector<1x16x128xf32> to vector<16x128xf32>
    %40 = arith.maximumf %37, %39 : vector<16x128xf32>
    %41 = arith.truncf %40 : vector<16x128xf32> to vector<16x128xbf16>
    %c0_32 = arith.constant 0 : index
    %c1_33 = arith.constant 1 : index
    %c0_34 = arith.constant 0 : index
    %c0_35 = arith.constant 0 : index
    %42 = vector.load %arg4[%c0_32, %c1_33, %c0_34, %c0_35] : memref<1x8x16x128xbf16, #tpu.memory_space<vmem>>, vector<1x1x16x128xbf16>
    %43 = vector.shape_cast %42 : vector<1x1x16x128xbf16> to vector<16x128xbf16>
    %44 = vector.shape_cast %41 : vector<16x128xbf16> to vector<1x1x16x128xbf16>
    tpu.vector_store %arg4[%c0_32, %c1_33, %c0_34, %c0_35], %44 {strides = array<i32>} : memref<1x8x16x128xbf16, #tpu.memory_space<vmem>>, vector<1x1x16x128xbf16>,
    %45 = vector.extract_strided_slice %20 {offsets = [4, 0, 0], sizes = [1, 16, 128], strides = [1, 1, 1]} : vector<18x16x128xf32> to vector<1x16x128xf32>
    %46 = vector.shape_cast %45 : vector<1x16x128xf32> to vector<16x128xf32>
    %47 = vector.extract_strided_slice %20 {offsets = [5, 0, 0], sizes = [1, 16, 128], strides = [1, 1, 1]} : vector<18x16x128xf32> to vector<1x16x128xf32>
    %48 = vector.shape_cast %47 : vector<1x16x128xf32> to vector<16x128xf32>
    %49 = arith.maximumf %46, %48 : vector<16x128xf32>
    %50 = vector.extract_strided_slice %20 {offsets = [6, 0, 0], sizes = [1, 16, 128], strides = [1, 1, 1]} : vector<18x16x128xf32> to vector<1x16x128xf32>
    %51 = vector.shape_cast %50 : vector<1x16x128xf32> to vector<16x128xf32>
    %52 = arith.maximumf %49, %51 : vector<16x128xf32>
    %53 = arith.truncf %52 : vector<16x128xf32> to vector<16x128xbf16>
    %c0_36 = arith.constant 0 : index
    %c2 = arith.constant 2 : index
    %c0_37 = arith.constant 0 : index
    %c0_38 = arith.constant 0 : index
    %54 = vector.load %arg4[%c0_36, %c2, %c0_37, %c0_38] : memref<1x8x16x128xbf16, #tpu.memory_space<vmem>>, vector<1x1x16x128xbf16>
    %55 = vector.shape_cast %54 : vector<1x1x16x128xbf16> to vector<16x128xbf16>
    %56 = vector.shape_cast %53 : vector<16x128xbf16> to vector<1x1x16x128xbf16>
    tpu.vector_store %arg4[%c0_36, %c2, %c0_37, %c0_38], %56 {strides = array<i32>} : memref<1x8x16x128xbf16, #tpu.memory_space<vmem>>, vector<1x1x16x128xbf16>,
    %57 = vector.extract_strided_slice %20 {offsets = [6, 0, 0], sizes = [1, 16, 128], strides = [1, 1, 1]} : vector<18x16x128xf32> to vector<1x16x128xf32>
    %58 = vector.shape_cast %57 : vector<1x16x128xf32> to vector<16x128xf32>
    %59 = vector.extract_strided_slice %20 {offsets = [7, 0, 0], sizes = [1, 16, 128], strides = [1, 1, 1]} : vector<18x16x128xf32> to vector<1x16x128xf32>
    %60 = vector.shape_cast %59 : vector<1x16x128xf32> to vector<16x128xf32>
    %61 = arith.maximumf %58, %60 : vector<16x128xf32>
    %62 = vector.extract_strided_slice %20 {offsets = [8, 0, 0], sizes = [1, 16, 128], strides = [1, 1, 1]} : vector<18x16x128xf32> to vector<1x16x128xf32>
    %63 = vector.shape_cast %62 : vector<1x16x128xf32> to vector<16x128xf32>
    %64 = arith.maximumf %61, %63 : vector<16x128xf32>
    %65 = arith.truncf %64 : vector<16x128xf32> to vector<16x128xbf16>
    %c0_39 = arith.constant 0 : index
    %c3 = arith.constant 3 : index
    %c0_40 = arith.constant 0 : index
    %c0_41 = arith.constant 0 : index
    %66 = vector.load %arg4[%c0_39, %c3, %c0_40, %c0_41] : memref<1x8x16x128xbf16, #tpu.memory_space<vmem>>, vector<1x1x16x128xbf16>
    %67 = vector.shape_cast %66 : vector<1x1x16x128xbf16> to vector<16x128xbf16>
    %68 = vector.shape_cast %65 : vector<16x128xbf16> to vector<1x1x16x128xbf16>
    tpu.vector_store %arg4[%c0_39, %c3, %c0_40, %c0_41], %68 {strides = array<i32>} : memref<1x8x16x128xbf16, #tpu.memory_space<vmem>>, vector<1x1x16x128xbf16>,
    %69 = vector.extract_strided_slice %20 {offsets = [8, 0, 0], sizes = [1, 16, 128], strides = [1, 1, 1]} : vector<18x16x128xf32> to vector<1x16x128xf32>
    %70 = vector.shape_cast %69 : vector<1x16x128xf32> to vector<16x128xf32>
    %71 = vector.extract_strided_slice %20 {offsets = [9, 0, 0], sizes = [1, 16, 128], strides = [1, 1, 1]} : vector<18x16x128xf32> to vector<1x16x128xf32>
    %72 = vector.shape_cast %71 : vector<1x16x128xf32> to vector<16x128xf32>
    %73 = arith.maximumf %70, %72 : vector<16x128xf32>
    %74 = vector.extract_strided_slice %20 {offsets = [10, 0, 0], sizes = [1, 16, 128], strides = [1, 1, 1]} : vector<18x16x128xf32> to vector<1x16x128xf32>
    %75 = vector.shape_cast %74 : vector<1x16x128xf32> to vector<16x128xf32>
    %76 = arith.maximumf %73, %75 : vector<16x128xf32>
    %77 = arith.truncf %76 : vector<16x128xf32> to vector<16x128xbf16>
    %c0_42 = arith.constant 0 : index
    %c4 = arith.constant 4 : index
    %c0_43 = arith.constant 0 : index
    %c0_44 = arith.constant 0 : index
    %78 = vector.load %arg4[%c0_42, %c4, %c0_43, %c0_44] : memref<1x8x16x128xbf16, #tpu.memory_space<vmem>>, vector<1x1x16x128xbf16>
    %79 = vector.shape_cast %78 : vector<1x1x16x128xbf16> to vector<16x128xbf16>
    %80 = vector.shape_cast %77 : vector<16x128xbf16> to vector<1x1x16x128xbf16>
    tpu.vector_store %arg4[%c0_42, %c4, %c0_43, %c0_44], %80 {strides = array<i32>} : memref<1x8x16x128xbf16, #tpu.memory_space<vmem>>, vector<1x1x16x128xbf16>,
    %81 = vector.extract_strided_slice %20 {offsets = [10, 0, 0], sizes = [1, 16, 128], strides = [1, 1, 1]} : vector<18x16x128xf32> to vector<1x16x128xf32>
    %82 = vector.shape_cast %81 : vector<1x16x128xf32> to vector<16x128xf32>
    %83 = vector.extract_strided_slice %20 {offsets = [11, 0, 0], sizes = [1, 16, 128], strides = [1, 1, 1]} : vector<18x16x128xf32> to vector<1x16x128xf32>
    %84 = vector.shape_cast %83 : vector<1x16x128xf32> to vector<16x128xf32>
    %85 = arith.maximumf %82, %84 : vector<16x128xf32>
    %86 = vector.extract_strided_slice %20 {offsets = [12, 0, 0], sizes = [1, 16, 128], strides = [1, 1, 1]} : vector<18x16x128xf32> to vector<1x16x128xf32>
    %87 = vector.shape_cast %86 : vector<1x16x128xf32> to vector<16x128xf32>
    %88 = arith.maximumf %85, %87 : vector<16x128xf32>
    %89 = arith.truncf %88 : vector<16x128xf32> to vector<16x128xbf16>
    %c0_45 = arith.constant 0 : index
    %c5 = arith.constant 5 : index
    %c0_46 = arith.constant 0 : index
    %c0_47 = arith.constant 0 : index
    %90 = vector.load %arg4[%c0_45, %c5, %c0_46, %c0_47] : memref<1x8x16x128xbf16, #tpu.memory_space<vmem>>, vector<1x1x16x128xbf16>
    %91 = vector.shape_cast %90 : vector<1x1x16x128xbf16> to vector<16x128xbf16>
    %92 = vector.shape_cast %89 : vector<16x128xbf16> to vector<1x1x16x128xbf16>
    tpu.vector_store %arg4[%c0_45, %c5, %c0_46, %c0_47], %92 {strides = array<i32>} : memref<1x8x16x128xbf16, #tpu.memory_space<vmem>>, vector<1x1x16x128xbf16>,
    %93 = vector.extract_strided_slice %20 {offsets = [12, 0, 0], sizes = [1, 16, 128], strides = [1, 1, 1]} : vector<18x16x128xf32> to vector<1x16x128xf32>
    %94 = vector.shape_cast %93 : vector<1x16x128xf32> to vector<16x128xf32>
    %95 = vector.extract_strided_slice %20 {offsets = [13, 0, 0], sizes = [1, 16, 128], strides = [1, 1, 1]} : vector<18x16x128xf32> to vector<1x16x128xf32>
    %96 = vector.shape_cast %95 : vector<1x16x128xf32> to vector<16x128xf32>
    %97 = arith.maximumf %94, %96 : vector<16x128xf32>
    %98 = vector.extract_strided_slice %20 {offsets = [14, 0, 0], sizes = [1, 16, 128], strides = [1, 1, 1]} : vector<18x16x128xf32> to vector<1x16x128xf32>
    %99 = vector.shape_cast %98 : vector<1x16x128xf32> to vector<16x128xf32>
    %100 = arith.maximumf %97, %99 : vector<16x128xf32>
    %101 = arith.truncf %100 : vector<16x128xf32> to vector<16x128xbf16>
    %c0_48 = arith.constant 0 : index
    %c6 = arith.constant 6 : index
    %c0_49 = arith.constant 0 : index
    %c0_50 = arith.constant 0 : index
    %102 = vector.load %arg4[%c0_48, %c6, %c0_49, %c0_50] : memref<1x8x16x128xbf16, #tpu.memory_space<vmem>>, vector<1x1x16x128xbf16>
    %103 = vector.shape_cast %102 : vector<1x1x16x128xbf16> to vector<16x128xbf16>
    %104 = vector.shape_cast %101 : vector<16x128xbf16> to vector<1x1x16x128xbf16>
    tpu.vector_store %arg4[%c0_48, %c6, %c0_49, %c0_50], %104 {strides = array<i32>} : memref<1x8x16x128xbf16, #tpu.memory_space<vmem>>, vector<1x1x16x128xbf16>,
    %105 = vector.extract_strided_slice %20 {offsets = [14, 0, 0], sizes = [1, 16, 128], strides = [1, 1, 1]} : vector<18x16x128xf32> to vector<1x16x128xf32>
    %106 = vector.shape_cast %105 : vector<1x16x128xf32> to vector<16x128xf32>
    %107 = vector.extract_strided_slice %20 {offsets = [15, 0, 0], sizes = [1, 16, 128], strides = [1, 1, 1]} : vector<18x16x128xf32> to vector<1x16x128xf32>
    %108 = vector.shape_cast %107 : vector<1x16x128xf32> to vector<16x128xf32>
    %109 = arith.maximumf %106, %108 : vector<16x128xf32>
    %110 = vector.extract_strided_slice %20 {offsets = [16, 0, 0], sizes = [1, 16, 128], strides = [1, 1, 1]} : vector<18x16x128xf32> to vector<1x16x128xf32>
    %111 = vector.shape_cast %110 : vector<1x16x128xf32> to vector<16x128xf32>
    %112 = arith.maximumf %109, %111 : vector<16x128xf32>
    %113 = arith.truncf %112 : vector<16x128xf32> to vector<16x128xbf16>
    %c0_51 = arith.constant 0 : index
    %c7_52 = arith.constant 7 : index
    %c0_53 = arith.constant 0 : index
    %c0_54 = arith.constant 0 : index
    %114 = vector.load %arg4[%c0_51, %c7_52, %c0_53, %c0_54] : memref<1x8x16x128xbf16, #tpu.memory_space<vmem>>, vector<1x1x16x128xbf16>
    %115 = vector.shape_cast %114 : vector<1x1x16x128xbf16> to vector<16x128xbf16>
    %116 = vector.shape_cast %113 : vector<16x128xbf16> to vector<1x1x16x128xbf16>
    tpu.vector_store %arg4[%c0_51, %c7_52, %c0_53, %c0_54], %116 {strides = array<i32>} : memref<1x8x16x128xbf16, #tpu.memory_space<vmem>>, vector<1x1x16x128xbf16>,
    return
  }
  func.func @transform_0(%arg0: i32) -> (i32, i32, i32, i32) {
    %c0_i32 = arith.constant 0 : i32
    %c0_i32_0 = arith.constant 0 : i32
    %c0_i32_1 = arith.constant 0 : i32
    %c0_i32_2 = arith.constant 0 : i32
    return %arg0, %c0_i32, %c0_i32_0, %c0_i32_1 : i32, i32, i32, i32
  }
  func.func @transform_1(%arg0: i32) -> (i32, i32, i32) {
    %c0_i32 = arith.constant 0 : i32
    %c0_i32_0 = arith.constant 0 : i32
    %c0_i32_1 = arith.constant 0 : i32
    %c0_i32_2 = arith.constant 0 : i32
    return %c0_i32, %c0_i32_0, %c0_i32_1 : i32, i32, i32
  }
  func.func @transform_2(%arg0: i32) -> (i32, i32, i32) {
    %c0_i32 = arith.constant 0 : i32
    %c0_i32_0 = arith.constant 0 : i32
    %c0_i32_1 = arith.constant 0 : i32
    %c0_i32_2 = arith.constant 0 : i32
    return %c0_i32, %c0_i32_0, %c0_i32_1 : i32, i32, i32
  }
  func.func @transform_3(%arg0: i32) -> (i32, i32, i32, i32) {
    %c0_i32 = arith.constant 0 : i32
    %c0_i32_0 = arith.constant 0 : i32
    %c0_i32_1 = arith.constant 0 : i32
    %c0_i32_2 = arith.constant 0 : i32
    return %arg0, %c0_i32, %c0_i32_0, %c0_i32_1 : i32, i32, i32, i32
  }
}

module attributes {stable_mosaic.version = 11 : i64} {
  func.func @_sepconv_kernel(%arg0: i32, %arg1: i32, %arg2: memref<1x16x16x128xbf16, #tpu.memory_space<vmem>>, %arg3: memref<1x1x128xf32, #tpu.memory_space<vmem>>, %arg4: memref<1x1x128xf32, #tpu.memory_space<vmem>>, %arg5: memref<9x1x1x128xf32, #tpu.memory_space<vmem>>, %arg6: memref<128x128xbf16, #tpu.memory_space<vmem>>, %arg7: memref<1x256x128xbf16, #tpu.memory_space<vmem>>, %arg8: memref<1x2x128xf32, #tpu.memory_space<vmem>>, %arg9: memref<18x32x128xf32, #tpu.memory_space<vmem>>) attributes {dimension_semantics = [#tpu.dimension_semantics<parallel>, #tpu.dimension_semantics<arbitrary>], iteration_bounds = array<i64: 2, 1>, scalar_prefetch = 0 : i64, scratch_operands = 1 : i64, tpu.core_type = #tpu.core_type<tc>, window_params = [{transform_indices = @transform_0, window_bounds = array<i64: 1, 16, 16, 128>}, {pipeline_mode = #tpu.pipeline_mode<synchronous>, transform_indices = @transform_1, window_bounds = array<i64: 1, 1, 128>}, {pipeline_mode = #tpu.pipeline_mode<synchronous>, transform_indices = @transform_2, window_bounds = array<i64: 1, 1, 128>}, {pipeline_mode = #tpu.pipeline_mode<synchronous>, transform_indices = @transform_3, window_bounds = array<i64: 9, 1, 1, 128>}, {transform_indices = @transform_4, window_bounds = array<i64: 128, 128>}, {transform_indices = @transform_5, window_bounds = array<i64: 1, 256, 128>}, {transform_indices = @transform_6, window_bounds = array<i64: 1, 2, 128>}]} {
    %c0 = arith.constant 0 : index
    %c0_0 = arith.constant 0 : index
    %c0_1 = arith.constant 0 : index
    %c0_2 = arith.constant 0 : index
    %0 = vector.load %arg2[%c0, %c0_0, %c0_1, %c0_2] : memref<1x16x16x128xbf16, #tpu.memory_space<vmem>>, vector<1x16x16x128xbf16>
    %1 = vector.shape_cast %0 : vector<1x16x16x128xbf16> to vector<16x16x128xbf16>
    %2 = arith.extf %1 : vector<16x16x128xbf16> to vector<16x16x128xf32>
    %c0_3 = arith.constant 0 : index
    %c0_4 = arith.constant 0 : index
    %c0_5 = arith.constant 0 : index
    %3 = vector.load %arg3[%c0_3, %c0_4, %c0_5] : memref<1x1x128xf32, #tpu.memory_space<vmem>>, vector<1x1x128xf32>
    %4 = vector.broadcast %3 : vector<1x1x128xf32> to vector<16x16x128xf32>
    %5 = arith.mulf %2, %4 : vector<16x16x128xf32>
    %c0_6 = arith.constant 0 : index
    %c0_7 = arith.constant 0 : index
    %c0_8 = arith.constant 0 : index
    %6 = vector.load %arg4[%c0_6, %c0_7, %c0_8] : memref<1x1x128xf32, #tpu.memory_space<vmem>>, vector<1x1x128xf32>
    %7 = vector.broadcast %6 : vector<1x1x128xf32> to vector<16x16x128xf32>
    %8 = arith.addf %5, %7 : vector<16x16x128xf32>
    %cst = arith.constant 0.000000e+00 : f32
    %9 = vector.broadcast %cst : f32 to vector<16x16x128xf32>
    %10 = arith.maximumf %8, %9 : vector<16x16x128xf32>
    %cst_9 = arith.constant 0.000000e+00 : f32
    %11 = vector.broadcast %cst_9 : f32 to vector<1x32x128xf32>
    %c0_10 = arith.constant 0 : index
    %c0_11 = arith.constant 0 : index
    %c0_12 = arith.constant 0 : index
    %12 = vector.load %arg9[%c0_10, %c0_11, %c0_12] : memref<18x32x128xf32, #tpu.memory_space<vmem>>, vector<1x32x128xf32>
    tpu.vector_store %arg9[%c0_10, %c0_11, %c0_12], %11 {strides = array<i32>} : memref<18x32x128xf32, #tpu.memory_space<vmem>>, vector<1x32x128xf32>,
    %c17 = arith.constant 17 : index
    %c0_13 = arith.constant 0 : index
    %c0_14 = arith.constant 0 : index
    %13 = vector.load %arg9[%c17, %c0_13, %c0_14] : memref<18x32x128xf32, #tpu.memory_space<vmem>>, vector<1x32x128xf32>
    tpu.vector_store %arg9[%c17, %c0_13, %c0_14], %11 {strides = array<i32>} : memref<18x32x128xf32, #tpu.memory_space<vmem>>, vector<1x32x128xf32>,
    %cst_15 = arith.constant 0.000000e+00 : f32
    %14 = vector.broadcast %cst_15 : f32 to vector<16x8x128xf32>
    %c1 = arith.constant 1 : index
    %c0_16 = arith.constant 0 : index
    %c0_17 = arith.constant 0 : index
    %15 = vector.load %arg9[%c1, %c0_16, %c0_17] : memref<18x32x128xf32, #tpu.memory_space<vmem>>, vector<16x8x128xf32>
    tpu.vector_store %arg9[%c1, %c0_16, %c0_17], %14 {strides = array<i32>} : memref<18x32x128xf32, #tpu.memory_space<vmem>>, vector<16x8x128xf32>,
    %c1_18 = arith.constant 1 : index
    %c24 = arith.constant 24 : index
    %c0_19 = arith.constant 0 : index
    %16 = vector.load %arg9[%c1_18, %c24, %c0_19] : memref<18x32x128xf32, #tpu.memory_space<vmem>>, vector<16x8x128xf32>
    tpu.vector_store %arg9[%c1_18, %c24, %c0_19], %14 {strides = array<i32>} : memref<18x32x128xf32, #tpu.memory_space<vmem>>, vector<16x8x128xf32>,
    %c1_20 = arith.constant 1 : index
    %c8 = arith.constant 8 : index
    %c0_21 = arith.constant 0 : index
    %17 = vector.load %arg9[%c1_20, %c8, %c0_21] : memref<18x32x128xf32, #tpu.memory_space<vmem>>, vector<16x16x128xf32>
    tpu.vector_store %arg9[%c1_20, %c8, %c0_21], %10 {strides = array<i32>} : memref<18x32x128xf32, #tpu.memory_space<vmem>>, vector<16x16x128xf32>,
    %c0_22 = arith.constant 0 : index
    %c7 = arith.constant 7 : index
    %c0_23 = arith.constant 0 : index
    %18 = vector.load %arg9[%c0_22, %c7, %c0_23] : memref<18x32x128xf32, #tpu.memory_space<vmem>>, vector<18x16x128xf32>
    %c0_24 = arith.constant 0 : index
    %c8_25 = arith.constant 8 : index
    %c0_26 = arith.constant 0 : index
    %19 = vector.load %arg9[%c0_24, %c8_25, %c0_26] : memref<18x32x128xf32, #tpu.memory_space<vmem>>, vector<18x16x128xf32>
    %c0_27 = arith.constant 0 : index
    %c9 = arith.constant 9 : index
    %c0_28 = arith.constant 0 : index
    %20 = vector.load %arg9[%c0_27, %c9, %c0_28] : memref<18x32x128xf32, #tpu.memory_space<vmem>>, vector<18x16x128xf32>
    %c0_29 = arith.constant 0 : index
    %c0_30 = arith.constant 0 : index
    %21 = vector.load %arg6[%c0_29, %c0_30] : memref<128x128xbf16, #tpu.memory_space<vmem>>, vector<128x128xbf16>
    %22 = vector.extract_strided_slice %18 {offsets = [0, 0, 0], sizes = [8, 16, 128], strides = [1, 1, 1]} : vector<18x16x128xf32> to vector<8x16x128xf32>
    %c0_31 = arith.constant 0 : index
    %c0_32 = arith.constant 0 : index
    %c0_33 = arith.constant 0 : index
    %c0_34 = arith.constant 0 : index
    %23 = vector.load %arg5[%c0_31, %c0_32, %c0_33, %c0_34] : memref<9x1x1x128xf32, #tpu.memory_space<vmem>>, vector<1x1x1x128xf32>
    %24 = vector.shape_cast %23 : vector<1x1x1x128xf32> to vector<1x1x128xf32>
    %25 = vector.broadcast %24 : vector<1x1x128xf32> to vector<8x16x128xf32>
    %26 = arith.mulf %22, %25 : vector<8x16x128xf32>
    %27 = vector.extract_strided_slice %19 {offsets = [0, 0, 0], sizes = [8, 16, 128], strides = [1, 1, 1]} : vector<18x16x128xf32> to vector<8x16x128xf32>
    %c1_35 = arith.constant 1 : index
    %c0_36 = arith.constant 0 : index
    %c0_37 = arith.constant 0 : index
    %c0_38 = arith.constant 0 : index
    %28 = vector.load %arg5[%c1_35, %c0_36, %c0_37, %c0_38] : memref<9x1x1x128xf32, #tpu.memory_space<vmem>>, vector<1x1x1x128xf32>
    %29 = vector.shape_cast %28 : vector<1x1x1x128xf32> to vector<1x1x128xf32>
    %30 = vector.broadcast %29 : vector<1x1x128xf32> to vector<8x16x128xf32>
    %31 = arith.mulf %27, %30 : vector<8x16x128xf32>
    %32 = arith.addf %26, %31 : vector<8x16x128xf32>
    %33 = vector.extract_strided_slice %20 {offsets = [0, 0, 0], sizes = [8, 16, 128], strides = [1, 1, 1]} : vector<18x16x128xf32> to vector<8x16x128xf32>
    %c2 = arith.constant 2 : index
    %c0_39 = arith.constant 0 : index
    %c0_40 = arith.constant 0 : index
    %c0_41 = arith.constant 0 : index
    %34 = vector.load %arg5[%c2, %c0_39, %c0_40, %c0_41] : memref<9x1x1x128xf32, #tpu.memory_space<vmem>>, vector<1x1x1x128xf32>
    %35 = vector.shape_cast %34 : vector<1x1x1x128xf32> to vector<1x1x128xf32>
    %36 = vector.broadcast %35 : vector<1x1x128xf32> to vector<8x16x128xf32>
    %37 = arith.mulf %33, %36 : vector<8x16x128xf32>
    %38 = vector.extract_strided_slice %18 {offsets = [1, 0, 0], sizes = [8, 16, 128], strides = [1, 1, 1]} : vector<18x16x128xf32> to vector<8x16x128xf32>
    %c3 = arith.constant 3 : index
    %c0_42 = arith.constant 0 : index
    %c0_43 = arith.constant 0 : index
    %c0_44 = arith.constant 0 : index
    %39 = vector.load %arg5[%c3, %c0_42, %c0_43, %c0_44] : memref<9x1x1x128xf32, #tpu.memory_space<vmem>>, vector<1x1x1x128xf32>
    %40 = vector.shape_cast %39 : vector<1x1x1x128xf32> to vector<1x1x128xf32>
    %41 = vector.broadcast %40 : vector<1x1x128xf32> to vector<8x16x128xf32>
    %42 = arith.mulf %38, %41 : vector<8x16x128xf32>
    %43 = arith.addf %37, %42 : vector<8x16x128xf32>
    %44 = arith.addf %32, %43 : vector<8x16x128xf32>
    %45 = vector.extract_strided_slice %19 {offsets = [1, 0, 0], sizes = [8, 16, 128], strides = [1, 1, 1]} : vector<18x16x128xf32> to vector<8x16x128xf32>
    %c4 = arith.constant 4 : index
    %c0_45 = arith.constant 0 : index
    %c0_46 = arith.constant 0 : index
    %c0_47 = arith.constant 0 : index
    %46 = vector.load %arg5[%c4, %c0_45, %c0_46, %c0_47] : memref<9x1x1x128xf32, #tpu.memory_space<vmem>>, vector<1x1x1x128xf32>
    %47 = vector.shape_cast %46 : vector<1x1x1x128xf32> to vector<1x1x128xf32>
    %48 = vector.broadcast %47 : vector<1x1x128xf32> to vector<8x16x128xf32>
    %49 = arith.mulf %45, %48 : vector<8x16x128xf32>
    %50 = vector.extract_strided_slice %20 {offsets = [1, 0, 0], sizes = [8, 16, 128], strides = [1, 1, 1]} : vector<18x16x128xf32> to vector<8x16x128xf32>
    %c5 = arith.constant 5 : index
    %c0_48 = arith.constant 0 : index
    %c0_49 = arith.constant 0 : index
    %c0_50 = arith.constant 0 : index
    %51 = vector.load %arg5[%c5, %c0_48, %c0_49, %c0_50] : memref<9x1x1x128xf32, #tpu.memory_space<vmem>>, vector<1x1x1x128xf32>
    %52 = vector.shape_cast %51 : vector<1x1x1x128xf32> to vector<1x1x128xf32>
    %53 = vector.broadcast %52 : vector<1x1x128xf32> to vector<8x16x128xf32>
    %54 = arith.mulf %50, %53 : vector<8x16x128xf32>
    %55 = arith.addf %49, %54 : vector<8x16x128xf32>
    %56 = arith.addf %44, %55 : vector<8x16x128xf32>
    %57 = vector.extract_strided_slice %18 {offsets = [2, 0, 0], sizes = [8, 16, 128], strides = [1, 1, 1]} : vector<18x16x128xf32> to vector<8x16x128xf32>
    %c6 = arith.constant 6 : index
    %c0_51 = arith.constant 0 : index
    %c0_52 = arith.constant 0 : index
    %c0_53 = arith.constant 0 : index
    %58 = vector.load %arg5[%c6, %c0_51, %c0_52, %c0_53] : memref<9x1x1x128xf32, #tpu.memory_space<vmem>>, vector<1x1x1x128xf32>
    %59 = vector.shape_cast %58 : vector<1x1x1x128xf32> to vector<1x1x128xf32>
    %60 = vector.broadcast %59 : vector<1x1x128xf32> to vector<8x16x128xf32>
    %61 = arith.mulf %57, %60 : vector<8x16x128xf32>
    %62 = vector.extract_strided_slice %19 {offsets = [2, 0, 0], sizes = [8, 16, 128], strides = [1, 1, 1]} : vector<18x16x128xf32> to vector<8x16x128xf32>
    %c7_54 = arith.constant 7 : index
    %c0_55 = arith.constant 0 : index
    %c0_56 = arith.constant 0 : index
    %c0_57 = arith.constant 0 : index
    %63 = vector.load %arg5[%c7_54, %c0_55, %c0_56, %c0_57] : memref<9x1x1x128xf32, #tpu.memory_space<vmem>>, vector<1x1x1x128xf32>
    %64 = vector.shape_cast %63 : vector<1x1x1x128xf32> to vector<1x1x128xf32>
    %65 = vector.broadcast %64 : vector<1x1x128xf32> to vector<8x16x128xf32>
    %66 = arith.mulf %62, %65 : vector<8x16x128xf32>
    %67 = arith.addf %61, %66 : vector<8x16x128xf32>
    %68 = arith.addf %56, %67 : vector<8x16x128xf32>
    %69 = vector.extract_strided_slice %20 {offsets = [2, 0, 0], sizes = [8, 16, 128], strides = [1, 1, 1]} : vector<18x16x128xf32> to vector<8x16x128xf32>
    %c8_58 = arith.constant 8 : index
    %c0_59 = arith.constant 0 : index
    %c0_60 = arith.constant 0 : index
    %c0_61 = arith.constant 0 : index
    %70 = vector.load %arg5[%c8_58, %c0_59, %c0_60, %c0_61] : memref<9x1x1x128xf32, #tpu.memory_space<vmem>>, vector<1x1x1x128xf32>
    %71 = vector.shape_cast %70 : vector<1x1x1x128xf32> to vector<1x1x128xf32>
    %72 = vector.broadcast %71 : vector<1x1x128xf32> to vector<8x16x128xf32>
    %73 = arith.mulf %69, %72 : vector<8x16x128xf32>
    %74 = arith.addf %68, %73 : vector<8x16x128xf32>
    %75 = vector.shape_cast %74 : vector<8x16x128xf32> to vector<128x128xf32>
    %76 = arith.truncf %75 : vector<128x128xf32> to vector<128x128xbf16>
    %cst_62 = arith.constant dense<0.000000e+00> : vector<128x128xf32>
    %77 = tpu.matmul %76, %21, %cst_62 {dimension_numbers = #tpu.dot_dimension_numbers<[1], [0], [0], [1], [0, 0, 1, 1], [], []>} : vector<128x128xbf16>, vector<128x128xbf16>, vector<128x128xf32> -> vector<128x128xf32>
    %78 = arith.truncf %77 : vector<128x128xf32> to vector<128x128xbf16>
    %c0_63 = arith.constant 0 : index
    %c0_64 = arith.constant 0 : index
    %c0_65 = arith.constant 0 : index
    %79 = vector.load %arg7[%c0_63, %c0_64, %c0_65] : memref<1x256x128xbf16, #tpu.memory_space<vmem>>, vector<1x128x128xbf16>
    %80 = vector.shape_cast %79 : vector<1x128x128xbf16> to vector<128x128xbf16>
    %81 = vector.shape_cast %78 : vector<128x128xbf16> to vector<1x128x128xbf16>
    tpu.vector_store %arg7[%c0_63, %c0_64, %c0_65], %81 {strides = array<i32>} : memref<1x256x128xbf16, #tpu.memory_space<vmem>>, vector<1x128x128xbf16>,
    %cst_66 = arith.constant dense<0.000000e+00> : vector<128xf32>
    %82 = vector.multi_reduction <add>, %77, %cst_66 [0] : vector<128x128xf32> to vector<128xf32>
    %83 = vector.shape_cast %82 : vector<128xf32> to vector<1x128xf32>
    %84 = arith.mulf %77, %77 : vector<128x128xf32>
    %cst_67 = arith.constant dense<0.000000e+00> : vector<128xf32>
    %85 = vector.multi_reduction <add>, %84, %cst_67 [0] : vector<128x128xf32> to vector<128xf32>
    %86 = vector.shape_cast %85 : vector<128xf32> to vector<1x128xf32>
    %87 = vector.extract_strided_slice %18 {offsets = [8, 0, 0], sizes = [8, 16, 128], strides = [1, 1, 1]} : vector<18x16x128xf32> to vector<8x16x128xf32>
    %c0_68 = arith.constant 0 : index
    %c0_69 = arith.constant 0 : index
    %c0_70 = arith.constant 0 : index
    %c0_71 = arith.constant 0 : index
    %88 = vector.load %arg5[%c0_68, %c0_69, %c0_70, %c0_71] : memref<9x1x1x128xf32, #tpu.memory_space<vmem>>, vector<1x1x1x128xf32>
    %89 = vector.shape_cast %88 : vector<1x1x1x128xf32> to vector<1x1x128xf32>
    %90 = vector.broadcast %89 : vector<1x1x128xf32> to vector<8x16x128xf32>
    %91 = arith.mulf %87, %90 : vector<8x16x128xf32>
    %92 = vector.extract_strided_slice %19 {offsets = [8, 0, 0], sizes = [8, 16, 128], strides = [1, 1, 1]} : vector<18x16x128xf32> to vector<8x16x128xf32>
    %c1_72 = arith.constant 1 : index
    %c0_73 = arith.constant 0 : index
    %c0_74 = arith.constant 0 : index
    %c0_75 = arith.constant 0 : index
    %93 = vector.load %arg5[%c1_72, %c0_73, %c0_74, %c0_75] : memref<9x1x1x128xf32, #tpu.memory_space<vmem>>, vector<1x1x1x128xf32>
    %94 = vector.shape_cast %93 : vector<1x1x1x128xf32> to vector<1x1x128xf32>
    %95 = vector.broadcast %94 : vector<1x1x128xf32> to vector<8x16x128xf32>
    %96 = arith.mulf %92, %95 : vector<8x16x128xf32>
    %97 = arith.addf %91, %96 : vector<8x16x128xf32>
    %98 = vector.extract_strided_slice %20 {offsets = [8, 0, 0], sizes = [8, 16, 128], strides = [1, 1, 1]} : vector<18x16x128xf32> to vector<8x16x128xf32>
    %c2_76 = arith.constant 2 : index
    %c0_77 = arith.constant 0 : index
    %c0_78 = arith.constant 0 : index
    %c0_79 = arith.constant 0 : index
    %99 = vector.load %arg5[%c2_76, %c0_77, %c0_78, %c0_79] : memref<9x1x1x128xf32, #tpu.memory_space<vmem>>, vector<1x1x1x128xf32>
    %100 = vector.shape_cast %99 : vector<1x1x1x128xf32> to vector<1x1x128xf32>
    %101 = vector.broadcast %100 : vector<1x1x128xf32> to vector<8x16x128xf32>
    %102 = arith.mulf %98, %101 : vector<8x16x128xf32>
    %103 = vector.extract_strided_slice %18 {offsets = [9, 0, 0], sizes = [8, 16, 128], strides = [1, 1, 1]} : vector<18x16x128xf32> to vector<8x16x128xf32>
    %c3_80 = arith.constant 3 : index
    %c0_81 = arith.constant 0 : index
    %c0_82 = arith.constant 0 : index
    %c0_83 = arith.constant 0 : index
    %104 = vector.load %arg5[%c3_80, %c0_81, %c0_82, %c0_83] : memref<9x1x1x128xf32, #tpu.memory_space<vmem>>, vector<1x1x1x128xf32>
    %105 = vector.shape_cast %104 : vector<1x1x1x128xf32> to vector<1x1x128xf32>
    %106 = vector.broadcast %105 : vector<1x1x128xf32> to vector<8x16x128xf32>
    %107 = arith.mulf %103, %106 : vector<8x16x128xf32>
    %108 = arith.addf %102, %107 : vector<8x16x128xf32>
    %109 = arith.addf %97, %108 : vector<8x16x128xf32>
    %110 = vector.extract_strided_slice %19 {offsets = [9, 0, 0], sizes = [8, 16, 128], strides = [1, 1, 1]} : vector<18x16x128xf32> to vector<8x16x128xf32>
    %c4_84 = arith.constant 4 : index
    %c0_85 = arith.constant 0 : index
    %c0_86 = arith.constant 0 : index
    %c0_87 = arith.constant 0 : index
    %111 = vector.load %arg5[%c4_84, %c0_85, %c0_86, %c0_87] : memref<9x1x1x128xf32, #tpu.memory_space<vmem>>, vector<1x1x1x128xf32>
    %112 = vector.shape_cast %111 : vector<1x1x1x128xf32> to vector<1x1x128xf32>
    %113 = vector.broadcast %112 : vector<1x1x128xf32> to vector<8x16x128xf32>
    %114 = arith.mulf %110, %113 : vector<8x16x128xf32>
    %115 = vector.extract_strided_slice %20 {offsets = [9, 0, 0], sizes = [8, 16, 128], strides = [1, 1, 1]} : vector<18x16x128xf32> to vector<8x16x128xf32>
    %c5_88 = arith.constant 5 : index
    %c0_89 = arith.constant 0 : index
    %c0_90 = arith.constant 0 : index
    %c0_91 = arith.constant 0 : index
    %116 = vector.load %arg5[%c5_88, %c0_89, %c0_90, %c0_91] : memref<9x1x1x128xf32, #tpu.memory_space<vmem>>, vector<1x1x1x128xf32>
    %117 = vector.shape_cast %116 : vector<1x1x1x128xf32> to vector<1x1x128xf32>
    %118 = vector.broadcast %117 : vector<1x1x128xf32> to vector<8x16x128xf32>
    %119 = arith.mulf %115, %118 : vector<8x16x128xf32>
    %120 = arith.addf %114, %119 : vector<8x16x128xf32>
    %121 = arith.addf %109, %120 : vector<8x16x128xf32>
    %122 = vector.extract_strided_slice %18 {offsets = [10, 0, 0], sizes = [8, 16, 128], strides = [1, 1, 1]} : vector<18x16x128xf32> to vector<8x16x128xf32>
    %c6_92 = arith.constant 6 : index
    %c0_93 = arith.constant 0 : index
    %c0_94 = arith.constant 0 : index
    %c0_95 = arith.constant 0 : index
    %123 = vector.load %arg5[%c6_92, %c0_93, %c0_94, %c0_95] : memref<9x1x1x128xf32, #tpu.memory_space<vmem>>, vector<1x1x1x128xf32>
    %124 = vector.shape_cast %123 : vector<1x1x1x128xf32> to vector<1x1x128xf32>
    %125 = vector.broadcast %124 : vector<1x1x128xf32> to vector<8x16x128xf32>
    %126 = arith.mulf %122, %125 : vector<8x16x128xf32>
    %127 = vector.extract_strided_slice %19 {offsets = [10, 0, 0], sizes = [8, 16, 128], strides = [1, 1, 1]} : vector<18x16x128xf32> to vector<8x16x128xf32>
    %c7_96 = arith.constant 7 : index
    %c0_97 = arith.constant 0 : index
    %c0_98 = arith.constant 0 : index
    %c0_99 = arith.constant 0 : index
    %128 = vector.load %arg5[%c7_96, %c0_97, %c0_98, %c0_99] : memref<9x1x1x128xf32, #tpu.memory_space<vmem>>, vector<1x1x1x128xf32>
    %129 = vector.shape_cast %128 : vector<1x1x1x128xf32> to vector<1x1x128xf32>
    %130 = vector.broadcast %129 : vector<1x1x128xf32> to vector<8x16x128xf32>
    %131 = arith.mulf %127, %130 : vector<8x16x128xf32>
    %132 = arith.addf %126, %131 : vector<8x16x128xf32>
    %133 = arith.addf %121, %132 : vector<8x16x128xf32>
    %134 = vector.extract_strided_slice %20 {offsets = [10, 0, 0], sizes = [8, 16, 128], strides = [1, 1, 1]} : vector<18x16x128xf32> to vector<8x16x128xf32>
    %c8_100 = arith.constant 8 : index
    %c0_101 = arith.constant 0 : index
    %c0_102 = arith.constant 0 : index
    %c0_103 = arith.constant 0 : index
    %135 = vector.load %arg5[%c8_100, %c0_101, %c0_102, %c0_103] : memref<9x1x1x128xf32, #tpu.memory_space<vmem>>, vector<1x1x1x128xf32>
    %136 = vector.shape_cast %135 : vector<1x1x1x128xf32> to vector<1x1x128xf32>
    %137 = vector.broadcast %136 : vector<1x1x128xf32> to vector<8x16x128xf32>
    %138 = arith.mulf %134, %137 : vector<8x16x128xf32>
    %139 = arith.addf %133, %138 : vector<8x16x128xf32>
    %140 = vector.shape_cast %139 : vector<8x16x128xf32> to vector<128x128xf32>
    %141 = arith.truncf %140 : vector<128x128xf32> to vector<128x128xbf16>
    %cst_104 = arith.constant dense<0.000000e+00> : vector<128x128xf32>
    %142 = tpu.matmul %141, %21, %cst_104 {dimension_numbers = #tpu.dot_dimension_numbers<[1], [0], [0], [1], [0, 0, 1, 1], [], []>} : vector<128x128xbf16>, vector<128x128xbf16>, vector<128x128xf32> -> vector<128x128xf32>
    %143 = arith.truncf %142 : vector<128x128xf32> to vector<128x128xbf16>
    %c0_105 = arith.constant 0 : index
    %c128 = arith.constant 128 : index
    %c0_106 = arith.constant 0 : index
    %144 = vector.load %arg7[%c0_105, %c128, %c0_106] : memref<1x256x128xbf16, #tpu.memory_space<vmem>>, vector<1x128x128xbf16>
    %145 = vector.shape_cast %144 : vector<1x128x128xbf16> to vector<128x128xbf16>
    %146 = vector.shape_cast %143 : vector<128x128xbf16> to vector<1x128x128xbf16>
    tpu.vector_store %arg7[%c0_105, %c128, %c0_106], %146 {strides = array<i32>} : memref<1x256x128xbf16, #tpu.memory_space<vmem>>, vector<1x128x128xbf16>,
    %cst_107 = arith.constant dense<0.000000e+00> : vector<128xf32>
    %147 = vector.multi_reduction <add>, %142, %cst_107 [0] : vector<128x128xf32> to vector<128xf32>
    %148 = vector.shape_cast %147 : vector<128xf32> to vector<1x128xf32>
    %149 = arith.mulf %142, %142 : vector<128x128xf32>
    %cst_108 = arith.constant dense<0.000000e+00> : vector<128xf32>
    %150 = vector.multi_reduction <add>, %149, %cst_108 [0] : vector<128x128xf32> to vector<128xf32>
    %151 = vector.shape_cast %150 : vector<128xf32> to vector<1x128xf32>
    %152 = arith.addf %83, %148 : vector<1x128xf32>
    %153 = arith.addf %86, %151 : vector<1x128xf32>
    %c0_109 = arith.constant 0 : index
    %c0_110 = arith.constant 0 : index
    %c0_111 = arith.constant 0 : index
    %154 = vector.load %arg8[%c0_109, %c0_110, %c0_111] : memref<1x2x128xf32, #tpu.memory_space<vmem>>, vector<1x1x128xf32>
    %155 = vector.shape_cast %154 : vector<1x1x128xf32> to vector<1x128xf32>
    %156 = vector.shape_cast %152 : vector<1x128xf32> to vector<1x1x128xf32>
    tpu.vector_store %arg8[%c0_109, %c0_110, %c0_111], %156 {strides = array<i32>} : memref<1x2x128xf32, #tpu.memory_space<vmem>>, vector<1x1x128xf32>,
    %c0_112 = arith.constant 0 : index
    %c1_113 = arith.constant 1 : index
    %c0_114 = arith.constant 0 : index
    %157 = vector.load %arg8[%c0_112, %c1_113, %c0_114] : memref<1x2x128xf32, #tpu.memory_space<vmem>>, vector<1x1x128xf32>
    %158 = vector.shape_cast %157 : vector<1x1x128xf32> to vector<1x128xf32>
    %159 = vector.shape_cast %153 : vector<1x128xf32> to vector<1x1x128xf32>
    tpu.vector_store %arg8[%c0_112, %c1_113, %c0_114], %159 {strides = array<i32>} : memref<1x2x128xf32, #tpu.memory_space<vmem>>, vector<1x1x128xf32>,
    return
  }
  func.func @transform_0(%arg0: i32, %arg1: i32) -> (i32, i32, i32, i32) {
    %c0_i32 = arith.constant 0 : i32
    %c0_i32_0 = arith.constant 0 : i32
    %c0_i32_1 = arith.constant 0 : i32
    %c0_i32_2 = arith.constant 0 : i32
    return %arg0, %c0_i32, %c0_i32_0, %c0_i32_1 : i32, i32, i32, i32
  }
  func.func @transform_1(%arg0: i32, %arg1: i32) -> (i32, i32, i32) {
    %c0_i32 = arith.constant 0 : i32
    %c0_i32_0 = arith.constant 0 : i32
    %c0_i32_1 = arith.constant 0 : i32
    %c0_i32_2 = arith.constant 0 : i32
    return %c0_i32, %c0_i32_0, %c0_i32_1 : i32, i32, i32
  }
  func.func @transform_2(%arg0: i32, %arg1: i32) -> (i32, i32, i32) {
    %c0_i32 = arith.constant 0 : i32
    %c0_i32_0 = arith.constant 0 : i32
    %c0_i32_1 = arith.constant 0 : i32
    %c0_i32_2 = arith.constant 0 : i32
    return %c0_i32, %c0_i32_0, %c0_i32_1 : i32, i32, i32
  }
  func.func @transform_3(%arg0: i32, %arg1: i32) -> (i32, i32, i32, i32) {
    %c0_i32 = arith.constant 0 : i32
    %c0_i32_0 = arith.constant 0 : i32
    %c0_i32_1 = arith.constant 0 : i32
    %c0_i32_2 = arith.constant 0 : i32
    %c0_i32_3 = arith.constant 0 : i32
    return %c0_i32, %c0_i32_0, %c0_i32_1, %c0_i32_2 : i32, i32, i32, i32
  }
  func.func @transform_4(%arg0: i32, %arg1: i32) -> (i32, i32) {
    %c0_i32 = arith.constant 0 : i32
    %c0_i32_0 = arith.constant 0 : i32
    return %c0_i32, %arg1 : i32, i32
  }
  func.func @transform_5(%arg0: i32, %arg1: i32) -> (i32, i32, i32) {
    %c0_i32 = arith.constant 0 : i32
    %c0_i32_0 = arith.constant 0 : i32
    return %arg0, %c0_i32, %arg1 : i32, i32, i32
  }
  func.func @transform_6(%arg0: i32, %arg1: i32) -> (i32, i32, i32) {
    %c0_i32 = arith.constant 0 : i32
    %c0_i32_0 = arith.constant 0 : i32
    return %arg0, %c0_i32, %arg1 : i32, i32, i32
  }
}

module attributes {stable_mosaic.version = 11 : i64} {
  func.func @_bn_apply_kernel(%arg0: i32, %arg1: memref<128x128xbf16, #tpu.memory_space<vmem>>, %arg2: memref<1x128xf32, #tpu.memory_space<vmem>>, %arg3: memref<1x128xf32, #tpu.memory_space<vmem>>, %arg4: memref<128x128xbf16, #tpu.memory_space<vmem>>, %arg5: memref<128x128xbf16, #tpu.memory_space<vmem>>) attributes {dimension_semantics = [#tpu.dimension_semantics<parallel>], iteration_bounds = array<i64: 1>, scalar_prefetch = 0 : i64, scratch_operands = 0 : i64, tpu.core_type = #tpu.core_type<tc>, window_params = [{transform_indices = @transform_0, window_bounds = array<i64: 128, 128>}, {pipeline_mode = #tpu.pipeline_mode<synchronous>, transform_indices = @transform_1, window_bounds = array<i64: 1, 128>}, {pipeline_mode = #tpu.pipeline_mode<synchronous>, transform_indices = @transform_2, window_bounds = array<i64: 1, 128>}, {transform_indices = @transform_3, window_bounds = array<i64: 128, 128>}, {transform_indices = @transform_4, window_bounds = array<i64: 128, 128>}]} {
    %c0 = arith.constant 0 : index
    %c0_0 = arith.constant 0 : index
    %0 = vector.load %arg1[%c0, %c0_0] : memref<128x128xbf16, #tpu.memory_space<vmem>>, vector<128x128xbf16>
    %1 = arith.extf %0 : vector<128x128xbf16> to vector<128x128xf32>
    %c0_1 = arith.constant 0 : index
    %c0_2 = arith.constant 0 : index
    %2 = vector.load %arg2[%c0_1, %c0_2] : memref<1x128xf32, #tpu.memory_space<vmem>>, vector<1x128xf32>
    %3 = vector.broadcast %2 : vector<1x128xf32> to vector<128x128xf32>
    %4 = arith.mulf %1, %3 : vector<128x128xf32>
    %c0_3 = arith.constant 0 : index
    %c0_4 = arith.constant 0 : index
    %5 = vector.load %arg3[%c0_3, %c0_4] : memref<1x128xf32, #tpu.memory_space<vmem>>, vector<1x128xf32>
    %6 = vector.broadcast %5 : vector<1x128xf32> to vector<128x128xf32>
    %7 = arith.addf %4, %6 : vector<128x128xf32>
    %c0_5 = arith.constant 0 : index
    %c0_6 = arith.constant 0 : index
    %8 = vector.load %arg4[%c0_5, %c0_6] : memref<128x128xbf16, #tpu.memory_space<vmem>>, vector<128x128xbf16>
    %9 = arith.extf %8 : vector<128x128xbf16> to vector<128x128xf32>
    %10 = arith.addf %7, %9 : vector<128x128xf32>
    %11 = arith.truncf %10 : vector<128x128xf32> to vector<128x128xbf16>
    %c0_7 = arith.constant 0 : index
    %c0_8 = arith.constant 0 : index
    %12 = vector.load %arg5[%c0_7, %c0_8] : memref<128x128xbf16, #tpu.memory_space<vmem>>, vector<128x128xbf16>
    tpu.vector_store %arg5[%c0_7, %c0_8], %11 {strides = array<i32>} : memref<128x128xbf16, #tpu.memory_space<vmem>>, vector<128x128xbf16>,
    return
  }
  func.func @transform_0(%arg0: i32) -> (i32, i32) {
    %c0_i32 = arith.constant 0 : i32
    %c0_i32_0 = arith.constant 0 : i32
    return %arg0, %c0_i32 : i32, i32
  }
  func.func @transform_1(%arg0: i32) -> (i32, i32) {
    %c0_i32 = arith.constant 0 : i32
    %c0_i32_0 = arith.constant 0 : i32
    %c0_i32_1 = arith.constant 0 : i32
    return %c0_i32, %c0_i32_0 : i32, i32
  }
  func.func @transform_2(%arg0: i32) -> (i32, i32) {
    %c0_i32 = arith.constant 0 : i32
    %c0_i32_0 = arith.constant 0 : i32
    %c0_i32_1 = arith.constant 0 : i32
    return %c0_i32, %c0_i32_0 : i32, i32
  }
  func.func @transform_3(%arg0: i32) -> (i32, i32) {
    %c0_i32 = arith.constant 0 : i32
    %c0_i32_0 = arith.constant 0 : i32
    return %arg0, %c0_i32 : i32, i32
  }
  func.func @transform_4(%arg0: i32) -> (i32, i32) {
    %c0_i32 = arith.constant 0 : i32
    %c0_i32_0 = arith.constant 0 : i32
    return %arg0, %c0_i32 : i32, i32
  }
}

module attributes {stable_mosaic.version = 11 : i64} {
  func.func @_sepconv_kernel(%arg0: i32, %arg1: i32, %arg2: memref<1x8x8x128xbf16, #tpu.memory_space<vmem>>, %arg3: memref<1x1x128xf32, #tpu.memory_space<vmem>>, %arg4: memref<1x1x128xf32, #tpu.memory_space<vmem>>, %arg5: memref<9x1x1x128xf32, #tpu.memory_space<vmem>>, %arg6: memref<128x128xbf16, #tpu.memory_space<vmem>>, %arg7: memref<1x64x128xbf16, #tpu.memory_space<vmem>>, %arg8: memref<1x2x128xf32, #tpu.memory_space<vmem>>, %arg9: memref<10x24x128xf32, #tpu.memory_space<vmem>>) attributes {dimension_semantics = [#tpu.dimension_semantics<parallel>, #tpu.dimension_semantics<arbitrary>], iteration_bounds = array<i64: 2, 1>, scalar_prefetch = 0 : i64, scratch_operands = 1 : i64, tpu.core_type = #tpu.core_type<tc>, window_params = [{transform_indices = @transform_0, window_bounds = array<i64: 1, 8, 8, 128>}, {pipeline_mode = #tpu.pipeline_mode<synchronous>, transform_indices = @transform_1, window_bounds = array<i64: 1, 1, 128>}, {pipeline_mode = #tpu.pipeline_mode<synchronous>, transform_indices = @transform_2, window_bounds = array<i64: 1, 1, 128>}, {pipeline_mode = #tpu.pipeline_mode<synchronous>, transform_indices = @transform_3, window_bounds = array<i64: 9, 1, 1, 128>}, {transform_indices = @transform_4, window_bounds = array<i64: 128, 128>}, {transform_indices = @transform_5, window_bounds = array<i64: 1, 64, 128>}, {transform_indices = @transform_6, window_bounds = array<i64: 1, 2, 128>}]} {
    %c0 = arith.constant 0 : index
    %c0_0 = arith.constant 0 : index
    %c0_1 = arith.constant 0 : index
    %c0_2 = arith.constant 0 : index
    %0 = vector.load %arg2[%c0, %c0_0, %c0_1, %c0_2] : memref<1x8x8x128xbf16, #tpu.memory_space<vmem>>, vector<1x8x8x128xbf16>
    %1 = vector.shape_cast %0 : vector<1x8x8x128xbf16> to vector<8x8x128xbf16>
    %2 = arith.extf %1 : vector<8x8x128xbf16> to vector<8x8x128xf32>
    %c0_3 = arith.constant 0 : index
    %c0_4 = arith.constant 0 : index
    %c0_5 = arith.constant 0 : index
    %3 = vector.load %arg3[%c0_3, %c0_4, %c0_5] : memref<1x1x128xf32, #tpu.memory_space<vmem>>, vector<1x1x128xf32>
    %4 = vector.broadcast %3 : vector<1x1x128xf32> to vector<8x8x128xf32>
    %5 = arith.mulf %2, %4 : vector<8x8x128xf32>
    %c0_6 = arith.constant 0 : index
    %c0_7 = arith.constant 0 : index
    %c0_8 = arith.constant 0 : index
    %6 = vector.load %arg4[%c0_6, %c0_7, %c0_8] : memref<1x1x128xf32, #tpu.memory_space<vmem>>, vector<1x1x128xf32>
    %7 = vector.broadcast %6 : vector<1x1x128xf32> to vector<8x8x128xf32>
    %8 = arith.addf %5, %7 : vector<8x8x128xf32>
    %cst = arith.constant 0.000000e+00 : f32
    %9 = vector.broadcast %cst : f32 to vector<8x8x128xf32>
    %10 = arith.maximumf %8, %9 : vector<8x8x128xf32>
    %cst_9 = arith.constant 0.000000e+00 : f32
    %11 = vector.broadcast %cst_9 : f32 to vector<1x24x128xf32>
    %c0_10 = arith.constant 0 : index
    %c0_11 = arith.constant 0 : index
    %c0_12 = arith.constant 0 : index
    %12 = vector.load %arg9[%c0_10, %c0_11, %c0_12] : memref<10x24x128xf32, #tpu.memory_space<vmem>>, vector<1x24x128xf32>
    tpu.vector_store %arg9[%c0_10, %c0_11, %c0_12], %11 {strides = array<i32>} : memref<10x24x128xf32, #tpu.memory_space<vmem>>, vector<1x24x128xf32>,
    %c9 = arith.constant 9 : index
    %c0_13 = arith.constant 0 : index
    %c0_14 = arith.constant 0 : index
    %13 = vector.load %arg9[%c9, %c0_13, %c0_14] : memref<10x24x128xf32, #tpu.memory_space<vmem>>, vector<1x24x128xf32>
    tpu.vector_store %arg9[%c9, %c0_13, %c0_14], %11 {strides = array<i32>} : memref<10x24x128xf32, #tpu.memory_space<vmem>>, vector<1x24x128xf32>,
    %cst_15 = arith.constant 0.000000e+00 : f32
    %14 = vector.broadcast %cst_15 : f32 to vector<8x8x128xf32>
    %c1 = arith.constant 1 : index
    %c0_16 = arith.constant 0 : index
    %c0_17 = arith.constant 0 : index
    %15 = vector.load %arg9[%c1, %c0_16, %c0_17] : memref<10x24x128xf32, #tpu.memory_space<vmem>>, vector<8x8x128xf32>
    tpu.vector_store %arg9[%c1, %c0_16, %c0_17], %14 {strides = array<i32>} : memref<10x24x128xf32, #tpu.memory_space<vmem>>, vector<8x8x128xf32>,
    %c1_18 = arith.constant 1 : index
    %c16 = arith.constant 16 : index
    %c0_19 = arith.constant 0 : index
    %16 = vector.load %arg9[%c1_18, %c16, %c0_19] : memref<10x24x128xf32, #tpu.memory_space<vmem>>, vector<8x8x128xf32>
    tpu.vector_store %arg9[%c1_18, %c16, %c0_19], %14 {strides = array<i32>} : memref<10x24x128xf32, #tpu.memory_space<vmem>>, vector<8x8x128xf32>,
    %c1_20 = arith.constant 1 : index
    %c8 = arith.constant 8 : index
    %c0_21 = arith.constant 0 : index
    %17 = vector.load %arg9[%c1_20, %c8, %c0_21] : memref<10x24x128xf32, #tpu.memory_space<vmem>>, vector<8x8x128xf32>
    tpu.vector_store %arg9[%c1_20, %c8, %c0_21], %10 {strides = array<i32>} : memref<10x24x128xf32, #tpu.memory_space<vmem>>, vector<8x8x128xf32>,
    %c0_22 = arith.constant 0 : index
    %c7 = arith.constant 7 : index
    %c0_23 = arith.constant 0 : index
    %18 = vector.load %arg9[%c0_22, %c7, %c0_23] : memref<10x24x128xf32, #tpu.memory_space<vmem>>, vector<10x8x128xf32>
    %c0_24 = arith.constant 0 : index
    %c8_25 = arith.constant 8 : index
    %c0_26 = arith.constant 0 : index
    %19 = vector.load %arg9[%c0_24, %c8_25, %c0_26] : memref<10x24x128xf32, #tpu.memory_space<vmem>>, vector<10x8x128xf32>
    %c0_27 = arith.constant 0 : index
    %c9_28 = arith.constant 9 : index
    %c0_29 = arith.constant 0 : index
    %20 = vector.load %arg9[%c0_27, %c9_28, %c0_29] : memref<10x24x128xf32, #tpu.memory_space<vmem>>, vector<10x8x128xf32>
    %c0_30 = arith.constant 0 : index
    %c0_31 = arith.constant 0 : index
    %21 = vector.load %arg6[%c0_30, %c0_31] : memref<128x128xbf16, #tpu.memory_space<vmem>>, vector<128x128xbf16>
    %22 = vector.extract_strided_slice %18 {offsets = [0, 0, 0], sizes = [8, 8, 128], strides = [1, 1, 1]} : vector<10x8x128xf32> to vector<8x8x128xf32>
    %c0_32 = arith.constant 0 : index
    %c0_33 = arith.constant 0 : index
    %c0_34 = arith.constant 0 : index
    %c0_35 = arith.constant 0 : index
    %23 = vector.load %arg5[%c0_32, %c0_33, %c0_34, %c0_35] : memref<9x1x1x128xf32, #tpu.memory_space<vmem>>, vector<1x1x1x128xf32>
    %24 = vector.shape_cast %23 : vector<1x1x1x128xf32> to vector<1x1x128xf32>
    %25 = vector.broadcast %24 : vector<1x1x128xf32> to vector<8x8x128xf32>
    %26 = arith.mulf %22, %25 : vector<8x8x128xf32>
    %27 = vector.extract_strided_slice %19 {offsets = [0, 0, 0], sizes = [8, 8, 128], strides = [1, 1, 1]} : vector<10x8x128xf32> to vector<8x8x128xf32>
    %c1_36 = arith.constant 1 : index
    %c0_37 = arith.constant 0 : index
    %c0_38 = arith.constant 0 : index
    %c0_39 = arith.constant 0 : index
    %28 = vector.load %arg5[%c1_36, %c0_37, %c0_38, %c0_39] : memref<9x1x1x128xf32, #tpu.memory_space<vmem>>, vector<1x1x1x128xf32>
    %29 = vector.shape_cast %28 : vector<1x1x1x128xf32> to vector<1x1x128xf32>
    %30 = vector.broadcast %29 : vector<1x1x128xf32> to vector<8x8x128xf32>
    %31 = arith.mulf %27, %30 : vector<8x8x128xf32>
    %32 = arith.addf %26, %31 : vector<8x8x128xf32>
    %33 = vector.extract_strided_slice %20 {offsets = [0, 0, 0], sizes = [8, 8, 128], strides = [1, 1, 1]} : vector<10x8x128xf32> to vector<8x8x128xf32>
    %c2 = arith.constant 2 : index
    %c0_40 = arith.constant 0 : index
    %c0_41 = arith.constant 0 : index
    %c0_42 = arith.constant 0 : index
    %34 = vector.load %arg5[%c2, %c0_40, %c0_41, %c0_42] : memref<9x1x1x128xf32, #tpu.memory_space<vmem>>, vector<1x1x1x128xf32>
    %35 = vector.shape_cast %34 : vector<1x1x1x128xf32> to vector<1x1x128xf32>
    %36 = vector.broadcast %35 : vector<1x1x128xf32> to vector<8x8x128xf32>
    %37 = arith.mulf %33, %36 : vector<8x8x128xf32>
    %38 = vector.extract_strided_slice %18 {offsets = [1, 0, 0], sizes = [8, 8, 128], strides = [1, 1, 1]} : vector<10x8x128xf32> to vector<8x8x128xf32>
    %c3 = arith.constant 3 : index
    %c0_43 = arith.constant 0 : index
    %c0_44 = arith.constant 0 : index
    %c0_45 = arith.constant 0 : index
    %39 = vector.load %arg5[%c3, %c0_43, %c0_44, %c0_45] : memref<9x1x1x128xf32, #tpu.memory_space<vmem>>, vector<1x1x1x128xf32>
    %40 = vector.shape_cast %39 : vector<1x1x1x128xf32> to vector<1x1x128xf32>
    %41 = vector.broadcast %40 : vector<1x1x128xf32> to vector<8x8x128xf32>
    %42 = arith.mulf %38, %41 : vector<8x8x128xf32>
    %43 = arith.addf %37, %42 : vector<8x8x128xf32>
    %44 = arith.addf %32, %43 : vector<8x8x128xf32>
    %45 = vector.extract_strided_slice %19 {offsets = [1, 0, 0], sizes = [8, 8, 128], strides = [1, 1, 1]} : vector<10x8x128xf32> to vector<8x8x128xf32>
    %c4 = arith.constant 4 : index
    %c0_46 = arith.constant 0 : index
    %c0_47 = arith.constant 0 : index
    %c0_48 = arith.constant 0 : index
    %46 = vector.load %arg5[%c4, %c0_46, %c0_47, %c0_48] : memref<9x1x1x128xf32, #tpu.memory_space<vmem>>, vector<1x1x1x128xf32>
    %47 = vector.shape_cast %46 : vector<1x1x1x128xf32> to vector<1x1x128xf32>
    %48 = vector.broadcast %47 : vector<1x1x128xf32> to vector<8x8x128xf32>
    %49 = arith.mulf %45, %48 : vector<8x8x128xf32>
    %50 = vector.extract_strided_slice %20 {offsets = [1, 0, 0], sizes = [8, 8, 128], strides = [1, 1, 1]} : vector<10x8x128xf32> to vector<8x8x128xf32>
    %c5 = arith.constant 5 : index
    %c0_49 = arith.constant 0 : index
    %c0_50 = arith.constant 0 : index
    %c0_51 = arith.constant 0 : index
    %51 = vector.load %arg5[%c5, %c0_49, %c0_50, %c0_51] : memref<9x1x1x128xf32, #tpu.memory_space<vmem>>, vector<1x1x1x128xf32>
    %52 = vector.shape_cast %51 : vector<1x1x1x128xf32> to vector<1x1x128xf32>
    %53 = vector.broadcast %52 : vector<1x1x128xf32> to vector<8x8x128xf32>
    %54 = arith.mulf %50, %53 : vector<8x8x128xf32>
    %55 = arith.addf %49, %54 : vector<8x8x128xf32>
    %56 = arith.addf %44, %55 : vector<8x8x128xf32>
    %57 = vector.extract_strided_slice %18 {offsets = [2, 0, 0], sizes = [8, 8, 128], strides = [1, 1, 1]} : vector<10x8x128xf32> to vector<8x8x128xf32>
    %c6 = arith.constant 6 : index
    %c0_52 = arith.constant 0 : index
    %c0_53 = arith.constant 0 : index
    %c0_54 = arith.constant 0 : index
    %58 = vector.load %arg5[%c6, %c0_52, %c0_53, %c0_54] : memref<9x1x1x128xf32, #tpu.memory_space<vmem>>, vector<1x1x1x128xf32>
    %59 = vector.shape_cast %58 : vector<1x1x1x128xf32> to vector<1x1x128xf32>
    %60 = vector.broadcast %59 : vector<1x1x128xf32> to vector<8x8x128xf32>
    %61 = arith.mulf %57, %60 : vector<8x8x128xf32>
    %62 = vector.extract_strided_slice %19 {offsets = [2, 0, 0], sizes = [8, 8, 128], strides = [1, 1, 1]} : vector<10x8x128xf32> to vector<8x8x128xf32>
    %c7_55 = arith.constant 7 : index
    %c0_56 = arith.constant 0 : index
    %c0_57 = arith.constant 0 : index
    %c0_58 = arith.constant 0 : index
    %63 = vector.load %arg5[%c7_55, %c0_56, %c0_57, %c0_58] : memref<9x1x1x128xf32, #tpu.memory_space<vmem>>, vector<1x1x1x128xf32>
    %64 = vector.shape_cast %63 : vector<1x1x1x128xf32> to vector<1x1x128xf32>
    %65 = vector.broadcast %64 : vector<1x1x128xf32> to vector<8x8x128xf32>
    %66 = arith.mulf %62, %65 : vector<8x8x128xf32>
    %67 = arith.addf %61, %66 : vector<8x8x128xf32>
    %68 = arith.addf %56, %67 : vector<8x8x128xf32>
    %69 = vector.extract_strided_slice %20 {offsets = [2, 0, 0], sizes = [8, 8, 128], strides = [1, 1, 1]} : vector<10x8x128xf32> to vector<8x8x128xf32>
    %c8_59 = arith.constant 8 : index
    %c0_60 = arith.constant 0 : index
    %c0_61 = arith.constant 0 : index
    %c0_62 = arith.constant 0 : index
    %70 = vector.load %arg5[%c8_59, %c0_60, %c0_61, %c0_62] : memref<9x1x1x128xf32, #tpu.memory_space<vmem>>, vector<1x1x1x128xf32>
    %71 = vector.shape_cast %70 : vector<1x1x1x128xf32> to vector<1x1x128xf32>
    %72 = vector.broadcast %71 : vector<1x1x128xf32> to vector<8x8x128xf32>
    %73 = arith.mulf %69, %72 : vector<8x8x128xf32>
    %74 = arith.addf %68, %73 : vector<8x8x128xf32>
    %75 = vector.shape_cast %74 : vector<8x8x128xf32> to vector<64x128xf32>
    %76 = arith.truncf %75 : vector<64x128xf32> to vector<64x128xbf16>
    %cst_63 = arith.constant dense<0.000000e+00> : vector<64x128xf32>
    %77 = tpu.matmul %76, %21, %cst_63 {dimension_numbers = #tpu.dot_dimension_numbers<[1], [0], [0], [1], [0, 0, 1, 1], [], []>} : vector<64x128xbf16>, vector<128x128xbf16>, vector<64x128xf32> -> vector<64x128xf32>
    %78 = arith.truncf %77 : vector<64x128xf32> to vector<64x128xbf16>
    %c0_64 = arith.constant 0 : index
    %c0_65 = arith.constant 0 : index
    %c0_66 = arith.constant 0 : index
    %79 = vector.load %arg7[%c0_64, %c0_65, %c0_66] : memref<1x64x128xbf16, #tpu.memory_space<vmem>>, vector<1x64x128xbf16>
    %80 = vector.shape_cast %79 : vector<1x64x128xbf16> to vector<64x128xbf16>
    %81 = vector.shape_cast %78 : vector<64x128xbf16> to vector<1x64x128xbf16>
    tpu.vector_store %arg7[%c0_64, %c0_65, %c0_66], %81 {strides = array<i32>} : memref<1x64x128xbf16, #tpu.memory_space<vmem>>, vector<1x64x128xbf16>,
    %cst_67 = arith.constant dense<0.000000e+00> : vector<128xf32>
    %82 = vector.multi_reduction <add>, %77, %cst_67 [0] : vector<64x128xf32> to vector<128xf32>
    %83 = vector.shape_cast %82 : vector<128xf32> to vector<1x128xf32>
    %84 = arith.mulf %77, %77 : vector<64x128xf32>
    %cst_68 = arith.constant dense<0.000000e+00> : vector<128xf32>
    %85 = vector.multi_reduction <add>, %84, %cst_68 [0] : vector<64x128xf32> to vector<128xf32>
    %86 = vector.shape_cast %85 : vector<128xf32> to vector<1x128xf32>
    %c0_69 = arith.constant 0 : index
    %c0_70 = arith.constant 0 : index
    %c0_71 = arith.constant 0 : index
    %87 = vector.load %arg8[%c0_69, %c0_70, %c0_71] : memref<1x2x128xf32, #tpu.memory_space<vmem>>, vector<1x1x128xf32>
    %88 = vector.shape_cast %87 : vector<1x1x128xf32> to vector<1x128xf32>
    %89 = vector.shape_cast %83 : vector<1x128xf32> to vector<1x1x128xf32>
    tpu.vector_store %arg8[%c0_69, %c0_70, %c0_71], %89 {strides = array<i32>} : memref<1x2x128xf32, #tpu.memory_space<vmem>>, vector<1x1x128xf32>,
    %c0_72 = arith.constant 0 : index
    %c1_73 = arith.constant 1 : index
    %c0_74 = arith.constant 0 : index
    %90 = vector.load %arg8[%c0_72, %c1_73, %c0_74] : memref<1x2x128xf32, #tpu.memory_space<vmem>>, vector<1x1x128xf32>
    %91 = vector.shape_cast %90 : vector<1x1x128xf32> to vector<1x128xf32>
    %92 = vector.shape_cast %86 : vector<1x128xf32> to vector<1x1x128xf32>
    tpu.vector_store %arg8[%c0_72, %c1_73, %c0_74], %92 {strides = array<i32>} : memref<1x2x128xf32, #tpu.memory_space<vmem>>, vector<1x1x128xf32>,
    return
  }
  func.func @transform_0(%arg0: i32, %arg1: i32) -> (i32, i32, i32, i32) {
    %c0_i32 = arith.constant 0 : i32
    %c0_i32_0 = arith.constant 0 : i32
    %c0_i32_1 = arith.constant 0 : i32
    %c0_i32_2 = arith.constant 0 : i32
    return %arg0, %c0_i32, %c0_i32_0, %c0_i32_1 : i32, i32, i32, i32
  }
  func.func @transform_1(%arg0: i32, %arg1: i32) -> (i32, i32, i32) {
    %c0_i32 = arith.constant 0 : i32
    %c0_i32_0 = arith.constant 0 : i32
    %c0_i32_1 = arith.constant 0 : i32
    %c0_i32_2 = arith.constant 0 : i32
    return %c0_i32, %c0_i32_0, %c0_i32_1 : i32, i32, i32
  }
  func.func @transform_2(%arg0: i32, %arg1: i32) -> (i32, i32, i32) {
    %c0_i32 = arith.constant 0 : i32
    %c0_i32_0 = arith.constant 0 : i32
    %c0_i32_1 = arith.constant 0 : i32
    %c0_i32_2 = arith.constant 0 : i32
    return %c0_i32, %c0_i32_0, %c0_i32_1 : i32, i32, i32
  }
  func.func @transform_3(%arg0: i32, %arg1: i32) -> (i32, i32, i32, i32) {
    %c0_i32 = arith.constant 0 : i32
    %c0_i32_0 = arith.constant 0 : i32
    %c0_i32_1 = arith.constant 0 : i32
    %c0_i32_2 = arith.constant 0 : i32
    %c0_i32_3 = arith.constant 0 : i32
    return %c0_i32, %c0_i32_0, %c0_i32_1, %c0_i32_2 : i32, i32, i32, i32
  }
  func.func @transform_4(%arg0: i32, %arg1: i32) -> (i32, i32) {
    %c0_i32 = arith.constant 0 : i32
    %c0_i32_0 = arith.constant 0 : i32
    return %c0_i32, %arg1 : i32, i32
  }
  func.func @transform_5(%arg0: i32, %arg1: i32) -> (i32, i32, i32) {
    %c0_i32 = arith.constant 0 : i32
    %c0_i32_0 = arith.constant 0 : i32
    return %arg0, %c0_i32, %arg1 : i32, i32, i32
  }
  func.func @transform_6(%arg0: i32, %arg1: i32) -> (i32, i32, i32) {
    %c0_i32 = arith.constant 0 : i32
    %c0_i32_0 = arith.constant 0 : i32
    return %arg0, %c0_i32, %arg1 : i32, i32, i32
  }
}

module attributes {stable_mosaic.version = 11 : i64} {
  func.func @_sepconv_kernel(%arg0: i32, %arg1: i32, %arg2: memref<1x8x8x128xbf16, #tpu.memory_space<vmem>>, %arg3: memref<1x1x128xf32, #tpu.memory_space<vmem>>, %arg4: memref<1x1x128xf32, #tpu.memory_space<vmem>>, %arg5: memref<9x1x1x128xf32, #tpu.memory_space<vmem>>, %arg6: memref<128x256xbf16, #tpu.memory_space<vmem>>, %arg7: memref<1x64x256xbf16, #tpu.memory_space<vmem>>, %arg8: memref<1x2x256xf32, #tpu.memory_space<vmem>>, %arg9: memref<10x24x128xf32, #tpu.memory_space<vmem>>) attributes {dimension_semantics = [#tpu.dimension_semantics<parallel>, #tpu.dimension_semantics<arbitrary>], iteration_bounds = array<i64: 2, 1>, scalar_prefetch = 0 : i64, scratch_operands = 1 : i64, tpu.core_type = #tpu.core_type<tc>, window_params = [{transform_indices = @transform_0, window_bounds = array<i64: 1, 8, 8, 128>}, {pipeline_mode = #tpu.pipeline_mode<synchronous>, transform_indices = @transform_1, window_bounds = array<i64: 1, 1, 128>}, {pipeline_mode = #tpu.pipeline_mode<synchronous>, transform_indices = @transform_2, window_bounds = array<i64: 1, 1, 128>}, {pipeline_mode = #tpu.pipeline_mode<synchronous>, transform_indices = @transform_3, window_bounds = array<i64: 9, 1, 1, 128>}, {transform_indices = @transform_4, window_bounds = array<i64: 128, 256>}, {transform_indices = @transform_5, window_bounds = array<i64: 1, 64, 256>}, {transform_indices = @transform_6, window_bounds = array<i64: 1, 2, 256>}]} {
    %c0 = arith.constant 0 : index
    %c0_0 = arith.constant 0 : index
    %c0_1 = arith.constant 0 : index
    %c0_2 = arith.constant 0 : index
    %0 = vector.load %arg2[%c0, %c0_0, %c0_1, %c0_2] : memref<1x8x8x128xbf16, #tpu.memory_space<vmem>>, vector<1x8x8x128xbf16>
    %1 = vector.shape_cast %0 : vector<1x8x8x128xbf16> to vector<8x8x128xbf16>
    %2 = arith.extf %1 : vector<8x8x128xbf16> to vector<8x8x128xf32>
    %c0_3 = arith.constant 0 : index
    %c0_4 = arith.constant 0 : index
    %c0_5 = arith.constant 0 : index
    %3 = vector.load %arg3[%c0_3, %c0_4, %c0_5] : memref<1x1x128xf32, #tpu.memory_space<vmem>>, vector<1x1x128xf32>
    %4 = vector.broadcast %3 : vector<1x1x128xf32> to vector<8x8x128xf32>
    %5 = arith.mulf %2, %4 : vector<8x8x128xf32>
    %c0_6 = arith.constant 0 : index
    %c0_7 = arith.constant 0 : index
    %c0_8 = arith.constant 0 : index
    %6 = vector.load %arg4[%c0_6, %c0_7, %c0_8] : memref<1x1x128xf32, #tpu.memory_space<vmem>>, vector<1x1x128xf32>
    %7 = vector.broadcast %6 : vector<1x1x128xf32> to vector<8x8x128xf32>
    %8 = arith.addf %5, %7 : vector<8x8x128xf32>
    %cst = arith.constant 0.000000e+00 : f32
    %9 = vector.broadcast %cst : f32 to vector<8x8x128xf32>
    %10 = arith.maximumf %8, %9 : vector<8x8x128xf32>
    %cst_9 = arith.constant 0.000000e+00 : f32
    %11 = vector.broadcast %cst_9 : f32 to vector<1x24x128xf32>
    %c0_10 = arith.constant 0 : index
    %c0_11 = arith.constant 0 : index
    %c0_12 = arith.constant 0 : index
    %12 = vector.load %arg9[%c0_10, %c0_11, %c0_12] : memref<10x24x128xf32, #tpu.memory_space<vmem>>, vector<1x24x128xf32>
    tpu.vector_store %arg9[%c0_10, %c0_11, %c0_12], %11 {strides = array<i32>} : memref<10x24x128xf32, #tpu.memory_space<vmem>>, vector<1x24x128xf32>,
    %c9 = arith.constant 9 : index
    %c0_13 = arith.constant 0 : index
    %c0_14 = arith.constant 0 : index
    %13 = vector.load %arg9[%c9, %c0_13, %c0_14] : memref<10x24x128xf32, #tpu.memory_space<vmem>>, vector<1x24x128xf32>
    tpu.vector_store %arg9[%c9, %c0_13, %c0_14], %11 {strides = array<i32>} : memref<10x24x128xf32, #tpu.memory_space<vmem>>, vector<1x24x128xf32>,
    %cst_15 = arith.constant 0.000000e+00 : f32
    %14 = vector.broadcast %cst_15 : f32 to vector<8x8x128xf32>
    %c1 = arith.constant 1 : index
    %c0_16 = arith.constant 0 : index
    %c0_17 = arith.constant 0 : index
    %15 = vector.load %arg9[%c1, %c0_16, %c0_17] : memref<10x24x128xf32, #tpu.memory_space<vmem>>, vector<8x8x128xf32>
    tpu.vector_store %arg9[%c1, %c0_16, %c0_17], %14 {strides = array<i32>} : memref<10x24x128xf32, #tpu.memory_space<vmem>>, vector<8x8x128xf32>,
    %c1_18 = arith.constant 1 : index
    %c16 = arith.constant 16 : index
    %c0_19 = arith.constant 0 : index
    %16 = vector.load %arg9[%c1_18, %c16, %c0_19] : memref<10x24x128xf32, #tpu.memory_space<vmem>>, vector<8x8x128xf32>
    tpu.vector_store %arg9[%c1_18, %c16, %c0_19], %14 {strides = array<i32>} : memref<10x24x128xf32, #tpu.memory_space<vmem>>, vector<8x8x128xf32>,
    %c1_20 = arith.constant 1 : index
    %c8 = arith.constant 8 : index
    %c0_21 = arith.constant 0 : index
    %17 = vector.load %arg9[%c1_20, %c8, %c0_21] : memref<10x24x128xf32, #tpu.memory_space<vmem>>, vector<8x8x128xf32>
    tpu.vector_store %arg9[%c1_20, %c8, %c0_21], %10 {strides = array<i32>} : memref<10x24x128xf32, #tpu.memory_space<vmem>>, vector<8x8x128xf32>,
    %c0_22 = arith.constant 0 : index
    %c7 = arith.constant 7 : index
    %c0_23 = arith.constant 0 : index
    %18 = vector.load %arg9[%c0_22, %c7, %c0_23] : memref<10x24x128xf32, #tpu.memory_space<vmem>>, vector<10x8x128xf32>
    %c0_24 = arith.constant 0 : index
    %c8_25 = arith.constant 8 : index
    %c0_26 = arith.constant 0 : index
    %19 = vector.load %arg9[%c0_24, %c8_25, %c0_26] : memref<10x24x128xf32, #tpu.memory_space<vmem>>, vector<10x8x128xf32>
    %c0_27 = arith.constant 0 : index
    %c9_28 = arith.constant 9 : index
    %c0_29 = arith.constant 0 : index
    %20 = vector.load %arg9[%c0_27, %c9_28, %c0_29] : memref<10x24x128xf32, #tpu.memory_space<vmem>>, vector<10x8x128xf32>
    %c0_30 = arith.constant 0 : index
    %c0_31 = arith.constant 0 : index
    %21 = vector.load %arg6[%c0_30, %c0_31] : memref<128x256xbf16, #tpu.memory_space<vmem>>, vector<128x256xbf16>
    %22 = vector.extract_strided_slice %18 {offsets = [0, 0, 0], sizes = [8, 8, 128], strides = [1, 1, 1]} : vector<10x8x128xf32> to vector<8x8x128xf32>
    %c0_32 = arith.constant 0 : index
    %c0_33 = arith.constant 0 : index
    %c0_34 = arith.constant 0 : index
    %c0_35 = arith.constant 0 : index
    %23 = vector.load %arg5[%c0_32, %c0_33, %c0_34, %c0_35] : memref<9x1x1x128xf32, #tpu.memory_space<vmem>>, vector<1x1x1x128xf32>
    %24 = vector.shape_cast %23 : vector<1x1x1x128xf32> to vector<1x1x128xf32>
    %25 = vector.broadcast %24 : vector<1x1x128xf32> to vector<8x8x128xf32>
    %26 = arith.mulf %22, %25 : vector<8x8x128xf32>
    %27 = vector.extract_strided_slice %19 {offsets = [0, 0, 0], sizes = [8, 8, 128], strides = [1, 1, 1]} : vector<10x8x128xf32> to vector<8x8x128xf32>
    %c1_36 = arith.constant 1 : index
    %c0_37 = arith.constant 0 : index
    %c0_38 = arith.constant 0 : index
    %c0_39 = arith.constant 0 : index
    %28 = vector.load %arg5[%c1_36, %c0_37, %c0_38, %c0_39] : memref<9x1x1x128xf32, #tpu.memory_space<vmem>>, vector<1x1x1x128xf32>
    %29 = vector.shape_cast %28 : vector<1x1x1x128xf32> to vector<1x1x128xf32>
    %30 = vector.broadcast %29 : vector<1x1x128xf32> to vector<8x8x128xf32>
    %31 = arith.mulf %27, %30 : vector<8x8x128xf32>
    %32 = arith.addf %26, %31 : vector<8x8x128xf32>
    %33 = vector.extract_strided_slice %20 {offsets = [0, 0, 0], sizes = [8, 8, 128], strides = [1, 1, 1]} : vector<10x8x128xf32> to vector<8x8x128xf32>
    %c2 = arith.constant 2 : index
    %c0_40 = arith.constant 0 : index
    %c0_41 = arith.constant 0 : index
    %c0_42 = arith.constant 0 : index
    %34 = vector.load %arg5[%c2, %c0_40, %c0_41, %c0_42] : memref<9x1x1x128xf32, #tpu.memory_space<vmem>>, vector<1x1x1x128xf32>
    %35 = vector.shape_cast %34 : vector<1x1x1x128xf32> to vector<1x1x128xf32>
    %36 = vector.broadcast %35 : vector<1x1x128xf32> to vector<8x8x128xf32>
    %37 = arith.mulf %33, %36 : vector<8x8x128xf32>
    %38 = vector.extract_strided_slice %18 {offsets = [1, 0, 0], sizes = [8, 8, 128], strides = [1, 1, 1]} : vector<10x8x128xf32> to vector<8x8x128xf32>
    %c3 = arith.constant 3 : index
    %c0_43 = arith.constant 0 : index
    %c0_44 = arith.constant 0 : index
    %c0_45 = arith.constant 0 : index
    %39 = vector.load %arg5[%c3, %c0_43, %c0_44, %c0_45] : memref<9x1x1x128xf32, #tpu.memory_space<vmem>>, vector<1x1x1x128xf32>
    %40 = vector.shape_cast %39 : vector<1x1x1x128xf32> to vector<1x1x128xf32>
    %41 = vector.broadcast %40 : vector<1x1x128xf32> to vector<8x8x128xf32>
    %42 = arith.mulf %38, %41 : vector<8x8x128xf32>
    %43 = arith.addf %37, %42 : vector<8x8x128xf32>
    %44 = arith.addf %32, %43 : vector<8x8x128xf32>
    %45 = vector.extract_strided_slice %19 {offsets = [1, 0, 0], sizes = [8, 8, 128], strides = [1, 1, 1]} : vector<10x8x128xf32> to vector<8x8x128xf32>
    %c4 = arith.constant 4 : index
    %c0_46 = arith.constant 0 : index
    %c0_47 = arith.constant 0 : index
    %c0_48 = arith.constant 0 : index
    %46 = vector.load %arg5[%c4, %c0_46, %c0_47, %c0_48] : memref<9x1x1x128xf32, #tpu.memory_space<vmem>>, vector<1x1x1x128xf32>
    %47 = vector.shape_cast %46 : vector<1x1x1x128xf32> to vector<1x1x128xf32>
    %48 = vector.broadcast %47 : vector<1x1x128xf32> to vector<8x8x128xf32>
    %49 = arith.mulf %45, %48 : vector<8x8x128xf32>
    %50 = vector.extract_strided_slice %20 {offsets = [1, 0, 0], sizes = [8, 8, 128], strides = [1, 1, 1]} : vector<10x8x128xf32> to vector<8x8x128xf32>
    %c5 = arith.constant 5 : index
    %c0_49 = arith.constant 0 : index
    %c0_50 = arith.constant 0 : index
    %c0_51 = arith.constant 0 : index
    %51 = vector.load %arg5[%c5, %c0_49, %c0_50, %c0_51] : memref<9x1x1x128xf32, #tpu.memory_space<vmem>>, vector<1x1x1x128xf32>
    %52 = vector.shape_cast %51 : vector<1x1x1x128xf32> to vector<1x1x128xf32>
    %53 = vector.broadcast %52 : vector<1x1x128xf32> to vector<8x8x128xf32>
    %54 = arith.mulf %50, %53 : vector<8x8x128xf32>
    %55 = arith.addf %49, %54 : vector<8x8x128xf32>
    %56 = arith.addf %44, %55 : vector<8x8x128xf32>
    %57 = vector.extract_strided_slice %18 {offsets = [2, 0, 0], sizes = [8, 8, 128], strides = [1, 1, 1]} : vector<10x8x128xf32> to vector<8x8x128xf32>
    %c6 = arith.constant 6 : index
    %c0_52 = arith.constant 0 : index
    %c0_53 = arith.constant 0 : index
    %c0_54 = arith.constant 0 : index
    %58 = vector.load %arg5[%c6, %c0_52, %c0_53, %c0_54] : memref<9x1x1x128xf32, #tpu.memory_space<vmem>>, vector<1x1x1x128xf32>
    %59 = vector.shape_cast %58 : vector<1x1x1x128xf32> to vector<1x1x128xf32>
    %60 = vector.broadcast %59 : vector<1x1x128xf32> to vector<8x8x128xf32>
    %61 = arith.mulf %57, %60 : vector<8x8x128xf32>
    %62 = vector.extract_strided_slice %19 {offsets = [2, 0, 0], sizes = [8, 8, 128], strides = [1, 1, 1]} : vector<10x8x128xf32> to vector<8x8x128xf32>
    %c7_55 = arith.constant 7 : index
    %c0_56 = arith.constant 0 : index
    %c0_57 = arith.constant 0 : index
    %c0_58 = arith.constant 0 : index
    %63 = vector.load %arg5[%c7_55, %c0_56, %c0_57, %c0_58] : memref<9x1x1x128xf32, #tpu.memory_space<vmem>>, vector<1x1x1x128xf32>
    %64 = vector.shape_cast %63 : vector<1x1x1x128xf32> to vector<1x1x128xf32>
    %65 = vector.broadcast %64 : vector<1x1x128xf32> to vector<8x8x128xf32>
    %66 = arith.mulf %62, %65 : vector<8x8x128xf32>
    %67 = arith.addf %61, %66 : vector<8x8x128xf32>
    %68 = arith.addf %56, %67 : vector<8x8x128xf32>
    %69 = vector.extract_strided_slice %20 {offsets = [2, 0, 0], sizes = [8, 8, 128], strides = [1, 1, 1]} : vector<10x8x128xf32> to vector<8x8x128xf32>
    %c8_59 = arith.constant 8 : index
    %c0_60 = arith.constant 0 : index
    %c0_61 = arith.constant 0 : index
    %c0_62 = arith.constant 0 : index
    %70 = vector.load %arg5[%c8_59, %c0_60, %c0_61, %c0_62] : memref<9x1x1x128xf32, #tpu.memory_space<vmem>>, vector<1x1x1x128xf32>
    %71 = vector.shape_cast %70 : vector<1x1x1x128xf32> to vector<1x1x128xf32>
    %72 = vector.broadcast %71 : vector<1x1x128xf32> to vector<8x8x128xf32>
    %73 = arith.mulf %69, %72 : vector<8x8x128xf32>
    %74 = arith.addf %68, %73 : vector<8x8x128xf32>
    %75 = vector.shape_cast %74 : vector<8x8x128xf32> to vector<64x128xf32>
    %76 = arith.truncf %75 : vector<64x128xf32> to vector<64x128xbf16>
    %cst_63 = arith.constant dense<0.000000e+00> : vector<64x256xf32>
    %77 = tpu.matmul %76, %21, %cst_63 {dimension_numbers = #tpu.dot_dimension_numbers<[1], [0], [0], [1], [0, 0, 1, 1], [], []>} : vector<64x128xbf16>, vector<128x256xbf16>, vector<64x256xf32> -> vector<64x256xf32>
    %78 = arith.truncf %77 : vector<64x256xf32> to vector<64x256xbf16>
    %c0_64 = arith.constant 0 : index
    %c0_65 = arith.constant 0 : index
    %c0_66 = arith.constant 0 : index
    %79 = vector.load %arg7[%c0_64, %c0_65, %c0_66] : memref<1x64x256xbf16, #tpu.memory_space<vmem>>, vector<1x64x256xbf16>
    %80 = vector.shape_cast %79 : vector<1x64x256xbf16> to vector<64x256xbf16>
    %81 = vector.shape_cast %78 : vector<64x256xbf16> to vector<1x64x256xbf16>
    tpu.vector_store %arg7[%c0_64, %c0_65, %c0_66], %81 {strides = array<i32>} : memref<1x64x256xbf16, #tpu.memory_space<vmem>>, vector<1x64x256xbf16>,
    %cst_67 = arith.constant dense<0.000000e+00> : vector<256xf32>
    %82 = vector.multi_reduction <add>, %77, %cst_67 [0] : vector<64x256xf32> to vector<256xf32>
    %83 = vector.shape_cast %82 : vector<256xf32> to vector<1x256xf32>
    %84 = arith.mulf %77, %77 : vector<64x256xf32>
    %cst_68 = arith.constant dense<0.000000e+00> : vector<256xf32>
    %85 = vector.multi_reduction <add>, %84, %cst_68 [0] : vector<64x256xf32> to vector<256xf32>
    %86 = vector.shape_cast %85 : vector<256xf32> to vector<1x256xf32>
    %c0_69 = arith.constant 0 : index
    %c0_70 = arith.constant 0 : index
    %c0_71 = arith.constant 0 : index
    %87 = vector.load %arg8[%c0_69, %c0_70, %c0_71] : memref<1x2x256xf32, #tpu.memory_space<vmem>>, vector<1x1x256xf32>
    %88 = vector.shape_cast %87 : vector<1x1x256xf32> to vector<1x256xf32>
    %89 = vector.shape_cast %83 : vector<1x256xf32> to vector<1x1x256xf32>
    tpu.vector_store %arg8[%c0_69, %c0_70, %c0_71], %89 {strides = array<i32>} : memref<1x2x256xf32, #tpu.memory_space<vmem>>, vector<1x1x256xf32>,
    %c0_72 = arith.constant 0 : index
    %c1_73 = arith.constant 1 : index
    %c0_74 = arith.constant 0 : index
    %90 = vector.load %arg8[%c0_72, %c1_73, %c0_74] : memref<1x2x256xf32, #tpu.memory_space<vmem>>, vector<1x1x256xf32>
    %91 = vector.shape_cast %90 : vector<1x1x256xf32> to vector<1x256xf32>
    %92 = vector.shape_cast %86 : vector<1x256xf32> to vector<1x1x256xf32>
    tpu.vector_store %arg8[%c0_72, %c1_73, %c0_74], %92 {strides = array<i32>} : memref<1x2x256xf32, #tpu.memory_space<vmem>>, vector<1x1x256xf32>,
    return
  }
  func.func @transform_0(%arg0: i32, %arg1: i32) -> (i32, i32, i32, i32) {
    %c0_i32 = arith.constant 0 : i32
    %c0_i32_0 = arith.constant 0 : i32
    %c0_i32_1 = arith.constant 0 : i32
    %c0_i32_2 = arith.constant 0 : i32
    return %arg0, %c0_i32, %c0_i32_0, %c0_i32_1 : i32, i32, i32, i32
  }
  func.func @transform_1(%arg0: i32, %arg1: i32) -> (i32, i32, i32) {
    %c0_i32 = arith.constant 0 : i32
    %c0_i32_0 = arith.constant 0 : i32
    %c0_i32_1 = arith.constant 0 : i32
    %c0_i32_2 = arith.constant 0 : i32
    return %c0_i32, %c0_i32_0, %c0_i32_1 : i32, i32, i32
  }
  func.func @transform_2(%arg0: i32, %arg1: i32) -> (i32, i32, i32) {
    %c0_i32 = arith.constant 0 : i32
    %c0_i32_0 = arith.constant 0 : i32
    %c0_i32_1 = arith.constant 0 : i32
    %c0_i32_2 = arith.constant 0 : i32
    return %c0_i32, %c0_i32_0, %c0_i32_1 : i32, i32, i32
  }
  func.func @transform_3(%arg0: i32, %arg1: i32) -> (i32, i32, i32, i32) {
    %c0_i32 = arith.constant 0 : i32
    %c0_i32_0 = arith.constant 0 : i32
    %c0_i32_1 = arith.constant 0 : i32
    %c0_i32_2 = arith.constant 0 : i32
    %c0_i32_3 = arith.constant 0 : i32
    return %c0_i32, %c0_i32_0, %c0_i32_1, %c0_i32_2 : i32, i32, i32, i32
  }
  func.func @transform_4(%arg0: i32, %arg1: i32) -> (i32, i32) {
    %c0_i32 = arith.constant 0 : i32
    %c0_i32_0 = arith.constant 0 : i32
    return %c0_i32, %arg1 : i32, i32
  }
  func.func @transform_5(%arg0: i32, %arg1: i32) -> (i32, i32, i32) {
    %c0_i32 = arith.constant 0 : i32
    %c0_i32_0 = arith.constant 0 : i32
    return %arg0, %c0_i32, %arg1 : i32, i32, i32
  }
  func.func @transform_6(%arg0: i32, %arg1: i32) -> (i32, i32, i32) {
    %c0_i32 = arith.constant 0 : i32
    %c0_i32_0 = arith.constant 0 : i32
    return %arg0, %c0_i32, %arg1 : i32, i32, i32
  }
}

module attributes {stable_mosaic.version = 11 : i64} {
  func.func @_bn_apply_kernel(%arg0: i32, %arg1: memref<128x256xbf16, #tpu.memory_space<vmem>>, %arg2: memref<1x256xf32, #tpu.memory_space<vmem>>, %arg3: memref<1x256xf32, #tpu.memory_space<vmem>>, %arg4: memref<128x256xbf16, #tpu.memory_space<vmem>>, %arg5: memref<1x256xf32, #tpu.memory_space<vmem>>, %arg6: memref<1x256xf32, #tpu.memory_space<vmem>>, %arg7: memref<128x256xbf16, #tpu.memory_space<vmem>>) attributes {dimension_semantics = [#tpu.dimension_semantics<parallel>], iteration_bounds = array<i64: 1>, scalar_prefetch = 0 : i64, scratch_operands = 0 : i64, tpu.core_type = #tpu.core_type<tc>, window_params = [{transform_indices = @transform_0, window_bounds = array<i64: 128, 256>}, {pipeline_mode = #tpu.pipeline_mode<synchronous>, transform_indices = @transform_1, window_bounds = array<i64: 1, 256>}, {pipeline_mode = #tpu.pipeline_mode<synchronous>, transform_indices = @transform_2, window_bounds = array<i64: 1, 256>}, {transform_indices = @transform_3, window_bounds = array<i64: 128, 256>}, {pipeline_mode = #tpu.pipeline_mode<synchronous>, transform_indices = @transform_4, window_bounds = array<i64: 1, 256>}, {pipeline_mode = #tpu.pipeline_mode<synchronous>, transform_indices = @transform_5, window_bounds = array<i64: 1, 256>}, {transform_indices = @transform_6, window_bounds = array<i64: 128, 256>}]} {
    %c0 = arith.constant 0 : index
    %c0_0 = arith.constant 0 : index
    %0 = vector.load %arg1[%c0, %c0_0] : memref<128x256xbf16, #tpu.memory_space<vmem>>, vector<128x256xbf16>
    %1 = arith.extf %0 : vector<128x256xbf16> to vector<128x256xf32>
    %c0_1 = arith.constant 0 : index
    %c0_2 = arith.constant 0 : index
    %2 = vector.load %arg2[%c0_1, %c0_2] : memref<1x256xf32, #tpu.memory_space<vmem>>, vector<1x256xf32>
    %3 = vector.broadcast %2 : vector<1x256xf32> to vector<128x256xf32>
    %4 = arith.mulf %1, %3 : vector<128x256xf32>
    %c0_3 = arith.constant 0 : index
    %c0_4 = arith.constant 0 : index
    %5 = vector.load %arg3[%c0_3, %c0_4] : memref<1x256xf32, #tpu.memory_space<vmem>>, vector<1x256xf32>
    %6 = vector.broadcast %5 : vector<1x256xf32> to vector<128x256xf32>
    %7 = arith.addf %4, %6 : vector<128x256xf32>
    %c0_5 = arith.constant 0 : index
    %c0_6 = arith.constant 0 : index
    %8 = vector.load %arg4[%c0_5, %c0_6] : memref<128x256xbf16, #tpu.memory_space<vmem>>, vector<128x256xbf16>
    %9 = arith.extf %8 : vector<128x256xbf16> to vector<128x256xf32>
    %c0_7 = arith.constant 0 : index
    %c0_8 = arith.constant 0 : index
    %10 = vector.load %arg5[%c0_7, %c0_8] : memref<1x256xf32, #tpu.memory_space<vmem>>, vector<1x256xf32>
    %11 = vector.broadcast %10 : vector<1x256xf32> to vector<128x256xf32>
    %12 = arith.mulf %9, %11 : vector<128x256xf32>
    %c0_9 = arith.constant 0 : index
    %c0_10 = arith.constant 0 : index
    %13 = vector.load %arg6[%c0_9, %c0_10] : memref<1x256xf32, #tpu.memory_space<vmem>>, vector<1x256xf32>
    %14 = vector.broadcast %13 : vector<1x256xf32> to vector<128x256xf32>
    %15 = arith.addf %12, %14 : vector<128x256xf32>
    %16 = arith.addf %7, %15 : vector<128x256xf32>
    %17 = arith.truncf %16 : vector<128x256xf32> to vector<128x256xbf16>
    %c0_11 = arith.constant 0 : index
    %c0_12 = arith.constant 0 : index
    %18 = vector.load %arg7[%c0_11, %c0_12] : memref<128x256xbf16, #tpu.memory_space<vmem>>, vector<128x256xbf16>
    tpu.vector_store %arg7[%c0_11, %c0_12], %17 {strides = array<i32>} : memref<128x256xbf16, #tpu.memory_space<vmem>>, vector<128x256xbf16>,
    return
  }
  func.func @transform_0(%arg0: i32) -> (i32, i32) {
    %c0_i32 = arith.constant 0 : i32
    %c0_i32_0 = arith.constant 0 : i32
    return %arg0, %c0_i32 : i32, i32
  }
  func.func @transform_1(%arg0: i32) -> (i32, i32) {
    %c0_i32 = arith.constant 0 : i32
    %c0_i32_0 = arith.constant 0 : i32
    %c0_i32_1 = arith.constant 0 : i32
    return %c0_i32, %c0_i32_0 : i32, i32
  }
  func.func @transform_2(%arg0: i32) -> (i32, i32) {
    %c0_i32 = arith.constant 0 : i32
    %c0_i32_0 = arith.constant 0 : i32
    %c0_i32_1 = arith.constant 0 : i32
    return %c0_i32, %c0_i32_0 : i32, i32
  }
  func.func @transform_3(%arg0: i32) -> (i32, i32) {
    %c0_i32 = arith.constant 0 : i32
    %c0_i32_0 = arith.constant 0 : i32
    return %arg0, %c0_i32 : i32, i32
  }
  func.func @transform_4(%arg0: i32) -> (i32, i32) {
    %c0_i32 = arith.constant 0 : i32
    %c0_i32_0 = arith.constant 0 : i32
    %c0_i32_1 = arith.constant 0 : i32
    return %c0_i32, %c0_i32_0 : i32, i32
  }
  func.func @transform_5(%arg0: i32) -> (i32, i32) {
    %c0_i32 = arith.constant 0 : i32
    %c0_i32_0 = arith.constant 0 : i32
    %c0_i32_1 = arith.constant 0 : i32
    return %c0_i32, %c0_i32_0 : i32, i32
  }
  func.func @transform_6(%arg0: i32) -> (i32, i32) {
    %c0_i32 = arith.constant 0 : i32
    %c0_i32_0 = arith.constant 0 : i32
    return %arg0, %c0_i32 : i32, i32
  }
}

module attributes {stable_mosaic.version = 11 : i64} {
  func.func @_matmul_kernel(%arg0: i32, %arg1: i32, %arg2: i32, %arg3: memref<128x128xbf16, #tpu.memory_space<vmem>>, %arg4: memref<128x256xbf16, #tpu.memory_space<vmem>>, %arg5: memref<128x256xbf16, #tpu.memory_space<vmem>>, %arg6: memref<1x2x256xf32, #tpu.memory_space<vmem>>, %arg7: memref<128x256xf32, #tpu.memory_space<vmem>>) attributes {dimension_semantics = [#tpu.dimension_semantics<parallel>, #tpu.dimension_semantics<parallel>, #tpu.dimension_semantics<arbitrary>], iteration_bounds = array<i64: 1, 1, 1>, scalar_prefetch = 0 : i64, scratch_operands = 1 : i64, tpu.core_type = #tpu.core_type<tc>, window_params = [{transform_indices = @transform_0, window_bounds = array<i64: 128, 128>}, {transform_indices = @transform_1, window_bounds = array<i64: 128, 256>}, {transform_indices = @transform_2, window_bounds = array<i64: 128, 256>}, {transform_indices = @transform_3, window_bounds = array<i64: 1, 2, 256>}]} {
    %c0_i32 = arith.constant 0 : i32
    %0 = arith.cmpi eq, %arg2, %c0_i32 : i32
    %1 = arith.extui %0 : i1 to i32
    %c0_i32_0 = arith.constant 0 : i32
    %2 = arith.cmpi ne, %1, %c0_i32_0 : i32
    scf.if %2 {
      %cst_10 = arith.constant 0.000000e+00 : f32
      %12 = vector.broadcast %cst_10 : f32 to vector<128x256xf32>
      %c0_11 = arith.constant 0 : index
      %c0_12 = arith.constant 0 : index
      %13 = vector.load %arg7[%c0_11, %c0_12] : memref<128x256xf32, #tpu.memory_space<vmem>>, vector<128x256xf32>
      tpu.vector_store %arg7[%c0_11, %c0_12], %12 {strides = array<i32>} : memref<128x256xf32, #tpu.memory_space<vmem>>, vector<128x256xf32>,
    } else {
    }
    %c0 = arith.constant 0 : index
    %c0_1 = arith.constant 0 : index
    %3 = vector.load %arg7[%c0, %c0_1] : memref<128x256xf32, #tpu.memory_space<vmem>>, vector<128x256xf32>
    %c0_2 = arith.constant 0 : index
    %c0_3 = arith.constant 0 : index
    %4 = vector.load %arg3[%c0_2, %c0_3] : memref<128x128xbf16, #tpu.memory_space<vmem>>, vector<128x128xbf16>
    %c0_4 = arith.constant 0 : index
    %c0_5 = arith.constant 0 : index
    %5 = vector.load %arg4[%c0_4, %c0_5] : memref<128x256xbf16, #tpu.memory_space<vmem>>, vector<128x256xbf16>
    %cst = arith.constant dense<0.000000e+00> : vector<128x256xf32>
    %6 = tpu.matmul %4, %5, %cst {dimension_numbers = #tpu.dot_dimension_numbers<[1], [0], [0], [1], [0, 0, 1, 1], [], []>} : vector<128x128xbf16>, vector<128x256xbf16>, vector<128x256xf32> -> vector<128x256xf32>
    %7 = arith.addf %3, %6 : vector<128x256xf32>
    %c0_6 = arith.constant 0 : index
    %c0_7 = arith.constant 0 : index
    %8 = vector.load %arg7[%c0_6, %c0_7] : memref<128x256xf32, #tpu.memory_space<vmem>>, vector<128x256xf32>
    tpu.vector_store %arg7[%c0_6, %c0_7], %7 {strides = array<i32>} : memref<128x256xf32, #tpu.memory_space<vmem>>, vector<128x256xf32>,
    %c0_i32_8 = arith.constant 0 : i32
    %9 = arith.cmpi eq, %arg2, %c0_i32_8 : i32
    %10 = arith.extui %9 : i1 to i32
    %c0_i32_9 = arith.constant 0 : i32
    %11 = arith.cmpi ne, %10, %c0_i32_9 : i32
    scf.if %11 {
      %c0_10 = arith.constant 0 : index
      %c0_11 = arith.constant 0 : index
      %12 = vector.load %arg7[%c0_10, %c0_11] : memref<128x256xf32, #tpu.memory_space<vmem>>, vector<128x256xf32>
      %13 = arith.truncf %12 : vector<128x256xf32> to vector<128x256xbf16>
      %c0_12 = arith.constant 0 : index
      %c0_13 = arith.constant 0 : index
      %14 = vector.load %arg5[%c0_12, %c0_13] : memref<128x256xbf16, #tpu.memory_space<vmem>>, vector<128x256xbf16>
      tpu.vector_store %arg5[%c0_12, %c0_13], %13 {strides = array<i32>} : memref<128x256xbf16, #tpu.memory_space<vmem>>, vector<128x256xbf16>,
      %cst_14 = arith.constant dense<0.000000e+00> : vector<256xf32>
      %15 = vector.multi_reduction <add>, %12, %cst_14 [0] : vector<128x256xf32> to vector<256xf32>
      %16 = vector.shape_cast %15 : vector<256xf32> to vector<1x256xf32>
      %c0_15 = arith.constant 0 : index
      %c0_16 = arith.constant 0 : index
      %c0_17 = arith.constant 0 : index
      %17 = vector.load %arg6[%c0_15, %c0_16, %c0_17] : memref<1x2x256xf32, #tpu.memory_space<vmem>>, vector<1x1x256xf32>
      %18 = vector.shape_cast %17 : vector<1x1x256xf32> to vector<1x256xf32>
      %19 = vector.shape_cast %16 : vector<1x256xf32> to vector<1x1x256xf32>
      tpu.vector_store %arg6[%c0_15, %c0_16, %c0_17], %19 {strides = array<i32>} : memref<1x2x256xf32, #tpu.memory_space<vmem>>, vector<1x1x256xf32>,
      %20 = arith.mulf %12, %12 : vector<128x256xf32>
      %cst_18 = arith.constant dense<0.000000e+00> : vector<256xf32>
      %21 = vector.multi_reduction <add>, %20, %cst_18 [0] : vector<128x256xf32> to vector<256xf32>
      %22 = vector.shape_cast %21 : vector<256xf32> to vector<1x256xf32>
      %c0_19 = arith.constant 0 : index
      %c1 = arith.constant 1 : index
      %c0_20 = arith.constant 0 : index
      %23 = vector.load %arg6[%c0_19, %c1, %c0_20] : memref<1x2x256xf32, #tpu.memory_space<vmem>>, vector<1x1x256xf32>
      %24 = vector.shape_cast %23 : vector<1x1x256xf32> to vector<1x256xf32>
      %25 = vector.shape_cast %22 : vector<1x256xf32> to vector<1x1x256xf32>
      tpu.vector_store %arg6[%c0_19, %c1, %c0_20], %25 {strides = array<i32>} : memref<1x2x256xf32, #tpu.memory_space<vmem>>, vector<1x1x256xf32>,
    } else {
    }
    return
  }
  func.func @transform_0(%arg0: i32, %arg1: i32, %arg2: i32) -> (i32, i32) {
    %c0_i32 = arith.constant 0 : i32
    return %arg0, %arg2 : i32, i32
  }
  func.func @transform_1(%arg0: i32, %arg1: i32, %arg2: i32) -> (i32, i32) {
    %c0_i32 = arith.constant 0 : i32
    return %arg2, %arg1 : i32, i32
  }
  func.func @transform_2(%arg0: i32, %arg1: i32, %arg2: i32) -> (i32, i32) {
    %c0_i32 = arith.constant 0 : i32
    return %arg0, %arg1 : i32, i32
  }
  func.func @transform_3(%arg0: i32, %arg1: i32, %arg2: i32) -> (i32, i32, i32) {
    %c0_i32 = arith.constant 0 : i32
    %c0_i32_0 = arith.constant 0 : i32
    return %arg0, %c0_i32, %arg1 : i32, i32, i32
  }
}

</mosaic_0001>

<llo_original>
// kernel: run_chain.15
$region0: #{run_chain.15}
  #allocation0 [shape = 'u32[]', space=smem, size = 0x4, offset = 0x4, fixed_abs, tag = 'smem constant byte address 0x4 - core index']
  #allocation1 [shape = 'u32[144,128]{1,0:T(1,128)}', space=vmem, size = 0x12000, scoped, tag = 'internal scratch']
  #allocation2 [shape = 'f32[128,128]{1,0:T(8,128)}', space=vmem, size = 0x10000, scoped, tag = 'scratch operand']
  %s0 = inlined_call_operand.vmem [shape: bf16[128,128], index: 0, kind: input, shape index: {}]
  %s1 = inlined_call_operand.vmem [shape: bf16[128,128], index: 1, kind: input, shape index: {}]
  %s2 = inlined_call_operand.vmem [shape: bf16[128,128], index: 2, kind: output, shape index: {0}]
  %s3 = inlined_call_operand.vmem [shape: f32[1,2,128], index: 3, kind: output, shape index: {1}]
  %4 = xla_tuple %s2, %s3
  %s5 = sld [smem:[#allocation0]]
  $region34: #{run_chain.15} parent=0
    _
  %s7 = ssub.s32 1, %s5
  %s8 = scalar_select 0, %s7, %s5
  // Predicated region
  $region2: #{run_chain.15} parent=0 // pred_check
    _
  $region3: #{run_chain.15} parent=0 // pred_check_branch
    %10 = sbr.rel (0) target = $region5
  $region4: #{run_chain.15} parent=0 // pred_region
    _
  $region5: #{run_chain.15} parent=0 // pred_fallthru
    _
  // Predicated region
  $region6: #{run_chain.15} parent=0 // pred_check
    _
  $region7: #{run_chain.15} parent=0 // pred_check_branch
    %12 = sbr.rel (0) target = $region9
  $region8: #{run_chain.15} parent=0 // pred_region
    _
  $region9: #{run_chain.15} parent=0 // pred_fallthru
    _
  %p14 = scmp.eq.s32.totalorder 0, 0
  // Predicated region
  $region10: #{run_chain.15} parent=0 // pred_check
    %p15 = pneg %p14
  $region11: #{run_chain.15} parent=0 // pred_check_branch
    %17 = sbr.rel (%p15) target = $region13
  $region12: #{run_chain.15} parent=0 // pred_region
    %18 = vst [vmem:[#allocation2] sm:$0xff] 0.0
    %19 = vst [vmem:[#allocation2 + $0x8] sm:$0xff] 0.0
    %20 = vst [vmem:[#allocation2 + $0x10] sm:$0xff] 0.0
    %21 = vst [vmem:[#allocation2 + $0x18] sm:$0xff] 0.0
    %22 = vst [vmem:[#allocation2 + $0x20] sm:$0xff] 0.0
    %23 = vst [vmem:[#allocation2 + $0x28] sm:$0xff] 0.0
    %24 = vst [vmem:[#allocation2 + $0x30] sm:$0xff] 0.0
    %25 = vst [vmem:[#allocation2 + $0x38] sm:$0xff] 0.0
    %26 = vst [vmem:[#allocation2 + $0x40] sm:$0xff] 0.0
    %27 = vst [vmem:[#allocation2 + $0x48] sm:$0xff] 0.0
    %28 = vst [vmem:[#allocation2 + $0x50] sm:$0xff] 0.0
    %29 = vst [vmem:[#allocation2 + $0x58] sm:$0xff] 0.0
    %30 = vst [vmem:[#allocation2 + $0x60] sm:$0xff] 0.0
    %31 = vst [vmem:[#allocation2 + $0x68] sm:$0xff] 0.0
    %32 = vst [vmem:[#allocation2 + $0x70] sm:$0xff] 0.0
    %33 = vst [vmem:[#allocation2 + $0x78] sm:$0xff] 0.0
  $region13: #{run_chain.15} parent=0 // pred_fallthru
    _
  %v34 = vld [vmem:[#allocation2] sm:$0xff]
  %v35 = vld [vmem:[#allocation2 + $0x8] sm:$0xff]
  %v36 = vld [vmem:[#allocation2 + $0x10] sm:$0xff]
  %v37 = vld [vmem:[#allocation2 + $0x18] sm:$0xff]
  %v38 = vld [vmem:[#allocation2 + $0x20] sm:$0xff]
  %v39 = vld [vmem:[#allocation2 + $0x28] sm:$0xff]
  %v40 = vld [vmem:[#allocation2 + $0x30] sm:$0xff]
  %v41 = vld [vmem:[#allocation2 + $0x38] sm:$0xff]
  %v42 = vld [vmem:[#allocation2 + $0x40] sm:$0xff]
  %v43 = vld [vmem:[#allocation2 + $0x48] sm:$0xff]
  %v44 = vld [vmem:[#allocation2 + $0x50] sm:$0xff]
  %v45 = vld [vmem:[#allocation2 + $0x58] sm:$0xff]
  %v46 = vld [vmem:[#allocation2 + $0x60] sm:$0xff]
  %v47 = vld [vmem:[#allocation2 + $0x68] sm:$0xff]
  %v48 = vld [vmem:[#allocation2 + $0x70] sm:$0xff]
  %v49 = vld [vmem:[#allocation2 + $0x78] sm:$0xff]
  %v50 = vld [vmem:[%s0] sm:$0xf]
  %v51 = vld [vmem:[%s0 + $0x4] sm:$0xf]
  %v52 = vld [vmem:[%s0 + $0x8] sm:$0xf]
  %v53 = vld [vmem:[%s0 + $0xc] sm:$0xf]
  %v54 = vld [vmem:[%s0 + $0x10] sm:$0xf]
  %v55 = vld [vmem:[%s0 + $0x14] sm:$0xf]
  %v56 = vld [vmem:[%s0 + $0x18] sm:$0xf]
  %v57 = vld [vmem:[%s0 + $0x1c] sm:$0xf]
  %v58 = vld [vmem:[%s0 + $0x20] sm:$0xf]
  %v59 = vld [vmem:[%s0 + $0x24] sm:$0xf]
  %v60 = vld [vmem:[%s0 + $0x28] sm:$0xf]
  %v61 = vld [vmem:[%s0 + $0x2c] sm:$0xf]
  %v62 = vld [vmem:[%s0 + $0x30] sm:$0xf]
  %v63 = vld [vmem:[%s0 + $0x34] sm:$0xf]
  %v64 = vld [vmem:[%s0 + $0x38] sm:$0xf]
  %v65 = vld [vmem:[%s0 + $0x3c] sm:$0xf]
  %v66 = vld [vmem:[%s1] sm:$0xf]
  %v67 = vld [vmem:[%s1 + $0x4] sm:$0xf]
  %v68 = vld [vmem:[%s1 + $0x8] sm:$0xf]
  %v69 = vld [vmem:[%s1 + $0xc] sm:$0xf]
  %v70 = vld [vmem:[%s1 + $0x10] sm:$0xf]
  %v71 = vld [vmem:[%s1 + $0x14] sm:$0xf]
  %v72 = vld [vmem:[%s1 + $0x18] sm:$0xf]
  %v73 = vld [vmem:[%s1 + $0x1c] sm:$0xf]
  %v74 = vld [vmem:[%s1 + $0x20] sm:$0xf]
  %v75 = vld [vmem:[%s1 + $0x24] sm:$0xf]
  %v76 = vld [vmem:[%s1 + $0x28] sm:$0xf]
  %v77 = vld [vmem:[%s1 + $0x2c] sm:$0xf]
  %v78 = vld [vmem:[%s1 + $0x30] sm:$0xf]
  %v79 = vld [vmem:[%s1 + $0x34] sm:$0xf]
  %v80 = vld [vmem:[%s1 + $0x38] sm:$0xf]
  %v81 = vld [vmem:[%s1 + $0x3c] sm:$0xf]
  %v98 = vunpack.c.l.b16 %v50
  %v99 = vunpack.c.l.b16 %v51
  %v100 = vunpack.c.l.b16 %v52
  %v101 = vunpack.c.l.b16 %v53
  %v102 = vunpack.c.l.b16 %v54
  %v103 = vunpack.c.l.b16 %v55
  %v104 = vunpack.c.l.b16 %v56
  %v105 = vunpack.c.l.b16 %v57
  %v106 = vunpack.c.l.b16 %v58
  %v107 = vunpack.c.l.b16 %v59
  %v108 = vunpack.c.l.b16 %v60
  %v109 = vunpack.c.l.b16 %v61
  %v110 = vunpack.c.l.b16 %v62
  %v111 = vunpack.c.l.b16 %v63
  %v112 = vunpack.c.l.b16 %v64
  %v113 = vunpack.c.l.b16 %v65
  %v114 = vpack.c.b16 %v99, %v98
  %v115 = vpack.c.b16 %v101, %v100
  %v116 = vpack.c.b16 %v103, %v102
  %v117 = vpack.c.b16 %v105, %v104
  %v118 = vpack.c.b16 %v107, %v106
  %v119 = vpack.c.b16 %v109, %v108
  %v120 = vpack.c.b16 %v111, %v110
  %v121 = vpack.c.b16 %v113, %v112
  %v146 = vunpack.c.l.b16 %v66
  %v147 = vunpack.c.l.b16 %v67
  %v148 = vunpack.c.l.b16 %v68
  %v149 = vunpack.c.l.b16 %v69
  %v150 = vunpack.c.l.b16 %v70
  %v151 = vunpack.c.l.b16 %v71
  %v152 = vunpack.c.l.b16 %v72
  %v153 = vunpack.c.l.b16 %v73
  %v154 = vunpack.c.l.b16 %v74
  %v155 = vunpack.c.l.b16 %v75
  %v156 = vunpack.c.l.b16 %v76
  %v157 = vunpack.c.l.b16 %v77
  %v158 = vunpack.c.l.b16 %v78
  %v159 = vunpack.c.l.b16 %v79
  %v160 = vunpack.c.l.b16 %v80
  %v161 = vunpack.c.l.b16 %v81
  %v162 = vpack.c.b16 %v147, %v146
  %v163 = vpack.c.b16 %v149, %v148
  %v164 = vpack.c.b16 %v151, %v150
  %v165 = vpack.c.b16 %v153, %v152
  %v166 = vpack.c.b16 %v155, %v154
  %v167 = vpack.c.b16 %v157, %v156
  %v168 = vpack.c.b16 %v159, %v158
  %v169 = vpack.c.b16 %v161, %v160
  %178 = vmatprep.subr.bf16.mxu0 0
  %179 = vmatpush1.bf16.msra.mxu0 %v169
  %180 = vmatprep.subr.bf16.mxu0 0
  %181 = vmatpush1.bf16.msra.mxu0 %v168
  %182 = vmatprep.subr.bf16.mxu0 0
  %183 = vmatpush1.bf16.msra.mxu0 %v167
  %184 = vmatprep.subr.bf16.mxu0 0
  %185 = vmatpush1.bf16.msra.mxu0 %v166
  %186 = vmatprep.subr.bf16.mxu0 0
  %187 = vmatpush1.bf16.msra.mxu0 %v165
  %188 = vmatprep.subr.bf16.mxu0 0
  %189 = vmatpush1.bf16.msra.mxu0 %v164
  %190 = vmatprep.subr.bf16.mxu0 0
  %191 = vmatpush1.bf16.msra.mxu0 %v163
  %192 = vmatprep.subr.bf16.mxu0 0
  %193 = vmatpush1.bf16.msra.mxu0 %v162
  %194 = vmatprep.subr.bf16.mxu0 0
  %195 = vmatpush2.bf16.msra.mxu0 0
  %196 = vmatprep.subr.bf16.mxu0 0
  %197 = vmatpush2.bf16.msra.mxu0 0
  %198 = vmatprep.subr.bf16.mxu0 0
  %199 = vmatpush2.bf16.msra.mxu0 0
  %200 = vmatprep.subr.bf16.mxu0 0
  %201 = vmatpush2.bf16.msra.mxu0 0
  %202 = vmatprep.subr.bf16.mxu0 0
  %203 = vmatpush2.bf16.msra.mxu0 0
  %204 = vmatprep.subr.bf16.mxu0 0
  %205 = vmatpush2.bf16.msra.mxu0 0
  %206 = vmatprep.subr.bf16.mxu0 0
  %207 = vmatpush2.bf16.msra.mxu0 0
  %208 = vmatprep.subr.bf16.mxu0 0
  %209 = vmatpush2.bf16.msra.mxu0 0
  %210 = vmatprep.mubr.bf16.mxu0 0
  %211 = vmatmul.mubr.bf16.gmra.mxu0 %v114
  %v212 = vpop.f32.mrf.mxu0
  %v213 = vadd.f32 0.0, %v212
  %v214 = vpop.f32.mrf.mxu0
  %v215 = vpop.f32.mrf.mxu0
  %v216 = vadd.f32 0.0, %v215
  %v217 = vpop.f32.mrf.mxu0
  %218 = vmatprep.mubr.bf16.mxu0 0
  %219 = vmatmul.mubr.bf16.gmra.mxu0 %v115
  %v220 = vpop.f32.mrf.mxu0
  %v221 = vadd.f32 0.0, %v220
  %v222 = vpop.f32.mrf.mxu0
  %v223 = vpop.f32.mrf.mxu0
  %v224 = vadd.f32 0.0, %v223
  %v225 = vpop.f32.mrf.mxu0
  %226 = vmatprep.mubr.bf16.mxu0 0
  %227 = vmatmul.mubr.bf16.gmra.mxu0 %v116
  %v228 = vpop.f32.mrf.mxu0
  %v229 = vadd.f32 0.0, %v228
  %v230 = vpop.f32.mrf.mxu0
  %v231 = vpop.f32.mrf.mxu0
  %v232 = vadd.f32 0.0, %v231
  %v233 = vpop.f32.mrf.mxu0
  %234 = vmatprep.mubr.bf16.mxu0 0
  %235 = vmatmul.mubr.bf16.gmra.mxu0 %v117
  %v236 = vpop.f32.mrf.mxu0
  %v237 = vadd.f32 0.0, %v236
  %v238 = vpop.f32.mrf.mxu0
  %v239 = vpop.f32.mrf.mxu0
  %v240 = vadd.f32 0.0, %v239
  %v241 = vpop.f32.mrf.mxu0
  %242 = vmatprep.mubr.bf16.mxu0 0
  %243 = vmatmul.mubr.bf16.gmra.mxu0 %v118
  %v244 = vpop.f32.mrf.mxu0
  %v245 = vadd.f32 0.0, %v244
  %v246 = vpop.f32.mrf.mxu0
  %v247 = vpop.f32.mrf.mxu0
  %v248 = vadd.f32 0.0, %v247
  %v249 = vpop.f32.mrf.mxu0
  %250 = vmatprep.mubr.bf16.mxu0 0
  %251 = vmatmul.mubr.bf16.gmra.mxu0 %v119
  %v252 = vpop.f32.mrf.mxu0
  %v253 = vadd.f32 0.0, %v252
  %v254 = vpop.f32.mrf.mxu0
  %v255 = vpop.f32.mrf.mxu0
  %v256 = vadd.f32 0.0, %v255
  %v257 = vpop.f32.mrf.mxu0
  %258 = vmatprep.mubr.bf16.mxu0 0
  %259 = vmatmul.mubr.bf16.gmra.mxu0 %v120
  %v260 = vpop.f32.mrf.mxu0
  %v261 = vadd.f32 0.0, %v260
  %v262 = vpop.f32.mrf.mxu0
  %v263 = vpop.f32.mrf.mxu0
  %v264 = vadd.f32 0.0, %v263
  %v265 = vpop.f32.mrf.mxu0
  %266 = vmatprep.mubr.bf16.mxu0 0
  %267 = vmatmul.mubr.bf16.gmra.mxu0 %v121
  %v268 = vpop.f32.mrf.mxu0
  %v269 = vadd.f32 0.0, %v268
  %v270 = vpop.f32.mrf.mxu0
  %v271 = vpop.f32.mrf.mxu0
  %v272 = vadd.f32 0.0, %v271
  %v273 = vpop.f32.mrf.mxu0
  %274 = vdwg.mxu0
  %v275 = vadd.f32 %v34, %v213
  %v276 = vadd.f32 %v35, %v216
  %v277 = vadd.f32 %v36, %v221
  %v278 = vadd.f32 %v37, %v224
  %v279 = vadd.f32 %v38, %v229
  %v280 = vadd.f32 %v39, %v232
  %v281 = vadd.f32 %v40, %v237
  %v282 = vadd.f32 %v41, %v240
  %v283 = vadd.f32 %v42, %v245
  %v284 = vadd.f32 %v43, %v248
  %v285 = vadd.f32 %v44, %v253
  %v286 = vadd.f32 %v45, %v256
  %v287 = vadd.f32 %v46, %v261
  %v288 = vadd.f32 %v47, %v264
  %v289 = vadd.f32 %v48, %v269
  %v290 = vadd.f32 %v49, %v272
  %291 = vst [vmem:[#allocation2] sm:$0xff] %v275
  %292 = vst [vmem:[#allocation2 + $0x8] sm:$0xff] %v276
  %293 = vst [vmem:[#allocation2 + $0x10] sm:$0xff] %v277
  %294 = vst [vmem:[#allocation2 + $0x18] sm:$0xff] %v278
  %295 = vst [vmem:[#allocation2 + $0x20] sm:$0xff] %v279
  %296 = vst [vmem:[#allocation2 + $0x28] sm:$0xff] %v280
  %297 = vst [vmem:[#allocation2 + $0x30] sm:$0xff] %v281
  %298 = vst [vmem:[#allocation2 + $0x38] sm:$0xff] %v282
  %299 = vst [vmem:[#allocation2 + $0x40] sm:$0xff] %v283
  %300 = vst [vmem:[#allocation2 + $0x48] sm:$0xff] %v284
  %301 = vst [vmem:[#allocation2 + $0x50] sm:$0xff] %v285
  %302 = vst [vmem:[#allocation2 + $0x58] sm:$0xff] %v286
  %303 = vst [vmem:[#allocation2 + $0x60] sm:$0xff] %v287
  %304 = vst [vmem:[#allocation2 + $0x68] sm:$0xff] %v288
  %305 = vst [vmem:[#allocation2 + $0x70] sm:$0xff] %v289
  %306 = vst [vmem:[#allocation2 + $0x78] sm:$0xff] %v290
  // Predicated region
  $region14: #{run_chain.15} parent=0 // pred_check
    %p307 = pneg %p14
  $region15: #{run_chain.15} parent=0 // pred_check_branch
    %309 = sbr.rel (%p307) target = $region17
  $region16: #{run_chain.15} parent=0 // pred_region
    %v310 = vld [vmem:[#allocation2] sm:$0xff]
    %v311 = vld [vmem:[#allocation2 + $0x8] sm:$0xff]
    %v312 = vld [vmem:[#allocation2 + $0x10] sm:$0xff]
    %v313 = vld [vmem:[#allocation2 + $0x18] sm:$0xff]
    %v314 = vld [vmem:[#allocation2 + $0x20] sm:$0xff]
    %v315 = vld [vmem:[#allocation2 + $0x28] sm:$0xff]
    %v316 = vld [vmem:[#allocation2 + $0x30] sm:$0xff]
    %v317 = vld [vmem:[#allocation2 + $0x38] sm:$0xff]
    %v318 = vld [vmem:[#allocation2 + $0x40] sm:$0xff]
    %v319 = vld [vmem:[#allocation2 + $0x48] sm:$0xff]
    %v320 = vld [vmem:[#allocation2 + $0x50] sm:$0xff]
    %v321 = vld [vmem:[#allocation2 + $0x58] sm:$0xff]
    %v322 = vld [vmem:[#allocation2 + $0x60] sm:$0xff]
    %v323 = vld [vmem:[#allocation2 + $0x68] sm:$0xff]
    %v324 = vld [vmem:[#allocation2 + $0x70] sm:$0xff]
    %v325 = vld [vmem:[#allocation2 + $0x78] sm:$0xff]
    %v326 = vpack.c.bf16 %v311, %v310
    %v327 = vpack.c.bf16 %v313, %v312
    %v328 = vpack.c.bf16 %v315, %v314
    %v329 = vpack.c.bf16 %v317, %v316
    %v330 = vpack.c.bf16 %v319, %v318
    %v331 = vpack.c.bf16 %v321, %v320
    %v332 = vpack.c.bf16 %v323, %v322
    %v333 = vpack.c.bf16 %v325, %v324
    %v342 = vunpack.c.l.b16 %v326
    %v343 = vunpack.c.h.b16 %v326
    %v344 = vunpack.c.l.b16 %v327
    %v345 = vunpack.c.h.b16 %v327
    %v346 = vunpack.c.l.b16 %v328
    %v347 = vunpack.c.h.b16 %v328
    %v348 = vunpack.c.l.b16 %v329
    %v349 = vunpack.c.h.b16 %v329
    %v350 = vunpack.c.l.b16 %v330
    %v351 = vunpack.c.h.b16 %v330
    %v352 = vunpack.c.l.b16 %v331
    %v353 = vunpack.c.h.b16 %v331
    %v354 = vunpack.c.l.b16 %v332
    %v355 = vunpack.c.h.b16 %v332
    %v356 = vunpack.c.l.b16 %v333
    %v357 = vunpack.c.h.b16 %v333
    %v358 = vpack.c.b16 %v342, %v342
    %v359 = vpack.c.b16 %v343, %v343
    %v360 = vpack.c.b16 %v344, %v344
    %v361 = vpack.c.b16 %v345, %v345
    %v362 = vpack.c.b16 %v346, %v346
    %v363 = vpack.c.b16 %v347, %v347
    %v364 = vpack.c.b16 %v348, %v348
    %v365 = vpack.c.b16 %v349, %v349
    %v366 = vpack.c.b16 %v350, %v350
    %v367 = vpack.c.b16 %v351, %v351
    %v368 = vpack.c.b16 %v352, %v352
    %v369 = vpack.c.b16 %v353, %v353
    %v370 = vpack.c.b16 %v354, %v354
    %v371 = vpack.c.b16 %v355, %v355
    %v372 = vpack.c.b16 %v356, %v356
    %v373 = vpack.c.b16 %v357, %v357
    %390 = vst [vmem:[%s2] sm:$0xf] %v358
    %391 = vst [vmem:[%s2 + $0x4] sm:$0xf] %v359
    %392 = vst [vmem:[%s2 + $0x8] sm:$0xf] %v360
    %393 = vst [vmem:[%s2 + $0xc] sm:$0xf] %v361
    %394 = vst [vmem:[%s2 + $0x10] sm:$0xf] %v362
    %395 = vst [vmem:[%s2 + $0x14] sm:$0xf] %v363
    %396 = vst [vmem:[%s2 + $0x18] sm:$0xf] %v364
    %397 = vst [vmem:[%s2 + $0x1c] sm:$0xf] %v365
    %398 = vst [vmem:[%s2 + $0x20] sm:$0xf] %v366
    %399 = vst [vmem:[%s2 + $0x24] sm:$0xf] %v367
    %400 = vst [vmem:[%s2 + $0x28] sm:$0xf] %v368
    %401 = vst [vmem:[%s2 + $0x2c] sm:$0xf] %v369
    %402 = vst [vmem:[%s2 + $0x30] sm:$0xf] %v370
    %403 = vst [vmem:[%s2 + $0x34] sm:$0xf] %v371
    %404 = vst [vmem:[%s2 + $0x38] sm:$0xf] %v372
    %405 = vst [vmem:[%s2 + $0x3c] sm:$0xf] %v373
    %v406 = vadd.f32 %v310, %v311
    %v407 = vadd.f32 %v406, %v312
    %v408 = vadd.f32 %v407, %v313
    %v409 = vadd.f32 %v408, %v314
    %v410 = vadd.f32 %v409, %v315
    %v411 = vadd.f32 %v410, %v316
    %v412 = vadd.f32 %v411, %v317
    %v413 = vadd.f32 %v412, %v318
    %v414 = vadd.f32 %v413, %v319
    %v415 = vadd.f32 %v414, %v320
    %v416 = vadd.f32 %v415, %v321
    %v417 = vadd.f32 %v416, %v322
    %v418 = vadd.f32 %v417, %v323
    %v419 = vadd.f32 %v418, %v324
    %v420 = vadd.f32 %v419, %v325
    %v421 = vrot.slane %v420, 4
    %v422 = vadd.f32 %v420, %v421
    %v423 = vrot.slane %v422, 2
    %v424 = vadd.f32 %v422, %v423
    %v425 = vrot.slane %v424, 1
    %v426 = vadd.f32 %v424, %v425
    %427 = vst [vmem:[%s3] sm:$0x1] %v426
    %v428 = vmul.f32 %v310, %v310
    %v429 = vmul.f32 %v311, %v311
    %v430 = vmul.f32 %v312, %v312
    %v431 = vmul.f32 %v313, %v313
    %v432 = vmul.f32 %v314, %v314
    %v433 = vmul.f32 %v315, %v315
    %v434 = vmul.f32 %v316, %v316
    %v435 = vmul.f32 %v317, %v317
    %v436 = vmul.f32 %v318, %v318
    %v437 = vmul.f32 %v319, %v319
    %v438 = vmul.f32 %v320, %v320
    %v439 = vmul.f32 %v321, %v321
    %v440 = vmul.f32 %v322, %v322
    %v441 = vmul.f32 %v323, %v323
    %v442 = vmul.f32 %v324, %v324
    %v443 = vmul.f32 %v325, %v325
    %v444 = vadd.f32 %v428, %v429
    %v445 = vadd.f32 %v444, %v430
    %v446 = vadd.f32 %v445, %v431
    %v447 = vadd.f32 %v446, %v432
    %v448 = vadd.f32 %v447, %v433
    %v449 = vadd.f32 %v448, %v434
    %v450 = vadd.f32 %v449, %v435
    %v451 = vadd.f32 %v450, %v436
    %v452 = vadd.f32 %v451, %v437
    %v453 = vadd.f32 %v452, %v438
    %v454 = vadd.f32 %v453, %v439
    %v455 = vadd.f32 %v454, %v440
    %v456 = vadd.f32 %v455, %v441
    %v457 = vadd.f32 %v456, %v442
    %v458 = vadd.f32 %v457, %v443
    %v459 = vrot.slane %v458, 4
    %v460 = vadd.f32 %v458, %v459
    %v461 = vrot.slane %v460, 2
    %v462 = vadd.f32 %v460, %v461
    %v463 = vrot.slane %v462, 1
    %v464 = vadd.f32 %v462, %v463
    %465 = vst [vmem:[%s3 + $0x1] sm:$0x1] %v464
  $region17: #{run_chain.15} parent=0 // pred_fallthru
    _
  // Predicated region
  $region18: #{run_chain.15} parent=0 // pred_check
    _
  $region19: #{run_chain.15} parent=0 // pred_check_branch
    %467 = sbr.rel (0) target = $region21
  $region20: #{run_chain.15} parent=0 // pred_region
    _
  $region21: #{run_chain.15} parent=0 // pred_fallthru
    _
  // Predicated region
  $region22: #{run_chain.15} parent=0 // pred_check
    _
  $region23: #{run_chain.15} parent=0 // pred_check_branch
    %469 = sbr.rel (0) target = $region25
  $region24: #{run_chain.15} parent=0 // pred_region
    _
  $region25: #{run_chain.15} parent=0 // pred_fallthru
    _
  // Predicated region
  $region26: #{run_chain.15} parent=0 // pred_check
    _
  $region27: #{run_chain.15} parent=0 // pred_check_branch
    %471 = sbr.rel (0) target = $region29
  $region28: #{run_chain.15} parent=0 // pred_region
    _
  $region29: #{run_chain.15} parent=0 // pred_fallthru
    _
  // Predicated region
  $region30: #{run_chain.15} parent=0 // pred_check
    _
  $region31: #{run_chain.15} parent=0 // pred_check_branch
    %473 = sbr.rel (0) target = $region33
  $region32: #{run_chain.15} parent=0 // pred_region
    _
  $region33: #{run_chain.15} parent=0 // pred_fallthru
    _

// kernel: run_chain.16
$region0: #{run_chain.16}
  #allocation0 [shape = 'u32[]', space=smem, size = 0x4, offset = 0x4, fixed_abs, tag = 'smem constant byte address 0x4 - core index']
  #allocation1 [shape = 'u32[144,128]{1,0:T(1,128)}', space=vmem, size = 0x12000, scoped, tag = 'internal scratch']
  #allocation2 [shape = 'f32[18,32,128]{2,1,0:T(8,128)}', space=vmem, size = 0x48000, scoped, tag = 'scratch operand']
  %s0 = inlined_call_operand.vmem [shape: bf16[2,16,16,128], index: 0, kind: input, shape index: {}]
  %s1 = inlined_call_operand.vmem [shape: f32[1,1,128], index: 1, kind: input, shape index: {}]
  %s2 = inlined_call_operand.vmem [shape: f32[1,1,128], index: 2, kind: input, shape index: {}]
  %s3 = inlined_call_operand.vmem [shape: bf16[2,8,16,128], index: 3, kind: output, shape index: {}]
  %s4 = sld [smem:[#allocation0]]
  $region45: #{run_chain.16} parent=0
    _
  %s6 = ssub.s32 1, %s4
  %s7 = scalar_select 0, %s6, %s4
  loop: start=0, step=1, limit=4
  $region2: #{run_chain.16} parent=0 // loop_pre_header
    _
  $region3: #{run_chain.16} parent=0 // loop_header
    %s9 = sphi 0, %s13
    %p10 = scmp.ge.s32.totalorder %s9, 4
    %s19 = sphi 0, %s21
    %s22 = sphi 0, %s19
    %s23 = sphi 0, %s22
    %s39 = sphi 0, %s23
    %s43 = sphi 0, %s43
    %s45 = sphi 0, %s43
    %s46 = sphi 0, %s45
    %s60 = sphi 0, %s46
    %s64 = sphi 0, %s64
    %s66 = sphi 0, %s64
    %s67 = sphi 0, %s66
    %s81 = sphi 0, %s67
    %s87 = sphi 0, %s89
    %s90 = sphi 0, %s87
    %s91 = sphi 0, %s90
    %s107 = sphi 0, %s91
  $region4: #{run_chain.16} parent=0 // loop_header_branch
    %12 = sbr.rel (%p10) target = $region8
  $region5: #{run_chain.16} parent=0 // loop_body
    %s14 = ssub.s32 %s9, 1
    %s15 = ssub.s32 %s9, 2
    %s16 = sadd.s32 %s9, 1
    %s17 = ssub.s32 %s9, %s16
    %p18 = scmp.eq.s32.totalorder %s17, 0
    %s20 = sadd.s32 %s19, 1
    %s21 = scalar_select %p18, %s19, %s20
    %p24 = pneg %p18
    %p25 = scmp.eq.s32.totalorder %s9, 1
    %p26 = por %p24, %p25
    %p27 = scmp.ne.s32.totalorder %s19, %s22
    %p28 = scmp.eq.s32.totalorder %s9, 0
    %p29 = por %p27, %p28
    %p30 = scmp.ne.s32.totalorder %s19, %s22
    %p31 = scmp.eq.s32.totalorder %s14, 1
    %p32 = por %p30, %p31
    %p33 = scmp.ne.s32.totalorder %s22, %s23
    %p34 = scmp.eq.s32.totalorder %s14, 0
    %p35 = por %p33, %p34
    %p36 = scmp.ne.s32.totalorder %s22, %s23
    %p37 = scmp.eq.s32.totalorder %s15, 1
    %p38 = por %p36, %p37
    %p40 = scmp.ne.s32.totalorder %s23, %s39
    %p41 = scmp.eq.s32.totalorder %s15, 0
    %p42 = por %p40, %p41
    %s44 = sadd.s32 %s43, 1
    %p47 = scmp.eq.s32.totalorder %s9, 1
    %p48 = scmp.ne.s32.totalorder %s43, %s45
    %p49 = scmp.eq.s32.totalorder %s9, 0
    %p50 = por %p48, %p49
    %p51 = scmp.ne.s32.totalorder %s43, %s45
    %p52 = scmp.eq.s32.totalorder %s14, 1
    %p53 = por %p51, %p52
    %p54 = scmp.ne.s32.totalorder %s45, %s46
    %p55 = scmp.eq.s32.totalorder %s14, 0
    %p56 = por %p54, %p55
    %p57 = scmp.ne.s32.totalorder %s45, %s46
    %p58 = scmp.eq.s32.totalorder %s15, 1
    %p59 = por %p57, %p58
    %p61 = scmp.ne.s32.totalorder %s46, %s60
    %p62 = scmp.eq.s32.totalorder %s15, 0
    %p63 = por %p61, %p62
    %s65 = sadd.s32 %s64, 1
    %p68 = scmp.eq.s32.totalorder %s9, 1
    %p69 = scmp.ne.s32.totalorder %s64, %s66
    %p70 = scmp.eq.s32.totalorder %s9, 0
    %p71 = por %p69, %p70
    %p72 = scmp.ne.s32.totalorder %s64, %s66
    %p73 = scmp.eq.s32.totalorder %s14, 1
    %p74 = por %p72, %p73
    %p75 = scmp.ne.s32.totalorder %s66, %s67
    %p76 = scmp.eq.s32.totalorder %s14, 0
    %p77 = por %p75, %p76
    %p78 = scmp.ne.s32.totalorder %s66, %s67
    %p79 = scmp.eq.s32.totalorder %s15, 1
    %p80 = por %p78, %p79
    %p82 = scmp.ne.s32.totalorder %s67, %s81
    %p83 = scmp.eq.s32.totalorder %s15, 0
    %p84 = por %p82, %p83
    %s85 = ssub.s32 %s9, %s16
    %p86 = scmp.eq.s32.totalorder %s85, 0
    %s88 = sadd.s32 %s87, 1
    %s89 = scalar_select %p86, %s87, %s88
    %p92 = pneg %p86
    %p93 = scmp.eq.s32.totalorder %s9, 1
    %p94 = por %p92, %p93
    %p95 = scmp.ne.s32.totalorder %s87, %s90
    %p96 = scmp.eq.s32.totalorder %s9, 0
    %p97 = por %p95, %p96
    %p98 = scmp.ne.s32.totalorder %s87, %s90
    %p99 = scmp.eq.s32.totalorder %s14, 1
    %p100 = por %p98, %p99
    %p101 = scmp.ne.s32.totalorder %s90, %s91
    %p102 = scmp.eq.s32.totalorder %s14, 0
    %p103 = por %p101, %p102
    %p104 = scmp.ne.s32.totalorder %s90, %s91
    %p105 = scmp.eq.s32.totalorder %s15, 1
    %p106 = por %p104, %p105
    %p108 = scmp.ne.s32.totalorder %s91, %s107
    %p109 = scmp.eq.s32.totalorder %s15, 0
    %p110 = por %p108, %p109
    %p111 = scmp.le.s32.totalorder 1, %s9
    %p112 = scmp.lt.s32.totalorder %s9, 3
    %p113 = pnand %p111, %p112
    %p114 = pneg %p113
    // Predicated region
    $region9: #{run_chain.16} parent=5 // pred_check
      _
    $region10: #{run_chain.16} parent=5 // pred_check_branch
      %116 = sbr.rel (%p113) target = $region12
    $region11: #{run_chain.16} parent=5 // pred_region
      %s117 = ssub.s32 %s9, 1
      // Predicated region
      $region13: #{run_chain.16} parent=11 // pred_check
        %p118 = pneg %p56
      $region14: #{run_chain.16} parent=11 // pred_check_branch
        %120 = sbr.rel (%p118) target = $region16
      $region15: #{run_chain.16} parent=11 // pred_region
        _
      $region16: #{run_chain.16} parent=11 // pred_fallthru
        _
      // Predicated region
      $region17: #{run_chain.16} parent=11 // pred_check
        %p121 = pneg %p77
      $region18: #{run_chain.16} parent=11 // pred_check_branch
        %123 = sbr.rel (%p121) target = $region20
      $region19: #{run_chain.16} parent=11 // pred_region
        _
      $region20: #{run_chain.16} parent=11 // pred_fallthru
        _
    $region12: #{run_chain.16} parent=5 // pred_fallthru
      _
    %p124 = scmp.lt.s32.totalorder %s9, 2
    // Predicated region
    $region21: #{run_chain.16} parent=5 // pred_check
      %p125 = pneg %p124
    $region22: #{run_chain.16} parent=5 // pred_check_branch
      %127 = sbr.rel (%p125) target = $region24
    $region23: #{run_chain.16} parent=5 // pred_region
      // Predicated region
      $region25: #{run_chain.16} parent=23 // pred_check
        %p128 = pneg %p29
      $region26: #{run_chain.16} parent=23 // pred_check_branch
        %130 = sbr.rel (%p128) target = $region28
      $region27: #{run_chain.16} parent=23 // pred_region
        %p131 = scmp.lt.s32.totalorder %s9, 1
        %s132 = scalar_select %p131, %s9, 1
        %s133 = smul.addr %s132, 32
        %s134 = smul.addr %s133, 4
        %s135 = scalar_lea.vmem %s0, %s134
      $region28: #{run_chain.16} parent=23 // pred_fallthru
        _
    $region24: #{run_chain.16} parent=5 // pred_fallthru
      _
    %p136 = scmp.le.s32.totalorder 1, %s9
    %p137 = scmp.lt.s32.totalorder %s9, 3
    %p138 = pnand %p136, %p137
    %p139 = pneg %p138
    // Predicated region
    $region29: #{run_chain.16} parent=5 // pred_check
      _
    $region30: #{run_chain.16} parent=5 // pred_check_branch
      %141 = sbr.rel (%p138) target = $region32
    $region31: #{run_chain.16} parent=5 // pred_region
      %s142 = ssub.s32 %s9, 1
      %p143 = scmp.lt.s32.totalorder %s14, 1
      %s144 = scalar_select %p143, %s14, 1
      %s145 = smul.addr %s144, 32
      %s146 = smul.addr %s145, 4
      %s147 = scalar_lea.vmem %s0, %s146
      %p148 = pneg %p35
      %p149 = pneg %p32
      %p150 = pneg %p56
      %p151 = pneg %p53
      %p152 = pneg %p77
      %p153 = pneg %p74
      %p154 = pneg %p103
      %p155 = pneg %p100
      %p156 = scmp.lt.s32.totalorder %s14, 1
      %s157 = scalar_select %p156, %s14, 1
      %s158 = smul.addr %s157, 16
      %s159 = smul.addr %s158, 4
      %s160 = scalar_lea.vmem %s3, %s159
      %p161 = scmp.lt.s32.totalorder %s14, 1
      %s162 = scalar_select %p161, %s14, 1
      %s163 = smul.addr %s162, 32
      %s164 = smul.addr %s163, 4
      %s165 = scalar_lea.vmem %s0, %s164
      %p166 = scmp.lt.s32.totalorder %s14, 1
      %s167 = scalar_select %p166, %s14, 1
      %s168 = smul.addr %s167, 16
      %s169 = smul.addr %s168, 4
      %s170 = scalar_lea.vmem %s3, %s169
      %v171 = vld [vmem:[%s165] sm:$0xf]
      %v172 = vld [vmem:[%s165 + $0x4] sm:$0xf]
      %v173 = vld [vmem:[%s165 + $0x8] sm:$0xf]
      %v174 = vld [vmem:[%s165 + $0xc] sm:$0xf]
      %v175 = vld [vmem:[%s165 + $0x10] sm:$0xf]
      %v176 = vld [vmem:[%s165 + $0x14] sm:$0xf]
      %v177 = vld [vmem:[%s165 + $0x18] sm:$0xf]
      %v178 = vld [vmem:[%s165 + $0x1c] sm:$0xf]
      %v179 = vld [vmem:[%s165 + $0x20] sm:$0xf]
      %v180 = vld [vmem:[%s165 + $0x24] sm:$0xf]
      %v181 = vld [vmem:[%s165 + $0x28] sm:$0xf]
      %v182 = vld [vmem:[%s165 + $0x2c] sm:$0xf]
      %v183 = vld [vmem:[%s165 + $0x30] sm:$0xf]
      %v184 = vld [vmem:[%s165 + $0x34] sm:$0xf]
      %v185 = vld [vmem:[%s165 + $0x38] sm:$0xf]
      %v186 = vld [vmem:[%s165 + $0x3c] sm:$0xf]
      %v187 = vld [vmem:[%s165 + $0x40] sm:$0xf]
      %v188 = vld [vmem:[%s165 + $0x44] sm:$0xf]
      %v189 = vld [vmem:[%s165 + $0x48] sm:$0xf]
      %v190 = vld [vmem:[%s165 + $0x4c] sm:$0xf]
      %v191 = vld [vmem:[%s165 + $0x50] sm:$0xf]
      %v192 = vld [vmem:[%s165 + $0x54] sm:$0xf]
      %v193 = vld [vmem:[%s165 + $0x58] sm:$0xf]
      %v194 = vld [vmem:[%s165 + $0x5c] sm:$0xf]
      %v195 = vld [vmem:[%s165 + $0x60] sm:$0xf]
      %v196 = vld [vmem:[%s165 + $0x64] sm:$0xf]
      %v197 = vld [vmem:[%s165 + $0x68] sm:$0xf]
      %v198 = vld [vmem:[%s165 + $0x6c] sm:$0xf]
      %v199 = vld [vmem:[%s165 + $0x70] sm:$0xf]
      %v200 = vld [vmem:[%s165 + $0x74] sm:$0xf]
      %v201 = vld [vmem:[%s165 + $0x78] sm:$0xf]
      %v202 = vld [vmem:[%s165 + $0x7c] sm:$0xf]
      %v203 = vunpack.c.l.bf16 %v171
      %v204 = vunpack.c.l.bf16 %v172
      %v205 = vunpack.c.l.bf16 %v173
      %v206 = vunpack.c.l.bf16 %v174
      %v207 = vunpack.c.l.bf16 %v175
      %v208 = vunpack.c.l.bf16 %v176
      %v209 = vunpack.c.l.bf16 %v177
      %v210 = vunpack.c.l.bf16 %v178
      %v211 = vunpack.c.l.bf16 %v179
      %v212 = vunpack.c.l.bf16 %v180
      %v213 = vunpack.c.l.bf16 %v181
      %v214 = vunpack.c.l.bf16 %v182
      %v215 = vunpack.c.l.bf16 %v183
      %v216 = vunpack.c.l.bf16 %v184
      %v217 = vunpack.c.l.bf16 %v185
      %v218 = vunpack.c.l.bf16 %v186
      %v219 = vunpack.c.l.bf16 %v187
      %v220 = vunpack.c.l.bf16 %v188
      %v221 = vunpack.c.l.bf16 %v189
      %v222 = vunpack.c.l.bf16 %v190
      %v223 = vunpack.c.l.bf16 %v191
      %v224 = vunpack.c.l.bf16 %v192
      %v225 = vunpack.c.l.bf16 %v193
      %v226 = vunpack.c.l.bf16 %v194
      %v227 = vunpack.c.l.bf16 %v195
      %v228 = vunpack.c.l.bf16 %v196
      %v229 = vunpack.c.l.bf16 %v197
      %v230 = vunpack.c.l.bf16 %v198
      %v231 = vunpack.c.l.bf16 %v199
      %v232 = vunpack.c.l.bf16 %v200
      %v233 = vunpack.c.l.bf16 %v201
      %v234 = vunpack.c.l.bf16 %v202
      %v235 = vld [vmem:[%s1] sm:$0x1]
      %v237 = vlaneseq
      %v238 = vshrl.u32 %v237, 7
      %v239 = vsub.s32 0, %v238
      %v240 = vrot.slane %v235, %v239
      %v242 = vmul.f32 %v203, %v240
      %v243 = vmul.f32 %v204, %v240
      %v244 = vmul.f32 %v205, %v240
      %v245 = vmul.f32 %v206, %v240
      %v246 = vmul.f32 %v207, %v240
      %v247 = vmul.f32 %v208, %v240
      %v248 = vmul.f32 %v209, %v240
      %v249 = vmul.f32 %v210, %v240
      %v250 = vmul.f32 %v211, %v240
      %v251 = vmul.f32 %v212, %v240
      %v252 = vmul.f32 %v213, %v240
      %v253 = vmul.f32 %v214, %v240
      %v254 = vmul.f32 %v215, %v240
      %v255 = vmul.f32 %v216, %v240
      %v256 = vmul.f32 %v217, %v240
      %v257 = vmul.f32 %v218, %v240
      %v258 = vmul.f32 %v219, %v240
      %v259 = vmul.f32 %v220, %v240
      %v260 = vmul.f32 %v221, %v240
      %v261 = vmul.f32 %v222, %v240
      %v262 = vmul.f32 %v223, %v240
      %v263 = vmul.f32 %v224, %v240
      %v264 = vmul.f32 %v225, %v240
      %v265 = vmul.f32 %v226, %v240
      %v266 = vmul.f32 %v227, %v240
      %v267 = vmul.f32 %v228, %v240
      %v268 = vmul.f32 %v229, %v240
      %v269 = vmul.f32 %v230, %v240
      %v270 = vmul.f32 %v231, %v240
      %v271 = vmul.f32 %v232, %v240
      %v272 = vmul.f32 %v233, %v240
      %v273 = vmul.f32 %v234, %v240
      %v274 = vld [vmem:[%s2] sm:$0x1]
      %v276 = vlaneseq
      %v277 = vshrl.u32 %v276, 7
      %v278 = vsub.s32 0, %v277
      %v279 = vrot.slane %v274, %v278
      %v281 = vadd.f32 %v242, %v279
      %v282 = vadd.f32 %v243, %v279
      %v283 = vadd.f32 %v244, %v279
      %v284 = vadd.f32 %v245, %v279
      %v285 = vadd.f32 %v246, %v279
      %v286 = vadd.f32 %v247, %v279
      %v287 = vadd.f32 %v248, %v279
      %v288 = vadd.f32 %v249, %v279
      %v289 = vadd.f32 %v250, %v279
      %v290 = vadd.f32 %v251, %v279
      %v291 = vadd.f32 %v252, %v279
      %v292 = vadd.f32 %v253, %v279
      %v293 = vadd.f32 %v254, %v279
      %v294 = vadd.f32 %v255, %v279
      %v295 = vadd.f32 %v256, %v279
      %v296 = vadd.f32 %v257, %v279
      %v297 = vadd.f32 %v258, %v279
      %v298 = vadd.f32 %v259, %v279
      %v299 = vadd.f32 %v260, %v279
      %v300 = vadd.f32 %v261, %v279
      %v301 = vadd.f32 %v262, %v279
      %v302 = vadd.f32 %v263, %v279
      %v303 = vadd.f32 %v264, %v279
      %v304 = vadd.f32 %v265, %v279
      %v305 = vadd.f32 %v266, %v279
      %v306 = vadd.f32 %v267, %v279
      %v307 = vadd.f32 %v268, %v279
      %v308 = vadd.f32 %v269, %v279
      %v309 = vadd.f32 %v270, %v279
      %v310 = vadd.f32 %v271, %v279
      %v311 = vadd.f32 %v272, %v279
      %v312 = vadd.f32 %v273, %v279
      %313 = vst [vmem:[#allocation2] sm:$0xff] -inf
      %314 = vst [vmem:[#allocation2 + $0x8] sm:$0xff] -inf
      %315 = vst [vmem:[#allocation2 + $0x10] sm:$0xff] -inf
      %316 = vst [vmem:[#allocation2 + $0x18] sm:$0xff] -inf
      %s317 = scalar_lea.vmem [#allocation2], 544
      %318 = vst [vmem:[%s317] sm:$0xff] -inf
      %319 = vst [vmem:[%s317 + $0x8] sm:$0xff] -inf
      %320 = vst [vmem:[%s317 + $0x10] sm:$0xff] -inf
      %321 = vst [vmem:[%s317 + $0x18] sm:$0xff] -inf
      %s322 = scalar_lea.vmem [#allocation2], 32
      %323 = vst [vmem:[%s322] sm:$0xff] -inf
      %324 = vst [vmem:[%s322 + $0x20] sm:$0xff] -inf
      %325 = vst [vmem:[%s322 + $0x40] sm:$0xff] -inf
      %326 = vst [vmem:[%s322 + $0x60] sm:$0xff] -inf
      %327 = vst [vmem:[%s322 + $0x80] sm:$0xff] -inf
      %328 = vst [vmem:[%s322 + $0xa0] sm:$0xff] -inf
      %329 = vst [vmem:[%s322 + $0xc0] sm:$0xff] -inf
      %330 = vst [vmem:[%s322 + $0xe0] sm:$0xff] -inf
      %331 = vst [vmem:[%s322 + $0x100] sm:$0xff] -inf
      %332 = vst [vmem:[%s322 + $0x120] sm:$0xff] -inf
      %333 = vst [vmem:[%s322 + $0x140] sm:$0xff] -inf
      %334 = vst [vmem:[%s322 + $0x160] sm:$0xff] -inf
      %335 = vst [vmem:[%s322 + $0x180] sm:$0xff] -inf
      %336 = vst [vmem:[%s322 + $0x1a0] sm:$0xff] -inf
      %337 = vst [vmem:[%s322 + $0x1c0] sm:$0xff] -inf
      %338 = vst [vmem:[%s322 + $0x1e0] sm:$0xff] -inf
      %339 = vst [vmem:[%s322 + $0x18] sm:$0xff] -inf
      %340 = vst [vmem:[%s322 + $0x38] sm:$0xff] -inf
      %341 = vst [vmem:[%s322 + $0x58] sm:$0xff] -inf
      %342 = vst [vmem:[%s322 + $0x78] sm:$0xff] -inf
      %343 = vst [vmem:[%s322 + $0x98] sm:$0xff] -inf
      %344 = vst [vmem:[%s322 + $0xb8] sm:$0xff] -inf
      %345 = vst [vmem:[%s322 + $0xd8] sm:$0xff] -inf
      %346 = vst [vmem:[%s322 + $0xf8] sm:$0xff] -inf
      %347 = vst [vmem:[%s322 + $0x118] sm:$0xff] -inf
      %348 = vst [vmem:[%s322 + $0x138] sm:$0xff] -inf
      %349 = vst [vmem:[%s322 + $0x158] sm:$0xff] -inf
      %350 = vst [vmem:[%s322 + $0x178] sm:$0xff] -inf
      %351 = vst [vmem:[%s322 + $0x198] sm:$0xff] -inf
      %352 = vst [vmem:[%s322 + $0x1b8] sm:$0xff] -inf
      %353 = vst [vmem:[%s322 + $0x1d8] sm:$0xff] -inf
      %354 = vst [vmem:[%s322 + $0x1f8] sm:$0xff] -inf
      %355 = vst [vmem:[%s322 + $0x8] sm:$0xff] %v281
      %356 = vst [vmem:[%s322 + $0x10] sm:$0xff] %v282
      %357 = vst [vmem:[%s322 + $0x28] sm:$0xff] %v283
      %358 = vst [vmem:[%s322 + $0x30] sm:$0xff] %v284
      %359 = vst [vmem:[%s322 + $0x48] sm:$0xff] %v285
      %360 = vst [vmem:[%s322 + $0x50] sm:$0xff] %v286
      %361 = vst [vmem:[%s322 + $0x68] sm:$0xff] %v287
      %362 = vst [vmem:[%s322 + $0x70] sm:$0xff] %v288
      %363 = vst [vmem:[%s322 + $0x88] sm:$0xff] %v289
      %364 = vst [vmem:[%s322 + $0x90] sm:$0xff] %v290
      %365 = vst [vmem:[%s322 + $0xa8] sm:$0xff] %v291
      %366 = vst [vmem:[%s322 + $0xb0] sm:$0xff] %v292
      %367 = vst [vmem:[%s322 + $0xc8] sm:$0xff] %v293
      %368 = vst [vmem:[%s322 + $0xd0] sm:$0xff] %v294
      %369 = vst [vmem:[%s322 + $0xe8] sm:$0xff] %v295
      %370 = vst [vmem:[%s322 + $0xf0] sm:$0xff] %v296
      %371 = vst [vmem:[%s322 + $0x108] sm:$0xff] %v297
      %372 = vst [vmem:[%s322 + $0x110] sm:$0xff] %v298
      %373 = vst [vmem:[%s322 + $0x128] sm:$0xff] %v299
      %374 = vst [vmem:[%s322 + $0x130] sm:$0xff] %v300
      %375 = vst [vmem:[%s322 + $0x148] sm:$0xff] %v301
      %376 = vst [vmem:[%s322 + $0x150] sm:$0xff] %v302
      %377 = vst [vmem:[%s322 + $0x168] sm:$0xff] %v303
      %378 = vst [vmem:[%s322 + $0x170] sm:$0xff] %v304
      %379 = vst [vmem:[%s322 + $0x188] sm:$0xff] %v305
      %380 = vst [vmem:[%s322 + $0x190] sm:$0xff] %v306
      %381 = vst [vmem:[%s322 + $0x1a8] sm:$0xff] %v307
      %382 = vst [vmem:[%s322 + $0x1b0] sm:$0xff] %v308
      %383 = vst [vmem:[%s322 + $0x1c8] sm:$0xff] %v309
      %384 = vst [vmem:[%s322 + $0x1d0] sm:$0xff] %v310
      %385 = vst [vmem:[%s322 + $0x1e8] sm:$0xff] %v311
      %386 = vst [vmem:[%s322 + $0x1f0] sm:$0xff] %v312
      %v387 = vld [vmem:[#allocation2 + $0x7] sm:$0xff]
      %v388 = vld [vmem:[#allocation2 + $0xf] sm:$0xff]
      %v389 = vld [vmem:[#allocation2 + $0x27] sm:$0xff]
      %v390 = vld [vmem:[#allocation2 + $0x2f] sm:$0xff]
      %v391 = vld [vmem:[#allocation2 + $0x47] sm:$0xff]
      %v392 = vld [vmem:[#allocation2 + $0x4f] sm:$0xff]
      %v393 = vld [vmem:[#allocation2 + $0x67] sm:$0xff]
      %v394 = vld [vmem:[#allocation2 + $0x6f] sm:$0xff]
      %v395 = vld [vmem:[#allocation2 + $0x87] sm:$0xff]
      %v396 = vld [vmem:[#allocation2 + $0x8f] sm:$0xff]
      %v397 = vld [vmem:[#allocation2 + $0xa7] sm:$0xff]
      %v398 = vld [vmem:[#allocation2 + $0xaf] sm:$0xff]
      %v399 = vld [vmem:[#allocation2 + $0xc7] sm:$0xff]
      %v400 = vld [vmem:[#allocation2 + $0xcf] sm:$0xff]
      %v401 = vld [vmem:[#allocation2 + $0xe7] sm:$0xff]
      %v402 = vld [vmem:[#allocation2 + $0xef] sm:$0xff]
      %v403 = vld [vmem:[#allocation2 + $0x107] sm:$0xff]
      %v404 = vld [vmem:[#allocation2 + $0x10f] sm:$0xff]
      %v405 = vld [vmem:[#allocation2 + $0x127] sm:$0xff]
      %v406 = vld [vmem:[#allocation2 + $0x12f] sm:$0xff]
      %v407 = vld [vmem:[#allocation2 + $0x147] sm:$0xff]
      %v408 = vld [vmem:[#allocation2 + $0x14f] sm:$0xff]
      %v409 = vld [vmem:[#allocation2 + $0x167] sm:$0xff]
      %v410 = vld [vmem:[#allocation2 + $0x16f] sm:$0xff]
      %v411 = vld [vmem:[#allocation2 + $0x187] sm:$0xff]
      %v412 = vld [vmem:[#allocation2 + $0x18f] sm:$0xff]
      %v413 = vld [vmem:[#allocation2 + $0x1a7] sm:$0xff]
      %v414 = vld [vmem:[#allocation2 + $0x1af] sm:$0xff]
      %v415 = vld [vmem:[#allocation2 + $0x1c7] sm:$0xff]
      %v416 = vld [vmem:[#allocation2 + $0x1cf] sm:$0xff]
      %v417 = vld [vmem:[#allocation2 + $0x1e7] sm:$0xff]
      %v418 = vld [vmem:[#allocation2 + $0x1ef] sm:$0xff]
      %v419 = vld [vmem:[#allocation2 + $0x207] sm:$0xff]
      %v420 = vld [vmem:[#allocation2 + $0x20f] sm:$0xff]
      %v421 = vld [vmem:[#allocation2 + $0x8] sm:$0xff]
      %v422 = vld [vmem:[#allocation2 + $0x10] sm:$0xff]
      %v423 = vld [vmem:[#allocation2 + $0x28] sm:$0xff]
      %v424 = vld [vmem:[#allocation2 + $0x30] sm:$0xff]
      %v425 = vld [vmem:[#allocation2 + $0x48] sm:$0xff]
      %v426 = vld [vmem:[#allocation2 + $0x50] sm:$0xff]
      %v427 = vld [vmem:[#allocation2 + $0x68] sm:$0xff]
      %v428 = vld [vmem:[#allocation2 + $0x70] sm:$0xff]
      %v429 = vld [vmem:[#allocation2 + $0x88] sm:$0xff]
      %v430 = vld [vmem:[#allocation2 + $0x90] sm:$0xff]
      %v431 = vld [vmem:[#allocation2 + $0xa8] sm:$0xff]
      %v432 = vld [vmem:[#allocation2 + $0xb0] sm:$0xff]
      %v433 = vld [vmem:[#allocation2 + $0xc8] sm:$0xff]
      %v434 = vld [vmem:[#allocation2 + $0xd0] sm:$0xff]
      %v435 = vld [vmem:[#allocation2 + $0xe8] sm:$0xff]
      %v436 = vld [vmem:[#allocation2 + $0xf0] sm:$0xff]
      %v437 = vld [vmem:[#allocation2 + $0x108] sm:$0xff]
      %v438 = vld [vmem:[#allocation2 + $0x110] sm:$0xff]
      %v439 = vld [vmem:[#allocation2 + $0x128] sm:$0xff]
      %v440 = vld [vmem:[#allocation2 + $0x130] sm:$0xff]
      %v441 = vld [vmem:[#allocation2 + $0x148] sm:$0xff]
      %v442 = vld [vmem:[#allocation2 + $0x150] sm:$0xff]
      %v443 = vld [vmem:[#allocation2 + $0x168] sm:$0xff]
      %v444 = vld [vmem:[#allocation2 + $0x170] sm:$0xff]
      %v445 = vld [vmem:[#allocation2 + $0x188] sm:$0xff]
      %v446 = vld [vmem:[#allocation2 + $0x190] sm:$0xff]
      %v447 = vld [vmem:[#allocation2 + $0x1a8] sm:$0xff]
      %v448 = vld [vmem:[#allocation2 + $0x1b0] sm:$0xff]
      %v449 = vld [vmem:[#allocation2 + $0x1c8] sm:$0xff]
      %v450 = vld [vmem:[#allocation2 + $0x1d0] sm:$0xff]
      %v451 = vld [vmem:[#allocation2 + $0x1e8] sm:$0xff]
      %v452 = vld [vmem:[#allocation2 + $0x1f0] sm:$0xff]
      %v453 = vld [vmem:[#allocation2 + $0x208] sm:$0xff]
      %v454 = vld [vmem:[#allocation2 + $0x210] sm:$0xff]
      %v455 = vld [vmem:[#allocation2 + $0x9] sm:$0xff]
      %v456 = vld [vmem:[#allocation2 + $0x11] sm:$0xff]
      %v457 = vld [vmem:[#allocation2 + $0x29] sm:$0xff]
      %v458 = vld [vmem:[#allocation2 + $0x31] sm:$0xff]
      %v459 = vld [vmem:[#allocation2 + $0x49] sm:$0xff]
      %v460 = vld [vmem:[#allocation2 + $0x51] sm:$0xff]
      %v461 = vld [vmem:[#allocation2 + $0x69] sm:$0xff]
      %v462 = vld [vmem:[#allocation2 + $0x71] sm:$0xff]
      %v463 = vld [vmem:[#allocation2 + $0x89] sm:$0xff]
      %v464 = vld [vmem:[#allocation2 + $0x91] sm:$0xff]
      %v465 = vld [vmem:[#allocation2 + $0xa9] sm:$0xff]
      %v466 = vld [vmem:[#allocation2 + $0xb1] sm:$0xff]
      %v467 = vld [vmem:[#allocation2 + $0xc9] sm:$0xff]
      %v468 = vld [vmem:[#allocation2 + $0xd1] sm:$0xff]
      %v469 = vld [vmem:[#allocation2 + $0xe9] sm:$0xff]
      %v470 = vld [vmem:[#allocation2 + $0xf1] sm:$0xff]
      %v471 = vld [vmem:[#allocation2 + $0x109] sm:$0xff]
      %v472 = vld [vmem:[#allocation2 + $0x111] sm:$0xff]
      %v473 = vld [vmem:[#allocation2 + $0x129] sm:$0xff]
      %v474 = vld [vmem:[#allocation2 + $0x131] sm:$0xff]
      %v475 = vld [vmem:[#allocation2 + $0x149] sm:$0xff]
      %v476 = vld [vmem:[#allocation2 + $0x151] sm:$0xff]
      %v477 = vld [vmem:[#allocation2 + $0x169] sm:$0xff]
      %v478 = vld [vmem:[#allocation2 + $0x171] sm:$0xff]
      %v479 = vld [vmem:[#allocation2 + $0x189] sm:$0xff]
      %v480 = vld [vmem:[#allocation2 + $0x191] sm:$0xff]
      %v481 = vld [vmem:[#allocation2 + $0x1a9] sm:$0xff]
      %v482 = vld [vmem:[#allocation2 + $0x1b1] sm:$0xff]
      %v483 = vld [vmem:[#allocation2 + $0x1c9] sm:$0xff]
      %v484 = vld [vmem:[#allocation2 + $0x1d1] sm:$0xff]
      %v485 = vld [vmem:[#allocation2 + $0x1e9] sm:$0xff]
      %v486 = vld [vmem:[#allocation2 + $0x1f1] sm:$0xff]
      %v487 = vld [vmem:[#allocation2 + $0x209] sm:$0xff]
      %v488 = vld [vmem:[#allocation2 + $0x211] sm:$0xff]
      %v489 = vmax.f32 %v387, %v421
      %v490 = vmax.f32 %v388, %v422
      %v491 = vmax.f32 %v389, %v423
      %v492 = vmax.f32 %v390, %v424
      %v493 = vmax.f32 %v391, %v425
      %v494 = vmax.f32 %v392, %v426
      %v495 = vmax.f32 %v393, %v427
      %v496 = vmax.f32 %v394, %v428
      %v497 = vmax.f32 %v395, %v429
      %v498 = vmax.f32 %v396, %v430
      %v499 = vmax.f32 %v397, %v431
      %v500 = vmax.f32 %v398, %v432
      %v501 = vmax.f32 %v399, %v433
      %v502 = vmax.f32 %v400, %v434
      %v503 = vmax.f32 %v401, %v435
      %v504 = vmax.f32 %v402, %v436
      %v505 = vmax.f32 %v403, %v437
      %v506 = vmax.f32 %v404, %v438
      %v507 = vmax.f32 %v405, %v439
      %v508 = vmax.f32 %v406, %v440
      %v509 = vmax.f32 %v407, %v441
      %v510 = vmax.f32 %v408, %v442
      %v511 = vmax.f32 %v409, %v443
      %v512 = vmax.f32 %v410, %v444
      %v513 = vmax.f32 %v411, %v445
      %v514 = vmax.f32 %v412, %v446
      %v515 = vmax.f32 %v413, %v447
      %v516 = vmax.f32 %v414, %v448
      %v517 = vmax.f32 %v415, %v449
      %v518 = vmax.f32 %v416, %v450
      %v519 = vmax.f32 %v417, %v451
      %v520 = vmax.f32 %v418, %v452
      %v521 = vmax.f32 %v419, %v453
      %v522 = vmax.f32 %v420, %v454
      %v523 = vmax.f32 %v489, %v455
      %v524 = vmax.f32 %v490, %v456
      %v525 = vmax.f32 %v491, %v457
      %v526 = vmax.f32 %v492, %v458
      %v527 = vmax.f32 %v493, %v459
      %v528 = vmax.f32 %v494, %v460
      %v529 = vmax.f32 %v495, %v461
      %v530 = vmax.f32 %v496, %v462
      %v531 = vmax.f32 %v497, %v463
      %v532 = vmax.f32 %v498, %v464
      %v533 = vmax.f32 %v499, %v465
      %v534 = vmax.f32 %v500, %v466
      %v535 = vmax.f32 %v501, %v467
      %v536 = vmax.f32 %v502, %v468
      %v537 = vmax.f32 %v503, %v469
      %v538 = vmax.f32 %v504, %v470
      %v539 = vmax.f32 %v505, %v471
      %v540 = vmax.f32 %v506, %v472
      %v541 = vmax.f32 %v507, %v473
      %v542 = vmax.f32 %v508, %v474
      %v543 = vmax.f32 %v509, %v475
      %v544 = vmax.f32 %v510, %v476
      %v545 = vmax.f32 %v511, %v477
      %v546 = vmax.f32 %v512, %v478
      %v547 = vmax.f32 %v513, %v479
      %v548 = vmax.f32 %v514, %v480
      %v549 = vmax.f32 %v515, %v481
      %v550 = vmax.f32 %v516, %v482
      %v551 = vmax.f32 %v517, %v483
      %v552 = vmax.f32 %v518, %v484
      %v553 = vmax.f32 %v519, %v485
      %v554 = vmax.f32 %v520, %v486
      %v555 = vmax.f32 %v521, %v487
      %v556 = vmax.f32 %v522, %v488
      %v557 = vmax.f32 %v523, %v525
      %v558 = vmax.f32 %v524, %v526
      %v559 = vmax.f32 %v557, %v527
      %v560 = vmax.f32 %v558, %v528
      %v561 = vpack.c.bf16 %v560, %v559
      %v563 = vunpack.c.l.b16 %v561
      %v564 = vunpack.c.h.b16 %v561
      %v565 = vpack.c.b16 %v563, %v563
      %v566 = vpack.c.b16 %v564, %v564
      %569 = vst [vmem:[%s170] sm:$0xf] %v565
      %570 = vst [vmem:[%s170 + $0x4] sm:$0xf] %v566
      %v571 = vmax.f32 %v527, %v529
      %v572 = vmax.f32 %v528, %v530
      %v573 = vmax.f32 %v571, %v531
      %v574 = vmax.f32 %v572, %v532
      %v575 = vpack.c.bf16 %v574, %v573
      %v577 = vunpack.c.l.b16 %v575
      %v578 = vunpack.c.h.b16 %v575
      %v579 = vpack.c.b16 %v577, %v577
      %v580 = vpack.c.b16 %v578, %v578
      %s583 = scalar_lea.vmem %s170, 8
      %584 = vst [vmem:[%s583] sm:$0xf] %v579
      %585 = vst [vmem:[%s583 + $0x4] sm:$0xf] %v580
      %v586 = vmax.f32 %v531, %v533
      %v587 = vmax.f32 %v532, %v534
      %v588 = vmax.f32 %v586, %v535
      %v589 = vmax.f32 %v587, %v536
      %v590 = vpack.c.bf16 %v589, %v588
      %v592 = vunpack.c.l.b16 %v590
      %v593 = vunpack.c.h.b16 %v590
      %v594 = vpack.c.b16 %v592, %v592
      %v595 = vpack.c.b16 %v593, %v593
      %s598 = scalar_lea.vmem %s170, 16
      %599 = vst [vmem:[%s598] sm:$0xf] %v594
      %600 = vst [vmem:[%s598 + $0x4] sm:$0xf] %v595
      %v601 = vmax.f32 %v535, %v537
      %v602 = vmax.f32 %v536, %v538
      %v603 = vmax.f32 %v601, %v539
      %v604 = vmax.f32 %v602, %v540
      %v605 = vpack.c.bf16 %v604, %v603
      %v607 = vunpack.c.l.b16 %v605
      %v608 = vunpack.c.h.b16 %v605
      %v609 = vpack.c.b16 %v607, %v607
      %v610 = vpack.c.b16 %v608, %v608
      %s613 = scalar_lea.vmem %s170, 24
      %614 = vst [vmem:[%s613] sm:$0xf] %v609
      %615 = vst [vmem:[%s613 + $0x4] sm:$0xf] %v610
      %v616 = vmax.f32 %v539, %v541
      %v617 = vmax.f32 %v540, %v542
      %v618 = vmax.f32 %v616, %v543
      %v619 = vmax.f32 %v617, %v544
      %v620 = vpack.c.bf16 %v619, %v618
      %v622 = vunpack.c.l.b16 %v620
      %v623 = vunpack.c.h.b16 %v620
      %v624 = vpack.c.b16 %v622, %v622
      %v625 = vpack.c.b16 %v623, %v623
      %s628 = scalar_lea.vmem %s170, 32
      %629 = vst [vmem:[%s628] sm:$0xf] %v624
      %630 = vst [vmem:[%s628 + $0x4] sm:$0xf] %v625
      %v631 = vmax.f32 %v543, %v545
      %v632 = vmax.f32 %v544, %v546
      %v633 = vmax.f32 %v631, %v547
      %v634 = vmax.f32 %v632, %v548
      %v635 = vpack.c.bf16 %v634, %v633
      %v637 = vunpack.c.l.b16 %v635
      %v638 = vunpack.c.h.b16 %v635
      %v639 = vpack.c.b16 %v637, %v637
      %v640 = vpack.c.b16 %v638, %v638
      %s643 = scalar_lea.vmem %s170, 40
      %644 = vst [vmem:[%s643] sm:$0xf] %v639
      %645 = vst [vmem:[%s643 + $0x4] sm:$0xf] %v640
      %v646 = vmax.f32 %v547, %v549
      %v647 = vmax.f32 %v548, %v550
      %v648 = vmax.f32 %v646, %v551
      %v649 = vmax.f32 %v647, %v552
      %v650 = vpack.c.bf16 %v649, %v648
      %v652 = vunpack.c.l.b16 %v650
      %v653 = vunpack.c.h.b16 %v650
      %v654 = vpack.c.b16 %v652, %v652
      %v655 = vpack.c.b16 %v653, %v653
      %s658 = scalar_lea.vmem %s170, 48
      %659 = vst [vmem:[%s658] sm:$0xf] %v654
      %660 = vst [vmem:[%s658 + $0x4] sm:$0xf] %v655
      %v661 = vmax.f32 %v551, %v553
      %v662 = vmax.f32 %v552, %v554
      %v663 = vmax.f32 %v661, %v555
      %v664 = vmax.f32 %v662, %v556
      %v665 = vpack.c.bf16 %v664, %v663
      %v667 = vunpack.c.l.b16 %v665
      %v668 = vunpack.c.h.b16 %v665
      %v669 = vpack.c.b16 %v667, %v667
      %v670 = vpack.c.b16 %v668, %v668
      %s673 = scalar_lea.vmem %s170, 56
      %674 = vst [vmem:[%s673] sm:$0xf] %v669
      %675 = vst [vmem:[%s673 + $0x4] sm:$0xf] %v670
      %p676 = scmp.lt.s32.totalorder %s14, 1
      %s677 = scalar_select %p676, %s14, 1
      %s678 = smul.addr %s677, 16
      %s679 = smul.addr %s678, 4
      %s680 = scalar_lea.vmem %s3, %s679
      // Predicated region
      $region33: #{run_chain.16} parent=31 // pred_check
        %p681 = pneg %p100
      $region34: #{run_chain.16} parent=31 // pred_check_branch
        %683 = sbr.rel (%p681) target = $region36
      $region35: #{run_chain.16} parent=31 // pred_region
        _
      $region36: #{run_chain.16} parent=31 // pred_fallthru
        _
    $region32: #{run_chain.16} parent=5 // pred_fallthru
      _
    %p684 = scmp.le.s32.totalorder 2, %s9
    // Predicated region
    $region37: #{run_chain.16} parent=5 // pred_check
      %p685 = pneg %p684
    $region38: #{run_chain.16} parent=5 // pred_check_branch
      %687 = sbr.rel (%p685) target = $region40
    $region39: #{run_chain.16} parent=5 // pred_region
      %s688 = ssub.s32 %s9, 2
      // Predicated region
      $region41: #{run_chain.16} parent=39 // pred_check
        %p689 = pneg %p106
      $region42: #{run_chain.16} parent=39 // pred_check_branch
        %691 = sbr.rel (%p689) target = $region44
      $region43: #{run_chain.16} parent=39 // pred_region
        %p692 = scmp.lt.s32.totalorder %s15, 1
        %s693 = scalar_select %p692, %s15, 1
        %s694 = smul.addr %s693, 16
        %s695 = smul.addr %s694, 4
        %s696 = scalar_lea.vmem %s3, %s695
      $region44: #{run_chain.16} parent=39 // pred_fallthru
        _
    $region40: #{run_chain.16} parent=5 // pred_fallthru
      _
  $region6: #{run_chain.16} parent=0 // loop_footer
    %s13 = sadd.s32 1, %s9
  $region7: #{run_chain.16} parent=0 // loop_footer_branch
    %8 = sbr.rel target = $region3
  $region8: #{run_chain.16} parent=0 // loop_exit
    _

// kernel: run_chain.17
$region0: #{run_chain.17}
  #allocation0 [shape = 'u32[]', space=smem, size = 0x4, offset = 0x4, fixed_abs, tag = 'smem constant byte address 0x4 - core index']
  #allocation1 [shape = 'u32[144,128]{1,0:T(1,128)}', space=vmem, size = 0x12000, scoped, tag = 'internal scratch']
  %s0 = inlined_call_operand.vmem [shape: bf16[128,128], index: 0, kind: input, shape index: {}]
  %s1 = inlined_call_operand.vmem [shape: f32[1,128], index: 1, kind: input, shape index: {}]
  %s2 = inlined_call_operand.vmem [shape: f32[1,128], index: 2, kind: input, shape index: {}]
  %s3 = inlined_call_operand.vmem [shape: bf16[128,128], index: 3, kind: input, shape index: {}]
  %s4 = inlined_call_operand.vmem [shape: bf16[128,128], index: 4, kind: output, shape index: {}]
  %s5 = sld [smem:[#allocation0]]
  $region26: #{run_chain.17} parent=0
    _
  %s7 = ssub.s32 1, %s5
  %s8 = scalar_select 0, %s7, %s5
  // Predicated region
  $region2: #{run_chain.17} parent=0 // pred_check
    _
  $region3: #{run_chain.17} parent=0 // pred_check_branch
    %10 = sbr.rel (0) target = $region5
  $region4: #{run_chain.17} parent=0 // pred_region
    _
  $region5: #{run_chain.17} parent=0 // pred_fallthru
    _
  // Predicated region
  $region6: #{run_chain.17} parent=0 // pred_check
    _
  $region7: #{run_chain.17} parent=0 // pred_check_branch
    %12 = sbr.rel (0) target = $region9
  $region8: #{run_chain.17} parent=0 // pred_region
    _
  $region9: #{run_chain.17} parent=0 // pred_fallthru
    _
  // Predicated region
  $region10: #{run_chain.17} parent=0 // pred_check
    _
  $region11: #{run_chain.17} parent=0 // pred_check_branch
    %14 = sbr.rel (0) target = $region13
  $region12: #{run_chain.17} parent=0 // pred_region
    _
  $region13: #{run_chain.17} parent=0 // pred_fallthru
    _
  // Predicated region
  $region14: #{run_chain.17} parent=0 // pred_check
    _
  $region15: #{run_chain.17} parent=0 // pred_check_branch
    %16 = sbr.rel (0) target = $region17
  $region16: #{run_chain.17} parent=0 // pred_region
    _
  $region17: #{run_chain.17} parent=0 // pred_fallthru
    _
  %v17 = vld [vmem:[%s0] sm:$0xf]
  %v18 = vld [vmem:[%s0 + $0x4] sm:$0xf]
  %v19 = vld [vmem:[%s0 + $0x8] sm:$0xf]
  %v20 = vld [vmem:[%s0 + $0xc] sm:$0xf]
  %v21 = vld [vmem:[%s0 + $0x10] sm:$0xf]
  %v22 = vld [vmem:[%s0 + $0x14] sm:$0xf]
  %v23 = vld [vmem:[%s0 + $0x18] sm:$0xf]
  %v24 = vld [vmem:[%s0 + $0x1c] sm:$0xf]
  %v25 = vld [vmem:[%s0 + $0x20] sm:$0xf]
  %v26 = vld [vmem:[%s0 + $0x24] sm:$0xf]
  %v27 = vld [vmem:[%s0 + $0x28] sm:$0xf]
  %v28 = vld [vmem:[%s0 + $0x2c] sm:$0xf]
  %v29 = vld [vmem:[%s0 + $0x30] sm:$0xf]
  %v30 = vld [vmem:[%s0 + $0x34] sm:$0xf]
  %v31 = vld [vmem:[%s0 + $0x38] sm:$0xf]
  %v32 = vld [vmem:[%s0 + $0x3c] sm:$0xf]
  %v33 = vunpack.c.l.bf16 %v17
  %v34 = vunpack.c.l.bf16 %v18
  %v35 = vunpack.c.l.bf16 %v19
  %v36 = vunpack.c.l.bf16 %v20
  %v37 = vunpack.c.l.bf16 %v21
  %v38 = vunpack.c.l.bf16 %v22
  %v39 = vunpack.c.l.bf16 %v23
  %v40 = vunpack.c.l.bf16 %v24
  %v41 = vunpack.c.l.bf16 %v25
  %v42 = vunpack.c.l.bf16 %v26
  %v43 = vunpack.c.l.bf16 %v27
  %v44 = vunpack.c.l.bf16 %v28
  %v45 = vunpack.c.l.bf16 %v29
  %v46 = vunpack.c.l.bf16 %v30
  %v47 = vunpack.c.l.bf16 %v31
  %v48 = vunpack.c.l.bf16 %v32
  %v49 = vld [vmem:[%s1] sm:$0x1]
  %v51 = vlaneseq
  %v52 = vshrl.u32 %v51, 7
  %v53 = vsub.s32 0, %v52
  %v54 = vrot.slane %v49, %v53
  %v56 = vmul.f32 %v33, %v54
  %v57 = vmul.f32 %v34, %v54
  %v58 = vmul.f32 %v35, %v54
  %v59 = vmul.f32 %v36, %v54
  %v60 = vmul.f32 %v37, %v54
  %v61 = vmul.f32 %v38, %v54
  %v62 = vmul.f32 %v39, %v54
  %v63 = vmul.f32 %v40, %v54
  %v64 = vmul.f32 %v41, %v54
  %v65 = vmul.f32 %v42, %v54
  %v66 = vmul.f32 %v43, %v54
  %v67 = vmul.f32 %v44, %v54
  %v68 = vmul.f32 %v45, %v54
  %v69 = vmul.f32 %v46, %v54
  %v70 = vmul.f32 %v47, %v54
  %v71 = vmul.f32 %v48, %v54
  %v72 = vld [vmem:[%s2] sm:$0x1]
  %v74 = vlaneseq
  %v75 = vshrl.u32 %v74, 7
  %v76 = vsub.s32 0, %v75
  %v77 = vrot.slane %v72, %v76
  %v79 = vadd.f32 %v56, %v77
  %v80 = vadd.f32 %v57, %v77
  %v81 = vadd.f32 %v58, %v77
  %v82 = vadd.f32 %v59, %v77
  %v83 = vadd.f32 %v60, %v77
  %v84 = vadd.f32 %v61, %v77
  %v85 = vadd.f32 %v62, %v77
  %v86 = vadd.f32 %v63, %v77
  %v87 = vadd.f32 %v64, %v77
  %v88 = vadd.f32 %v65, %v77
  %v89 = vadd.f32 %v66, %v77
  %v90 = vadd.f32 %v67, %v77
  %v91 = vadd.f32 %v68, %v77
  %v92 = vadd.f32 %v69, %v77
  %v93 = vadd.f32 %v70, %v77
  %v94 = vadd.f32 %v71, %v77
  %v95 = vld [vmem:[%s3] sm:$0xf]
  %v96 = vld [vmem:[%s3 + $0x4] sm:$0xf]
  %v97 = vld [vmem:[%s3 + $0x8] sm:$0xf]
  %v98 = vld [vmem:[%s3 + $0xc] sm:$0xf]
  %v99 = vld [vmem:[%s3 + $0x10] sm:$0xf]
  %v100 = vld [vmem:[%s3 + $0x14] sm:$0xf]
  %v101 = vld [vmem:[%s3 + $0x18] sm:$0xf]
  %v102 = vld [vmem:[%s3 + $0x1c] sm:$0xf]
  %v103 = vld [vmem:[%s3 + $0x20] sm:$0xf]
  %v104 = vld [vmem:[%s3 + $0x24] sm:$0xf]
  %v105 = vld [vmem:[%s3 + $0x28] sm:$0xf]
  %v106 = vld [vmem:[%s3 + $0x2c] sm:$0xf]
  %v107 = vld [vmem:[%s3 + $0x30] sm:$0xf]
  %v108 = vld [vmem:[%s3 + $0x34] sm:$0xf]
  %v109 = vld [vmem:[%s3 + $0x38] sm:$0xf]
  %v110 = vld [vmem:[%s3 + $0x3c] sm:$0xf]
  %v111 = vunpack.c.l.bf16 %v95
  %v112 = vunpack.c.l.bf16 %v96
  %v113 = vunpack.c.l.bf16 %v97
  %v114 = vunpack.c.l.bf16 %v98
  %v115 = vunpack.c.l.bf16 %v99
  %v116 = vunpack.c.l.bf16 %v100
  %v117 = vunpack.c.l.bf16 %v101
  %v118 = vunpack.c.l.bf16 %v102
  %v119 = vunpack.c.l.bf16 %v103
  %v120 = vunpack.c.l.bf16 %v104
  %v121 = vunpack.c.l.bf16 %v105
  %v122 = vunpack.c.l.bf16 %v106
  %v123 = vunpack.c.l.bf16 %v107
  %v124 = vunpack.c.l.bf16 %v108
  %v125 = vunpack.c.l.bf16 %v109
  %v126 = vunpack.c.l.bf16 %v110
  %v127 = vadd.f32 %v79, %v111
  %v128 = vadd.f32 %v80, %v112
  %v129 = vadd.f32 %v81, %v113
  %v130 = vadd.f32 %v82, %v114
  %v131 = vadd.f32 %v83, %v115
  %v132 = vadd.f32 %v84, %v116
  %v133 = vadd.f32 %v85, %v117
  %v134 = vadd.f32 %v86, %v118
  %v135 = vadd.f32 %v87, %v119
  %v136 = vadd.f32 %v88, %v120
  %v137 = vadd.f32 %v89, %v121
  %v138 = vadd.f32 %v90, %v122
  %v139 = vadd.f32 %v91, %v123
  %v140 = vadd.f32 %v92, %v124
  %v141 = vadd.f32 %v93, %v125
  %v142 = vadd.f32 %v94, %v126
  %v143 = vpack.c.bf16 %v128, %v127
  %v144 = vpack.c.bf16 %v130, %v129
  %v145 = vpack.c.bf16 %v132, %v131
  %v146 = vpack.c.bf16 %v134, %v133
  %v147 = vpack.c.bf16 %v136, %v135
  %v148 = vpack.c.bf16 %v138, %v137
  %v149 = vpack.c.bf16 %v140, %v139
  %v150 = vpack.c.bf16 %v142, %v141
  %v159 = vunpack.c.l.b16 %v143
  %v160 = vunpack.c.h.b16 %v143
  %v161 = vunpack.c.l.b16 %v144
  %v162 = vunpack.c.h.b16 %v144
  %v163 = vunpack.c.l.b16 %v145
  %v164 = vunpack.c.h.b16 %v145
  %v165 = vunpack.c.l.b16 %v146
  %v166 = vunpack.c.h.b16 %v146
  %v167 = vunpack.c.l.b16 %v147
  %v168 = vunpack.c.h.b16 %v147
  %v169 = vunpack.c.l.b16 %v148
  %v170 = vunpack.c.h.b16 %v148
  %v171 = vunpack.c.l.b16 %v149
  %v172 = vunpack.c.h.b16 %v149
  %v173 = vunpack.c.l.b16 %v150
  %v174 = vunpack.c.h.b16 %v150
  %v175 = vpack.c.b16 %v159, %v159
  %v176 = vpack.c.b16 %v160, %v160
  %v177 = vpack.c.b16 %v161, %v161
  %v178 = vpack.c.b16 %v162, %v162
  %v179 = vpack.c.b16 %v163, %v163
  %v180 = vpack.c.b16 %v164, %v164
  %v181 = vpack.c.b16 %v165, %v165
  %v182 = vpack.c.b16 %v166, %v166
  %v183 = vpack.c.b16 %v167, %v167
  %v184 = vpack.c.b16 %v168, %v168
  %v185 = vpack.c.b16 %v169, %v169
  %v186 = vpack.c.b16 %v170, %v170
  %v187 = vpack.c.b16 %v171, %v171
  %v188 = vpack.c.b16 %v172, %v172
  %v189 = vpack.c.b16 %v173, %v173
  %v190 = vpack.c.b16 %v174, %v174
  %207 = vst [vmem:[%s4] sm:$0xf] %v175
  %208 = vst [vmem:[%s4 + $0x4] sm:$0xf] %v176
  %209 = vst [vmem:[%s4 + $0x8] sm:$0xf] %v177
  %210 = vst [vmem:[%s4 + $0xc] sm:$0xf] %v178
  %211 = vst [vmem:[%s4 + $0x10] sm:$0xf] %v179
  %212 = vst [vmem:[%s4 + $0x14] sm:$0xf] %v180
  %213 = vst [vmem:[%s4 + $0x18] sm:$0xf] %v181
  %214 = vst [vmem:[%s4 + $0x1c] sm:$0xf] %v182
  %215 = vst [vmem:[%s4 + $0x20] sm:$0xf] %v183
  %216 = vst [vmem:[%s4 + $0x24] sm:$0xf] %v184
  %217 = vst [vmem:[%s4 + $0x28] sm:$0xf] %v185
  %218 = vst [vmem:[%s4 + $0x2c] sm:$0xf] %v186
  %219 = vst [vmem:[%s4 + $0x30] sm:$0xf] %v187
  %220 = vst [vmem:[%s4 + $0x34] sm:$0xf] %v188
  %221 = vst [vmem:[%s4 + $0x38] sm:$0xf] %v189
  %222 = vst [vmem:[%s4 + $0x3c] sm:$0xf] %v190
  // Predicated region
  $region18: #{run_chain.17} parent=0 // pred_check
    _
  $region19: #{run_chain.17} parent=0 // pred_check_branch
    %224 = sbr.rel (0) target = $region21
  $region20: #{run_chain.17} parent=0 // pred_region
    _
  $region21: #{run_chain.17} parent=0 // pred_fallthru
    _
  // Predicated region
  $region22: #{run_chain.17} parent=0 // pred_check
    _
  $region23: #{run_chain.17} parent=0 // pred_check_branch
    %226 = sbr.rel (0) target = $region25
  $region24: #{run_chain.17} parent=0 // pred_region
    _
  $region25: #{run_chain.17} parent=0 // pred_fallthru
    _

// kernel: run_chain.13
$region0: #{run_chain.13}
  #allocation0 [shape = 'u32[]', space=smem, size = 0x4, offset = 0x4, fixed_abs, tag = 'smem constant byte address 0x4 - core index']
  #allocation1 [shape = 'u32[144,128]{1,0:T(1,128)}', space=vmem, size = 0x12000, scoped, tag = 'internal scratch']
  #allocation2 [shape = 'f32[18,32,128]{2,1,0:T(8,128)}', space=vmem, size = 0x48000, scoped, tag = 'scratch operand']
  %s0 = inlined_call_operand.vmem [shape: bf16[2,16,16,128], index: 0, kind: input, shape index: {}]
  %s1 = inlined_call_operand.vmem [shape: f32[1,1,128], index: 1, kind: input, shape index: {}]
  %s2 = inlined_call_operand.vmem [shape: f32[1,1,128], index: 2, kind: input, shape index: {}]
  %s3 = inlined_call_operand.vmem [shape: f32[9,1,1,128], index: 3, kind: input, shape index: {}]
  %s4 = inlined_call_operand.vmem [shape: bf16[128,128], index: 4, kind: input, shape index: {}]
  %s5 = inlined_call_operand.vmem [shape: bf16[2,256,128], index: 5, kind: output, shape index: {0}]
  %s6 = inlined_call_operand.vmem [shape: f32[2,2,128], index: 6, kind: output, shape index: {1}]
  %7 = xla_tuple %s5, %s6
  %s8 = sld [smem:[#allocation0]]
  $region61: #{run_chain.13} parent=0
    _
  %s10 = ssub.s32 1, %s8
  %s11 = scalar_select 0, %s10, %s8
  loop: start=0, step=1, limit=4
  $region2: #{run_chain.13} parent=0 // loop_pre_header
    _
  $region3: #{run_chain.13} parent=0 // loop_header
    %s13 = sphi 0, %s17
    %p14 = scmp.ge.s32.totalorder %s13, 4
    %s20 = sphi 0, %s32
    %s21 = sphi 0, %s28
    %s22 = sphi 0, %s20
    %s23 = sphi 0, %s21
    %s24 = sphi 0, %s22
    %s25 = sphi 0, %s23
    %s35 = sphi 0, %s37
    %s38 = sphi 0, %s35
    %s39 = sphi 0, %s38
    %s55 = sphi 0, %s39
    %s59 = sphi 0, %s59
    %s61 = sphi 0, %s59
    %s62 = sphi 0, %s61
    %s76 = sphi 0, %s62
    %s80 = sphi 0, %s80
    %s82 = sphi 0, %s80
    %s83 = sphi 0, %s82
    %s97 = sphi 0, %s83
    %s101 = sphi 0, %s101
    %s103 = sphi 0, %s101
    %s104 = sphi 0, %s103
    %s118 = sphi 0, %s104
    %s124 = sphi 0, %s126
    %s127 = sphi 0, %s124
    %s128 = sphi 0, %s127
    %s144 = sphi 0, %s128
    %s152 = sphi 0, %s154
    %s155 = sphi 0, %s152
    %s156 = sphi 0, %s155
    %s172 = sphi 0, %s156
    %s180 = sphi 0, %s182
    %s183 = sphi 0, %s180
    %s184 = sphi 0, %s183
    %s200 = sphi 0, %s184
  $region4: #{run_chain.13} parent=0 // loop_header_branch
    %16 = sbr.rel (%p14) target = $region8
  $region5: #{run_chain.13} parent=0 // loop_body
    %s18 = ssub.s32 %s13, 1
    %s19 = ssub.s32 %s13, 2
    %s26 = sadd.s32 1, %s21
    %p27 = scmp.ge.s32.totalorder %s26, 1
    %s28 = scalar_select %p27, 0, %s26
    %s29 = sadd.s32 1, %s20
    %s30 = scalar_select %p27, %s29, %s20
    %p31 = scmp.ge.s32.totalorder %s30, 2
    %s32 = scalar_select %p31, 0, %s30
    %s33 = ssub.s32 %s20, %s32
    %p34 = scmp.eq.s32.totalorder %s33, 0
    %s36 = sadd.s32 %s35, 1
    %s37 = scalar_select %p34, %s35, %s36
    %p40 = pneg %p34
    %p41 = scmp.eq.s32.totalorder %s13, 1
    %p42 = por %p40, %p41
    %p43 = scmp.ne.s32.totalorder %s35, %s38
    %p44 = scmp.eq.s32.totalorder %s13, 0
    %p45 = por %p43, %p44
    %p46 = scmp.ne.s32.totalorder %s35, %s38
    %p47 = scmp.eq.s32.totalorder %s18, 1
    %p48 = por %p46, %p47
    %p49 = scmp.ne.s32.totalorder %s38, %s39
    %p50 = scmp.eq.s32.totalorder %s18, 0
    %p51 = por %p49, %p50
    %p52 = scmp.ne.s32.totalorder %s38, %s39
    %p53 = scmp.eq.s32.totalorder %s19, 1
    %p54 = por %p52, %p53
    %p56 = scmp.ne.s32.totalorder %s39, %s55
    %p57 = scmp.eq.s32.totalorder %s19, 0
    %p58 = por %p56, %p57
    %s60 = sadd.s32 %s59, 1
    %p63 = scmp.eq.s32.totalorder %s13, 1
    %p64 = scmp.ne.s32.totalorder %s59, %s61
    %p65 = scmp.eq.s32.totalorder %s13, 0
    %p66 = por %p64, %p65
    %p67 = scmp.ne.s32.totalorder %s59, %s61
    %p68 = scmp.eq.s32.totalorder %s18, 1
    %p69 = por %p67, %p68
    %p70 = scmp.ne.s32.totalorder %s61, %s62
    %p71 = scmp.eq.s32.totalorder %s18, 0
    %p72 = por %p70, %p71
    %p73 = scmp.ne.s32.totalorder %s61, %s62
    %p74 = scmp.eq.s32.totalorder %s19, 1
    %p75 = por %p73, %p74
    %p77 = scmp.ne.s32.totalorder %s62, %s76
    %p78 = scmp.eq.s32.totalorder %s19, 0
    %p79 = por %p77, %p78
    %s81 = sadd.s32 %s80, 1
    %p84 = scmp.eq.s32.totalorder %s13, 1
    %p85 = scmp.ne.s32.totalorder %s80, %s82
    %p86 = scmp.eq.s32.totalorder %s13, 0
    %p87 = por %p85, %p86
    %p88 = scmp.ne.s32.totalorder %s80, %s82
    %p89 = scmp.eq.s32.totalorder %s18, 1
    %p90 = por %p88, %p89
    %p91 = scmp.ne.s32.totalorder %s82, %s83
    %p92 = scmp.eq.s32.totalorder %s18, 0
    %p93 = por %p91, %p92
    %p94 = scmp.ne.s32.totalorder %s82, %s83
    %p95 = scmp.eq.s32.totalorder %s19, 1
    %p96 = por %p94, %p95
    %p98 = scmp.ne.s32.totalorder %s83, %s97
    %p99 = scmp.eq.s32.totalorder %s19, 0
    %p100 = por %p98, %p99
    %s102 = sadd.s32 %s101, 1
    %p105 = scmp.eq.s32.totalorder %s13, 1
    %p106 = scmp.ne.s32.totalorder %s101, %s103
    %p107 = scmp.eq.s32.totalorder %s13, 0
    %p108 = por %p106, %p107
    %p109 = scmp.ne.s32.totalorder %s101, %s103
    %p110 = scmp.eq.s32.totalorder %s18, 1
    %p111 = por %p109, %p110
    %p112 = scmp.ne.s32.totalorder %s103, %s104
    %p113 = scmp.eq.s32.totalorder %s18, 0
    %p114 = por %p112, %p113
    %p115 = scmp.ne.s32.totalorder %s103, %s104
    %p116 = scmp.eq.s32.totalorder %s19, 1
    %p117 = por %p115, %p116
    %p119 = scmp.ne.s32.totalorder %s104, %s118
    %p120 = scmp.eq.s32.totalorder %s19, 0
    %p121 = por %p119, %p120
    %s122 = ssub.s32 %s21, %s28
    %p123 = scmp.eq.s32.totalorder %s122, 0
    %s125 = sadd.s32 %s124, 1
    %s126 = scalar_select %p123, %s124, %s125
    %p129 = pneg %p123
    %p130 = scmp.eq.s32.totalorder %s13, 1
    %p131 = por %p129, %p130
    %p132 = scmp.ne.s32.totalorder %s124, %s127
    %p133 = scmp.eq.s32.totalorder %s13, 0
    %p134 = por %p132, %p133
    %p135 = scmp.ne.s32.totalorder %s124, %s127
    %p136 = scmp.eq.s32.totalorder %s18, 1
    %p137 = por %p135, %p136
    %p138 = scmp.ne.s32.totalorder %s127, %s128
    %p139 = scmp.eq.s32.totalorder %s18, 0
    %p140 = por %p138, %p139
    %p141 = scmp.ne.s32.totalorder %s127, %s128
    %p142 = scmp.eq.s32.totalorder %s19, 1
    %p143 = por %p141, %p142
    %p145 = scmp.ne.s32.totalorder %s128, %s144
    %p146 = scmp.eq.s32.totalorder %s19, 0
    %p147 = por %p145, %p146
    %s148 = ssub.s32 %s20, %s32
    %s149 = ssub.s32 %s21, %s28
    %s150 = sor.u32 %s148, %s149
    %p151 = scmp.eq.s32.totalorder %s150, 0
    %s153 = sadd.s32 %s152, 1
    %s154 = scalar_select %p151, %s152, %s153
    %p157 = pneg %p151
    %p158 = scmp.eq.s32.totalorder %s13, 1
    %p159 = por %p157, %p158
    %p160 = scmp.ne.s32.totalorder %s152, %s155
    %p161 = scmp.eq.s32.totalorder %s13, 0
    %p162 = por %p160, %p161
    %p163 = scmp.ne.s32.totalorder %s152, %s155
    %p164 = scmp.eq.s32.totalorder %s18, 1
    %p165 = por %p163, %p164
    %p166 = scmp.ne.s32.totalorder %s155, %s156
    %p167 = scmp.eq.s32.totalorder %s18, 0
    %p168 = por %p166, %p167
    %p169 = scmp.ne.s32.totalorder %s155, %s156
    %p170 = scmp.eq.s32.totalorder %s19, 1
    %p171 = por %p169, %p170
    %p173 = scmp.ne.s32.totalorder %s156, %s172
    %p174 = scmp.eq.s32.totalorder %s19, 0
    %p175 = por %p173, %p174
    %s176 = ssub.s32 %s20, %s32
    %s177 = ssub.s32 %s21, %s28
    %s178 = sor.u32 %s176, %s177
    %p179 = scmp.eq.s32.totalorder %s178, 0
    %s181 = sadd.s32 %s180, 1
    %s182 = scalar_select %p179, %s180, %s181
    %p185 = pneg %p179
    %p186 = scmp.eq.s32.totalorder %s13, 1
    %p187 = por %p185, %p186
    %p188 = scmp.ne.s32.totalorder %s180, %s183
    %p189 = scmp.eq.s32.totalorder %s13, 0
    %p190 = por %p188, %p189
    %p191 = scmp.ne.s32.totalorder %s180, %s183
    %p192 = scmp.eq.s32.totalorder %s18, 1
    %p193 = por %p191, %p192
    %p194 = scmp.ne.s32.totalorder %s183, %s184
    %p195 = scmp.eq.s32.totalorder %s18, 0
    %p196 = por %p194, %p195
    %p197 = scmp.ne.s32.totalorder %s183, %s184
    %p198 = scmp.eq.s32.totalorder %s19, 1
    %p199 = por %p197, %p198
    %p201 = scmp.ne.s32.totalorder %s184, %s200
    %p202 = scmp.eq.s32.totalorder %s19, 0
    %p203 = por %p201, %p202
    %p204 = scmp.le.s32.totalorder 1, %s13
    %p205 = scmp.lt.s32.totalorder %s13, 3
    %p206 = pnand %p204, %p205
    %p207 = pneg %p206
    // Predicated region
    $region9: #{run_chain.13} parent=5 // pred_check
      _
    $region10: #{run_chain.13} parent=5 // pred_check_branch
      %209 = sbr.rel (%p206) target = $region12
    $region11: #{run_chain.13} parent=5 // pred_region
      %s210 = ssub.s32 %s13, 1
      // Predicated region
      $region13: #{run_chain.13} parent=11 // pred_check
        %p211 = pneg %p72
      $region14: #{run_chain.13} parent=11 // pred_check_branch
        %213 = sbr.rel (%p211) target = $region16
      $region15: #{run_chain.13} parent=11 // pred_region
        _
      $region16: #{run_chain.13} parent=11 // pred_fallthru
        _
      // Predicated region
      $region17: #{run_chain.13} parent=11 // pred_check
        %p214 = pneg %p93
      $region18: #{run_chain.13} parent=11 // pred_check_branch
        %216 = sbr.rel (%p214) target = $region20
      $region19: #{run_chain.13} parent=11 // pred_region
        _
      $region20: #{run_chain.13} parent=11 // pred_fallthru
        _
      // Predicated region
      $region21: #{run_chain.13} parent=11 // pred_check
        %p217 = pneg %p114
      $region22: #{run_chain.13} parent=11 // pred_check_branch
        %219 = sbr.rel (%p217) target = $region24
      $region23: #{run_chain.13} parent=11 // pred_region
        _
      $region24: #{run_chain.13} parent=11 // pred_fallthru
        _
      // Predicated region
      $region25: #{run_chain.13} parent=11 // pred_check
        %p220 = pneg %p140
      $region26: #{run_chain.13} parent=11 // pred_check_branch
        %222 = sbr.rel (%p220) target = $region28
      $region27: #{run_chain.13} parent=11 // pred_region
        %p223 = scmp.lt.s32.totalorder %s23, 0
        %s224 = scalar_select %p223, %s23, 0
        %s225 = smul.addr %s224, 4
        %s226 = scalar_lea.vmem %s4, %s225
      $region28: #{run_chain.13} parent=11 // pred_fallthru
        _
    $region12: #{run_chain.13} parent=5 // pred_fallthru
      _
    %p227 = scmp.lt.s32.totalorder %s13, 2
    // Predicated region
    $region29: #{run_chain.13} parent=5 // pred_check
      %p228 = pneg %p227
    $region30: #{run_chain.13} parent=5 // pred_check_branch
      %230 = sbr.rel (%p228) target = $region32
    $region31: #{run_chain.13} parent=5 // pred_region
      // Predicated region
      $region33: #{run_chain.13} parent=31 // pred_check
        %p231 = pneg %p45
      $region34: #{run_chain.13} parent=31 // pred_check_branch
        %233 = sbr.rel (%p231) target = $region36
      $region35: #{run_chain.13} parent=31 // pred_region
        %p234 = scmp.lt.s32.totalorder %s20, 1
        %s235 = scalar_select %p234, %s20, 1
        %s236 = smul.addr %s235, 32
        %s237 = smul.addr %s236, 4
        %s238 = scalar_lea.vmem %s0, %s237
      $region36: #{run_chain.13} parent=31 // pred_fallthru
        _
    $region32: #{run_chain.13} parent=5 // pred_fallthru
      _
    %p239 = scmp.le.s32.totalorder 1, %s13
    %p240 = scmp.lt.s32.totalorder %s13, 3
    %p241 = pnand %p239, %p240
    %p242 = pneg %p241
    // Predicated region
    $region37: #{run_chain.13} parent=5 // pred_check
      _
    $region38: #{run_chain.13} parent=5 // pred_check_branch
      %244 = sbr.rel (%p241) target = $region40
    $region39: #{run_chain.13} parent=5 // pred_region
      %s245 = ssub.s32 %s13, 1
      %p246 = scmp.lt.s32.totalorder %s22, 1
      %s247 = scalar_select %p246, %s22, 1
      %s248 = smul.addr %s247, 32
      %s249 = smul.addr %s248, 4
      %s250 = scalar_lea.vmem %s0, %s249
      %p251 = pneg %p51
      %p252 = pneg %p48
      %p253 = pneg %p72
      %p254 = pneg %p69
      %p255 = pneg %p93
      %p256 = pneg %p90
      %p257 = pneg %p114
      %p258 = pneg %p111
      %p259 = scmp.lt.s32.totalorder %s23, 0
      %s260 = scalar_select %p259, %s23, 0
      %s261 = smul.addr %s260, 4
      %s262 = scalar_lea.vmem %s4, %s261
      %p263 = pneg %p140
      %p264 = pneg %p137
      %p265 = pneg %p168
      %p266 = pneg %p165
      %p267 = scmp.lt.s32.totalorder %s22, 1
      %s268 = scalar_select %p267, %s22, 1
      %p269 = scmp.lt.s32.totalorder %s23, 0
      %s270 = scalar_select %p269, %s23, 0
      %s271 = smul.addr %s268, 32
      %s272 = sadd.s32 %s270, %s271
      %s273 = smul.addr %s272, 4
      %s274 = scalar_lea.vmem %s5, %s273
      %p275 = pneg %p196
      %p276 = pneg %p193
      %p277 = scmp.lt.s32.totalorder %s22, 1
      %s278 = scalar_select %p277, %s22, 1
      %p279 = scmp.lt.s32.totalorder %s23, 0
      %s280 = scalar_select %p279, %s23, 0
      %s281 = sadd.s32 %s280, %s278
      %s282 = smul.addr %s281, 2
      %s283 = scalar_lea.vmem %s6, %s282
      %p284 = scmp.lt.s32.totalorder %s22, 1
      %s285 = scalar_select %p284, %s22, 1
      %s286 = smul.addr %s285, 32
      %s287 = smul.addr %s286, 4
      %s288 = scalar_lea.vmem %s0, %s287
      %p289 = scmp.lt.s32.totalorder %s23, 0
      %s290 = scalar_select %p289, %s23, 0
      %s291 = smul.addr %s290, 4
      %s292 = scalar_lea.vmem %s4, %s291
      %p293 = scmp.lt.s32.totalorder %s22, 1
      %s294 = scalar_select %p293, %s22, 1
      %p295 = scmp.lt.s32.totalorder %s23, 0
      %s296 = scalar_select %p295, %s23, 0
      %s297 = smul.addr %s294, 32
      %s298 = sadd.s32 %s296, %s297
      %s299 = smul.addr %s298, 4
      %s300 = scalar_lea.vmem %s5, %s299
      %p301 = scmp.lt.s32.totalorder %s22, 1
      %s302 = scalar_select %p301, %s22, 1
      %p303 = scmp.lt.s32.totalorder %s23, 0
      %s304 = scalar_select %p303, %s23, 0
      %s305 = sadd.s32 %s304, %s302
      %s306 = smul.addr %s305, 2
      %s307 = scalar_lea.vmem %s6, %s306
      %v309 = vld [vmem:[%s288] sm:$0xf]
      %v310 = vld [vmem:[%s288 + $0x4] sm:$0xf]
      %v311 = vld [vmem:[%s288 + $0x8] sm:$0xf]
      %v312 = vld [vmem:[%s288 + $0xc] sm:$0xf]
      %v313 = vld [vmem:[%s288 + $0x10] sm:$0xf]
      %v314 = vld [vmem:[%s288 + $0x14] sm:$0xf]
      %v315 = vld [vmem:[%s288 + $0x18] sm:$0xf]
      %v316 = vld [vmem:[%s288 + $0x1c] sm:$0xf]
      %v317 = vld [vmem:[%s288 + $0x20] sm:$0xf]
      %v318 = vld [vmem:[%s288 + $0x24] sm:$0xf]
      %v319 = vld [vmem:[%s288 + $0x28] sm:$0xf]
      %v320 = vld [vmem:[%s288 + $0x2c] sm:$0xf]
      %v321 = vld [vmem:[%s288 + $0x30] sm:$0xf]
      %v322 = vld [vmem:[%s288 + $0x34] sm:$0xf]
      %v323 = vld [vmem:[%s288 + $0x38] sm:$0xf]
      %v324 = vld [vmem:[%s288 + $0x3c] sm:$0xf]
      %v325 = vld [vmem:[%s288 + $0x40] sm:$0xf]
      %v326 = vld [vmem:[%s288 + $0x44] sm:$0xf]
      %v327 = vld [vmem:[%s288 + $0x48] sm:$0xf]
      %v328 = vld [vmem:[%s288 + $0x4c] sm:$0xf]
      %v329 = vld [vmem:[%s288 + $0x50] sm:$0xf]
      %v330 = vld [vmem:[%s288 + $0x54] sm:$0xf]
      %v331 = vld [vmem:[%s288 + $0x58] sm:$0xf]
      %v332 = vld [vmem:[%s288 + $0x5c] sm:$0xf]
      %v333 = vld [vmem:[%s288 + $0x60] sm:$0xf]
      %v334 = vld [vmem:[%s288 + $0x64] sm:$0xf]
      %v335 = vld [vmem:[%s288 + $0x68] sm:$0xf]
      %v336 = vld [vmem:[%s288 + $0x6c] sm:$0xf]
      %v337 = vld [vmem:[%s288 + $0x70] sm:$0xf]
      %v338 = vld [vmem:[%s288 + $0x74] sm:$0xf]
      %v339 = vld [vmem:[%s288 + $0x78] sm:$0xf]
      %v340 = vld [vmem:[%s288 + $0x7c] sm:$0xf]
      %v341 = vunpack.c.l.bf16 %v309
      %v342 = vunpack.c.l.bf16 %v310
      %v343 = vunpack.c.l.bf16 %v311
      %v344 = vunpack.c.l.bf16 %v312
      %v345 = vunpack.c.l.bf16 %v313
      %v346 = vunpack.c.l.bf16 %v314
      %v347 = vunpack.c.l.bf16 %v315
      %v348 = vunpack.c.l.bf16 %v316
      %v349 = vunpack.c.l.bf16 %v317
      %v350 = vunpack.c.l.bf16 %v318
      %v351 = vunpack.c.l.bf16 %v319
      %v352 = vunpack.c.l.bf16 %v320
      %v353 = vunpack.c.l.bf16 %v321
      %v354 = vunpack.c.l.bf16 %v322
      %v355 = vunpack.c.l.bf16 %v323
      %v356 = vunpack.c.l.bf16 %v324
      %v357 = vunpack.c.l.bf16 %v325
      %v358 = vunpack.c.l.bf16 %v326
      %v359 = vunpack.c.l.bf16 %v327
      %v360 = vunpack.c.l.bf16 %v328
      %v361 = vunpack.c.l.bf16 %v329
      %v362 = vunpack.c.l.bf16 %v330
      %v363 = vunpack.c.l.bf16 %v331
      %v364 = vunpack.c.l.bf16 %v332
      %v365 = vunpack.c.l.bf16 %v333
      %v366 = vunpack.c.l.bf16 %v334
      %v367 = vunpack.c.l.bf16 %v335
      %v368 = vunpack.c.l.bf16 %v336
      %v369 = vunpack.c.l.bf16 %v337
      %v370 = vunpack.c.l.bf16 %v338
      %v371 = vunpack.c.l.bf16 %v339
      %v372 = vunpack.c.l.bf16 %v340
      %v373 = vld [vmem:[%s1] sm:$0x1]
      %v375 = vlaneseq
      %v376 = vshrl.u32 %v375, 7
      %v377 = vsub.s32 0, %v376
      %v378 = vrot.slane %v373, %v377
      %v380 = vmul.f32 %v341, %v378
      %v381 = vmul.f32 %v342, %v378
      %v382 = vmul.f32 %v343, %v378
      %v383 = vmul.f32 %v344, %v378
      %v384 = vmul.f32 %v345, %v378
      %v385 = vmul.f32 %v346, %v378
      %v386 = vmul.f32 %v347, %v378
      %v387 = vmul.f32 %v348, %v378
      %v388 = vmul.f32 %v349, %v378
      %v389 = vmul.f32 %v350, %v378
      %v390 = vmul.f32 %v351, %v378
      %v391 = vmul.f32 %v352, %v378
      %v392 = vmul.f32 %v353, %v378
      %v393 = vmul.f32 %v354, %v378
      %v394 = vmul.f32 %v355, %v378
      %v395 = vmul.f32 %v356, %v378
      %v396 = vmul.f32 %v357, %v378
      %v397 = vmul.f32 %v358, %v378
      %v398 = vmul.f32 %v359, %v378
      %v399 = vmul.f32 %v360, %v378
      %v400 = vmul.f32 %v361, %v378
      %v401 = vmul.f32 %v362, %v378
      %v402 = vmul.f32 %v363, %v378
      %v403 = vmul.f32 %v364, %v378
      %v404 = vmul.f32 %v365, %v378
      %v405 = vmul.f32 %v366, %v378
      %v406 = vmul.f32 %v367, %v378
      %v407 = vmul.f32 %v368, %v378
      %v408 = vmul.f32 %v369, %v378
      %v409 = vmul.f32 %v370, %v378
      %v410 = vmul.f32 %v371, %v378
      %v411 = vmul.f32 %v372, %v378
      %v412 = vld [vmem:[%s2] sm:$0x1]
      %v414 = vlaneseq
      %v415 = vshrl.u32 %v414, 7
      %v416 = vsub.s32 0, %v415
      %v417 = vrot.slane %v412, %v416
      %v419 = vadd.f32 %v380, %v417
      %v420 = vadd.f32 %v381, %v417
      %v421 = vadd.f32 %v382, %v417
      %v422 = vadd.f32 %v383, %v417
      %v423 = vadd.f32 %v384, %v417
      %v424 = vadd.f32 %v385, %v417
      %v425 = vadd.f32 %v386, %v417
      %v426 = vadd.f32 %v387, %v417
      %v427 = vadd.f32 %v388, %v417
      %v428 = vadd.f32 %v389, %v417
      %v429 = vadd.f32 %v390, %v417
      %v430 = vadd.f32 %v391, %v417
      %v431 = vadd.f32 %v392, %v417
      %v432 = vadd.f32 %v393, %v417
      %v433 = vadd.f32 %v394, %v417
      %v434 = vadd.f32 %v395, %v417
      %v435 = vadd.f32 %v396, %v417
      %v436 = vadd.f32 %v397, %v417
      %v437 = vadd.f32 %v398, %v417
      %v438 = vadd.f32 %v399, %v417
      %v439 = vadd.f32 %v400, %v417
      %v440 = vadd.f32 %v401, %v417
      %v441 = vadd.f32 %v402, %v417
      %v442 = vadd.f32 %v403, %v417
      %v443 = vadd.f32 %v404, %v417
      %v444 = vadd.f32 %v405, %v417
      %v445 = vadd.f32 %v406, %v417
      %v446 = vadd.f32 %v407, %v417
      %v447 = vadd.f32 %v408, %v417
      %v448 = vadd.f32 %v409, %v417
      %v449 = vadd.f32 %v410, %v417
      %v450 = vadd.f32 %v411, %v417
      %451 = vst [vmem:[#allocation2] sm:$0xff] 0.0
      %452 = vst [vmem:[#allocation2 + $0x8] sm:$0xff] 0.0
      %453 = vst [vmem:[#allocation2 + $0x10] sm:$0xff] 0.0
      %454 = vst [vmem:[#allocation2 + $0x18] sm:$0xff] 0.0
      %s455 = scalar_lea.vmem [#allocation2], 544
      %456 = vst [vmem:[%s455] sm:$0xff] 0.0
      %457 = vst [vmem:[%s455 + $0x8] sm:$0xff] 0.0
      %458 = vst [vmem:[%s455 + $0x10] sm:$0xff] 0.0
      %459 = vst [vmem:[%s455 + $0x18] sm:$0xff] 0.0
      %s460 = scalar_lea.vmem [#allocation2], 32
      %461 = vst [vmem:[%s460] sm:$0xff] 0.0
      %462 = vst [vmem:[%s460 + $0x20] sm:$0xff] 0.0
      %463 = vst [vmem:[%s460 + $0x40] sm:$0xff] 0.0
      %464 = vst [vmem:[%s460 + $0x60] sm:$0xff] 0.0
      %465 = vst [vmem:[%s460 + $0x80] sm:$0xff] 0.0
      %466 = vst [vmem:[%s460 + $0xa0] sm:$0xff] 0.0
      %467 = vst [vmem:[%s460 + $0xc0] sm:$0xff] 0.0
      %468 = vst [vmem:[%s460 + $0xe0] sm:$0xff] 0.0
      %469 = vst [vmem:[%s460 + $0x100] sm:$0xff] 0.0
      %470 = vst [vmem:[%s460 + $0x120] sm:$0xff] 0.0
      %471 = vst [vmem:[%s460 + $0x140] sm:$0xff] 0.0
      %472 = vst [vmem:[%s460 + $0x160] sm:$0xff] 0.0
      %473 = vst [vmem:[%s460 + $0x180] sm:$0xff] 0.0
      %474 = vst [vmem:[%s460 + $0x1a0] sm:$0xff] 0.0
      %475 = vst [vmem:[%s460 + $0x1c0] sm:$0xff] 0.0
      %476 = vst [vmem:[%s460 + $0x1e0] sm:$0xff] 0.0
      %477 = vst [vmem:[%s460 + $0x18] sm:$0xff] 0.0
      %478 = vst [vmem:[%s460 + $0x38] sm:$0xff] 0.0
      %479 = vst [vmem:[%s460 + $0x58] sm:$0xff] 0.0
      %480 = vst [vmem:[%s460 + $0x78] sm:$0xff] 0.0
      %481 = vst [vmem:[%s460 + $0x98] sm:$0xff] 0.0
      %482 = vst [vmem:[%s460 + $0xb8] sm:$0xff] 0.0
      %483 = vst [vmem:[%s460 + $0xd8] sm:$0xff] 0.0
      %484 = vst [vmem:[%s460 + $0xf8] sm:$0xff] 0.0
      %485 = vst [vmem:[%s460 + $0x118] sm:$0xff] 0.0
      %486 = vst [vmem:[%s460 + $0x138] sm:$0xff] 0.0
      %487 = vst [vmem:[%s460 + $0x158] sm:$0xff] 0.0
      %488 = vst [vmem:[%s460 + $0x178] sm:$0xff] 0.0
      %489 = vst [vmem:[%s460 + $0x198] sm:$0xff] 0.0
      %490 = vst [vmem:[%s460 + $0x1b8] sm:$0xff] 0.0
      %491 = vst [vmem:[%s460 + $0x1d8] sm:$0xff] 0.0
      %492 = vst [vmem:[%s460 + $0x1f8] sm:$0xff] 0.0
      %493 = vst [vmem:[%s460 + $0x8] sm:$0xff] %v419
      %494 = vst [vmem:[%s460 + $0x10] sm:$0xff] %v420
      %495 = vst [vmem:[%s460 + $0x28] sm:$0xff] %v421
      %496 = vst [vmem:[%s460 + $0x30] sm:$0xff] %v422
      %497 = vst [vmem:[%s460 + $0x48] sm:$0xff] %v423
      %498 = vst [vmem:[%s460 + $0x50] sm:$0xff] %v424
      %499 = vst [vmem:[%s460 + $0x68] sm:$0xff] %v425
      %500 = vst [vmem:[%s460 + $0x70] sm:$0xff] %v426
      %501 = vst [vmem:[%s460 + $0x88] sm:$0xff] %v427
      %502 = vst [vmem:[%s460 + $0x90] sm:$0xff] %v428
      %503 = vst [vmem:[%s460 + $0xa8] sm:$0xff] %v429
      %504 = vst [vmem:[%s460 + $0xb0] sm:$0xff] %v430
      %505 = vst [vmem:[%s460 + $0xc8] sm:$0xff] %v431
      %506 = vst [vmem:[%s460 + $0xd0] sm:$0xff] %v432
      %507 = vst [vmem:[%s460 + $0xe8] sm:$0xff] %v433
      %508 = vst [vmem:[%s460 + $0xf0] sm:$0xff] %v434
      %509 = vst [vmem:[%s460 + $0x108] sm:$0xff] %v435
      %510 = vst [vmem:[%s460 + $0x110] sm:$0xff] %v436
      %511 = vst [vmem:[%s460 + $0x128] sm:$0xff] %v437
      %512 = vst [vmem:[%s460 + $0x130] sm:$0xff] %v438
      %513 = vst [vmem:[%s460 + $0x148] sm:$0xff] %v439
      %514 = vst [vmem:[%s460 + $0x150] sm:$0xff] %v440
      %515 = vst [vmem:[%s460 + $0x168] sm:$0xff] %v441
      %516 = vst [vmem:[%s460 + $0x170] sm:$0xff] %v442
      %517 = vst [vmem:[%s460 + $0x188] sm:$0xff] %v443
      %518 = vst [vmem:[%s460 + $0x190] sm:$0xff] %v444
      %519 = vst [vmem:[%s460 + $0x1a8] sm:$0xff] %v445
      %520 = vst [vmem:[%s460 + $0x1b0] sm:$0xff] %v446
      %521 = vst [vmem:[%s460 + $0x1c8] sm:$0xff] %v447
      %522 = vst [vmem:[%s460 + $0x1d0] sm:$0xff] %v448
      %523 = vst [vmem:[%s460 + $0x1e8] sm:$0xff] %v449
      %524 = vst [vmem:[%s460 + $0x1f0] sm:$0xff] %v450
      %v525 = vld [vmem:[#allocation2 + $0x7] sm:$0xff]
      %v526 = vld [vmem:[#allocation2 + $0xf] sm:$0xff]
      %v527 = vld [vmem:[#allocation2 + $0x27] sm:$0xff]
      %v528 = vld [vmem:[#allocation2 + $0x2f] sm:$0xff]
      %v529 = vld [vmem:[#allocation2 + $0x47] sm:$0xff]
      %v530 = vld [vmem:[#allocation2 + $0x4f] sm:$0xff]
      %v531 = vld [vmem:[#allocation2 + $0x67] sm:$0xff]
      %v532 = vld [vmem:[#allocation2 + $0x6f] sm:$0xff]
      %v533 = vld [vmem:[#allocation2 + $0x87] sm:$0xff]
      %v534 = vld [vmem:[#allocation2 + $0x8f] sm:$0xff]
      %v535 = vld [vmem:[#allocation2 + $0xa7] sm:$0xff]
      %v536 = vld [vmem:[#allocation2 + $0xaf] sm:$0xff]
      %v537 = vld [vmem:[#allocation2 + $0xc7] sm:$0xff]
      %v538 = vld [vmem:[#allocation2 + $0xcf] sm:$0xff]
      %v539 = vld [vmem:[#allocation2 + $0xe7] sm:$0xff]
      %v540 = vld [vmem:[#allocation2 + $0xef] sm:$0xff]
      %v541 = vld [vmem:[#allocation2 + $0x107] sm:$0xff]
      %v542 = vld [vmem:[#allocation2 + $0x10f] sm:$0xff]
      %v543 = vld [vmem:[#allocation2 + $0x127] sm:$0xff]
      %v544 = vld [vmem:[#allocation2 + $0x12f] sm:$0xff]
      %v545 = vld [vmem:[#allocation2 + $0x147] sm:$0xff]
      %v546 = vld [vmem:[#allocation2 + $0x14f] sm:$0xff]
      %v547 = vld [vmem:[#allocation2 + $0x167] sm:$0xff]
      %v548 = vld [vmem:[#allocation2 + $0x16f] sm:$0xff]
      %v549 = vld [vmem:[#allocation2 + $0x187] sm:$0xff]
      %v550 = vld [vmem:[#allocation2 + $0x18f] sm:$0xff]
      %v551 = vld [vmem:[#allocation2 + $0x1a7] sm:$0xff]
      %v552 = vld [vmem:[#allocation2 + $0x1af] sm:$0xff]
      %v553 = vld [vmem:[#allocation2 + $0x1c7] sm:$0xff]
      %v554 = vld [vmem:[#allocation2 + $0x1cf] sm:$0xff]
      %v555 = vld [vmem:[#allocation2 + $0x1e7] sm:$0xff]
      %v556 = vld [vmem:[#allocation2 + $0x1ef] sm:$0xff]
      %v557 = vld [vmem:[#allocation2 + $0x207] sm:$0xff]
      %v558 = vld [vmem:[#allocation2 + $0x20f] sm:$0xff]
      %v559 = vld [vmem:[#allocation2 + $0x227] sm:$0xff]
      %v560 = vld [vmem:[#allocation2 + $0x22f] sm:$0xff]
      %v561 = vld [vmem:[#allocation2 + $0x8] sm:$0xff]
      %v562 = vld [vmem:[#allocation2 + $0x10] sm:$0xff]
      %v563 = vld [vmem:[#allocation2 + $0x28] sm:$0xff]
      %v564 = vld [vmem:[#allocation2 + $0x30] sm:$0xff]
      %v565 = vld [vmem:[#allocation2 + $0x48] sm:$0xff]
      %v566 = vld [vmem:[#allocation2 + $0x50] sm:$0xff]
      %v567 = vld [vmem:[#allocation2 + $0x68] sm:$0xff]
      %v568 = vld [vmem:[#allocation2 + $0x70] sm:$0xff]
      %v569 = vld [vmem:[#allocation2 + $0x88] sm:$0xff]
      %v570 = vld [vmem:[#allocation2 + $0x90] sm:$0xff]
      %v571 = vld [vmem:[#allocation2 + $0xa8] sm:$0xff]
      %v572 = vld [vmem:[#allocation2 + $0xb0] sm:$0xff]
      %v573 = vld [vmem:[#allocation2 + $0xc8] sm:$0xff]
      %v574 = vld [vmem:[#allocation2 + $0xd0] sm:$0xff]
      %v575 = vld [vmem:[#allocation2 + $0xe8] sm:$0xff]
      %v576 = vld [vmem:[#allocation2 + $0xf0] sm:$0xff]
      %v577 = vld [vmem:[#allocation2 + $0x108] sm:$0xff]
      %v578 = vld [vmem:[#allocation2 + $0x110] sm:$0xff]
      %v579 = vld [vmem:[#allocation2 + $0x128] sm:$0xff]
      %v580 = vld [vmem:[#allocation2 + $0x130] sm:$0xff]
      %v581 = vld [vmem:[#allocation2 + $0x148] sm:$0xff]
      %v582 = vld [vmem:[#allocation2 + $0x150] sm:$0xff]
      %v583 = vld [vmem:[#allocation2 + $0x168] sm:$0xff]
      %v584 = vld [vmem:[#allocation2 + $0x170] sm:$0xff]
      %v585 = vld [vmem:[#allocation2 + $0x188] sm:$0xff]
      %v586 = vld [vmem:[#allocation2 + $0x190] sm:$0xff]
      %v587 = vld [vmem:[#allocation2 + $0x1a8] sm:$0xff]
      %v588 = vld [vmem:[#allocation2 + $0x1b0] sm:$0xff]
      %v589 = vld [vmem:[#allocation2 + $0x1c8] sm:$0xff]
      %v590 = vld [vmem:[#allocation2 + $0x1d0] sm:$0xff]
      %v591 = vld [vmem:[#allocation2 + $0x1e8] sm:$0xff]
      %v592 = vld [vmem:[#allocation2 + $0x1f0] sm:$0xff]
      %v593 = vld [vmem:[#allocation2 + $0x208] sm:$0xff]
      %v594 = vld [vmem:[#allocation2 + $0x210] sm:$0xff]
      %v595 = vld [vmem:[#allocation2 + $0x228] sm:$0xff]
      %v596 = vld [vmem:[#allocation2 + $0x230] sm:$0xff]
      %v597 = vld [vmem:[#allocation2 + $0x9] sm:$0xff]
      %v598 = vld [vmem:[#allocation2 + $0x11] sm:$0xff]
      %v599 = vld [vmem:[#allocation2 + $0x29] sm:$0xff]
      %v600 = vld [vmem:[#allocation2 + $0x31] sm:$0xff]
      %v601 = vld [vmem:[#allocation2 + $0x49] sm:$0xff]
      %v602 = vld [vmem:[#allocation2 + $0x51] sm:$0xff]
      %v603 = vld [vmem:[#allocation2 + $0x69] sm:$0xff]
      %v604 = vld [vmem:[#allocation2 + $0x71] sm:$0xff]
      %v605 = vld [vmem:[#allocation2 + $0x89] sm:$0xff]
      %v606 = vld [vmem:[#allocation2 + $0x91] sm:$0xff]
      %v607 = vld [vmem:[#allocation2 + $0xa9] sm:$0xff]
      %v608 = vld [vmem:[#allocation2 + $0xb1] sm:$0xff]
      %v609 = vld [vmem:[#allocation2 + $0xc9] sm:$0xff]
      %v610 = vld [vmem:[#allocation2 + $0xd1] sm:$0xff]
      %v611 = vld [vmem:[#allocation2 + $0xe9] sm:$0xff]
      %v612 = vld [vmem:[#allocation2 + $0xf1] sm:$0xff]
      %v613 = vld [vmem:[#allocation2 + $0x109] sm:$0xff]
      %v614 = vld [vmem:[#allocation2 + $0x111] sm:$0xff]
      %v615 = vld [vmem:[#allocation2 + $0x129] sm:$0xff]
      %v616 = vld [vmem:[#allocation2 + $0x131] sm:$0xff]
      %v617 = vld [vmem:[#allocation2 + $0x149] sm:$0xff]
      %v618 = vld [vmem:[#allocation2 + $0x151] sm:$0xff]
      %v619 = vld [vmem:[#allocation2 + $0x169] sm:$0xff]
      %v620 = vld [vmem:[#allocation2 + $0x171] sm:$0xff]
      %v621 = vld [vmem:[#allocation2 + $0x189] sm:$0xff]
      %v622 = vld [vmem:[#allocation2 + $0x191] sm:$0xff]
      %v623 = vld [vmem:[#allocation2 + $0x1a9] sm:$0xff]
      %v624 = vld [vmem:[#allocation2 + $0x1b1] sm:$0xff]
      %v625 = vld [vmem:[#allocation2 + $0x1c9] sm:$0xff]
      %v626 = vld [vmem:[#allocation2 + $0x1d1] sm:$0xff]
      %v627 = vld [vmem:[#allocation2 + $0x1e9] sm:$0xff]
      %v628 = vld [vmem:[#allocation2 + $0x1f1] sm:$0xff]
      %v629 = vld [vmem:[#allocation2 + $0x209] sm:$0xff]
      %v630 = vld [vmem:[#allocation2 + $0x211] sm:$0xff]
      %v631 = vld [vmem:[#allocation2 + $0x229] sm:$0xff]
      %v632 = vld [vmem:[#allocation2 + $0x231] sm:$0xff]
      %v633 = vld [vmem:[%s292] sm:$0xf]
      %v634 = vld [vmem:[%s292 + $0x4] sm:$0xf]
      %v635 = vld [vmem:[%s292 + $0x8] sm:$0xf]
      %v636 = vld [vmem:[%s292 + $0xc] sm:$0xf]
      %v637 = vld [vmem:[%s292 + $0x10] sm:$0xf]
      %v638 = vld [vmem:[%s292 + $0x14] sm:$0xf]
      %v639 = vld [vmem:[%s292 + $0x18] sm:$0xf]
      %v640 = vld [vmem:[%s292 + $0x1c] sm:$0xf]
      %v641 = vld [vmem:[%s292 + $0x20] sm:$0xf]
      %v642 = vld [vmem:[%s292 + $0x24] sm:$0xf]
      %v643 = vld [vmem:[%s292 + $0x28] sm:$0xf]
      %v644 = vld [vmem:[%s292 + $0x2c] sm:$0xf]
      %v645 = vld [vmem:[%s292 + $0x30] sm:$0xf]
      %v646 = vld [vmem:[%s292 + $0x34] sm:$0xf]
      %v647 = vld [vmem:[%s292 + $0x38] sm:$0xf]
      %v648 = vld [vmem:[%s292 + $0x3c] sm:$0xf]
      %v649 = vld [vmem:[%s3] sm:$0x1]
      %v651 = vlaneseq
      %v652 = vshrl.u32 %v651, 7
      %v653 = vsub.s32 0, %v652
      %v654 = vrot.slane %v649, %v653
      %v656 = vmul.f32 %v525, %v654
      %v657 = vmul.f32 %v526, %v654
      %v658 = vmul.f32 %v527, %v654
      %v659 = vmul.f32 %v528, %v654
      %v660 = vmul.f32 %v529, %v654
      %v661 = vmul.f32 %v530, %v654
      %v662 = vmul.f32 %v531, %v654
      %v663 = vmul.f32 %v532, %v654
      %v664 = vmul.f32 %v533, %v654
      %v665 = vmul.f32 %v534, %v654
      %v666 = vmul.f32 %v535, %v654
      %v667 = vmul.f32 %v536, %v654
      %v668 = vmul.f32 %v537, %v654
      %v669 = vmul.f32 %v538, %v654
      %v670 = vmul.f32 %v539, %v654
      %v671 = vmul.f32 %v540, %v654
      %s672 = scalar_lea.vmem %s3, 1
      %v673 = vld [vmem:[%s672] sm:$0x1]
      %v675 = vlaneseq
      %v676 = vshrl.u32 %v675, 7
      %v677 = vsub.s32 0, %v676
      %v678 = vrot.slane %v673, %v677
      %v680 = vmul.f32 %v561, %v678
      %v681 = vmul.f32 %v562, %v678
      %v682 = vmul.f32 %v563, %v678
      %v683 = vmul.f32 %v564, %v678
      %v684 = vmul.f32 %v565, %v678
      %v685 = vmul.f32 %v566, %v678
      %v686 = vmul.f32 %v567, %v678
      %v687 = vmul.f32 %v568, %v678
      %v688 = vmul.f32 %v569, %v678
      %v689 = vmul.f32 %v570, %v678
      %v690 = vmul.f32 %v571, %v678
      %v691 = vmul.f32 %v572, %v678
      %v692 = vmul.f32 %v573, %v678
      %v693 = vmul.f32 %v574, %v678
      %v694 = vmul.f32 %v575, %v678
      %v695 = vmul.f32 %v576, %v678
      %v696 = vadd.f32 %v656, %v680
      %v697 = vadd.f32 %v657, %v681
      %v698 = vadd.f32 %v658, %v682
      %v699 = vadd.f32 %v659, %v683
      %v700 = vadd.f32 %v660, %v684
      %v701 = vadd.f32 %v661, %v685
      %v702 = vadd.f32 %v662, %v686
      %v703 = vadd.f32 %v663, %v687
      %v704 = vadd.f32 %v664, %v688
      %v705 = vadd.f32 %v665, %v689
      %v706 = vadd.f32 %v666, %v690
      %v707 = vadd.f32 %v667, %v691
      %v708 = vadd.f32 %v668, %v692
      %v709 = vadd.f32 %v669, %v693
      %v710 = vadd.f32 %v670, %v694
      %v711 = vadd.f32 %v671, %v695
      %s712 = scalar_lea.vmem %s3, 2
      %v713 = vld [vmem:[%s712] sm:$0x1]
      %v715 = vlaneseq
      %v716 = vshrl.u32 %v715, 7
      %v717 = vsub.s32 0, %v716
      %v718 = vrot.slane %v713, %v717
      %v720 = vmul.f32 %v597, %v718
      %v721 = vmul.f32 %v598, %v718
      %v722 = vmul.f32 %v599, %v718
      %v723 = vmul.f32 %v600, %v718
      %v724 = vmul.f32 %v601, %v718
      %v725 = vmul.f32 %v602, %v718
      %v726 = vmul.f32 %v603, %v718
      %v727 = vmul.f32 %v604, %v718
      %v728 = vmul.f32 %v605, %v718
      %v729 = vmul.f32 %v606, %v718
      %v730 = vmul.f32 %v607, %v718
      %v731 = vmul.f32 %v608, %v718
      %v732 = vmul.f32 %v609, %v718
      %v733 = vmul.f32 %v610, %v718
      %v734 = vmul.f32 %v611, %v718
      %v735 = vmul.f32 %v612, %v718
      %s736 = scalar_lea.vmem %s3, 3
      %v737 = vld [vmem:[%s736] sm:$0x1]
      %v739 = vlaneseq
      %v740 = vshrl.u32 %v739, 7
      %v741 = vsub.s32 0, %v740
      %v742 = vrot.slane %v737, %v741
      %v744 = vmul.f32 %v527, %v742
      %v745 = vmul.f32 %v528, %v742
      %v746 = vmul.f32 %v529, %v742
      %v747 = vmul.f32 %v530, %v742
      %v748 = vmul.f32 %v531, %v742
      %v749 = vmul.f32 %v532, %v742
      %v750 = vmul.f32 %v533, %v742
      %v751 = vmul.f32 %v534, %v742
      %v752 = vmul.f32 %v535, %v742
      %v753 = vmul.f32 %v536, %v742
      %v754 = vmul.f32 %v537, %v742
      %v755 = vmul.f32 %v538, %v742
      %v756 = vmul.f32 %v539, %v742
      %v757 = vmul.f32 %v540, %v742
      %v758 = vmul.f32 %v541, %v742
      %v759 = vmul.f32 %v542, %v742
      %v760 = vadd.f32 %v720, %v744
      %v761 = vadd.f32 %v721, %v745
      %v762 = vadd.f32 %v722, %v746
      %v763 = vadd.f32 %v723, %v747
      %v764 = vadd.f32 %v724, %v748
      %v765 = vadd.f32 %v725, %v749
      %v766 = vadd.f32 %v726, %v750
      %v767 = vadd.f32 %v727, %v751
      %v768 = vadd.f32 %v728, %v752
      %v769 = vadd.f32 %v729, %v753
      %v770 = vadd.f32 %v730, %v754
      %v771 = vadd.f32 %v731, %v755
      %v772 = vadd.f32 %v732, %v756
      %v773 = vadd.f32 %v733, %v757
      %v774 = vadd.f32 %v734, %v758
      %v775 = vadd.f32 %v735, %v759
      %v776 = vadd.f32 %v696, %v760
      %v777 = vadd.f32 %v697, %v761
      %v778 = vadd.f32 %v698, %v762
      %v779 = vadd.f32 %v699, %v763
      %v780 = vadd.f32 %v700, %v764
      %v781 = vadd.f32 %v701, %v765
      %v782 = vadd.f32 %v702, %v766
      %v783 = vadd.f32 %v703, %v767
      %v784 = vadd.f32 %v704, %v768
      %v785 = vadd.f32 %v705, %v769
      %v786 = vadd.f32 %v706, %v770
      %v787 = vadd.f32 %v707, %v771
      %v788 = vadd.f32 %v708, %v772
      %v789 = vadd.f32 %v709, %v773
      %v790 = vadd.f32 %v710, %v774
      %v791 = vadd.f32 %v711, %v775
      %s792 = scalar_lea.vmem %s3, 4
      %v793 = vld [vmem:[%s792] sm:$0x1]
      %v795 = vlaneseq
      %v796 = vshrl.u32 %v795, 7
      %v797 = vsub.s32 0, %v796
      %v798 = vrot.slane %v793, %v797
      %v800 = vmul.f32 %v563, %v798
      %v801 = vmul.f32 %v564, %v798
      %v802 = vmul.f32 %v565, %v798
      %v803 = vmul.f32 %v566, %v798
      %v804 = vmul.f32 %v567, %v798
      %v805 = vmul.f32 %v568, %v798
      %v806 = vmul.f32 %v569, %v798
      %v807 = vmul.f32 %v570, %v798
      %v808 = vmul.f32 %v571, %v798
      %v809 = vmul.f32 %v572, %v798
      %v810 = vmul.f32 %v573, %v798
      %v811 = vmul.f32 %v574, %v798
      %v812 = vmul.f32 %v575, %v798
      %v813 = vmul.f32 %v576, %v798
      %v814 = vmul.f32 %v577, %v798
      %v815 = vmul.f32 %v578, %v798
      %s816 = scalar_lea.vmem %s3, 5
      %v817 = vld [vmem:[%s816] sm:$0x1]
      %v819 = vlaneseq
      %v820 = vshrl.u32 %v819, 7
      %v821 = vsub.s32 0, %v820
      %v822 = vrot.slane %v817, %v821
      %v824 = vmul.f32 %v599, %v822
      %v825 = vmul.f32 %v600, %v822
      %v826 = vmul.f32 %v601, %v822
      %v827 = vmul.f32 %v602, %v822
      %v828 = vmul.f32 %v603, %v822
      %v829 = vmul.f32 %v604, %v822
      %v830 = vmul.f32 %v605, %v822
      %v831 = vmul.f32 %v606, %v822
      %v832 = vmul.f32 %v607, %v822
      %v833 = vmul.f32 %v608, %v822
      %v834 = vmul.f32 %v609, %v822
      %v835 = vmul.f32 %v610, %v822
      %v836 = vmul.f32 %v611, %v822
      %v837 = vmul.f32 %v612, %v822
      %v838 = vmul.f32 %v613, %v822
      %v839 = vmul.f32 %v614, %v822
      %v840 = vadd.f32 %v800, %v824
      %v841 = vadd.f32 %v801, %v825
      %v842 = vadd.f32 %v802, %v826
      %v843 = vadd.f32 %v803, %v827
      %v844 = vadd.f32 %v804, %v828
      %v845 = vadd.f32 %v805, %v829
      %v846 = vadd.f32 %v806, %v830
      %v847 = vadd.f32 %v807, %v831
      %v848 = vadd.f32 %v808, %v832
      %v849 = vadd.f32 %v809, %v833
      %v850 = vadd.f32 %v810, %v834
      %v851 = vadd.f32 %v811, %v835
      %v852 = vadd.f32 %v812, %v836
      %v853 = vadd.f32 %v813, %v837
      %v854 = vadd.f32 %v814, %v838
      %v855 = vadd.f32 %v815, %v839
      %v856 = vadd.f32 %v776, %v840
      %v857 = vadd.f32 %v777, %v841
      %v858 = vadd.f32 %v778, %v842
      %v859 = vadd.f32 %v779, %v843
      %v860 = vadd.f32 %v780, %v844
      %v861 = vadd.f32 %v781, %v845
      %v862 = vadd.f32 %v782, %v846
      %v863 = vadd.f32 %v783, %v847
      %v864 = vadd.f32 %v784, %v848
      %v865 = vadd.f32 %v785, %v849
      %v866 = vadd.f32 %v786, %v850
      %v867 = vadd.f32 %v787, %v851
      %v868 = vadd.f32 %v788, %v852
      %v869 = vadd.f32 %v789, %v853
      %v870 = vadd.f32 %v790, %v854
      %v871 = vadd.f32 %v791, %v855
      %s872 = scalar_lea.vmem %s3, 6
      %v873 = vld [vmem:[%s872] sm:$0x1]
      %v875 = vlaneseq
      %v876 = vshrl.u32 %v875, 7
      %v877 = vsub.s32 0, %v876
      %v878 = vrot.slane %v873, %v877
      %v880 = vmul.f32 %v529, %v878
      %v881 = vmul.f32 %v530, %v878
      %v882 = vmul.f32 %v531, %v878
      %v883 = vmul.f32 %v532, %v878
      %v884 = vmul.f32 %v533, %v878
      %v885 = vmul.f32 %v534, %v878
      %v886 = vmul.f32 %v535, %v878
      %v887 = vmul.f32 %v536, %v878
      %v888 = vmul.f32 %v537, %v878
      %v889 = vmul.f32 %v538, %v878
      %v890 = vmul.f32 %v539, %v878
      %v891 = vmul.f32 %v540, %v878
      %v892 = vmul.f32 %v541, %v878
      %v893 = vmul.f32 %v542, %v878
      %v894 = vmul.f32 %v543, %v878
      %v895 = vmul.f32 %v544, %v878
      %s896 = scalar_lea.vmem %s3, 7
      %v897 = vld [vmem:[%s896] sm:$0x1]
      %v899 = vlaneseq
      %v900 = vshrl.u32 %v899, 7
      %v901 = vsub.s32 0, %v900
      %v902 = vrot.slane %v897, %v901
      %v904 = vmul.f32 %v565, %v902
      %v905 = vmul.f32 %v566, %v902
      %v906 = vmul.f32 %v567, %v902
      %v907 = vmul.f32 %v568, %v902
      %v908 = vmul.f32 %v569, %v902
      %v909 = vmul.f32 %v570, %v902
      %v910 = vmul.f32 %v571, %v902
      %v911 = vmul.f32 %v572, %v902
      %v912 = vmul.f32 %v573, %v902
      %v913 = vmul.f32 %v574, %v902
      %v914 = vmul.f32 %v575, %v902
      %v915 = vmul.f32 %v576, %v902
      %v916 = vmul.f32 %v577, %v902
      %v917 = vmul.f32 %v578, %v902
      %v918 = vmul.f32 %v579, %v902
      %v919 = vmul.f32 %v580, %v902
      %v920 = vadd.f32 %v880, %v904
      %v921 = vadd.f32 %v881, %v905
      %v922 = vadd.f32 %v882, %v906
      %v923 = vadd.f32 %v883, %v907
      %v924 = vadd.f32 %v884, %v908
      %v925 = vadd.f32 %v885, %v909
      %v926 = vadd.f32 %v886, %v910
      %v927 = vadd.f32 %v887, %v911
      %v928 = vadd.f32 %v888, %v912
      %v929 = vadd.f32 %v889, %v913
      %v930 = vadd.f32 %v890, %v914
      %v931 = vadd.f32 %v891, %v915
      %v932 = vadd.f32 %v892, %v916
      %v933 = vadd.f32 %v893, %v917
      %v934 = vadd.f32 %v894, %v918
      %v935 = vadd.f32 %v895, %v919
      %v936 = vadd.f32 %v856, %v920
      %v937 = vadd.f32 %v857, %v921
      %v938 = vadd.f32 %v858, %v922
      %v939 = vadd.f32 %v859, %v923
      %v940 = vadd.f32 %v860, %v924
      %v941 = vadd.f32 %v861, %v925
      %v942 = vadd.f32 %v862, %v926
      %v943 = vadd.f32 %v863, %v927
      %v944 = vadd.f32 %v864, %v928
      %v945 = vadd.f32 %v865, %v929
      %v946 = vadd.f32 %v866, %v930
      %v947 = vadd.f32 %v867, %v931
      %v948 = vadd.f32 %v868, %v932
      %v949 = vadd.f32 %v869, %v933
      %v950 = vadd.f32 %v870, %v934
      %v951 = vadd.f32 %v871, %v935
      %s952 = scalar_lea.vmem %s3, 8
      %v953 = vld [vmem:[%s952] sm:$0x1]
      %v955 = vlaneseq
      %v956 = vshrl.u32 %v955, 7
      %v957 = vsub.s32 0, %v956
      %v958 = vrot.slane %v953, %v957
      %v960 = vmul.f32 %v601, %v958
      %v961 = vmul.f32 %v602, %v958
      %v962 = vmul.f32 %v603, %v958
      %v963 = vmul.f32 %v604, %v958
      %v964 = vmul.f32 %v605, %v958
      %v965 = vmul.f32 %v606, %v958
      %v966 = vmul.f32 %v607, %v958
      %v967 = vmul.f32 %v608, %v958
      %v968 = vmul.f32 %v609, %v958
      %v969 = vmul.f32 %v610, %v958
      %v970 = vmul.f32 %v611, %v958
      %v971 = vmul.f32 %v612, %v958
      %v972 = vmul.f32 %v613, %v958
      %v973 = vmul.f32 %v614, %v958
      %v974 = vmul.f32 %v615, %v958
      %v975 = vmul.f32 %v616, %v958
      %v976 = vadd.f32 %v936, %v960
      %v977 = vadd.f32 %v937, %v961
      %v978 = vadd.f32 %v938, %v962
      %v979 = vadd.f32 %v939, %v963
      %v980 = vadd.f32 %v940, %v964
      %v981 = vadd.f32 %v941, %v965
      %v982 = vadd.f32 %v942, %v966
      %v983 = vadd.f32 %v943, %v967
      %v984 = vadd.f32 %v944, %v968
      %v985 = vadd.f32 %v945, %v969
      %v986 = vadd.f32 %v946, %v970
      %v987 = vadd.f32 %v947, %v971
      %v988 = vadd.f32 %v948, %v972
      %v989 = vadd.f32 %v949, %v973
      %v990 = vadd.f32 %v950, %v974
      %v991 = vadd.f32 %v951, %v975
      %v992 = vpack.c.bf16 %v977, %v976
      %v993 = vpack.c.bf16 %v979, %v978
      %v994 = vpack.c.bf16 %v981, %v980
      %v995 = vpack.c.bf16 %v983, %v982
      %v996 = vpack.c.bf16 %v985, %v984
      %v997 = vpack.c.bf16 %v987, %v986
      %v998 = vpack.c.bf16 %v989, %v988
      %v999 = vpack.c.bf16 %v991, %v990
      %v1016 = vunpack.c.l.b16 %v633
      %v1017 = vunpack.c.l.b16 %v634
      %v1018 = vunpack.c.l.b16 %v635
      %v1019 = vunpack.c.l.b16 %v636
      %v1020 = vunpack.c.l.b16 %v637
      %v1021 = vunpack.c.l.b16 %v638
      %v1022 = vunpack.c.l.b16 %v639
      %v1023 = vunpack.c.l.b16 %v640
      %v1024 = vunpack.c.l.b16 %v641
      %v1025 = vunpack.c.l.b16 %v642
      %v1026 = vunpack.c.l.b16 %v643
      %v1027 = vunpack.c.l.b16 %v644
      %v1028 = vunpack.c.l.b16 %v645
      %v1029 = vunpack.c.l.b16 %v646
      %v1030 = vunpack.c.l.b16 %v647
      %v1031 = vunpack.c.l.b16 %v648
      %v1032 = vpack.c.b16 %v1017, %v1016
      %v1033 = vpack.c.b16 %v1019, %v1018
      %v1034 = vpack.c.b16 %v1021, %v1020
      %v1035 = vpack.c.b16 %v1023, %v1022
      %v1036 = vpack.c.b16 %v1025, %v1024
      %v1037 = vpack.c.b16 %v1027, %v1026
      %v1038 = vpack.c.b16 %v1029, %v1028
      %v1039 = vpack.c.b16 %v1031, %v1030
      %1048 = vmatprep.subr.bf16.mxu0 0
      %1049 = vmatpush1.bf16.msra.mxu0 %v1039
      %1050 = vmatprep.subr.bf16.mxu0 0
      %1051 = vmatpush1.bf16.msra.mxu0 %v1038
      %1052 = vmatprep.subr.bf16.mxu0 0
      %1053 = vmatpush1.bf16.msra.mxu0 %v1037
      %1054 = vmatprep.subr.bf16.mxu0 0
      %1055 = vmatpush1.bf16.msra.mxu0 %v1036
      %1056 = vmatprep.subr.bf16.mxu0 0
      %1057 = vmatpush1.bf16.msra.mxu0 %v1035
      %1058 = vmatprep.subr.bf16.mxu0 0
      %1059 = vmatpush1.bf16.msra.mxu0 %v1034
      %1060 = vmatprep.subr.bf16.mxu0 0
      %1061 = vmatpush1.bf16.msra.mxu0 %v1033
      %1062 = vmatprep.subr.bf16.mxu0 0
      %1063 = vmatpush1.bf16.msra.mxu0 %v1032
      %1064 = vmatprep.subr.bf16.mxu0 0
      %1065 = vmatpush2.bf16.msra.mxu0 0
      %1066 = vmatprep.subr.bf16.mxu0 0
      %1067 = vmatpush2.bf16.msra.mxu0 0
      %1068 = vmatprep.subr.bf16.mxu0 0
      %1069 = vmatpush2.bf16.msra.mxu0 0
      %1070 = vmatprep.subr.bf16.mxu0 0
      %1071 = vmatpush2.bf16.msra.mxu0 0
      %1072 = vmatprep.subr.bf16.mxu0 0
      %1073 = vmatpush2.bf16.msra.mxu0 0
      %1074 = vmatprep.subr.bf16.mxu0 0
      %1075 = vmatpush2.bf16.msra.mxu0 0
      %1076 = vmatprep.subr.bf16.mxu0 0
      %1077 = vmatpush2.bf16.msra.mxu0 0
      %1078 = vmatprep.subr.bf16.mxu0 0
      %1079 = vmatpush2.bf16.msra.mxu0 0
      %1080 = vmatprep.mubr.bf16.mxu0 0
      %1081 = vmatmul.mubr.bf16.gmra.mxu0 %v992
      %v1082 = vpop.f32.mrf.mxu0
      %v1083 = vadd.f32 0.0, %v1082
      %v1084 = vpop.f32.mrf.mxu0
      %v1085 = vpop.f32.mrf.mxu0
      %v1086 = vadd.f32 0.0, %v1085
      %v1087 = vpop.f32.mrf.mxu0
      %1088 = vmatprep.mubr.bf16.mxu0 0
      %1089 = vmatmul.mubr.bf16.gmra.mxu0 %v993
      %v1090 = vpop.f32.mrf.mxu0
      %v1091 = vadd.f32 0.0, %v1090
      %v1092 = vpop.f32.mrf.mxu0
      %v1093 = vpop.f32.mrf.mxu0
      %v1094 = vadd.f32 0.0, %v1093
      %v1095 = vpop.f32.mrf.mxu0
      %1096 = vmatprep.mubr.bf16.mxu0 0
      %1097 = vmatmul.mubr.bf16.gmra.mxu0 %v994
      %v1098 = vpop.f32.mrf.mxu0
      %v1099 = vadd.f32 0.0, %v1098
      %v1100 = vpop.f32.mrf.mxu0
      %v1101 = vpop.f32.mrf.mxu0
      %v1102 = vadd.f32 0.0, %v1101
      %v1103 = vpop.f32.mrf.mxu0
      %1104 = vmatprep.mubr.bf16.mxu0 0
      %1105 = vmatmul.mubr.bf16.gmra.mxu0 %v995
      %v1106 = vpop.f32.mrf.mxu0
      %v1107 = vadd.f32 0.0, %v1106
      %v1108 = vpop.f32.mrf.mxu0
      %v1109 = vpop.f32.mrf.mxu0
      %v1110 = vadd.f32 0.0, %v1109
      %v1111 = vpop.f32.mrf.mxu0
      %1112 = vmatprep.mubr.bf16.mxu0 0
      %1113 = vmatmul.mubr.bf16.gmra.mxu0 %v996
      %v1114 = vpop.f32.mrf.mxu0
      %v1115 = vadd.f32 0.0, %v1114
      %v1116 = vpop.f32.mrf.mxu0
      %v1117 = vpop.f32.mrf.mxu0
      %v1118 = vadd.f32 0.0, %v1117
      %v1119 = vpop.f32.mrf.mxu0
      %1120 = vmatprep.mubr.bf16.mxu0 0
      %1121 = vmatmul.mubr.bf16.gmra.mxu0 %v997
      %v1122 = vpop.f32.mrf.mxu0
      %v1123 = vadd.f32 0.0, %v1122
      %v1124 = vpop.f32.mrf.mxu0
      %v1125 = vpop.f32.mrf.mxu0
      %v1126 = vadd.f32 0.0, %v1125
      %v1127 = vpop.f32.mrf.mxu0
      %1128 = vmatprep.mubr.bf16.mxu0 0
      %1129 = vmatmul.mubr.bf16.gmra.mxu0 %v998
      %v1130 = vpop.f32.mrf.mxu0
      %v1131 = vadd.f32 0.0, %v1130
      %v1132 = vpop.f32.mrf.mxu0
      %v1133 = vpop.f32.mrf.mxu0
      %v1134 = vadd.f32 0.0, %v1133
      %v1135 = vpop.f32.mrf.mxu0
      %1136 = vmatprep.mubr.bf16.mxu0 0
      %1137 = vmatmul.mubr.bf16.gmra.mxu0 %v999
      %v1138 = vpop.f32.mrf.mxu0
      %v1139 = vadd.f32 0.0, %v1138
      %v1140 = vpop.f32.mrf.mxu0
      %v1141 = vpop.f32.mrf.mxu0
      %v1142 = vadd.f32 0.0, %v1141
      %v1143 = vpop.f32.mrf.mxu0
      %1144 = vdwg.mxu0
      %v1145 = vpack.c.bf16 %v1086, %v1083
      %v1146 = vpack.c.bf16 %v1094, %v1091
      %v1147 = vpack.c.bf16 %v1102, %v1099
      %v1148 = vpack.c.bf16 %v1110, %v1107
      %v1149 = vpack.c.bf16 %v1118, %v1115
      %v1150 = vpack.c.bf16 %v1126, %v1123
      %v1151 = vpack.c.bf16 %v1134, %v1131
      %v1152 = vpack.c.bf16 %v1142, %v1139
      %v1161 = vunpack.c.l.b16 %v1145
      %v1162 = vunpack.c.h.b16 %v1145
      %v1163 = vunpack.c.l.b16 %v1146
      %v1164 = vunpack.c.h.b16 %v1146
      %v1165 = vunpack.c.l.b16 %v1147
      %v1166 = vunpack.c.h.b16 %v1147
      %v1167 = vunpack.c.l.b16 %v1148
      %v1168 = vunpack.c.h.b16 %v1148
      %v1169 = vunpack.c.l.b16 %v1149
      %v1170 = vunpack.c.h.b16 %v1149
      %v1171 = vunpack.c.l.b16 %v1150
      %v1172 = vunpack.c.h.b16 %v1150
      %v1173 = vunpack.c.l.b16 %v1151
      %v1174 = vunpack.c.h.b16 %v1151
      %v1175 = vunpack.c.l.b16 %v1152
      %v1176 = vunpack.c.h.b16 %v1152
      %v1177 = vpack.c.b16 %v1161, %v1161
      %v1178 = vpack.c.b16 %v1162, %v1162
      %v1179 = vpack.c.b16 %v1163, %v1163
      %v1180 = vpack.c.b16 %v1164, %v1164
      %v1181 = vpack.c.b16 %v1165, %v1165
      %v1182 = vpack.c.b16 %v1166, %v1166
      %v1183 = vpack.c.b16 %v1167, %v1167
      %v1184 = vpack.c.b16 %v1168, %v1168
      %v1185 = vpack.c.b16 %v1169, %v1169
      %v1186 = vpack.c.b16 %v1170, %v1170
      %v1187 = vpack.c.b16 %v1171, %v1171
      %v1188 = vpack.c.b16 %v1172, %v1172
      %v1189 = vpack.c.b16 %v1173, %v1173
      %v1190 = vpack.c.b16 %v1174, %v1174
      %v1191 = vpack.c.b16 %v1175, %v1175
      %v1192 = vpack.c.b16 %v1176, %v1176
      %1209 = vst [vmem:[%s300] sm:$0xf] %v1177
      %1210 = vst [vmem:[%s300 + $0x4] sm:$0xf] %v1178
      %1211 = vst [vmem:[%s300 + $0x8] sm:$0xf] %v1179
      %1212 = vst [vmem:[%s300 + $0xc] sm:$0xf] %v1180
      %1213 = vst [vmem:[%s300 + $0x10] sm:$0xf] %v1181
      %1214 = vst [vmem:[%s300 + $0x14] sm:$0xf] %v1182
      %1215 = vst [vmem:[%s300 + $0x18] sm:$0xf] %v1183
      %1216 = vst [vmem:[%s300 + $0x1c] sm:$0xf] %v1184
      %1217 = vst [vmem:[%s300 + $0x20] sm:$0xf] %v1185
      %1218 = vst [vmem:[%s300 + $0x24] sm:$0xf] %v1186
      %1219 = vst [vmem:[%s300 + $0x28] sm:$0xf] %v1187
      %1220 = vst [vmem:[%s300 + $0x2c] sm:$0xf] %v1188
      %1221 = vst [vmem:[%s300 + $0x30] sm:$0xf] %v1189
      %1222 = vst [vmem:[%s300 + $0x34] sm:$0xf] %v1190
      %1223 = vst [vmem:[%s300 + $0x38] sm:$0xf] %v1191
      %1224 = vst [vmem:[%s300 + $0x3c] sm:$0xf] %v1192
      %v1225 = vadd.f32 %v1083, %v1086
      %v1226 = vadd.f32 %v1225, %v1091
      %v1227 = vadd.f32 %v1226, %v1094
      %v1228 = vadd.f32 %v1227, %v1099
      %v1229 = vadd.f32 %v1228, %v1102
      %v1230 = vadd.f32 %v1229, %v1107
      %v1231 = vadd.f32 %v1230, %v1110
      %v1232 = vadd.f32 %v1231, %v1115
      %v1233 = vadd.f32 %v1232, %v1118
      %v1234 = vadd.f32 %v1233, %v1123
      %v1235 = vadd.f32 %v1234, %v1126
      %v1236 = vadd.f32 %v1235, %v1131
      %v1237 = vadd.f32 %v1236, %v1134
      %v1238 = vadd.f32 %v1237, %v1139
      %v1239 = vadd.f32 %v1238, %v1142
      %v1240 = vrot.slane %v1239, 4
      %v1241 = vadd.f32 %v1239, %v1240
      %v1242 = vrot.slane %v1241, 2
      %v1243 = vadd.f32 %v1241, %v1242
      %v1244 = vrot.slane %v1243, 1
      %v1245 = vadd.f32 %v1243, %v1244
      %v1246 = vmul.f32 %v1083, %v1083
      %v1247 = vmul.f32 %v1086, %v1086
      %v1248 = vmul.f32 %v1091, %v1091
      %v1249 = vmul.f32 %v1094, %v1094
      %v1250 = vmul.f32 %v1099, %v1099
      %v1251 = vmul.f32 %v1102, %v1102
      %v1252 = vmul.f32 %v1107, %v1107
      %v1253 = vmul.f32 %v1110, %v1110
      %v1254 = vmul.f32 %v1115, %v1115
      %v1255 = vmul.f32 %v1118, %v1118
      %v1256 = vmul.f32 %v1123, %v1123
      %v1257 = vmul.f32 %v1126, %v1126
      %v1258 = vmul.f32 %v1131, %v1131
      %v1259 = vmul.f32 %v1134, %v1134
      %v1260 = vmul.f32 %v1139, %v1139
      %v1261 = vmul.f32 %v1142, %v1142
      %v1262 = vadd.f32 %v1246, %v1247
      %v1263 = vadd.f32 %v1262, %v1248
      %v1264 = vadd.f32 %v1263, %v1249
      %v1265 = vadd.f32 %v1264, %v1250
      %v1266 = vadd.f32 %v1265, %v1251
      %v1267 = vadd.f32 %v1266, %v1252
      %v1268 = vadd.f32 %v1267, %v1253
      %v1269 = vadd.f32 %v1268, %v1254
      %v1270 = vadd.f32 %v1269, %v1255
      %v1271 = vadd.f32 %v1270, %v1256
      %v1272 = vadd.f32 %v1271, %v1257
      %v1273 = vadd.f32 %v1272, %v1258
      %v1274 = vadd.f32 %v1273, %v1259
      %v1275 = vadd.f32 %v1274, %v1260
      %v1276 = vadd.f32 %v1275, %v1261
      %v1277 = vrot.slane %v1276, 4
      %v1278 = vadd.f32 %v1276, %v1277
      %v1279 = vrot.slane %v1278, 2
      %v1280 = vadd.f32 %v1278, %v1279
      %v1281 = vrot.slane %v1280, 1
      %v1282 = vadd.f32 %v1280, %v1281
      %v1283 = vld [vmem:[%s3] sm:$0x1]
      %v1285 = vlaneseq
      %v1286 = vshrl.u32 %v1285, 7
      %v1287 = vsub.s32 0, %v1286
      %v1288 = vrot.slane %v1283, %v1287
      %v1290 = vmul.f32 %v541, %v1288
      %v1291 = vmul.f32 %v542, %v1288
      %v1292 = vmul.f32 %v543, %v1288
      %v1293 = vmul.f32 %v544, %v1288
      %v1294 = vmul.f32 %v545, %v1288
      %v1295 = vmul.f32 %v546, %v1288
      %v1296 = vmul.f32 %v547, %v1288
      %v1297 = vmul.f32 %v548, %v1288
      %v1298 = vmul.f32 %v549, %v1288
      %v1299 = vmul.f32 %v550, %v1288
      %v1300 = vmul.f32 %v551, %v1288
      %v1301 = vmul.f32 %v552, %v1288
      %v1302 = vmul.f32 %v553, %v1288
      %v1303 = vmul.f32 %v554, %v1288
      %v1304 = vmul.f32 %v555, %v1288
      %v1305 = vmul.f32 %v556, %v1288
      %v1306 = vld [vmem:[%s672] sm:$0x1]
      %v1308 = vlaneseq
      %v1309 = vshrl.u32 %v1308, 7
      %v1310 = vsub.s32 0, %v1309
      %v1311 = vrot.slane %v1306, %v1310
      %v1313 = vmul.f32 %v577, %v1311
      %v1314 = vmul.f32 %v578, %v1311
      %v1315 = vmul.f32 %v579, %v1311
      %v1316 = vmul.f32 %v580, %v1311
      %v1317 = vmul.f32 %v581, %v1311
      %v1318 = vmul.f32 %v582, %v1311
      %v1319 = vmul.f32 %v583, %v1311
      %v1320 = vmul.f32 %v584, %v1311
      %v1321 = vmul.f32 %v585, %v1311
      %v1322 = vmul.f32 %v586, %v1311
      %v1323 = vmul.f32 %v587, %v1311
      %v1324 = vmul.f32 %v588, %v1311
      %v1325 = vmul.f32 %v589, %v1311
      %v1326 = vmul.f32 %v590, %v1311
      %v1327 = vmul.f32 %v591, %v1311
      %v1328 = vmul.f32 %v592, %v1311
      %v1329 = vadd.f32 %v1290, %v1313
      %v1330 = vadd.f32 %v1291, %v1314
      %v1331 = vadd.f32 %v1292, %v1315
      %v1332 = vadd.f32 %v1293, %v1316
      %v1333 = vadd.f32 %v1294, %v1317
      %v1334 = vadd.f32 %v1295, %v1318
      %v1335 = vadd.f32 %v1296, %v1319
      %v1336 = vadd.f32 %v1297, %v1320
      %v1337 = vadd.f32 %v1298, %v1321
      %v1338 = vadd.f32 %v1299, %v1322
      %v1339 = vadd.f32 %v1300, %v1323
      %v1340 = vadd.f32 %v1301, %v1324
      %v1341 = vadd.f32 %v1302, %v1325
      %v1342 = vadd.f32 %v1303, %v1326
      %v1343 = vadd.f32 %v1304, %v1327
      %v1344 = vadd.f32 %v1305, %v1328
      %v1345 = vld [vmem:[%s712] sm:$0x1]
      %v1347 = vlaneseq
      %v1348 = vshrl.u32 %v1347, 7
      %v1349 = vsub.s32 0, %v1348
      %v1350 = vrot.slane %v1345, %v1349
      %v1352 = vmul.f32 %v613, %v1350
      %v1353 = vmul.f32 %v614, %v1350
      %v1354 = vmul.f32 %v615, %v1350
      %v1355 = vmul.f32 %v616, %v1350
      %v1356 = vmul.f32 %v617, %v1350
      %v1357 = vmul.f32 %v618, %v1350
      %v1358 = vmul.f32 %v619, %v1350
      %v1359 = vmul.f32 %v620, %v1350
      %v1360 = vmul.f32 %v621, %v1350
      %v1361 = vmul.f32 %v622, %v1350
      %v1362 = vmul.f32 %v623, %v1350
      %v1363 = vmul.f32 %v624, %v1350
      %v1364 = vmul.f32 %v625, %v1350
      %v1365 = vmul.f32 %v626, %v1350
      %v1366 = vmul.f32 %v627, %v1350
      %v1367 = vmul.f32 %v628, %v1350
      %v1368 = vld [vmem:[%s736] sm:$0x1]
      %v1370 = vlaneseq
      %v1371 = vshrl.u32 %v1370, 7
      %v1372 = vsub.s32 0, %v1371
      %v1373 = vrot.slane %v1368, %v1372
      %v1375 = vmul.f32 %v543, %v1373
      %v1376 = vmul.f32 %v544, %v1373
      %v1377 = vmul.f32 %v545, %v1373
      %v1378 = vmul.f32 %v546, %v1373
      %v1379 = vmul.f32 %v547, %v1373
      %v1380 = vmul.f32 %v548, %v1373
      %v1381 = vmul.f32 %v549, %v1373
      %v1382 = vmul.f32 %v550, %v1373
      %v1383 = vmul.f32 %v551, %v1373
      %v1384 = vmul.f32 %v552, %v1373
      %v1385 = vmul.f32 %v553, %v1373
      %v1386 = vmul.f32 %v554, %v1373
      %v1387 = vmul.f32 %v555, %v1373
      %v1388 = vmul.f32 %v556, %v1373
      %v1389 = vmul.f32 %v557, %v1373
      %v1390 = vmul.f32 %v558, %v1373
      %v1391 = vadd.f32 %v1352, %v1375
      %v1392 = vadd.f32 %v1353, %v1376
      %v1393 = vadd.f32 %v1354, %v1377
      %v1394 = vadd.f32 %v1355, %v1378
      %v1395 = vadd.f32 %v1356, %v1379
      %v1396 = vadd.f32 %v1357, %v1380
      %v1397 = vadd.f32 %v1358, %v1381
      %v1398 = vadd.f32 %v1359, %v1382
      %v1399 = vadd.f32 %v1360, %v1383
      %v1400 = vadd.f32 %v1361, %v1384
      %v1401 = vadd.f32 %v1362, %v1385
      %v1402 = vadd.f32 %v1363, %v1386
      %v1403 = vadd.f32 %v1364, %v1387
      %v1404 = vadd.f32 %v1365, %v1388
      %v1405 = vadd.f32 %v1366, %v1389
      %v1406 = vadd.f32 %v1367, %v1390
      %v1407 = vadd.f32 %v1329, %v1391
      %v1408 = vadd.f32 %v1330, %v1392
      %v1409 = vadd.f32 %v1331, %v1393
      %v1410 = vadd.f32 %v1332, %v1394
      %v1411 = vadd.f32 %v1333, %v1395
      %v1412 = vadd.f32 %v1334, %v1396
      %v1413 = vadd.f32 %v1335, %v1397
      %v1414 = vadd.f32 %v1336, %v1398
      %v1415 = vadd.f32 %v1337, %v1399
      %v1416 = vadd.f32 %v1338, %v1400
      %v1417 = vadd.f32 %v1339, %v1401
      %v1418 = vadd.f32 %v1340, %v1402
      %v1419 = vadd.f32 %v1341, %v1403
      %v1420 = vadd.f32 %v1342, %v1404
      %v1421 = vadd.f32 %v1343, %v1405
      %v1422 = vadd.f32 %v1344, %v1406
      %v1423 = vld [vmem:[%s792] sm:$0x1]
      %v1425 = vlaneseq
      %v1426 = vshrl.u32 %v1425, 7
      %v1427 = vsub.s32 0, %v1426
      %v1428 = vrot.slane %v1423, %v1427
      %v1430 = vmul.f32 %v579, %v1428
      %v1431 = vmul.f32 %v580, %v1428
      %v1432 = vmul.f32 %v581, %v1428
      %v1433 = vmul.f32 %v582, %v1428
      %v1434 = vmul.f32 %v583, %v1428
      %v1435 = vmul.f32 %v584, %v1428
      %v1436 = vmul.f32 %v585, %v1428
      %v1437 = vmul.f32 %v586, %v1428
      %v1438 = vmul.f32 %v587, %v1428
      %v1439 = vmul.f32 %v588, %v1428
      %v1440 = vmul.f32 %v589, %v1428
      %v1441 = vmul.f32 %v590, %v1428
      %v1442 = vmul.f32 %v591, %v1428
      %v1443 = vmul.f32 %v592, %v1428
      %v1444 = vmul.f32 %v593, %v1428
      %v1445 = vmul.f32 %v594, %v1428
      %v1446 = vld [vmem:[%s816] sm:$0x1]
      %v1448 = vlaneseq
      %v1449 = vshrl.u32 %v1448, 7
      %v1450 = vsub.s32 0, %v1449
      %v1451 = vrot.slane %v1446, %v1450
      %v1453 = vmul.f32 %v615, %v1451
      %v1454 = vmul.f32 %v616, %v1451
      %v1455 = vmul.f32 %v617, %v1451
      %v1456 = vmul.f32 %v618, %v1451
      %v1457 = vmul.f32 %v619, %v1451
      %v1458 = vmul.f32 %v620, %v1451
      %v1459 = vmul.f32 %v621, %v1451
      %v1460 = vmul.f32 %v622, %v1451
      %v1461 = vmul.f32 %v623, %v1451
      %v1462 = vmul.f32 %v624, %v1451
      %v1463 = vmul.f32 %v625, %v1451
      %v1464 = vmul.f32 %v626, %v1451
      %v1465 = vmul.f32 %v627, %v1451
      %v1466 = vmul.f32 %v628, %v1451
      %v1467 = vmul.f32 %v629, %v1451
      %v1468 = vmul.f32 %v630, %v1451
      %v1469 = vadd.f32 %v1430, %v1453
      %v1470 = vadd.f32 %v1431, %v1454
      %v1471 = vadd.f32 %v1432, %v1455
      %v1472 = vadd.f32 %v1433, %v1456
      %v1473 = vadd.f32 %v1434, %v1457
      %v1474 = vadd.f32 %v1435, %v1458
      %v1475 = vadd.f32 %v1436, %v1459
      %v1476 = vadd.f32 %v1437, %v1460
      %v1477 = vadd.f32 %v1438, %v1461
      %v1478 = vadd.f32 %v1439, %v1462
      %v1479 = vadd.f32 %v1440, %v1463
      %v1480 = vadd.f32 %v1441, %v1464
      %v1481 = vadd.f32 %v1442, %v1465
      %v1482 = vadd.f32 %v1443, %v1466
      %v1483 = vadd.f32 %v1444, %v1467
      %v1484 = vadd.f32 %v1445, %v1468
      %v1485 = vadd.f32 %v1407, %v1469
      %v1486 = vadd.f32 %v1408, %v1470
      %v1487 = vadd.f32 %v1409, %v1471
      %v1488 = vadd.f32 %v1410, %v1472
      %v1489 = vadd.f32 %v1411, %v1473
      %v1490 = vadd.f32 %v1412, %v1474
      %v1491 = vadd.f32 %v1413, %v1475
      %v1492 = vadd.f32 %v1414, %v1476
      %v1493 = vadd.f32 %v1415, %v1477
      %v1494 = vadd.f32 %v1416, %v1478
      %v1495 = vadd.f32 %v1417, %v1479
      %v1496 = vadd.f32 %v1418, %v1480
      %v1497 = vadd.f32 %v1419, %v1481
      %v1498 = vadd.f32 %v1420, %v1482
      %v1499 = vadd.f32 %v1421, %v1483
      %v1500 = vadd.f32 %v1422, %v1484
      %v1501 = vld [vmem:[%s872] sm:$0x1]
      %v1503 = vlaneseq
      %v1504 = vshrl.u32 %v1503, 7
      %v1505 = vsub.s32 0, %v1504
      %v1506 = vrot.slane %v1501, %v1505
      %v1508 = vmul.f32 %v545, %v1506
      %v1509 = vmul.f32 %v546, %v1506
      %v1510 = vmul.f32 %v547, %v1506
      %v1511 = vmul.f32 %v548, %v1506
      %v1512 = vmul.f32 %v549, %v1506
      %v1513 = vmul.f32 %v550, %v1506
      %v1514 = vmul.f32 %v551, %v1506
      %v1515 = vmul.f32 %v552, %v1506
      %v1516 = vmul.f32 %v553, %v1506
      %v1517 = vmul.f32 %v554, %v1506
      %v1518 = vmul.f32 %v555, %v1506
      %v1519 = vmul.f32 %v556, %v1506
      %v1520 = vmul.f32 %v557, %v1506
      %v1521 = vmul.f32 %v558, %v1506
      %v1522 = vmul.f32 %v559, %v1506
      %v1523 = vmul.f32 %v560, %v1506
      %v1524 = vld [vmem:[%s896] sm:$0x1]
      %v1526 = vlaneseq
      %v1527 = vshrl.u32 %v1526, 7
      %v1528 = vsub.s32 0, %v1527
      %v1529 = vrot.slane %v1524, %v1528
      %v1531 = vmul.f32 %v581, %v1529
      %v1532 = vmul.f32 %v582, %v1529
      %v1533 = vmul.f32 %v583, %v1529
      %v1534 = vmul.f32 %v584, %v1529
      %v1535 = vmul.f32 %v585, %v1529
      %v1536 = vmul.f32 %v586, %v1529
      %v1537 = vmul.f32 %v587, %v1529
      %v1538 = vmul.f32 %v588, %v1529
      %v1539 = vmul.f32 %v589, %v1529
      %v1540 = vmul.f32 %v590, %v1529
      %v1541 = vmul.f32 %v591, %v1529
      %v1542 = vmul.f32 %v592, %v1529
      %v1543 = vmul.f32 %v593, %v1529
      %v1544 = vmul.f32 %v594, %v1529
      %v1545 = vmul.f32 %v595, %v1529
      %v1546 = vmul.f32 %v596, %v1529
      %v1547 = vadd.f32 %v1508, %v1531
      %v1548 = vadd.f32 %v1509, %v1532
      %v1549 = vadd.f32 %v1510, %v1533
      %v1550 = vadd.f32 %v1511, %v1534
      %v1551 = vadd.f32 %v1512, %v1535
      %v1552 = vadd.f32 %v1513, %v1536
      %v1553 = vadd.f32 %v1514, %v1537
      %v1554 = vadd.f32 %v1515, %v1538
      %v1555 = vadd.f32 %v1516, %v1539
      %v1556 = vadd.f32 %v1517, %v1540
      %v1557 = vadd.f32 %v1518, %v1541
      %v1558 = vadd.f32 %v1519, %v1542
      %v1559 = vadd.f32 %v1520, %v1543
      %v1560 = vadd.f32 %v1521, %v1544
      %v1561 = vadd.f32 %v1522, %v1545
      %v1562 = vadd.f32 %v1523, %v1546
      %v1563 = vadd.f32 %v1485, %v1547
      %v1564 = vadd.f32 %v1486, %v1548
      %v1565 = vadd.f32 %v1487, %v1549
      %v1566 = vadd.f32 %v1488, %v1550
      %v1567 = vadd.f32 %v1489, %v1551
      %v1568 = vadd.f32 %v1490, %v1552
      %v1569 = vadd.f32 %v1491, %v1553
      %v1570 = vadd.f32 %v1492, %v1554
      %v1571 = vadd.f32 %v1493, %v1555
      %v1572 = vadd.f32 %v1494, %v1556
      %v1573 = vadd.f32 %v1495, %v1557
      %v1574 = vadd.f32 %v1496, %v1558
      %v1575 = vadd.f32 %v1497, %v1559
      %v1576 = vadd.f32 %v1498, %v1560
      %v1577 = vadd.f32 %v1499, %v1561
      %v1578 = vadd.f32 %v1500, %v1562
      %v1579 = vld [vmem:[%s952] sm:$0x1]
      %v1581 = vlaneseq
      %v1582 = vshrl.u32 %v1581, 7
      %v1583 = vsub.s32 0, %v1582
      %v1584 = vrot.slane %v1579, %v1583
      %v1586 = vmul.f32 %v617, %v1584
      %v1587 = vmul.f32 %v618, %v1584
      %v1588 = vmul.f32 %v619, %v1584
      %v1589 = vmul.f32 %v620, %v1584
      %v1590 = vmul.f32 %v621, %v1584
      %v1591 = vmul.f32 %v622, %v1584
      %v1592 = vmul.f32 %v623, %v1584
      %v1593 = vmul.f32 %v624, %v1584
      %v1594 = vmul.f32 %v625, %v1584
      %v1595 = vmul.f32 %v626, %v1584
      %v1596 = vmul.f32 %v627, %v1584
      %v1597 = vmul.f32 %v628, %v1584
      %v1598 = vmul.f32 %v629, %v1584
      %v1599 = vmul.f32 %v630, %v1584
      %v1600 = vmul.f32 %v631, %v1584
      %v1601 = vmul.f32 %v632, %v1584
      %v1602 = vadd.f32 %v1563, %v1586
      %v1603 = vadd.f32 %v1564, %v1587
      %v1604 = vadd.f32 %v1565, %v1588
      %v1605 = vadd.f32 %v1566, %v1589
      %v1606 = vadd.f32 %v1567, %v1590
      %v1607 = vadd.f32 %v1568, %v1591
      %v1608 = vadd.f32 %v1569, %v1592
      %v1609 = vadd.f32 %v1570, %v1593
      %v1610 = vadd.f32 %v1571, %v1594
      %v1611 = vadd.f32 %v1572, %v1595
      %v1612 = vadd.f32 %v1573, %v1596
      %v1613 = vadd.f32 %v1574, %v1597
      %v1614 = vadd.f32 %v1575, %v1598
      %v1615 = vadd.f32 %v1576, %v1599
      %v1616 = vadd.f32 %v1577, %v1600
      %v1617 = vadd.f32 %v1578, %v1601
      %v1618 = vpack.c.bf16 %v1603, %v1602
      %v1619 = vpack.c.bf16 %v1605, %v1604
      %v1620 = vpack.c.bf16 %v1607, %v1606
      %v1621 = vpack.c.bf16 %v1609, %v1608
      %v1622 = vpack.c.bf16 %v1611, %v1610
      %v1623 = vpack.c.bf16 %v1613, %v1612
      %v1624 = vpack.c.bf16 %v1615, %v1614
      %v1625 = vpack.c.bf16 %v1617, %v1616
      %1626 = vmatprep.subr.bf16.mxu0 0
      %1627 = vmatpush1.bf16.msra.mxu0 %v1039
      %1628 = vmatprep.subr.bf16.mxu0 0
      %1629 = vmatpush1.bf16.msra.mxu0 %v1038
      %1630 = vmatprep.subr.bf16.mxu0 0
      %1631 = vmatpush1.bf16.msra.mxu0 %v1037
      %1632 = vmatprep.subr.bf16.mxu0 0
      %1633 = vmatpush1.bf16.msra.mxu0 %v1036
      %1634 = vmatprep.subr.bf16.mxu0 0
      %1635 = vmatpush1.bf16.msra.mxu0 %v1035
      %1636 = vmatprep.subr.bf16.mxu0 0
      %1637 = vmatpush1.bf16.msra.mxu0 %v1034
      %1638 = vmatprep.subr.bf16.mxu0 0
      %1639 = vmatpush1.bf16.msra.mxu0 %v1033
      %1640 = vmatprep.subr.bf16.mxu0 0
      %1641 = vmatpush1.bf16.msra.mxu0 %v1032
      %1642 = vmatprep.subr.bf16.mxu0 0
      %1643 = vmatpush2.bf16.msra.mxu0 0
      %1644 = vmatprep.subr.bf16.mxu0 0
      %1645 = vmatpush2.bf16.msra.mxu0 0
      %1646 = vmatprep.subr.bf16.mxu0 0
      %1647 = vmatpush2.bf16.msra.mxu0 0
      %1648 = vmatprep.subr.bf16.mxu0 0
      %1649 = vmatpush2.bf16.msra.mxu0 0
      %1650 = vmatprep.subr.bf16.mxu0 0
      %1651 = vmatpush2.bf16.msra.mxu0 0
      %1652 = vmatprep.subr.bf16.mxu0 0
      %1653 = vmatpush2.bf16.msra.mxu0 0
      %1654 = vmatprep.subr.bf16.mxu0 0
      %1655 = vmatpush2.bf16.msra.mxu0 0
      %1656 = vmatprep.subr.bf16.mxu0 0
      %1657 = vmatpush2.bf16.msra.mxu0 0
      %1658 = vmatprep.mubr.bf16.mxu0 0
      %1659 = vmatmul.mubr.bf16.gmra.mxu0 %v1618
      %v1660 = vpop.f32.mrf.mxu0
      %v1661 = vadd.f32 0.0, %v1660
      %v1662 = vpop.f32.mrf.mxu0
      %v1663 = vpop.f32.mrf.mxu0
      %v1664 = vadd.f32 0.0, %v1663
      %v1665 = vpop.f32.mrf.mxu0
      %1666 = vmatprep.mubr.bf16.mxu0 0
      %1667 = vmatmul.mubr.bf16.gmra.mxu0 %v1619
      %v1668 = vpop.f32.mrf.mxu0
      %v1669 = vadd.f32 0.0, %v1668
      %v1670 = vpop.f32.mrf.mxu0
      %v1671 = vpop.f32.mrf.mxu0
      %v1672 = vadd.f32 0.0, %v1671
      %v1673 = vpop.f32.mrf.mxu0
      %1674 = vmatprep.mubr.bf16.mxu0 0
      %1675 = vmatmul.mubr.bf16.gmra.mxu0 %v1620
      %v1676 = vpop.f32.mrf.mxu0
      %v1677 = vadd.f32 0.0, %v1676
      %v1678 = vpop.f32.mrf.mxu0
      %v1679 = vpop.f32.mrf.mxu0
      %v1680 = vadd.f32 0.0, %v1679
      %v1681 = vpop.f32.mrf.mxu0
      %1682 = vmatprep.mubr.bf16.mxu0 0
      %1683 = vmatmul.mubr.bf16.gmra.mxu0 %v1621
      %v1684 = vpop.f32.mrf.mxu0
      %v1685 = vadd.f32 0.0, %v1684
      %v1686 = vpop.f32.mrf.mxu0
      %v1687 = vpop.f32.mrf.mxu0
      %v1688 = vadd.f32 0.0, %v1687
      %v1689 = vpop.f32.mrf.mxu0
      %1690 = vmatprep.mubr.bf16.mxu0 0
      %1691 = vmatmul.mubr.bf16.gmra.mxu0 %v1622
      %v1692 = vpop.f32.mrf.mxu0
      %v1693 = vadd.f32 0.0, %v1692
      %v1694 = vpop.f32.mrf.mxu0
      %v1695 = vpop.f32.mrf.mxu0
      %v1696 = vadd.f32 0.0, %v1695
      %v1697 = vpop.f32.mrf.mxu0
      %1698 = vmatprep.mubr.bf16.mxu0 0
      %1699 = vmatmul.mubr.bf16.gmra.mxu0 %v1623
      %v1700 = vpop.f32.mrf.mxu0
      %v1701 = vadd.f32 0.0, %v1700
      %v1702 = vpop.f32.mrf.mxu0
      %v1703 = vpop.f32.mrf.mxu0
      %v1704 = vadd.f32 0.0, %v1703
      %v1705 = vpop.f32.mrf.mxu0
      %1706 = vmatprep.mubr.bf16.mxu0 0
      %1707 = vmatmul.mubr.bf16.gmra.mxu0 %v1624
      %v1708 = vpop.f32.mrf.mxu0
      %v1709 = vadd.f32 0.0, %v1708
      %v1710 = vpop.f32.mrf.mxu0
      %v1711 = vpop.f32.mrf.mxu0
      %v1712 = vadd.f32 0.0, %v1711
      %v1713 = vpop.f32.mrf.mxu0
      %1714 = vmatprep.mubr.bf16.mxu0 0
      %1715 = vmatmul.mubr.bf16.gmra.mxu0 %v1625
      %v1716 = vpop.f32.mrf.mxu0
      %v1717 = vadd.f32 0.0, %v1716
      %v1718 = vpop.f32.mrf.mxu0
      %v1719 = vpop.f32.mrf.mxu0
      %v1720 = vadd.f32 0.0, %v1719
      %v1721 = vpop.f32.mrf.mxu0
      %1722 = vdwg.mxu0
      %v1723 = vpack.c.bf16 %v1664, %v1661
      %v1724 = vpack.c.bf16 %v1672, %v1669
      %v1725 = vpack.c.bf16 %v1680, %v1677
      %v1726 = vpack.c.bf16 %v1688, %v1685
      %v1727 = vpack.c.bf16 %v1696, %v1693
      %v1728 = vpack.c.bf16 %v1704, %v1701
      %v1729 = vpack.c.bf16 %v1712, %v1709
      %v1730 = vpack.c.bf16 %v1720, %v1717
      %v1739 = vunpack.c.l.b16 %v1723
      %v1740 = vunpack.c.h.b16 %v1723
      %v1741 = vunpack.c.l.b16 %v1724
      %v1742 = vunpack.c.h.b16 %v1724
      %v1743 = vunpack.c.l.b16 %v1725
      %v1744 = vunpack.c.h.b16 %v1725
      %v1745 = vunpack.c.l.b16 %v1726
      %v1746 = vunpack.c.h.b16 %v1726
      %v1747 = vunpack.c.l.b16 %v1727
      %v1748 = vunpack.c.h.b16 %v1727
      %v1749 = vunpack.c.l.b16 %v1728
      %v1750 = vunpack.c.h.b16 %v1728
      %v1751 = vunpack.c.l.b16 %v1729
      %v1752 = vunpack.c.h.b16 %v1729
      %v1753 = vunpack.c.l.b16 %v1730
      %v1754 = vunpack.c.h.b16 %v1730
      %v1755 = vpack.c.b16 %v1739, %v1739
      %v1756 = vpack.c.b16 %v1740, %v1740
      %v1757 = vpack.c.b16 %v1741, %v1741
      %v1758 = vpack.c.b16 %v1742, %v1742
      %v1759 = vpack.c.b16 %v1743, %v1743
      %v1760 = vpack.c.b16 %v1744, %v1744
      %v1761 = vpack.c.b16 %v1745, %v1745
      %v1762 = vpack.c.b16 %v1746, %v1746
      %v1763 = vpack.c.b16 %v1747, %v1747
      %v1764 = vpack.c.b16 %v1748, %v1748
      %v1765 = vpack.c.b16 %v1749, %v1749
      %v1766 = vpack.c.b16 %v1750, %v1750
      %v1767 = vpack.c.b16 %v1751, %v1751
      %v1768 = vpack.c.b16 %v1752, %v1752
      %v1769 = vpack.c.b16 %v1753, %v1753
      %v1770 = vpack.c.b16 %v1754, %v1754
      %1787 = vst [vmem:[%s300 + $0x40] sm:$0xf] %v1755
      %1788 = vst [vmem:[%s300 + $0x44] sm:$0xf] %v1756
      %1789 = vst [vmem:[%s300 + $0x48] sm:$0xf] %v1757
      %1790 = vst [vmem:[%s300 + $0x4c] sm:$0xf] %v1758
      %1791 = vst [vmem:[%s300 + $0x50] sm:$0xf] %v1759
      %1792 = vst [vmem:[%s300 + $0x54] sm:$0xf] %v1760
      %1793 = vst [vmem:[%s300 + $0x58] sm:$0xf] %v1761
      %1794 = vst [vmem:[%s300 + $0x5c] sm:$0xf] %v1762
      %1795 = vst [vmem:[%s300 + $0x60] sm:$0xf] %v1763
      %1796 = vst [vmem:[%s300 + $0x64] sm:$0xf] %v1764
      %1797 = vst [vmem:[%s300 + $0x68] sm:$0xf] %v1765
      %1798 = vst [vmem:[%s300 + $0x6c] sm:$0xf] %v1766
      %1799 = vst [vmem:[%s300 + $0x70] sm:$0xf] %v1767
      %1800 = vst [vmem:[%s300 + $0x74] sm:$0xf] %v1768
      %1801 = vst [vmem:[%s300 + $0x78] sm:$0xf] %v1769
      %1802 = vst [vmem:[%s300 + $0x7c] sm:$0xf] %v1770
      %v1803 = vadd.f32 %v1661, %v1664
      %v1804 = vadd.f32 %v1803, %v1669
      %v1805 = vadd.f32 %v1804, %v1672
      %v1806 = vadd.f32 %v1805, %v1677
      %v1807 = vadd.f32 %v1806, %v1680
      %v1808 = vadd.f32 %v1807, %v1685
      %v1809 = vadd.f32 %v1808, %v1688
      %v1810 = vadd.f32 %v1809, %v1693
      %v1811 = vadd.f32 %v1810, %v1696
      %v1812 = vadd.f32 %v1811, %v1701
      %v1813 = vadd.f32 %v1812, %v1704
      %v1814 = vadd.f32 %v1813, %v1709
      %v1815 = vadd.f32 %v1814, %v1712
      %v1816 = vadd.f32 %v1815, %v1717
      %v1817 = vadd.f32 %v1816, %v1720
      %v1818 = vrot.slane %v1817, 4
      %v1819 = vadd.f32 %v1817, %v1818
      %v1820 = vrot.slane %v1819, 2
      %v1821 = vadd.f32 %v1819, %v1820
      %v1822 = vrot.slane %v1821, 1
      %v1823 = vadd.f32 %v1821, %v1822
      %v1824 = vmul.f32 %v1661, %v1661
      %v1825 = vmul.f32 %v1664, %v1664
      %v1826 = vmul.f32 %v1669, %v1669
      %v1827 = vmul.f32 %v1672, %v1672
      %v1828 = vmul.f32 %v1677, %v1677
      %v1829 = vmul.f32 %v1680, %v1680
      %v1830 = vmul.f32 %v1685, %v1685
      %v1831 = vmul.f32 %v1688, %v1688
      %v1832 = vmul.f32 %v1693, %v1693
      %v1833 = vmul.f32 %v1696, %v1696
      %v1834 = vmul.f32 %v1701, %v1701
      %v1835 = vmul.f32 %v1704, %v1704
      %v1836 = vmul.f32 %v1709, %v1709
      %v1837 = vmul.f32 %v1712, %v1712
      %v1838 = vmul.f32 %v1717, %v1717
      %v1839 = vmul.f32 %v1720, %v1720
      %v1840 = vadd.f32 %v1824, %v1825
      %v1841 = vadd.f32 %v1840, %v1826
      %v1842 = vadd.f32 %v1841, %v1827
      %v1843 = vadd.f32 %v1842, %v1828
      %v1844 = vadd.f32 %v1843, %v1829
      %v1845 = vadd.f32 %v1844, %v1830
      %v1846 = vadd.f32 %v1845, %v1831
      %v1847 = vadd.f32 %v1846, %v1832
      %v1848 = vadd.f32 %v1847, %v1833
      %v1849 = vadd.f32 %v1848, %v1834
      %v1850 = vadd.f32 %v1849, %v1835
      %v1851 = vadd.f32 %v1850, %v1836
      %v1852 = vadd.f32 %v1851, %v1837
      %v1853 = vadd.f32 %v1852, %v1838
      %v1854 = vadd.f32 %v1853, %v1839
      %v1855 = vrot.slane %v1854, 4
      %v1856 = vadd.f32 %v1854, %v1855
      %v1857 = vrot.slane %v1856, 2
      %v1858 = vadd.f32 %v1856, %v1857
      %v1859 = vrot.slane %v1858, 1
      %v1860 = vadd.f32 %v1858, %v1859
      %v1861 = vadd.f32 %v1245, %v1823
      %v1862 = vadd.f32 %v1282, %v1860
      %1863 = vst [vmem:[%s307] sm:$0x1] %v1861
      %1864 = vst [vmem:[%s307 + $0x1] sm:$0x1] %v1862
      %p1865 = scmp.lt.s32.totalorder %s22, 1
      %s1866 = scalar_select %p1865, %s22, 1
      %p1867 = scmp.lt.s32.totalorder %s23, 0
      %s1868 = scalar_select %p1867, %s23, 0
      %s1869 = smul.addr %s1866, 32
      %s1870 = sadd.s32 %s1868, %s1869
      %s1871 = smul.addr %s1870, 4
      %s1872 = scalar_lea.vmem %s5, %s1871
      %p1873 = scmp.lt.s32.totalorder %s22, 1
      %s1874 = scalar_select %p1873, %s22, 1
      %p1875 = scmp.lt.s32.totalorder %s23, 0
      %s1876 = scalar_select %p1875, %s23, 0
      %s1877 = sadd.s32 %s1876, %s1874
      %s1878 = smul.addr %s1877, 2
      %s1879 = scalar_lea.vmem %s6, %s1878
      // Predicated region
      $region41: #{run_chain.13} parent=39 // pred_check
        %p1880 = pneg %p165
      $region42: #{run_chain.13} parent=39 // pred_check_branch
        %1882 = sbr.rel (%p1880) target = $region44
      $region43: #{run_chain.13} parent=39 // pred_region
        _
      $region44: #{run_chain.13} parent=39 // pred_fallthru
        _
      // Predicated region
      $region45: #{run_chain.13} parent=39 // pred_check
        %p1883 = pneg %p193
      $region46: #{run_chain.13} parent=39 // pred_check_branch
        %1885 = sbr.rel (%p1883) target = $region48
      $region47: #{run_chain.13} parent=39 // pred_region
        _
      $region48: #{run_chain.13} parent=39 // pred_fallthru
        _
    $region40: #{run_chain.13} parent=5 // pred_fallthru
      _
    %p1886 = scmp.le.s32.totalorder 2, %s13
    // Predicated region
    $region49: #{run_chain.13} parent=5 // pred_check
      %p1887 = pneg %p1886
    $region50: #{run_chain.13} parent=5 // pred_check_branch
      %1889 = sbr.rel (%p1887) target = $region52
    $region51: #{run_chain.13} parent=5 // pred_region
      %s1890 = ssub.s32 %s13, 2
      // Predicated region
      $region53: #{run_chain.13} parent=51 // pred_check
        %p1891 = pneg %p171
      $region54: #{run_chain.13} parent=51 // pred_check_branch
        %1893 = sbr.rel (%p1891) target = $region56
      $region55: #{run_chain.13} parent=51 // pred_region
        %p1894 = scmp.lt.s32.totalorder %s24, 1
        %s1895 = scalar_select %p1894, %s24, 1
        %p1896 = scmp.lt.s32.totalorder %s25, 0
        %s1897 = scalar_select %p1896, %s25, 0
        %s1898 = smul.addr %s1895, 32
        %s1899 = sadd.s32 %s1897, %s1898
        %s1900 = smul.addr %s1899, 4
        %s1901 = scalar_lea.vmem %s5, %s1900
      $region56: #{run_chain.13} parent=51 // pred_fallthru
        _
      // Predicated region
      $region57: #{run_chain.13} parent=51 // pred_check
        %p1902 = pneg %p199
      $region58: #{run_chain.13} parent=51 // pred_check_branch
        %1904 = sbr.rel (%p1902) target = $region60
      $region59: #{run_chain.13} parent=51 // pred_region
        %p1905 = scmp.lt.s32.totalorder %s24, 1
        %s1906 = scalar_select %p1905, %s24, 1
        %p1907 = scmp.lt.s32.totalorder %s25, 0
        %s1908 = scalar_select %p1907, %s25, 0
        %s1909 = sadd.s32 %s1908, %s1906
        %s1910 = smul.addr %s1909, 2
        %s1911 = scalar_lea.vmem %s6, %s1910
      $region60: #{run_chain.13} parent=51 // pred_fallthru
        _
    $region52: #{run_chain.13} parent=5 // pred_fallthru
      _
  $region6: #{run_chain.13} parent=0 // loop_footer
    %s17 = sadd.s32 1, %s13
  $region7: #{run_chain.13} parent=0 // loop_footer_branch
    %12 = sbr.rel target = $region3
  $region8: #{run_chain.13} parent=0 // loop_exit
    _

// kernel: run_chain.14
$region0: #{run_chain.14}
  #allocation0 [shape = 'u32[]', space=smem, size = 0x4, offset = 0x4, fixed_abs, tag = 'smem constant byte address 0x4 - core index']
  #allocation1 [shape = 'u32[144,128]{1,0:T(1,128)}', space=vmem, size = 0x12000, scoped, tag = 'internal scratch']
  #allocation2 [shape = 'f32[18,32,128]{2,1,0:T(8,128)}', space=vmem, size = 0x48000, scoped, tag = 'scratch operand']
  %s0 = inlined_call_operand.vmem [shape: bf16[2,16,16,128], index: 0, kind: input, shape index: {}]
  %s1 = inlined_call_operand.vmem [shape: f32[1,1,128], index: 1, kind: input, shape index: {}]
  %s2 = inlined_call_operand.vmem [shape: f32[1,1,128], index: 2, kind: input, shape index: {}]
  %s3 = inlined_call_operand.vmem [shape: f32[9,1,1,128], index: 3, kind: input, shape index: {}]
  %s4 = inlined_call_operand.vmem [shape: bf16[128,128], index: 4, kind: input, shape index: {}]
  %s5 = inlined_call_operand.vmem [shape: bf16[2,256,128], index: 5, kind: output, shape index: {0}]
  %s6 = inlined_call_operand.vmem [shape: f32[2,2,128], index: 6, kind: output, shape index: {1}]
  %7 = xla_tuple %s5, %s6
  %s8 = sld [smem:[#allocation0]]
  $region61: #{run_chain.14} parent=0
    _
  %s10 = ssub.s32 1, %s8
  %s11 = scalar_select 0, %s10, %s8
  loop: start=0, step=1, limit=4
  $region2: #{run_chain.14} parent=0 // loop_pre_header
    _
  $region3: #{run_chain.14} parent=0 // loop_header
    %s13 = sphi 0, %s17
    %p14 = scmp.ge.s32.totalorder %s13, 4
    %s20 = sphi 0, %s32
    %s21 = sphi 0, %s28
    %s22 = sphi 0, %s20
    %s23 = sphi 0, %s21
    %s24 = sphi 0, %s22
    %s25 = sphi 0, %s23
    %s35 = sphi 0, %s37
    %s38 = sphi 0, %s35
    %s39 = sphi 0, %s38
    %s55 = sphi 0, %s39
    %s59 = sphi 0, %s59
    %s61 = sphi 0, %s59
    %s62 = sphi 0, %s61
    %s76 = sphi 0, %s62
    %s80 = sphi 0, %s80
    %s82 = sphi 0, %s80
    %s83 = sphi 0, %s82
    %s97 = sphi 0, %s83
    %s101 = sphi 0, %s101
    %s103 = sphi 0, %s101
    %s104 = sphi 0, %s103
    %s118 = sphi 0, %s104
    %s124 = sphi 0, %s126
    %s127 = sphi 0, %s124
    %s128 = sphi 0, %s127
    %s144 = sphi 0, %s128
    %s152 = sphi 0, %s154
    %s155 = sphi 0, %s152
    %s156 = sphi 0, %s155
    %s172 = sphi 0, %s156
    %s180 = sphi 0, %s182
    %s183 = sphi 0, %s180
    %s184 = sphi 0, %s183
    %s200 = sphi 0, %s184
  $region4: #{run_chain.14} parent=0 // loop_header_branch
    %16 = sbr.rel (%p14) target = $region8
  $region5: #{run_chain.14} parent=0 // loop_body
    %s18 = ssub.s32 %s13, 1
    %s19 = ssub.s32 %s13, 2
    %s26 = sadd.s32 1, %s21
    %p27 = scmp.ge.s32.totalorder %s26, 1
    %s28 = scalar_select %p27, 0, %s26
    %s29 = sadd.s32 1, %s20
    %s30 = scalar_select %p27, %s29, %s20
    %p31 = scmp.ge.s32.totalorder %s30, 2
    %s32 = scalar_select %p31, 0, %s30
    %s33 = ssub.s32 %s20, %s32
    %p34 = scmp.eq.s32.totalorder %s33, 0
    %s36 = sadd.s32 %s35, 1
    %s37 = scalar_select %p34, %s35, %s36
    %p40 = pneg %p34
    %p41 = scmp.eq.s32.totalorder %s13, 1
    %p42 = por %p40, %p41
    %p43 = scmp.ne.s32.totalorder %s35, %s38
    %p44 = scmp.eq.s32.totalorder %s13, 0
    %p45 = por %p43, %p44
    %p46 = scmp.ne.s32.totalorder %s35, %s38
    %p47 = scmp.eq.s32.totalorder %s18, 1
    %p48 = por %p46, %p47
    %p49 = scmp.ne.s32.totalorder %s38, %s39
    %p50 = scmp.eq.s32.totalorder %s18, 0
    %p51 = por %p49, %p50
    %p52 = scmp.ne.s32.totalorder %s38, %s39
    %p53 = scmp.eq.s32.totalorder %s19, 1
    %p54 = por %p52, %p53
    %p56 = scmp.ne.s32.totalorder %s39, %s55
    %p57 = scmp.eq.s32.totalorder %s19, 0
    %p58 = por %p56, %p57
    %s60 = sadd.s32 %s59, 1
    %p63 = scmp.eq.s32.totalorder %s13, 1
    %p64 = scmp.ne.s32.totalorder %s59, %s61
    %p65 = scmp.eq.s32.totalorder %s13, 0
    %p66 = por %p64, %p65
    %p67 = scmp.ne.s32.totalorder %s59, %s61
    %p68 = scmp.eq.s32.totalorder %s18, 1
    %p69 = por %p67, %p68
    %p70 = scmp.ne.s32.totalorder %s61, %s62
    %p71 = scmp.eq.s32.totalorder %s18, 0
    %p72 = por %p70, %p71
    %p73 = scmp.ne.s32.totalorder %s61, %s62
    %p74 = scmp.eq.s32.totalorder %s19, 1
    %p75 = por %p73, %p74
    %p77 = scmp.ne.s32.totalorder %s62, %s76
    %p78 = scmp.eq.s32.totalorder %s19, 0
    %p79 = por %p77, %p78
    %s81 = sadd.s32 %s80, 1
    %p84 = scmp.eq.s32.totalorder %s13, 1
    %p85 = scmp.ne.s32.totalorder %s80, %s82
    %p86 = scmp.eq.s32.totalorder %s13, 0
    %p87 = por %p85, %p86
    %p88 = scmp.ne.s32.totalorder %s80, %s82
    %p89 = scmp.eq.s32.totalorder %s18, 1
    %p90 = por %p88, %p89
    %p91 = scmp.ne.s32.totalorder %s82, %s83
    %p92 = scmp.eq.s32.totalorder %s18, 0
    %p93 = por %p91, %p92
    %p94 = scmp.ne.s32.totalorder %s82, %s83
    %p95 = scmp.eq.s32.totalorder %s19, 1
    %p96 = por %p94, %p95
    %p98 = scmp.ne.s32.totalorder %s83, %s97
    %p99 = scmp.eq.s32.totalorder %s19, 0
    %p100 = por %p98, %p99
    %s102 = sadd.s32 %s101, 1
    %p105 = scmp.eq.s32.totalorder %s13, 1
    %p106 = scmp.ne.s32.totalorder %s101, %s103
    %p107 = scmp.eq.s32.totalorder %s13, 0
    %p108 = por %p106, %p107
    %p109 = scmp.ne.s32.totalorder %s101, %s103
    %p110 = scmp.eq.s32.totalorder %s18, 1
    %p111 = por %p109, %p110
    %p112 = scmp.ne.s32.totalorder %s103, %s104
    %p113 = scmp.eq.s32.totalorder %s18, 0
    %p114 = por %p112, %p113
    %p115 = scmp.ne.s32.totalorder %s103, %s104
    %p116 = scmp.eq.s32.totalorder %s19, 1
    %p117 = por %p115, %p116
    %p119 = scmp.ne.s32.totalorder %s104, %s118
    %p120 = scmp.eq.s32.totalorder %s19, 0
    %p121 = por %p119, %p120
    %s122 = ssub.s32 %s21, %s28
    %p123 = scmp.eq.s32.totalorder %s122, 0
    %s125 = sadd.s32 %s124, 1
    %s126 = scalar_select %p123, %s124, %s125
    %p129 = pneg %p123
    %p130 = scmp.eq.s32.totalorder %s13, 1
    %p131 = por %p129, %p130
    %p132 = scmp.ne.s32.totalorder %s124, %s127
    %p133 = scmp.eq.s32.totalorder %s13, 0
    %p134 = por %p132, %p133
    %p135 = scmp.ne.s32.totalorder %s124, %s127
    %p136 = scmp.eq.s32.totalorder %s18, 1
    %p137 = por %p135, %p136
    %p138 = scmp.ne.s32.totalorder %s127, %s128
    %p139 = scmp.eq.s32.totalorder %s18, 0
    %p140 = por %p138, %p139
    %p141 = scmp.ne.s32.totalorder %s127, %s128
    %p142 = scmp.eq.s32.totalorder %s19, 1
    %p143 = por %p141, %p142
    %p145 = scmp.ne.s32.totalorder %s128, %s144
    %p146 = scmp.eq.s32.totalorder %s19, 0
    %p147 = por %p145, %p146
    %s148 = ssub.s32 %s20, %s32
    %s149 = ssub.s32 %s21, %s28
    %s150 = sor.u32 %s148, %s149
    %p151 = scmp.eq.s32.totalorder %s150, 0
    %s153 = sadd.s32 %s152, 1
    %s154 = scalar_select %p151, %s152, %s153
    %p157 = pneg %p151
    %p158 = scmp.eq.s32.totalorder %s13, 1
    %p159 = por %p157, %p158
    %p160 = scmp.ne.s32.totalorder %s152, %s155
    %p161 = scmp.eq.s32.totalorder %s13, 0
    %p162 = por %p160, %p161
    %p163 = scmp.ne.s32.totalorder %s152, %s155
    %p164 = scmp.eq.s32.totalorder %s18, 1
    %p165 = por %p163, %p164
    %p166 = scmp.ne.s32.totalorder %s155, %s156
    %p167 = scmp.eq.s32.totalorder %s18, 0
    %p168 = por %p166, %p167
    %p169 = scmp.ne.s32.totalorder %s155, %s156
    %p170 = scmp.eq.s32.totalorder %s19, 1
    %p171 = por %p169, %p170
    %p173 = scmp.ne.s32.totalorder %s156, %s172
    %p174 = scmp.eq.s32.totalorder %s19, 0
    %p175 = por %p173, %p174
    %s176 = ssub.s32 %s20, %s32
    %s177 = ssub.s32 %s21, %s28
    %s178 = sor.u32 %s176, %s177
    %p179 = scmp.eq.s32.totalorder %s178, 0
    %s181 = sadd.s32 %s180, 1
    %s182 = scalar_select %p179, %s180, %s181
    %p185 = pneg %p179
    %p186 = scmp.eq.s32.totalorder %s13, 1
    %p187 = por %p185, %p186
    %p188 = scmp.ne.s32.totalorder %s180, %s183
    %p189 = scmp.eq.s32.totalorder %s13, 0
    %p190 = por %p188, %p189
    %p191 = scmp.ne.s32.totalorder %s180, %s183
    %p192 = scmp.eq.s32.totalorder %s18, 1
    %p193 = por %p191, %p192
    %p194 = scmp.ne.s32.totalorder %s183, %s184
    %p195 = scmp.eq.s32.totalorder %s18, 0
    %p196 = por %p194, %p195
    %p197 = scmp.ne.s32.totalorder %s183, %s184
    %p198 = scmp.eq.s32.totalorder %s19, 1
    %p199 = por %p197, %p198
    %p201 = scmp.ne.s32.totalorder %s184, %s200
    %p202 = scmp.eq.s32.totalorder %s19, 0
    %p203 = por %p201, %p202
    %p204 = scmp.le.s32.totalorder 1, %s13
    %p205 = scmp.lt.s32.totalorder %s13, 3
    %p206 = pnand %p204, %p205
    %p207 = pneg %p206
    // Predicated region
    $region9: #{run_chain.14} parent=5 // pred_check
      _
    $region10: #{run_chain.14} parent=5 // pred_check_branch
      %209 = sbr.rel (%p206) target = $region12
    $region11: #{run_chain.14} parent=5 // pred_region
      %s210 = ssub.s32 %s13, 1
      // Predicated region
      $region13: #{run_chain.14} parent=11 // pred_check
        %p211 = pneg %p72
      $region14: #{run_chain.14} parent=11 // pred_check_branch
        %213 = sbr.rel (%p211) target = $region16
      $region15: #{run_chain.14} parent=11 // pred_region
        _
      $region16: #{run_chain.14} parent=11 // pred_fallthru
        _
      // Predicated region
      $region17: #{run_chain.14} parent=11 // pred_check
        %p214 = pneg %p93
      $region18: #{run_chain.14} parent=11 // pred_check_branch
        %216 = sbr.rel (%p214) target = $region20
      $region19: #{run_chain.14} parent=11 // pred_region
        _
      $region20: #{run_chain.14} parent=11 // pred_fallthru
        _
      // Predicated region
      $region21: #{run_chain.14} parent=11 // pred_check
        %p217 = pneg %p114
      $region22: #{run_chain.14} parent=11 // pred_check_branch
        %219 = sbr.rel (%p217) target = $region24
      $region23: #{run_chain.14} parent=11 // pred_region
        _
      $region24: #{run_chain.14} parent=11 // pred_fallthru
        _
      // Predicated region
      $region25: #{run_chain.14} parent=11 // pred_check
        %p220 = pneg %p140
      $region26: #{run_chain.14} parent=11 // pred_check_branch
        %222 = sbr.rel (%p220) target = $region28
      $region27: #{run_chain.14} parent=11 // pred_region
        %p223 = scmp.lt.s32.totalorder %s23, 0
        %s224 = scalar_select %p223, %s23, 0
        %s225 = smul.addr %s224, 4
        %s226 = scalar_lea.vmem %s4, %s225
      $region28: #{run_chain.14} parent=11 // pred_fallthru
        _
    $region12: #{run_chain.14} parent=5 // pred_fallthru
      _
    %p227 = scmp.lt.s32.totalorder %s13, 2
    // Predicated region
    $region29: #{run_chain.14} parent=5 // pred_check
      %p228 = pneg %p227
    $region30: #{run_chain.14} parent=5 // pred_check_branch
      %230 = sbr.rel (%p228) target = $region32
    $region31: #{run_chain.14} parent=5 // pred_region
      // Predicated region
      $region33: #{run_chain.14} parent=31 // pred_check
        %p231 = pneg %p45
      $region34: #{run_chain.14} parent=31 // pred_check_branch
        %233 = sbr.rel (%p231) target = $region36
      $region35: #{run_chain.14} parent=31 // pred_region
        %p234 = scmp.lt.s32.totalorder %s20, 1
        %s235 = scalar_select %p234, %s20, 1
        %s236 = smul.addr %s235, 32
        %s237 = smul.addr %s236, 4
        %s238 = scalar_lea.vmem %s0, %s237
      $region36: #{run_chain.14} parent=31 // pred_fallthru
        _
    $region32: #{run_chain.14} parent=5 // pred_fallthru
      _
    %p239 = scmp.le.s32.totalorder 1, %s13
    %p240 = scmp.lt.s32.totalorder %s13, 3
    %p241 = pnand %p239, %p240
    %p242 = pneg %p241
    // Predicated region
    $region37: #{run_chain.14} parent=5 // pred_check
      _
    $region38: #{run_chain.14} parent=5 // pred_check_branch
      %244 = sbr.rel (%p241) target = $region40
    $region39: #{run_chain.14} parent=5 // pred_region
      %s245 = ssub.s32 %s13, 1
      %p246 = scmp.lt.s32.totalorder %s22, 1
      %s247 = scalar_select %p246, %s22, 1
      %s248 = smul.addr %s247, 32
      %s249 = smul.addr %s248, 4
      %s250 = scalar_lea.vmem %s0, %s249
      %p251 = pneg %p51
      %p252 = pneg %p48
      %p253 = pneg %p72
      %p254 = pneg %p69
      %p255 = pneg %p93
      %p256 = pneg %p90
      %p257 = pneg %p114
      %p258 = pneg %p111
      %p259 = scmp.lt.s32.totalorder %s23, 0
      %s260 = scalar_select %p259, %s23, 0
      %s261 = smul.addr %s260, 4
      %s262 = scalar_lea.vmem %s4, %s261
      %p263 = pneg %p140
      %p264 = pneg %p137
      %p265 = pneg %p168
      %p266 = pneg %p165
      %p267 = scmp.lt.s32.totalorder %s22, 1
      %s268 = scalar_select %p267, %s22, 1
      %p269 = scmp.lt.s32.totalorder %s23, 0
      %s270 = scalar_select %p269, %s23, 0
      %s271 = smul.addr %s268, 32
      %s272 = sadd.s32 %s270, %s271
      %s273 = smul.addr %s272, 4
      %s274 = scalar_lea.vmem %s5, %s273
      %p275 = pneg %p196
      %p276 = pneg %p193
      %p277 = scmp.lt.s32.totalorder %s22, 1
      %s278 = scalar_select %p277, %s22, 1
      %p279 = scmp.lt.s32.totalorder %s23, 0
      %s280 = scalar_select %p279, %s23, 0
      %s281 = sadd.s32 %s280, %s278
      %s282 = smul.addr %s281, 2
      %s283 = scalar_lea.vmem %s6, %s282
      %p284 = scmp.lt.s32.totalorder %s22, 1
      %s285 = scalar_select %p284, %s22, 1
      %s286 = smul.addr %s285, 32
      %s287 = smul.addr %s286, 4
      %s288 = scalar_lea.vmem %s0, %s287
      %p289 = scmp.lt.s32.totalorder %s23, 0
      %s290 = scalar_select %p289, %s23, 0
      %s291 = smul.addr %s290, 4
      %s292 = scalar_lea.vmem %s4, %s291
      %p293 = scmp.lt.s32.totalorder %s22, 1
      %s294 = scalar_select %p293, %s22, 1
      %p295 = scmp.lt.s32.totalorder %s23, 0
      %s296 = scalar_select %p295, %s23, 0
      %s297 = smul.addr %s294, 32
      %s298 = sadd.s32 %s296, %s297
      %s299 = smul.addr %s298, 4
      %s300 = scalar_lea.vmem %s5, %s299
      %p301 = scmp.lt.s32.totalorder %s22, 1
      %s302 = scalar_select %p301, %s22, 1
      %p303 = scmp.lt.s32.totalorder %s23, 0
      %s304 = scalar_select %p303, %s23, 0
      %s305 = sadd.s32 %s304, %s302
      %s306 = smul.addr %s305, 2
      %s307 = scalar_lea.vmem %s6, %s306
      %v309 = vld [vmem:[%s288] sm:$0xf]
      %v310 = vld [vmem:[%s288 + $0x4] sm:$0xf]
      %v311 = vld [vmem:[%s288 + $0x8] sm:$0xf]
      %v312 = vld [vmem:[%s288 + $0xc] sm:$0xf]
      %v313 = vld [vmem:[%s288 + $0x10] sm:$0xf]
      %v314 = vld [vmem:[%s288 + $0x14] sm:$0xf]
      %v315 = vld [vmem:[%s288 + $0x18] sm:$0xf]
      %v316 = vld [vmem:[%s288 + $0x1c] sm:$0xf]
      %v317 = vld [vmem:[%s288 + $0x20] sm:$0xf]
      %v318 = vld [vmem:[%s288 + $0x24] sm:$0xf]
      %v319 = vld [vmem:[%s288 + $0x28] sm:$0xf]
      %v320 = vld [vmem:[%s288 + $0x2c] sm:$0xf]
      %v321 = vld [vmem:[%s288 + $0x30] sm:$0xf]
      %v322 = vld [vmem:[%s288 + $0x34] sm:$0xf]
      %v323 = vld [vmem:[%s288 + $0x38] sm:$0xf]
      %v324 = vld [vmem:[%s288 + $0x3c] sm:$0xf]
      %v325 = vld [vmem:[%s288 + $0x40] sm:$0xf]
      %v326 = vld [vmem:[%s288 + $0x44] sm:$0xf]
      %v327 = vld [vmem:[%s288 + $0x48] sm:$0xf]
      %v328 = vld [vmem:[%s288 + $0x4c] sm:$0xf]
      %v329 = vld [vmem:[%s288 + $0x50] sm:$0xf]
      %v330 = vld [vmem:[%s288 + $0x54] sm:$0xf]
      %v331 = vld [vmem:[%s288 + $0x58] sm:$0xf]
      %v332 = vld [vmem:[%s288 + $0x5c] sm:$0xf]
      %v333 = vld [vmem:[%s288 + $0x60] sm:$0xf]
      %v334 = vld [vmem:[%s288 + $0x64] sm:$0xf]
      %v335 = vld [vmem:[%s288 + $0x68] sm:$0xf]
      %v336 = vld [vmem:[%s288 + $0x6c] sm:$0xf]
      %v337 = vld [vmem:[%s288 + $0x70] sm:$0xf]
      %v338 = vld [vmem:[%s288 + $0x74] sm:$0xf]
      %v339 = vld [vmem:[%s288 + $0x78] sm:$0xf]
      %v340 = vld [vmem:[%s288 + $0x7c] sm:$0xf]
      %v341 = vunpack.c.l.bf16 %v309
      %v342 = vunpack.c.l.bf16 %v310
      %v343 = vunpack.c.l.bf16 %v311
      %v344 = vunpack.c.l.bf16 %v312
      %v345 = vunpack.c.l.bf16 %v313
      %v346 = vunpack.c.l.bf16 %v314
      %v347 = vunpack.c.l.bf16 %v315
      %v348 = vunpack.c.l.bf16 %v316
      %v349 = vunpack.c.l.bf16 %v317
      %v350 = vunpack.c.l.bf16 %v318
      %v351 = vunpack.c.l.bf16 %v319
      %v352 = vunpack.c.l.bf16 %v320
      %v353 = vunpack.c.l.bf16 %v321
      %v354 = vunpack.c.l.bf16 %v322
      %v355 = vunpack.c.l.bf16 %v323
      %v356 = vunpack.c.l.bf16 %v324
      %v357 = vunpack.c.l.bf16 %v325
      %v358 = vunpack.c.l.bf16 %v326
      %v359 = vunpack.c.l.bf16 %v327
      %v360 = vunpack.c.l.bf16 %v328
      %v361 = vunpack.c.l.bf16 %v329
      %v362 = vunpack.c.l.bf16 %v330
      %v363 = vunpack.c.l.bf16 %v331
      %v364 = vunpack.c.l.bf16 %v332
      %v365 = vunpack.c.l.bf16 %v333
      %v366 = vunpack.c.l.bf16 %v334
      %v367 = vunpack.c.l.bf16 %v335
      %v368 = vunpack.c.l.bf16 %v336
      %v369 = vunpack.c.l.bf16 %v337
      %v370 = vunpack.c.l.bf16 %v338
      %v371 = vunpack.c.l.bf16 %v339
      %v372 = vunpack.c.l.bf16 %v340
      %v373 = vld [vmem:[%s1] sm:$0x1]
      %v375 = vlaneseq
      %v376 = vshrl.u32 %v375, 7
      %v377 = vsub.s32 0, %v376
      %v378 = vrot.slane %v373, %v377
      %v380 = vmul.f32 %v341, %v378
      %v381 = vmul.f32 %v342, %v378
      %v382 = vmul.f32 %v343, %v378
      %v383 = vmul.f32 %v344, %v378
      %v384 = vmul.f32 %v345, %v378
      %v385 = vmul.f32 %v346, %v378
      %v386 = vmul.f32 %v347, %v378
      %v387 = vmul.f32 %v348, %v378
      %v388 = vmul.f32 %v349, %v378
      %v389 = vmul.f32 %v350, %v378
      %v390 = vmul.f32 %v351, %v378
      %v391 = vmul.f32 %v352, %v378
      %v392 = vmul.f32 %v353, %v378
      %v393 = vmul.f32 %v354, %v378
      %v394 = vmul.f32 %v355, %v378
      %v395 = vmul.f32 %v356, %v378
      %v396 = vmul.f32 %v357, %v378
      %v397 = vmul.f32 %v358, %v378
      %v398 = vmul.f32 %v359, %v378
      %v399 = vmul.f32 %v360, %v378
      %v400 = vmul.f32 %v361, %v378
      %v401 = vmul.f32 %v362, %v378
      %v402 = vmul.f32 %v363, %v378
      %v403 = vmul.f32 %v364, %v378
      %v404 = vmul.f32 %v365, %v378
      %v405 = vmul.f32 %v366, %v378
      %v406 = vmul.f32 %v367, %v378
      %v407 = vmul.f32 %v368, %v378
      %v408 = vmul.f32 %v369, %v378
      %v409 = vmul.f32 %v370, %v378
      %v410 = vmul.f32 %v371, %v378
      %v411 = vmul.f32 %v372, %v378
      %v412 = vld [vmem:[%s2] sm:$0x1]
      %v414 = vlaneseq
      %v415 = vshrl.u32 %v414, 7
      %v416 = vsub.s32 0, %v415
      %v417 = vrot.slane %v412, %v416
      %v419 = vadd.f32 %v380, %v417
      %v420 = vadd.f32 %v381, %v417
      %v421 = vadd.f32 %v382, %v417
      %v422 = vadd.f32 %v383, %v417
      %v423 = vadd.f32 %v384, %v417
      %v424 = vadd.f32 %v385, %v417
      %v425 = vadd.f32 %v386, %v417
      %v426 = vadd.f32 %v387, %v417
      %v427 = vadd.f32 %v388, %v417
      %v428 = vadd.f32 %v389, %v417
      %v429 = vadd.f32 %v390, %v417
      %v430 = vadd.f32 %v391, %v417
      %v431 = vadd.f32 %v392, %v417
      %v432 = vadd.f32 %v393, %v417
      %v433 = vadd.f32 %v394, %v417
      %v434 = vadd.f32 %v395, %v417
      %v435 = vadd.f32 %v396, %v417
      %v436 = vadd.f32 %v397, %v417
      %v437 = vadd.f32 %v398, %v417
      %v438 = vadd.f32 %v399, %v417
      %v439 = vadd.f32 %v400, %v417
      %v440 = vadd.f32 %v401, %v417
      %v441 = vadd.f32 %v402, %v417
      %v442 = vadd.f32 %v403, %v417
      %v443 = vadd.f32 %v404, %v417
      %v444 = vadd.f32 %v405, %v417
      %v445 = vadd.f32 %v406, %v417
      %v446 = vadd.f32 %v407, %v417
      %v447 = vadd.f32 %v408, %v417
      %v448 = vadd.f32 %v409, %v417
      %v449 = vadd.f32 %v410, %v417
      %v450 = vadd.f32 %v411, %v417
      %v451 = vmax.f32 %v419, 0.0
      %v452 = vmax.f32 %v420, 0.0
      %v453 = vmax.f32 %v421, 0.0
      %v454 = vmax.f32 %v422, 0.0
      %v455 = vmax.f32 %v423, 0.0
      %v456 = vmax.f32 %v424, 0.0
      %v457 = vmax.f32 %v425, 0.0
      %v458 = vmax.f32 %v426, 0.0
      %v459 = vmax.f32 %v427, 0.0
      %v460 = vmax.f32 %v428, 0.0
      %v461 = vmax.f32 %v429, 0.0
      %v462 = vmax.f32 %v430, 0.0
      %v463 = vmax.f32 %v431, 0.0
      %v464 = vmax.f32 %v432, 0.0
      %v465 = vmax.f32 %v433, 0.0
      %v466 = vmax.f32 %v434, 0.0
      %v467 = vmax.f32 %v435, 0.0
      %v468 = vmax.f32 %v436, 0.0
      %v469 = vmax.f32 %v437, 0.0
      %v470 = vmax.f32 %v438, 0.0
      %v471 = vmax.f32 %v439, 0.0
      %v472 = vmax.f32 %v440, 0.0
      %v473 = vmax.f32 %v441, 0.0
      %v474 = vmax.f32 %v442, 0.0
      %v475 = vmax.f32 %v443, 0.0
      %v476 = vmax.f32 %v444, 0.0
      %v477 = vmax.f32 %v445, 0.0
      %v478 = vmax.f32 %v446, 0.0
      %v479 = vmax.f32 %v447, 0.0
      %v480 = vmax.f32 %v448, 0.0
      %v481 = vmax.f32 %v449, 0.0
      %v482 = vmax.f32 %v450, 0.0
      %483 = vst [vmem:[#allocation2] sm:$0xff] 0.0
      %484 = vst [vmem:[#allocation2 + $0x8] sm:$0xff] 0.0
      %485 = vst [vmem:[#allocation2 + $0x10] sm:$0xff] 0.0
      %486 = vst [vmem:[#allocation2 + $0x18] sm:$0xff] 0.0
      %s487 = scalar_lea.vmem [#allocation2], 544
      %488 = vst [vmem:[%s487] sm:$0xff] 0.0
      %489 = vst [vmem:[%s487 + $0x8] sm:$0xff] 0.0
      %490 = vst [vmem:[%s487 + $0x10] sm:$0xff] 0.0
      %491 = vst [vmem:[%s487 + $0x18] sm:$0xff] 0.0
      %s492 = scalar_lea.vmem [#allocation2], 32
      %493 = vst [vmem:[%s492] sm:$0xff] 0.0
      %494 = vst [vmem:[%s492 + $0x20] sm:$0xff] 0.0
      %495 = vst [vmem:[%s492 + $0x40] sm:$0xff] 0.0
      %496 = vst [vmem:[%s492 + $0x60] sm:$0xff] 0.0
      %497 = vst [vmem:[%s492 + $0x80] sm:$0xff] 0.0
      %498 = vst [vmem:[%s492 + $0xa0] sm:$0xff] 0.0
      %499 = vst [vmem:[%s492 + $0xc0] sm:$0xff] 0.0
      %500 = vst [vmem:[%s492 + $0xe0] sm:$0xff] 0.0
      %501 = vst [vmem:[%s492 + $0x100] sm:$0xff] 0.0
      %502 = vst [vmem:[%s492 + $0x120] sm:$0xff] 0.0
      %503 = vst [vmem:[%s492 + $0x140] sm:$0xff] 0.0
      %504 = vst [vmem:[%s492 + $0x160] sm:$0xff] 0.0
      %505 = vst [vmem:[%s492 + $0x180] sm:$0xff] 0.0
      %506 = vst [vmem:[%s492 + $0x1a0] sm:$0xff] 0.0
      %507 = vst [vmem:[%s492 + $0x1c0] sm:$0xff] 0.0
      %508 = vst [vmem:[%s492 + $0x1e0] sm:$0xff] 0.0
      %509 = vst [vmem:[%s492 + $0x18] sm:$0xff] 0.0
      %510 = vst [vmem:[%s492 + $0x38] sm:$0xff] 0.0
      %511 = vst [vmem:[%s492 + $0x58] sm:$0xff] 0.0
      %512 = vst [vmem:[%s492 + $0x78] sm:$0xff] 0.0
      %513 = vst [vmem:[%s492 + $0x98] sm:$0xff] 0.0
      %514 = vst [vmem:[%s492 + $0xb8] sm:$0xff] 0.0
      %515 = vst [vmem:[%s492 + $0xd8] sm:$0xff] 0.0
      %516 = vst [vmem:[%s492 + $0xf8] sm:$0xff] 0.0
      %517 = vst [vmem:[%s492 + $0x118] sm:$0xff] 0.0
      %518 = vst [vmem:[%s492 + $0x138] sm:$0xff] 0.0
      %519 = vst [vmem:[%s492 + $0x158] sm:$0xff] 0.0
      %520 = vst [vmem:[%s492 + $0x178] sm:$0xff] 0.0
      %521 = vst [vmem:[%s492 + $0x198] sm:$0xff] 0.0
      %522 = vst [vmem:[%s492 + $0x1b8] sm:$0xff] 0.0
      %523 = vst [vmem:[%s492 + $0x1d8] sm:$0xff] 0.0
      %524 = vst [vmem:[%s492 + $0x1f8] sm:$0xff] 0.0
      %525 = vst [vmem:[%s492 + $0x8] sm:$0xff] %v451
      %526 = vst [vmem:[%s492 + $0x10] sm:$0xff] %v452
      %527 = vst [vmem:[%s492 + $0x28] sm:$0xff] %v453
      %528 = vst [vmem:[%s492 + $0x30] sm:$0xff] %v454
      %529 = vst [vmem:[%s492 + $0x48] sm:$0xff] %v455
      %530 = vst [vmem:[%s492 + $0x50] sm:$0xff] %v456
      %531 = vst [vmem:[%s492 + $0x68] sm:$0xff] %v457
      %532 = vst [vmem:[%s492 + $0x70] sm:$0xff] %v458
      %533 = vst [vmem:[%s492 + $0x88] sm:$0xff] %v459
      %534 = vst [vmem:[%s492 + $0x90] sm:$0xff] %v460
      %535 = vst [vmem:[%s492 + $0xa8] sm:$0xff] %v461
      %536 = vst [vmem:[%s492 + $0xb0] sm:$0xff] %v462
      %537 = vst [vmem:[%s492 + $0xc8] sm:$0xff] %v463
      %538 = vst [vmem:[%s492 + $0xd0] sm:$0xff] %v464
      %539 = vst [vmem:[%s492 + $0xe8] sm:$0xff] %v465
      %540 = vst [vmem:[%s492 + $0xf0] sm:$0xff] %v466
      %541 = vst [vmem:[%s492 + $0x108] sm:$0xff] %v467
      %542 = vst [vmem:[%s492 + $0x110] sm:$0xff] %v468
      %543 = vst [vmem:[%s492 + $0x128] sm:$0xff] %v469
      %544 = vst [vmem:[%s492 + $0x130] sm:$0xff] %v470
      %545 = vst [vmem:[%s492 + $0x148] sm:$0xff] %v471
      %546 = vst [vmem:[%s492 + $0x150] sm:$0xff] %v472
      %547 = vst [vmem:[%s492 + $0x168] sm:$0xff] %v473
      %548 = vst [vmem:[%s492 + $0x170] sm:$0xff] %v474
      %549 = vst [vmem:[%s492 + $0x188] sm:$0xff] %v475
      %550 = vst [vmem:[%s492 + $0x190] sm:$0xff] %v476
      %551 = vst [vmem:[%s492 + $0x1a8] sm:$0xff] %v477
      %552 = vst [vmem:[%s492 + $0x1b0] sm:$0xff] %v478
      %553 = vst [vmem:[%s492 + $0x1c8] sm:$0xff] %v479
      %554 = vst [vmem:[%s492 + $0x1d0] sm:$0xff] %v480
      %555 = vst [vmem:[%s492 + $0x1e8] sm:$0xff] %v481
      %556 = vst [vmem:[%s492 + $0x1f0] sm:$0xff] %v482
      %v557 = vld [vmem:[#allocation2 + $0x7] sm:$0xff]
      %v558 = vld [vmem:[#allocation2 + $0xf] sm:$0xff]
      %v559 = vld [vmem:[#allocation2 + $0x27] sm:$0xff]
      %v560 = vld [vmem:[#allocation2 + $0x2f] sm:$0xff]
      %v561 = vld [vmem:[#allocation2 + $0x47] sm:$0xff]
      %v562 = vld [vmem:[#allocation2 + $0x4f] sm:$0xff]
      %v563 = vld [vmem:[#allocation2 + $0x67] sm:$0xff]
      %v564 = vld [vmem:[#allocation2 + $0x6f] sm:$0xff]
      %v565 = vld [vmem:[#allocation2 + $0x87] sm:$0xff]
      %v566 = vld [vmem:[#allocation2 + $0x8f] sm:$0xff]
      %v567 = vld [vmem:[#allocation2 + $0xa7] sm:$0xff]
      %v568 = vld [vmem:[#allocation2 + $0xaf] sm:$0xff]
      %v569 = vld [vmem:[#allocation2 + $0xc7] sm:$0xff]
      %v570 = vld [vmem:[#allocation2 + $0xcf] sm:$0xff]
      %v571 = vld [vmem:[#allocation2 + $0xe7] sm:$0xff]
      %v572 = vld [vmem:[#allocation2 + $0xef] sm:$0xff]
      %v573 = vld [vmem:[#allocation2 + $0x107] sm:$0xff]
      %v574 = vld [vmem:[#allocation2 + $0x10f] sm:$0xff]
      %v575 = vld [vmem:[#allocation2 + $0x127] sm:$0xff]
      %v576 = vld [vmem:[#allocation2 + $0x12f] sm:$0xff]
      %v577 = vld [vmem:[#allocation2 + $0x147] sm:$0xff]
      %v578 = vld [vmem:[#allocation2 + $0x14f] sm:$0xff]
      %v579 = vld [vmem:[#allocation2 + $0x167] sm:$0xff]
      %v580 = vld [vmem:[#allocation2 + $0x16f] sm:$0xff]
      %v581 = vld [vmem:[#allocation2 + $0x187] sm:$0xff]
      %v582 = vld [vmem:[#allocation2 + $0x18f] sm:$0xff]
      %v583 = vld [vmem:[#allocation2 + $0x1a7] sm:$0xff]
      %v584 = vld [vmem:[#allocation2 + $0x1af] sm:$0xff]
      %v585 = vld [vmem:[#allocation2 + $0x1c7] sm:$0xff]
      %v586 = vld [vmem:[#allocation2 + $0x1cf] sm:$0xff]
      %v587 = vld [vmem:[#allocation2 + $0x1e7] sm:$0xff]
      %v588 = vld [vmem:[#allocation2 + $0x1ef] sm:$0xff]
      %v589 = vld [vmem:[#allocation2 + $0x207] sm:$0xff]
      %v590 = vld [vmem:[#allocation2 + $0x20f] sm:$0xff]
      %v591 = vld [vmem:[#allocation2 + $0x227] sm:$0xff]
      %v592 = vld [vmem:[#allocation2 + $0x22f] sm:$0xff]
      %v593 = vld [vmem:[#allocation2 + $0x8] sm:$0xff]
      %v594 = vld [vmem:[#allocation2 + $0x10] sm:$0xff]
      %v595 = vld [vmem:[#allocation2 + $0x28] sm:$0xff]
      %v596 = vld [vmem:[#allocation2 + $0x30] sm:$0xff]
      %v597 = vld [vmem:[#allocation2 + $0x48] sm:$0xff]
      %v598 = vld [vmem:[#allocation2 + $0x50] sm:$0xff]
      %v599 = vld [vmem:[#allocation2 + $0x68] sm:$0xff]
      %v600 = vld [vmem:[#allocation2 + $0x70] sm:$0xff]
      %v601 = vld [vmem:[#allocation2 + $0x88] sm:$0xff]
      %v602 = vld [vmem:[#allocation2 + $0x90] sm:$0xff]
      %v603 = vld [vmem:[#allocation2 + $0xa8] sm:$0xff]
      %v604 = vld [vmem:[#allocation2 + $0xb0] sm:$0xff]
      %v605 = vld [vmem:[#allocation2 + $0xc8] sm:$0xff]
      %v606 = vld [vmem:[#allocation2 + $0xd0] sm:$0xff]
      %v607 = vld [vmem:[#allocation2 + $0xe8] sm:$0xff]
      %v608 = vld [vmem:[#allocation2 + $0xf0] sm:$0xff]
      %v609 = vld [vmem:[#allocation2 + $0x108] sm:$0xff]
      %v610 = vld [vmem:[#allocation2 + $0x110] sm:$0xff]
      %v611 = vld [vmem:[#allocation2 + $0x128] sm:$0xff]
      %v612 = vld [vmem:[#allocation2 + $0x130] sm:$0xff]
      %v613 = vld [vmem:[#allocation2 + $0x148] sm:$0xff]
      %v614 = vld [vmem:[#allocation2 + $0x150] sm:$0xff]
      %v615 = vld [vmem:[#allocation2 + $0x168] sm:$0xff]
      %v616 = vld [vmem:[#allocation2 + $0x170] sm:$0xff]
      %v617 = vld [vmem:[#allocation2 + $0x188] sm:$0xff]
      %v618 = vld [vmem:[#allocation2 + $0x190] sm:$0xff]
      %v619 = vld [vmem:[#allocation2 + $0x1a8] sm:$0xff]
      %v620 = vld [vmem:[#allocation2 + $0x1b0] sm:$0xff]
      %v621 = vld [vmem:[#allocation2 + $0x1c8] sm:$0xff]
      %v622 = vld [vmem:[#allocation2 + $0x1d0] sm:$0xff]
      %v623 = vld [vmem:[#allocation2 + $0x1e8] sm:$0xff]
      %v624 = vld [vmem:[#allocation2 + $0x1f0] sm:$0xff]
      %v625 = vld [vmem:[#allocation2 + $0x208] sm:$0xff]
      %v626 = vld [vmem:[#allocation2 + $0x210] sm:$0xff]
      %v627 = vld [vmem:[#allocation2 + $0x228] sm:$0xff]
      %v628 = vld [vmem:[#allocation2 + $0x230] sm:$0xff]
      %v629 = vld [vmem:[#allocation2 + $0x9] sm:$0xff]
      %v630 = vld [vmem:[#allocation2 + $0x11] sm:$0xff]
      %v631 = vld [vmem:[#allocation2 + $0x29] sm:$0xff]
      %v632 = vld [vmem:[#allocation2 + $0x31] sm:$0xff]
      %v633 = vld [vmem:[#allocation2 + $0x49] sm:$0xff]
      %v634 = vld [vmem:[#allocation2 + $0x51] sm:$0xff]
      %v635 = vld [vmem:[#allocation2 + $0x69] sm:$0xff]
      %v636 = vld [vmem:[#allocation2 + $0x71] sm:$0xff]
      %v637 = vld [vmem:[#allocation2 + $0x89] sm:$0xff]
      %v638 = vld [vmem:[#allocation2 + $0x91] sm:$0xff]
      %v639 = vld [vmem:[#allocation2 + $0xa9] sm:$0xff]
      %v640 = vld [vmem:[#allocation2 + $0xb1] sm:$0xff]
      %v641 = vld [vmem:[#allocation2 + $0xc9] sm:$0xff]
      %v642 = vld [vmem:[#allocation2 + $0xd1] sm:$0xff]
      %v643 = vld [vmem:[#allocation2 + $0xe9] sm:$0xff]
      %v644 = vld [vmem:[#allocation2 + $0xf1] sm:$0xff]
      %v645 = vld [vmem:[#allocation2 + $0x109] sm:$0xff]
      %v646 = vld [vmem:[#allocation2 + $0x111] sm:$0xff]
      %v647 = vld [vmem:[#allocation2 + $0x129] sm:$0xff]
      %v648 = vld [vmem:[#allocation2 + $0x131] sm:$0xff]
      %v649 = vld [vmem:[#allocation2 + $0x149] sm:$0xff]
      %v650 = vld [vmem:[#allocation2 + $0x151] sm:$0xff]
      %v651 = vld [vmem:[#allocation2 + $0x169] sm:$0xff]
      %v652 = vld [vmem:[#allocation2 + $0x171] sm:$0xff]
      %v653 = vld [vmem:[#allocation2 + $0x189] sm:$0xff]
      %v654 = vld [vmem:[#allocation2 + $0x191] sm:$0xff]
      %v655 = vld [vmem:[#allocation2 + $0x1a9] sm:$0xff]
      %v656 = vld [vmem:[#allocation2 + $0x1b1] sm:$0xff]
      %v657 = vld [vmem:[#allocation2 + $0x1c9] sm:$0xff]
      %v658 = vld [vmem:[#allocation2 + $0x1d1] sm:$0xff]
      %v659 = vld [vmem:[#allocation2 + $0x1e9] sm:$0xff]
      %v660 = vld [vmem:[#allocation2 + $0x1f1] sm:$0xff]
      %v661 = vld [vmem:[#allocation2 + $0x209] sm:$0xff]
      %v662 = vld [vmem:[#allocation2 + $0x211] sm:$0xff]
      %v663 = vld [vmem:[#allocation2 + $0x229] sm:$0xff]
      %v664 = vld [vmem:[#allocation2 + $0x231] sm:$0xff]
      %v665 = vld [vmem:[%s292] sm:$0xf]
      %v666 = vld [vmem:[%s292 + $0x4] sm:$0xf]
      %v667 = vld [vmem:[%s292 + $0x8] sm:$0xf]
      %v668 = vld [vmem:[%s292 + $0xc] sm:$0xf]
      %v669 = vld [vmem:[%s292 + $0x10] sm:$0xf]
      %v670 = vld [vmem:[%s292 + $0x14] sm:$0xf]
      %v671 = vld [vmem:[%s292 + $0x18] sm:$0xf]
      %v672 = vld [vmem:[%s292 + $0x1c] sm:$0xf]
      %v673 = vld [vmem:[%s292 + $0x20] sm:$0xf]
      %v674 = vld [vmem:[%s292 + $0x24] sm:$0xf]
      %v675 = vld [vmem:[%s292 + $0x28] sm:$0xf]
      %v676 = vld [vmem:[%s292 + $0x2c] sm:$0xf]
      %v677 = vld [vmem:[%s292 + $0x30] sm:$0xf]
      %v678 = vld [vmem:[%s292 + $0x34] sm:$0xf]
      %v679 = vld [vmem:[%s292 + $0x38] sm:$0xf]
      %v680 = vld [vmem:[%s292 + $0x3c] sm:$0xf]
      %v681 = vld [vmem:[%s3] sm:$0x1]
      %v683 = vlaneseq
      %v684 = vshrl.u32 %v683, 7
      %v685 = vsub.s32 0, %v684
      %v686 = vrot.slane %v681, %v685
      %v688 = vmul.f32 %v557, %v686
      %v689 = vmul.f32 %v558, %v686
      %v690 = vmul.f32 %v559, %v686
      %v691 = vmul.f32 %v560, %v686
      %v692 = vmul.f32 %v561, %v686
      %v693 = vmul.f32 %v562, %v686
      %v694 = vmul.f32 %v563, %v686
      %v695 = vmul.f32 %v564, %v686
      %v696 = vmul.f32 %v565, %v686
      %v697 = vmul.f32 %v566, %v686
      %v698 = vmul.f32 %v567, %v686
      %v699 = vmul.f32 %v568, %v686
      %v700 = vmul.f32 %v569, %v686
      %v701 = vmul.f32 %v570, %v686
      %v702 = vmul.f32 %v571, %v686
      %v703 = vmul.f32 %v572, %v686
      %s704 = scalar_lea.vmem %s3, 1
      %v705 = vld [vmem:[%s704] sm:$0x1]
      %v707 = vlaneseq
      %v708 = vshrl.u32 %v707, 7
      %v709 = vsub.s32 0, %v708
      %v710 = vrot.slane %v705, %v709
      %v712 = vmul.f32 %v593, %v710
      %v713 = vmul.f32 %v594, %v710
      %v714 = vmul.f32 %v595, %v710
      %v715 = vmul.f32 %v596, %v710
      %v716 = vmul.f32 %v597, %v710
      %v717 = vmul.f32 %v598, %v710
      %v718 = vmul.f32 %v599, %v710
      %v719 = vmul.f32 %v600, %v710
      %v720 = vmul.f32 %v601, %v710
      %v721 = vmul.f32 %v602, %v710
      %v722 = vmul.f32 %v603, %v710
      %v723 = vmul.f32 %v604, %v710
      %v724 = vmul.f32 %v605, %v710
      %v725 = vmul.f32 %v606, %v710
      %v726 = vmul.f32 %v607, %v710
      %v727 = vmul.f32 %v608, %v710
      %v728 = vadd.f32 %v688, %v712
      %v729 = vadd.f32 %v689, %v713
      %v730 = vadd.f32 %v690, %v714
      %v731 = vadd.f32 %v691, %v715
      %v732 = vadd.f32 %v692, %v716
      %v733 = vadd.f32 %v693, %v717
      %v734 = vadd.f32 %v694, %v718
      %v735 = vadd.f32 %v695, %v719
      %v736 = vadd.f32 %v696, %v720
      %v737 = vadd.f32 %v697, %v721
      %v738 = vadd.f32 %v698, %v722
      %v739 = vadd.f32 %v699, %v723
      %v740 = vadd.f32 %v700, %v724
      %v741 = vadd.f32 %v701, %v725
      %v742 = vadd.f32 %v702, %v726
      %v743 = vadd.f32 %v703, %v727
      %s744 = scalar_lea.vmem %s3, 2
      %v745 = vld [vmem:[%s744] sm:$0x1]
      %v747 = vlaneseq
      %v748 = vshrl.u32 %v747, 7
      %v749 = vsub.s32 0, %v748
      %v750 = vrot.slane %v745, %v749
      %v752 = vmul.f32 %v629, %v750
      %v753 = vmul.f32 %v630, %v750
      %v754 = vmul.f32 %v631, %v750
      %v755 = vmul.f32 %v632, %v750
      %v756 = vmul.f32 %v633, %v750
      %v757 = vmul.f32 %v634, %v750
      %v758 = vmul.f32 %v635, %v750
      %v759 = vmul.f32 %v636, %v750
      %v760 = vmul.f32 %v637, %v750
      %v761 = vmul.f32 %v638, %v750
      %v762 = vmul.f32 %v639, %v750
      %v763 = vmul.f32 %v640, %v750
      %v764 = vmul.f32 %v641, %v750
      %v765 = vmul.f32 %v642, %v750
      %v766 = vmul.f32 %v643, %v750
      %v767 = vmul.f32 %v644, %v750
      %s768 = scalar_lea.vmem %s3, 3
      %v769 = vld [vmem:[%s768] sm:$0x1]
      %v771 = vlaneseq
      %v772 = vshrl.u32 %v771, 7
      %v773 = vsub.s32 0, %v772
      %v774 = vrot.slane %v769, %v773
      %v776 = vmul.f32 %v559, %v774
      %v777 = vmul.f32 %v560, %v774
      %v778 = vmul.f32 %v561, %v774
      %v779 = vmul.f32 %v562, %v774
      %v780 = vmul.f32 %v563, %v774
      %v781 = vmul.f32 %v564, %v774
      %v782 = vmul.f32 %v565, %v774
      %v783 = vmul.f32 %v566, %v774
      %v784 = vmul.f32 %v567, %v774
      %v785 = vmul.f32 %v568, %v774
      %v786 = vmul.f32 %v569, %v774
      %v787 = vmul.f32 %v570, %v774
      %v788 = vmul.f32 %v571, %v774
      %v789 = vmul.f32 %v572, %v774
      %v790 = vmul.f32 %v573, %v774
      %v791 = vmul.f32 %v574, %v774
      %v792 = vadd.f32 %v752, %v776
      %v793 = vadd.f32 %v753, %v777
      %v794 = vadd.f32 %v754, %v778
      %v795 = vadd.f32 %v755, %v779
      %v796 = vadd.f32 %v756, %v780
      %v797 = vadd.f32 %v757, %v781
      %v798 = vadd.f32 %v758, %v782
      %v799 = vadd.f32 %v759, %v783
      %v800 = vadd.f32 %v760, %v784
      %v801 = vadd.f32 %v761, %v785
      %v802 = vadd.f32 %v762, %v786
      %v803 = vadd.f32 %v763, %v787
      %v804 = vadd.f32 %v764, %v788
      %v805 = vadd.f32 %v765, %v789
      %v806 = vadd.f32 %v766, %v790
      %v807 = vadd.f32 %v767, %v791
      %v808 = vadd.f32 %v728, %v792
      %v809 = vadd.f32 %v729, %v793
      %v810 = vadd.f32 %v730, %v794
      %v811 = vadd.f32 %v731, %v795
      %v812 = vadd.f32 %v732, %v796
      %v813 = vadd.f32 %v733, %v797
      %v814 = vadd.f32 %v734, %v798
      %v815 = vadd.f32 %v735, %v799
      %v816 = vadd.f32 %v736, %v800
      %v817 = vadd.f32 %v737, %v801
      %v818 = vadd.f32 %v738, %v802
      %v819 = vadd.f32 %v739, %v803
      %v820 = vadd.f32 %v740, %v804
      %v821 = vadd.f32 %v741, %v805
      %v822 = vadd.f32 %v742, %v806
      %v823 = vadd.f32 %v743, %v807
      %s824 = scalar_lea.vmem %s3, 4
      %v825 = vld [vmem:[%s824] sm:$0x1]
      %v827 = vlaneseq
      %v828 = vshrl.u32 %v827, 7
      %v829 = vsub.s32 0, %v828
      %v830 = vrot.slane %v825, %v829
      %v832 = vmul.f32 %v595, %v830
      %v833 = vmul.f32 %v596, %v830
      %v834 = vmul.f32 %v597, %v830
      %v835 = vmul.f32 %v598, %v830
      %v836 = vmul.f32 %v599, %v830
      %v837 = vmul.f32 %v600, %v830
      %v838 = vmul.f32 %v601, %v830
      %v839 = vmul.f32 %v602, %v830
      %v840 = vmul.f32 %v603, %v830
      %v841 = vmul.f32 %v604, %v830
      %v842 = vmul.f32 %v605, %v830
      %v843 = vmul.f32 %v606, %v830
      %v844 = vmul.f32 %v607, %v830
      %v845 = vmul.f32 %v608, %v830
      %v846 = vmul.f32 %v609, %v830
      %v847 = vmul.f32 %v610, %v830
      %s848 = scalar_lea.vmem %s3, 5
      %v849 = vld [vmem:[%s848] sm:$0x1]
      %v851 = vlaneseq
      %v852 = vshrl.u32 %v851, 7
      %v853 = vsub.s32 0, %v852
      %v854 = vrot.slane %v849, %v853
      %v856 = vmul.f32 %v631, %v854
      %v857 = vmul.f32 %v632, %v854
      %v858 = vmul.f32 %v633, %v854
      %v859 = vmul.f32 %v634, %v854
      %v860 = vmul.f32 %v635, %v854
      %v861 = vmul.f32 %v636, %v854
      %v862 = vmul.f32 %v637, %v854
      %v863 = vmul.f32 %v638, %v854
      %v864 = vmul.f32 %v639, %v854
      %v865 = vmul.f32 %v640, %v854
      %v866 = vmul.f32 %v641, %v854
      %v867 = vmul.f32 %v642, %v854
      %v868 = vmul.f32 %v643, %v854
      %v869 = vmul.f32 %v644, %v854
      %v870 = vmul.f32 %v645, %v854
      %v871 = vmul.f32 %v646, %v854
      %v872 = vadd.f32 %v832, %v856
      %v873 = vadd.f32 %v833, %v857
      %v874 = vadd.f32 %v834, %v858
      %v875 = vadd.f32 %v835, %v859
      %v876 = vadd.f32 %v836, %v860
      %v877 = vadd.f32 %v837, %v861
      %v878 = vadd.f32 %v838, %v862
      %v879 = vadd.f32 %v839, %v863
      %v880 = vadd.f32 %v840, %v864
      %v881 = vadd.f32 %v841, %v865
      %v882 = vadd.f32 %v842, %v866
      %v883 = vadd.f32 %v843, %v867
      %v884 = vadd.f32 %v844, %v868
      %v885 = vadd.f32 %v845, %v869
      %v886 = vadd.f32 %v846, %v870
      %v887 = vadd.f32 %v847, %v871
      %v888 = vadd.f32 %v808, %v872
      %v889 = vadd.f32 %v809, %v873
      %v890 = vadd.f32 %v810, %v874
      %v891 = vadd.f32 %v811, %v875
      %v892 = vadd.f32 %v812, %v876
      %v893 = vadd.f32 %v813, %v877
      %v894 = vadd.f32 %v814, %v878
      %v895 = vadd.f32 %v815, %v879
      %v896 = vadd.f32 %v816, %v880
      %v897 = vadd.f32 %v817, %v881
      %v898 = vadd.f32 %v818, %v882
      %v899 = vadd.f32 %v819, %v883
      %v900 = vadd.f32 %v820, %v884
      %v901 = vadd.f32 %v821, %v885
      %v902 = vadd.f32 %v822, %v886
      %v903 = vadd.f32 %v823, %v887
      %s904 = scalar_lea.vmem %s3, 6
      %v905 = vld [vmem:[%s904] sm:$0x1]
      %v907 = vlaneseq
      %v908 = vshrl.u32 %v907, 7
      %v909 = vsub.s32 0, %v908
      %v910 = vrot.slane %v905, %v909
      %v912 = vmul.f32 %v561, %v910
      %v913 = vmul.f32 %v562, %v910
      %v914 = vmul.f32 %v563, %v910
      %v915 = vmul.f32 %v564, %v910
      %v916 = vmul.f32 %v565, %v910
      %v917 = vmul.f32 %v566, %v910
      %v918 = vmul.f32 %v567, %v910
      %v919 = vmul.f32 %v568, %v910
      %v920 = vmul.f32 %v569, %v910
      %v921 = vmul.f32 %v570, %v910
      %v922 = vmul.f32 %v571, %v910
      %v923 = vmul.f32 %v572, %v910
      %v924 = vmul.f32 %v573, %v910
      %v925 = vmul.f32 %v574, %v910
      %v926 = vmul.f32 %v575, %v910
      %v927 = vmul.f32 %v576, %v910
      %s928 = scalar_lea.vmem %s3, 7
      %v929 = vld [vmem:[%s928] sm:$0x1]
      %v931 = vlaneseq
      %v932 = vshrl.u32 %v931, 7
      %v933 = vsub.s32 0, %v932
      %v934 = vrot.slane %v929, %v933
      %v936 = vmul.f32 %v597, %v934
      %v937 = vmul.f32 %v598, %v934
      %v938 = vmul.f32 %v599, %v934
      %v939 = vmul.f32 %v600, %v934
      %v940 = vmul.f32 %v601, %v934
      %v941 = vmul.f32 %v602, %v934
      %v942 = vmul.f32 %v603, %v934
      %v943 = vmul.f32 %v604, %v934
      %v944 = vmul.f32 %v605, %v934
      %v945 = vmul.f32 %v606, %v934
      %v946 = vmul.f32 %v607, %v934
      %v947 = vmul.f32 %v608, %v934
      %v948 = vmul.f32 %v609, %v934
      %v949 = vmul.f32 %v610, %v934
      %v950 = vmul.f32 %v611, %v934
      %v951 = vmul.f32 %v612, %v934
      %v952 = vadd.f32 %v912, %v936
      %v953 = vadd.f32 %v913, %v937
      %v954 = vadd.f32 %v914, %v938
      %v955 = vadd.f32 %v915, %v939
      %v956 = vadd.f32 %v916, %v940
      %v957 = vadd.f32 %v917, %v941
      %v958 = vadd.f32 %v918, %v942
      %v959 = vadd.f32 %v919, %v943
      %v960 = vadd.f32 %v920, %v944
      %v961 = vadd.f32 %v921, %v945
      %v962 = vadd.f32 %v922, %v946
      %v963 = vadd.f32 %v923, %v947
      %v964 = vadd.f32 %v924, %v948
      %v965 = vadd.f32 %v925, %v949
      %v966 = vadd.f32 %v926, %v950
      %v967 = vadd.f32 %v927, %v951
      %v968 = vadd.f32 %v888, %v952
      %v969 = vadd.f32 %v889, %v953
      %v970 = vadd.f32 %v890, %v954
      %v971 = vadd.f32 %v891, %v955
      %v972 = vadd.f32 %v892, %v956
      %v973 = vadd.f32 %v893, %v957
      %v974 = vadd.f32 %v894, %v958
      %v975 = vadd.f32 %v895, %v959
      %v976 = vadd.f32 %v896, %v960
      %v977 = vadd.f32 %v897, %v961
      %v978 = vadd.f32 %v898, %v962
      %v979 = vadd.f32 %v899, %v963
      %v980 = vadd.f32 %v900, %v964
      %v981 = vadd.f32 %v901, %v965
      %v982 = vadd.f32 %v902, %v966
      %v983 = vadd.f32 %v903, %v967
      %s984 = scalar_lea.vmem %s3, 8
      %v985 = vld [vmem:[%s984] sm:$0x1]
      %v987 = vlaneseq
      %v988 = vshrl.u32 %v987, 7
      %v989 = vsub.s32 0, %v988
      %v990 = vrot.slane %v985, %v989
      %v992 = vmul.f32 %v633, %v990
      %v993 = vmul.f32 %v634, %v990
      %v994 = vmul.f32 %v635, %v990
      %v995 = vmul.f32 %v636, %v990
      %v996 = vmul.f32 %v637, %v990
      %v997 = vmul.f32 %v638, %v990
      %v998 = vmul.f32 %v639, %v990
      %v999 = vmul.f32 %v640, %v990
      %v1000 = vmul.f32 %v641, %v990
      %v1001 = vmul.f32 %v642, %v990
      %v1002 = vmul.f32 %v643, %v990
      %v1003 = vmul.f32 %v644, %v990
      %v1004 = vmul.f32 %v645, %v990
      %v1005 = vmul.f32 %v646, %v990
      %v1006 = vmul.f32 %v647, %v990
      %v1007 = vmul.f32 %v648, %v990
      %v1008 = vadd.f32 %v968, %v992
      %v1009 = vadd.f32 %v969, %v993
      %v1010 = vadd.f32 %v970, %v994
      %v1011 = vadd.f32 %v971, %v995
      %v1012 = vadd.f32 %v972, %v996
      %v1013 = vadd.f32 %v973, %v997
      %v1014 = vadd.f32 %v974, %v998
      %v1015 = vadd.f32 %v975, %v999
      %v1016 = vadd.f32 %v976, %v1000
      %v1017 = vadd.f32 %v977, %v1001
      %v1018 = vadd.f32 %v978, %v1002
      %v1019 = vadd.f32 %v979, %v1003
      %v1020 = vadd.f32 %v980, %v1004
      %v1021 = vadd.f32 %v981, %v1005
      %v1022 = vadd.f32 %v982, %v1006
      %v1023 = vadd.f32 %v983, %v1007
      %v1024 = vpack.c.bf16 %v1009, %v1008
      %v1025 = vpack.c.bf16 %v1011, %v1010
      %v1026 = vpack.c.bf16 %v1013, %v1012
      %v1027 = vpack.c.bf16 %v1015, %v1014
      %v1028 = vpack.c.bf16 %v1017, %v1016
      %v1029 = vpack.c.bf16 %v1019, %v1018
      %v1030 = vpack.c.bf16 %v1021, %v1020
      %v1031 = vpack.c.bf16 %v1023, %v1022
      %v1048 = vunpack.c.l.b16 %v665
      %v1049 = vunpack.c.l.b16 %v666
      %v1050 = vunpack.c.l.b16 %v667
      %v1051 = vunpack.c.l.b16 %v668
      %v1052 = vunpack.c.l.b16 %v669
      %v1053 = vunpack.c.l.b16 %v670
      %v1054 = vunpack.c.l.b16 %v671
      %v1055 = vunpack.c.l.b16 %v672
      %v1056 = vunpack.c.l.b16 %v673
      %v1057 = vunpack.c.l.b16 %v674
      %v1058 = vunpack.c.l.b16 %v675
      %v1059 = vunpack.c.l.b16 %v676
      %v1060 = vunpack.c.l.b16 %v677
      %v1061 = vunpack.c.l.b16 %v678
      %v1062 = vunpack.c.l.b16 %v679
      %v1063 = vunpack.c.l.b16 %v680
      %v1064 = vpack.c.b16 %v1049, %v1048
      %v1065 = vpack.c.b16 %v1051, %v1050
      %v1066 = vpack.c.b16 %v1053, %v1052
      %v1067 = vpack.c.b16 %v1055, %v1054
      %v1068 = vpack.c.b16 %v1057, %v1056
      %v1069 = vpack.c.b16 %v1059, %v1058
      %v1070 = vpack.c.b16 %v1061, %v1060
      %v1071 = vpack.c.b16 %v1063, %v1062
      %1080 = vmatprep.subr.bf16.mxu0 0
      %1081 = vmatpush1.bf16.msra.mxu0 %v1071
      %1082 = vmatprep.subr.bf16.mxu0 0
      %1083 = vmatpush1.bf16.msra.mxu0 %v1070
      %1084 = vmatprep.subr.bf16.mxu0 0
      %1085 = vmatpush1.bf16.msra.mxu0 %v1069
      %1086 = vmatprep.subr.bf16.mxu0 0
      %1087 = vmatpush1.bf16.msra.mxu0 %v1068
      %1088 = vmatprep.subr.bf16.mxu0 0
      %1089 = vmatpush1.bf16.msra.mxu0 %v1067
      %1090 = vmatprep.subr.bf16.mxu0 0
      %1091 = vmatpush1.bf16.msra.mxu0 %v1066
      %1092 = vmatprep.subr.bf16.mxu0 0
      %1093 = vmatpush1.bf16.msra.mxu0 %v1065
      %1094 = vmatprep.subr.bf16.mxu0 0
      %1095 = vmatpush1.bf16.msra.mxu0 %v1064
      %1096 = vmatprep.subr.bf16.mxu0 0
      %1097 = vmatpush2.bf16.msra.mxu0 0
      %1098 = vmatprep.subr.bf16.mxu0 0
      %1099 = vmatpush2.bf16.msra.mxu0 0
      %1100 = vmatprep.subr.bf16.mxu0 0
      %1101 = vmatpush2.bf16.msra.mxu0 0
      %1102 = vmatprep.subr.bf16.mxu0 0
      %1103 = vmatpush2.bf16.msra.mxu0 0
      %1104 = vmatprep.subr.bf16.mxu0 0
      %1105 = vmatpush2.bf16.msra.mxu0 0
      %1106 = vmatprep.subr.bf16.mxu0 0
      %1107 = vmatpush2.bf16.msra.mxu0 0
      %1108 = vmatprep.subr.bf16.mxu0 0
      %1109 = vmatpush2.bf16.msra.mxu0 0
      %1110 = vmatprep.subr.bf16.mxu0 0
      %1111 = vmatpush2.bf16.msra.mxu0 0
      %1112 = vmatprep.mubr.bf16.mxu0 0
      %1113 = vmatmul.mubr.bf16.gmra.mxu0 %v1024
      %v1114 = vpop.f32.mrf.mxu0
      %v1115 = vadd.f32 0.0, %v1114
      %v1116 = vpop.f32.mrf.mxu0
      %v1117 = vpop.f32.mrf.mxu0
      %v1118 = vadd.f32 0.0, %v1117
      %v1119 = vpop.f32.mrf.mxu0
      %1120 = vmatprep.mubr.bf16.mxu0 0
      %1121 = vmatmul.mubr.bf16.gmra.mxu0 %v1025
      %v1122 = vpop.f32.mrf.mxu0
      %v1123 = vadd.f32 0.0, %v1122
      %v1124 = vpop.f32.mrf.mxu0
      %v1125 = vpop.f32.mrf.mxu0
      %v1126 = vadd.f32 0.0, %v1125
      %v1127 = vpop.f32.mrf.mxu0
      %1128 = vmatprep.mubr.bf16.mxu0 0
      %1129 = vmatmul.mubr.bf16.gmra.mxu0 %v1026
      %v1130 = vpop.f32.mrf.mxu0
      %v1131 = vadd.f32 0.0, %v1130
      %v1132 = vpop.f32.mrf.mxu0
      %v1133 = vpop.f32.mrf.mxu0
      %v1134 = vadd.f32 0.0, %v1133
      %v1135 = vpop.f32.mrf.mxu0
      %1136 = vmatprep.mubr.bf16.mxu0 0
      %1137 = vmatmul.mubr.bf16.gmra.mxu0 %v1027
      %v1138 = vpop.f32.mrf.mxu0
      %v1139 = vadd.f32 0.0, %v1138
      %v1140 = vpop.f32.mrf.mxu0
      %v1141 = vpop.f32.mrf.mxu0
      %v1142 = vadd.f32 0.0, %v1141
      %v1143 = vpop.f32.mrf.mxu0
      %1144 = vmatprep.mubr.bf16.mxu0 0
      %1145 = vmatmul.mubr.bf16.gmra.mxu0 %v1028
      %v1146 = vpop.f32.mrf.mxu0
      %v1147 = vadd.f32 0.0, %v1146
      %v1148 = vpop.f32.mrf.mxu0
      %v1149 = vpop.f32.mrf.mxu0
      %v1150 = vadd.f32 0.0, %v1149
      %v1151 = vpop.f32.mrf.mxu0
      %1152 = vmatprep.mubr.bf16.mxu0 0
      %1153 = vmatmul.mubr.bf16.gmra.mxu0 %v1029
      %v1154 = vpop.f32.mrf.mxu0
      %v1155 = vadd.f32 0.0, %v1154
      %v1156 = vpop.f32.mrf.mxu0
      %v1157 = vpop.f32.mrf.mxu0
      %v1158 = vadd.f32 0.0, %v1157
      %v1159 = vpop.f32.mrf.mxu0
      %1160 = vmatprep.mubr.bf16.mxu0 0
      %1161 = vmatmul.mubr.bf16.gmra.mxu0 %v1030
      %v1162 = vpop.f32.mrf.mxu0
      %v1163 = vadd.f32 0.0, %v1162
      %v1164 = vpop.f32.mrf.mxu0
      %v1165 = vpop.f32.mrf.mxu0
      %v1166 = vadd.f32 0.0, %v1165
      %v1167 = vpop.f32.mrf.mxu0
      %1168 = vmatprep.mubr.bf16.mxu0 0
      %1169 = vmatmul.mubr.bf16.gmra.mxu0 %v1031
      %v1170 = vpop.f32.mrf.mxu0
      %v1171 = vadd.f32 0.0, %v1170
      %v1172 = vpop.f32.mrf.mxu0
      %v1173 = vpop.f32.mrf.mxu0
      %v1174 = vadd.f32 0.0, %v1173
      %v1175 = vpop.f32.mrf.mxu0
      %1176 = vdwg.mxu0
      %v1177 = vpack.c.bf16 %v1118, %v1115
      %v1178 = vpack.c.bf16 %v1126, %v1123
      %v1179 = vpack.c.bf16 %v1134, %v1131
      %v1180 = vpack.c.bf16 %v1142, %v1139
      %v1181 = vpack.c.bf16 %v1150, %v1147
      %v1182 = vpack.c.bf16 %v1158, %v1155
      %v1183 = vpack.c.bf16 %v1166, %v1163
      %v1184 = vpack.c.bf16 %v1174, %v1171
      %v1193 = vunpack.c.l.b16 %v1177
      %v1194 = vunpack.c.h.b16 %v1177
      %v1195 = vunpack.c.l.b16 %v1178
      %v1196 = vunpack.c.h.b16 %v1178
      %v1197 = vunpack.c.l.b16 %v1179
      %v1198 = vunpack.c.h.b16 %v1179
      %v1199 = vunpack.c.l.b16 %v1180
      %v1200 = vunpack.c.h.b16 %v1180
      %v1201 = vunpack.c.l.b16 %v1181
      %v1202 = vunpack.c.h.b16 %v1181
      %v1203 = vunpack.c.l.b16 %v1182
      %v1204 = vunpack.c.h.b16 %v1182
      %v1205 = vunpack.c.l.b16 %v1183
      %v1206 = vunpack.c.h.b16 %v1183
      %v1207 = vunpack.c.l.b16 %v1184
      %v1208 = vunpack.c.h.b16 %v1184
      %v1209 = vpack.c.b16 %v1193, %v1193
      %v1210 = vpack.c.b16 %v1194, %v1194
      %v1211 = vpack.c.b16 %v1195, %v1195
      %v1212 = vpack.c.b16 %v1196, %v1196
      %v1213 = vpack.c.b16 %v1197, %v1197
      %v1214 = vpack.c.b16 %v1198, %v1198
      %v1215 = vpack.c.b16 %v1199, %v1199
      %v1216 = vpack.c.b16 %v1200, %v1200
      %v1217 = vpack.c.b16 %v1201, %v1201
      %v1218 = vpack.c.b16 %v1202, %v1202
      %v1219 = vpack.c.b16 %v1203, %v1203
      %v1220 = vpack.c.b16 %v1204, %v1204
      %v1221 = vpack.c.b16 %v1205, %v1205
      %v1222 = vpack.c.b16 %v1206, %v1206
      %v1223 = vpack.c.b16 %v1207, %v1207
      %v1224 = vpack.c.b16 %v1208, %v1208
      %1241 = vst [vmem:[%s300] sm:$0xf] %v1209
      %1242 = vst [vmem:[%s300 + $0x4] sm:$0xf] %v1210
      %1243 = vst [vmem:[%s300 + $0x8] sm:$0xf] %v1211
      %1244 = vst [vmem:[%s300 + $0xc] sm:$0xf] %v1212
      %1245 = vst [vmem:[%s300 + $0x10] sm:$0xf] %v1213
      %1246 = vst [vmem:[%s300 + $0x14] sm:$0xf] %v1214
      %1247 = vst [vmem:[%s300 + $0x18] sm:$0xf] %v1215
      %1248 = vst [vmem:[%s300 + $0x1c] sm:$0xf] %v1216
      %1249 = vst [vmem:[%s300 + $0x20] sm:$0xf] %v1217
      %1250 = vst [vmem:[%s300 + $0x24] sm:$0xf] %v1218
      %1251 = vst [vmem:[%s300 + $0x28] sm:$0xf] %v1219
      %1252 = vst [vmem:[%s300 + $0x2c] sm:$0xf] %v1220
      %1253 = vst [vmem:[%s300 + $0x30] sm:$0xf] %v1221
      %1254 = vst [vmem:[%s300 + $0x34] sm:$0xf] %v1222
      %1255 = vst [vmem:[%s300 + $0x38] sm:$0xf] %v1223
      %1256 = vst [vmem:[%s300 + $0x3c] sm:$0xf] %v1224
      %v1257 = vadd.f32 %v1115, %v1118
      %v1258 = vadd.f32 %v1257, %v1123
      %v1259 = vadd.f32 %v1258, %v1126
      %v1260 = vadd.f32 %v1259, %v1131
      %v1261 = vadd.f32 %v1260, %v1134
      %v1262 = vadd.f32 %v1261, %v1139
      %v1263 = vadd.f32 %v1262, %v1142
      %v1264 = vadd.f32 %v1263, %v1147
      %v1265 = vadd.f32 %v1264, %v1150
      %v1266 = vadd.f32 %v1265, %v1155
      %v1267 = vadd.f32 %v1266, %v1158
      %v1268 = vadd.f32 %v1267, %v1163
      %v1269 = vadd.f32 %v1268, %v1166
      %v1270 = vadd.f32 %v1269, %v1171
      %v1271 = vadd.f32 %v1270, %v1174
      %v1272 = vrot.slane %v1271, 4
      %v1273 = vadd.f32 %v1271, %v1272
      %v1274 = vrot.slane %v1273, 2
      %v1275 = vadd.f32 %v1273, %v1274
      %v1276 = vrot.slane %v1275, 1
      %v1277 = vadd.f32 %v1275, %v1276
      %v1278 = vmul.f32 %v1115, %v1115
      %v1279 = vmul.f32 %v1118, %v1118
      %v1280 = vmul.f32 %v1123, %v1123
      %v1281 = vmul.f32 %v1126, %v1126
      %v1282 = vmul.f32 %v1131, %v1131
      %v1283 = vmul.f32 %v1134, %v1134
      %v1284 = vmul.f32 %v1139, %v1139
      %v1285 = vmul.f32 %v1142, %v1142
      %v1286 = vmul.f32 %v1147, %v1147
      %v1287 = vmul.f32 %v1150, %v1150
      %v1288 = vmul.f32 %v1155, %v1155
      %v1289 = vmul.f32 %v1158, %v1158
      %v1290 = vmul.f32 %v1163, %v1163
      %v1291 = vmul.f32 %v1166, %v1166
      %v1292 = vmul.f32 %v1171, %v1171
      %v1293 = vmul.f32 %v1174, %v1174
      %v1294 = vadd.f32 %v1278, %v1279
      %v1295 = vadd.f32 %v1294, %v1280
      %v1296 = vadd.f32 %v1295, %v1281
      %v1297 = vadd.f32 %v1296, %v1282
      %v1298 = vadd.f32 %v1297, %v1283
      %v1299 = vadd.f32 %v1298, %v1284
      %v1300 = vadd.f32 %v1299, %v1285
      %v1301 = vadd.f32 %v1300, %v1286
      %v1302 = vadd.f32 %v1301, %v1287
      %v1303 = vadd.f32 %v1302, %v1288
      %v1304 = vadd.f32 %v1303, %v1289
      %v1305 = vadd.f32 %v1304, %v1290
      %v1306 = vadd.f32 %v1305, %v1291
      %v1307 = vadd.f32 %v1306, %v1292
      %v1308 = vadd.f32 %v1307, %v1293
      %v1309 = vrot.slane %v1308, 4
      %v1310 = vadd.f32 %v1308, %v1309
      %v1311 = vrot.slane %v1310, 2
      %v1312 = vadd.f32 %v1310, %v1311
      %v1313 = vrot.slane %v1312, 1
      %v1314 = vadd.f32 %v1312, %v1313
      %v1315 = vld [vmem:[%s3] sm:$0x1]
      %v1317 = vlaneseq
      %v1318 = vshrl.u32 %v1317, 7
      %v1319 = vsub.s32 0, %v1318
      %v1320 = vrot.slane %v1315, %v1319
      %v1322 = vmul.f32 %v573, %v1320
      %v1323 = vmul.f32 %v574, %v1320
      %v1324 = vmul.f32 %v575, %v1320
      %v1325 = vmul.f32 %v576, %v1320
      %v1326 = vmul.f32 %v577, %v1320
      %v1327 = vmul.f32 %v578, %v1320
      %v1328 = vmul.f32 %v579, %v1320
      %v1329 = vmul.f32 %v580, %v1320
      %v1330 = vmul.f32 %v581, %v1320
      %v1331 = vmul.f32 %v582, %v1320
      %v1332 = vmul.f32 %v583, %v1320
      %v1333 = vmul.f32 %v584, %v1320
      %v1334 = vmul.f32 %v585, %v1320
      %v1335 = vmul.f32 %v586, %v1320
      %v1336 = vmul.f32 %v587, %v1320
      %v1337 = vmul.f32 %v588, %v1320
      %v1338 = vld [vmem:[%s704] sm:$0x1]
      %v1340 = vlaneseq
      %v1341 = vshrl.u32 %v1340, 7
      %v1342 = vsub.s32 0, %v1341
      %v1343 = vrot.slane %v1338, %v1342
      %v1345 = vmul.f32 %v609, %v1343
      %v1346 = vmul.f32 %v610, %v1343
      %v1347 = vmul.f32 %v611, %v1343
      %v1348 = vmul.f32 %v612, %v1343
      %v1349 = vmul.f32 %v613, %v1343
      %v1350 = vmul.f32 %v614, %v1343
      %v1351 = vmul.f32 %v615, %v1343
      %v1352 = vmul.f32 %v616, %v1343
      %v1353 = vmul.f32 %v617, %v1343
      %v1354 = vmul.f32 %v618, %v1343
      %v1355 = vmul.f32 %v619, %v1343
      %v1356 = vmul.f32 %v620, %v1343
      %v1357 = vmul.f32 %v621, %v1343
      %v1358 = vmul.f32 %v622, %v1343
      %v1359 = vmul.f32 %v623, %v1343
      %v1360 = vmul.f32 %v624, %v1343
      %v1361 = vadd.f32 %v1322, %v1345
      %v1362 = vadd.f32 %v1323, %v1346
      %v1363 = vadd.f32 %v1324, %v1347
      %v1364 = vadd.f32 %v1325, %v1348
      %v1365 = vadd.f32 %v1326, %v1349
      %v1366 = vadd.f32 %v1327, %v1350
      %v1367 = vadd.f32 %v1328, %v1351
      %v1368 = vadd.f32 %v1329, %v1352
      %v1369 = vadd.f32 %v1330, %v1353
      %v1370 = vadd.f32 %v1331, %v1354
      %v1371 = vadd.f32 %v1332, %v1355
      %v1372 = vadd.f32 %v1333, %v1356
      %v1373 = vadd.f32 %v1334, %v1357
      %v1374 = vadd.f32 %v1335, %v1358
      %v1375 = vadd.f32 %v1336, %v1359
      %v1376 = vadd.f32 %v1337, %v1360
      %v1377 = vld [vmem:[%s744] sm:$0x1]
      %v1379 = vlaneseq
      %v1380 = vshrl.u32 %v1379, 7
      %v1381 = vsub.s32 0, %v1380
      %v1382 = vrot.slane %v1377, %v1381
      %v1384 = vmul.f32 %v645, %v1382
      %v1385 = vmul.f32 %v646, %v1382
      %v1386 = vmul.f32 %v647, %v1382
      %v1387 = vmul.f32 %v648, %v1382
      %v1388 = vmul.f32 %v649, %v1382
      %v1389 = vmul.f32 %v650, %v1382
      %v1390 = vmul.f32 %v651, %v1382
      %v1391 = vmul.f32 %v652, %v1382
      %v1392 = vmul.f32 %v653, %v1382
      %v1393 = vmul.f32 %v654, %v1382
      %v1394 = vmul.f32 %v655, %v1382
      %v1395 = vmul.f32 %v656, %v1382
      %v1396 = vmul.f32 %v657, %v1382
      %v1397 = vmul.f32 %v658, %v1382
      %v1398 = vmul.f32 %v659, %v1382
      %v1399 = vmul.f32 %v660, %v1382
      %v1400 = vld [vmem:[%s768] sm:$0x1]
      %v1402 = vlaneseq
      %v1403 = vshrl.u32 %v1402, 7
      %v1404 = vsub.s32 0, %v1403
      %v1405 = vrot.slane %v1400, %v1404
      %v1407 = vmul.f32 %v575, %v1405
      %v1408 = vmul.f32 %v576, %v1405
      %v1409 = vmul.f32 %v577, %v1405
      %v1410 = vmul.f32 %v578, %v1405
      %v1411 = vmul.f32 %v579, %v1405
      %v1412 = vmul.f32 %v580, %v1405
      %v1413 = vmul.f32 %v581, %v1405
      %v1414 = vmul.f32 %v582, %v1405
      %v1415 = vmul.f32 %v583, %v1405
      %v1416 = vmul.f32 %v584, %v1405
      %v1417 = vmul.f32 %v585, %v1405
      %v1418 = vmul.f32 %v586, %v1405
      %v1419 = vmul.f32 %v587, %v1405
      %v1420 = vmul.f32 %v588, %v1405
      %v1421 = vmul.f32 %v589, %v1405
      %v1422 = vmul.f32 %v590, %v1405
      %v1423 = vadd.f32 %v1384, %v1407
      %v1424 = vadd.f32 %v1385, %v1408
      %v1425 = vadd.f32 %v1386, %v1409
      %v1426 = vadd.f32 %v1387, %v1410
      %v1427 = vadd.f32 %v1388, %v1411
      %v1428 = vadd.f32 %v1389, %v1412
      %v1429 = vadd.f32 %v1390, %v1413
      %v1430 = vadd.f32 %v1391, %v1414
      %v1431 = vadd.f32 %v1392, %v1415
      %v1432 = vadd.f32 %v1393, %v1416
      %v1433 = vadd.f32 %v1394, %v1417
      %v1434 = vadd.f32 %v1395, %v1418
      %v1435 = vadd.f32 %v1396, %v1419
      %v1436 = vadd.f32 %v1397, %v1420
      %v1437 = vadd.f32 %v1398, %v1421
      %v1438 = vadd.f32 %v1399, %v1422
      %v1439 = vadd.f32 %v1361, %v1423
      %v1440 = vadd.f32 %v1362, %v1424
      %v1441 = vadd.f32 %v1363, %v1425
      %v1442 = vadd.f32 %v1364, %v1426
      %v1443 = vadd.f32 %v1365, %v1427
      %v1444 = vadd.f32 %v1366, %v1428
      %v1445 = vadd.f32 %v1367, %v1429
      %v1446 = vadd.f32 %v1368, %v1430
      %v1447 = vadd.f32 %v1369, %v1431
      %v1448 = vadd.f32 %v1370, %v1432
      %v1449 = vadd.f32 %v1371, %v1433
      %v1450 = vadd.f32 %v1372, %v1434
      %v1451 = vadd.f32 %v1373, %v1435
      %v1452 = vadd.f32 %v1374, %v1436
      %v1453 = vadd.f32 %v1375, %v1437
      %v1454 = vadd.f32 %v1376, %v1438
      %v1455 = vld [vmem:[%s824] sm:$0x1]
      %v1457 = vlaneseq
      %v1458 = vshrl.u32 %v1457, 7
      %v1459 = vsub.s32 0, %v1458
      %v1460 = vrot.slane %v1455, %v1459
      %v1462 = vmul.f32 %v611, %v1460
      %v1463 = vmul.f32 %v612, %v1460
      %v1464 = vmul.f32 %v613, %v1460
      %v1465 = vmul.f32 %v614, %v1460
      %v1466 = vmul.f32 %v615, %v1460
      %v1467 = vmul.f32 %v616, %v1460
      %v1468 = vmul.f32 %v617, %v1460
      %v1469 = vmul.f32 %v618, %v1460
      %v1470 = vmul.f32 %v619, %v1460
      %v1471 = vmul.f32 %v620, %v1460
      %v1472 = vmul.f32 %v621, %v1460
      %v1473 = vmul.f32 %v622, %v1460
      %v1474 = vmul.f32 %v623, %v1460
      %v1475 = vmul.f32 %v624, %v1460
      %v1476 = vmul.f32 %v625, %v1460
      %v1477 = vmul.f32 %v626, %v1460
      %v1478 = vld [vmem:[%s848] sm:$0x1]
      %v1480 = vlaneseq
      %v1481 = vshrl.u32 %v1480, 7
      %v1482 = vsub.s32 0, %v1481
      %v1483 = vrot.slane %v1478, %v1482
      %v1485 = vmul.f32 %v647, %v1483
      %v1486 = vmul.f32 %v648, %v1483
      %v1487 = vmul.f32 %v649, %v1483
      %v1488 = vmul.f32 %v650, %v1483
      %v1489 = vmul.f32 %v651, %v1483
      %v1490 = vmul.f32 %v652, %v1483
      %v1491 = vmul.f32 %v653, %v1483
      %v1492 = vmul.f32 %v654, %v1483
      %v1493 = vmul.f32 %v655, %v1483
      %v1494 = vmul.f32 %v656, %v1483
      %v1495 = vmul.f32 %v657, %v1483
      %v1496 = vmul.f32 %v658, %v1483
      %v1497 = vmul.f32 %v659, %v1483
      %v1498 = vmul.f32 %v660, %v1483
      %v1499 = vmul.f32 %v661, %v1483
      %v1500 = vmul.f32 %v662, %v1483
      %v1501 = vadd.f32 %v1462, %v1485
      %v1502 = vadd.f32 %v1463, %v1486
      %v1503 = vadd.f32 %v1464, %v1487
      %v1504 = vadd.f32 %v1465, %v1488
      %v1505 = vadd.f32 %v1466, %v1489
      %v1506 = vadd.f32 %v1467, %v1490
      %v1507 = vadd.f32 %v1468, %v1491
      %v1508 = vadd.f32 %v1469, %v1492
      %v1509 = vadd.f32 %v1470, %v1493
      %v1510 = vadd.f32 %v1471, %v1494
      %v1511 = vadd.f32 %v1472, %v1495
      %v1512 = vadd.f32 %v1473, %v1496
      %v1513 = vadd.f32 %v1474, %v1497
      %v1514 = vadd.f32 %v1475, %v1498
      %v1515 = vadd.f32 %v1476, %v1499
      %v1516 = vadd.f32 %v1477, %v1500
      %v1517 = vadd.f32 %v1439, %v1501
      %v1518 = vadd.f32 %v1440, %v1502
      %v1519 = vadd.f32 %v1441, %v1503
      %v1520 = vadd.f32 %v1442, %v1504
      %v1521 = vadd.f32 %v1443, %v1505
      %v1522 = vadd.f32 %v1444, %v1506
      %v1523 = vadd.f32 %v1445, %v1507
      %v1524 = vadd.f32 %v1446, %v1508
      %v1525 = vadd.f32 %v1447, %v1509
      %v1526 = vadd.f32 %v1448, %v1510
      %v1527 = vadd.f32 %v1449, %v1511
      %v1528 = vadd.f32 %v1450, %v1512
      %v1529 = vadd.f32 %v1451, %v1513
      %v1530 = vadd.f32 %v1452, %v1514
      %v1531 = vadd.f32 %v1453, %v1515
      %v1532 = vadd.f32 %v1454, %v1516
      %v1533 = vld [vmem:[%s904] sm:$0x1]
      %v1535 = vlaneseq
      %v1536 = vshrl.u32 %v1535, 7
      %v1537 = vsub.s32 0, %v1536
      %v1538 = vrot.slane %v1533, %v1537
      %v1540 = vmul.f32 %v577, %v1538
      %v1541 = vmul.f32 %v578, %v1538
      %v1542 = vmul.f32 %v579, %v1538
      %v1543 = vmul.f32 %v580, %v1538
      %v1544 = vmul.f32 %v581, %v1538
      %v1545 = vmul.f32 %v582, %v1538
      %v1546 = vmul.f32 %v583, %v1538
      %v1547 = vmul.f32 %v584, %v1538
      %v1548 = vmul.f32 %v585, %v1538
      %v1549 = vmul.f32 %v586, %v1538
      %v1550 = vmul.f32 %v587, %v1538
      %v1551 = vmul.f32 %v588, %v1538
      %v1552 = vmul.f32 %v589, %v1538
      %v1553 = vmul.f32 %v590, %v1538
      %v1554 = vmul.f32 %v591, %v1538
      %v1555 = vmul.f32 %v592, %v1538
      %v1556 = vld [vmem:[%s928] sm:$0x1]
      %v1558 = vlaneseq
      %v1559 = vshrl.u32 %v1558, 7
      %v1560 = vsub.s32 0, %v1559
      %v1561 = vrot.slane %v1556, %v1560
      %v1563 = vmul.f32 %v613, %v1561
      %v1564 = vmul.f32 %v614, %v1561
      %v1565 = vmul.f32 %v615, %v1561
      %v1566 = vmul.f32 %v616, %v1561
      %v1567 = vmul.f32 %v617, %v1561
      %v1568 = vmul.f32 %v618, %v1561
      %v1569 = vmul.f32 %v619, %v1561
      %v1570 = vmul.f32 %v620, %v1561
      %v1571 = vmul.f32 %v621, %v1561
      %v1572 = vmul.f32 %v622, %v1561
      %v1573 = vmul.f32 %v623, %v1561
      %v1574 = vmul.f32 %v624, %v1561
      %v1575 = vmul.f32 %v625, %v1561
      %v1576 = vmul.f32 %v626, %v1561
      %v1577 = vmul.f32 %v627, %v1561
      %v1578 = vmul.f32 %v628, %v1561
      %v1579 = vadd.f32 %v1540, %v1563
      %v1580 = vadd.f32 %v1541, %v1564
      %v1581 = vadd.f32 %v1542, %v1565
      %v1582 = vadd.f32 %v1543, %v1566
      %v1583 = vadd.f32 %v1544, %v1567
      %v1584 = vadd.f32 %v1545, %v1568
      %v1585 = vadd.f32 %v1546, %v1569
      %v1586 = vadd.f32 %v1547, %v1570
      %v1587 = vadd.f32 %v1548, %v1571
      %v1588 = vadd.f32 %v1549, %v1572
      %v1589 = vadd.f32 %v1550, %v1573
      %v1590 = vadd.f32 %v1551, %v1574
      %v1591 = vadd.f32 %v1552, %v1575
      %v1592 = vadd.f32 %v1553, %v1576
      %v1593 = vadd.f32 %v1554, %v1577
      %v1594 = vadd.f32 %v1555, %v1578
      %v1595 = vadd.f32 %v1517, %v1579
      %v1596 = vadd.f32 %v1518, %v1580
      %v1597 = vadd.f32 %v1519, %v1581
      %v1598 = vadd.f32 %v1520, %v1582
      %v1599 = vadd.f32 %v1521, %v1583
      %v1600 = vadd.f32 %v1522, %v1584
      %v1601 = vadd.f32 %v1523, %v1585
      %v1602 = vadd.f32 %v1524, %v1586
      %v1603 = vadd.f32 %v1525, %v1587
      %v1604 = vadd.f32 %v1526, %v1588
      %v1605 = vadd.f32 %v1527, %v1589
      %v1606 = vadd.f32 %v1528, %v1590
      %v1607 = vadd.f32 %v1529, %v1591
      %v1608 = vadd.f32 %v1530, %v1592
      %v1609 = vadd.f32 %v1531, %v1593
      %v1610 = vadd.f32 %v1532, %v1594
      %v1611 = vld [vmem:[%s984] sm:$0x1]
      %v1613 = vlaneseq
      %v1614 = vshrl.u32 %v1613, 7
      %v1615 = vsub.s32 0, %v1614
      %v1616 = vrot.slane %v1611, %v1615
      %v1618 = vmul.f32 %v649, %v1616
      %v1619 = vmul.f32 %v650, %v1616
      %v1620 = vmul.f32 %v651, %v1616
      %v1621 = vmul.f32 %v652, %v1616
      %v1622 = vmul.f32 %v653, %v1616
      %v1623 = vmul.f32 %v654, %v1616
      %v1624 = vmul.f32 %v655, %v1616
      %v1625 = vmul.f32 %v656, %v1616
      %v1626 = vmul.f32 %v657, %v1616
      %v1627 = vmul.f32 %v658, %v1616
      %v1628 = vmul.f32 %v659, %v1616
      %v1629 = vmul.f32 %v660, %v1616
      %v1630 = vmul.f32 %v661, %v1616
      %v1631 = vmul.f32 %v662, %v1616
      %v1632 = vmul.f32 %v663, %v1616
      %v1633 = vmul.f32 %v664, %v1616
      %v1634 = vadd.f32 %v1595, %v1618
      %v1635 = vadd.f32 %v1596, %v1619
      %v1636 = vadd.f32 %v1597, %v1620
      %v1637 = vadd.f32 %v1598, %v1621
      %v1638 = vadd.f32 %v1599, %v1622
      %v1639 = vadd.f32 %v1600, %v1623
      %v1640 = vadd.f32 %v1601, %v1624
      %v1641 = vadd.f32 %v1602, %v1625
      %v1642 = vadd.f32 %v1603, %v1626
      %v1643 = vadd.f32 %v1604, %v1627
      %v1644 = vadd.f32 %v1605, %v1628
      %v1645 = vadd.f32 %v1606, %v1629
      %v1646 = vadd.f32 %v1607, %v1630
      %v1647 = vadd.f32 %v1608, %v1631
      %v1648 = vadd.f32 %v1609, %v1632
      %v1649 = vadd.f32 %v1610, %v1633
      %v1650 = vpack.c.bf16 %v1635, %v1634
      %v1651 = vpack.c.bf16 %v1637, %v1636
      %v1652 = vpack.c.bf16 %v1639, %v1638
      %v1653 = vpack.c.bf16 %v1641, %v1640
      %v1654 = vpack.c.bf16 %v1643, %v1642
      %v1655 = vpack.c.bf16 %v1645, %v1644
      %v1656 = vpack.c.bf16 %v1647, %v1646
      %v1657 = vpack.c.bf16 %v1649, %v1648
      %1658 = vmatprep.subr.bf16.mxu0 0
      %1659 = vmatpush1.bf16.msra.mxu0 %v1071
      %1660 = vmatprep.subr.bf16.mxu0 0
      %1661 = vmatpush1.bf16.msra.mxu0 %v1070
      %1662 = vmatprep.subr.bf16.mxu0 0
      %1663 = vmatpush1.bf16.msra.mxu0 %v1069
      %1664 = vmatprep.subr.bf16.mxu0 0
      %1665 = vmatpush1.bf16.msra.mxu0 %v1068
      %1666 = vmatprep.subr.bf16.mxu0 0
      %1667 = vmatpush1.bf16.msra.mxu0 %v1067
      %1668 = vmatprep.subr.bf16.mxu0 0
      %1669 = vmatpush1.bf16.msra.mxu0 %v1066
      %1670 = vmatprep.subr.bf16.mxu0 0
      %1671 = vmatpush1.bf16.msra.mxu0 %v1065
      %1672 = vmatprep.subr.bf16.mxu0 0
      %1673 = vmatpush1.bf16.msra.mxu0 %v1064
      %1674 = vmatprep.subr.bf16.mxu0 0
      %1675 = vmatpush2.bf16.msra.mxu0 0
      %1676 = vmatprep.subr.bf16.mxu0 0
      %1677 = vmatpush2.bf16.msra.mxu0 0
      %1678 = vmatprep.subr.bf16.mxu0 0
      %1679 = vmatpush2.bf16.msra.mxu0 0
      %1680 = vmatprep.subr.bf16.mxu0 0
      %1681 = vmatpush2.bf16.msra.mxu0 0
      %1682 = vmatprep.subr.bf16.mxu0 0
      %1683 = vmatpush2.bf16.msra.mxu0 0
      %1684 = vmatprep.subr.bf16.mxu0 0
      %1685 = vmatpush2.bf16.msra.mxu0 0
      %1686 = vmatprep.subr.bf16.mxu0 0
      %1687 = vmatpush2.bf16.msra.mxu0 0
      %1688 = vmatprep.subr.bf16.mxu0 0
      %1689 = vmatpush2.bf16.msra.mxu0 0
      %1690 = vmatprep.mubr.bf16.mxu0 0
      %1691 = vmatmul.mubr.bf16.gmra.mxu0 %v1650
      %v1692 = vpop.f32.mrf.mxu0
      %v1693 = vadd.f32 0.0, %v1692
      %v1694 = vpop.f32.mrf.mxu0
      %v1695 = vpop.f32.mrf.mxu0
      %v1696 = vadd.f32 0.0, %v1695
      %v1697 = vpop.f32.mrf.mxu0
      %1698 = vmatprep.mubr.bf16.mxu0 0
      %1699 = vmatmul.mubr.bf16.gmra.mxu0 %v1651
      %v1700 = vpop.f32.mrf.mxu0
      %v1701 = vadd.f32 0.0, %v1700
      %v1702 = vpop.f32.mrf.mxu0
      %v1703 = vpop.f32.mrf.mxu0
      %v1704 = vadd.f32 0.0, %v1703
      %v1705 = vpop.f32.mrf.mxu0
      %1706 = vmatprep.mubr.bf16.mxu0 0
      %1707 = vmatmul.mubr.bf16.gmra.mxu0 %v1652
      %v1708 = vpop.f32.mrf.mxu0
      %v1709 = vadd.f32 0.0, %v1708
      %v1710 = vpop.f32.mrf.mxu0
      %v1711 = vpop.f32.mrf.mxu0
      %v1712 = vadd.f32 0.0, %v1711
      %v1713 = vpop.f32.mrf.mxu0
      %1714 = vmatprep.mubr.bf16.mxu0 0
      %1715 = vmatmul.mubr.bf16.gmra.mxu0 %v1653
      %v1716 = vpop.f32.mrf.mxu0
      %v1717 = vadd.f32 0.0, %v1716
      %v1718 = vpop.f32.mrf.mxu0
      %v1719 = vpop.f32.mrf.mxu0
      %v1720 = vadd.f32 0.0, %v1719
      %v1721 = vpop.f32.mrf.mxu0
      %1722 = vmatprep.mubr.bf16.mxu0 0
      %1723 = vmatmul.mubr.bf16.gmra.mxu0 %v1654
      %v1724 = vpop.f32.mrf.mxu0
      %v1725 = vadd.f32 0.0, %v1724
      %v1726 = vpop.f32.mrf.mxu0
      %v1727 = vpop.f32.mrf.mxu0
      %v1728 = vadd.f32 0.0, %v1727
      %v1729 = vpop.f32.mrf.mxu0
      %1730 = vmatprep.mubr.bf16.mxu0 0
      %1731 = vmatmul.mubr.bf16.gmra.mxu0 %v1655
      %v1732 = vpop.f32.mrf.mxu0
      %v1733 = vadd.f32 0.0, %v1732
      %v1734 = vpop.f32.mrf.mxu0
      %v1735 = vpop.f32.mrf.mxu0
      %v1736 = vadd.f32 0.0, %v1735
      %v1737 = vpop.f32.mrf.mxu0
      %1738 = vmatprep.mubr.bf16.mxu0 0
      %1739 = vmatmul.mubr.bf16.gmra.mxu0 %v1656
      %v1740 = vpop.f32.mrf.mxu0
      %v1741 = vadd.f32 0.0, %v1740
      %v1742 = vpop.f32.mrf.mxu0
      %v1743 = vpop.f32.mrf.mxu0
      %v1744 = vadd.f32 0.0, %v1743
      %v1745 = vpop.f32.mrf.mxu0
      %1746 = vmatprep.mubr.bf16.mxu0 0
      %1747 = vmatmul.mubr.bf16.gmra.mxu0 %v1657
      %v1748 = vpop.f32.mrf.mxu0
      %v1749 = vadd.f32 0.0, %v1748
      %v1750 = vpop.f32.mrf.mxu0
      %v1751 = vpop.f32.mrf.mxu0
      %v1752 = vadd.f32 0.0, %v1751
      %v1753 = vpop.f32.mrf.mxu0
      %1754 = vdwg.mxu0
      %v1755 = vpack.c.bf16 %v1696, %v1693
      %v1756 = vpack.c.bf16 %v1704, %v1701
      %v1757 = vpack.c.bf16 %v1712, %v1709
      %v1758 = vpack.c.bf16 %v1720, %v1717
      %v1759 = vpack.c.bf16 %v1728, %v1725
      %v1760 = vpack.c.bf16 %v1736, %v1733
      %v1761 = vpack.c.bf16 %v1744, %v1741
      %v1762 = vpack.c.bf16 %v1752, %v1749
      %v1771 = vunpack.c.l.b16 %v1755
      %v1772 = vunpack.c.h.b16 %v1755
      %v1773 = vunpack.c.l.b16 %v1756
      %v1774 = vunpack.c.h.b16 %v1756
      %v1775 = vunpack.c.l.b16 %v1757
      %v1776 = vunpack.c.h.b16 %v1757
      %v1777 = vunpack.c.l.b16 %v1758
      %v1778 = vunpack.c.h.b16 %v1758
      %v1779 = vunpack.c.l.b16 %v1759
      %v1780 = vunpack.c.h.b16 %v1759
      %v1781 = vunpack.c.l.b16 %v1760
      %v1782 = vunpack.c.h.b16 %v1760
      %v1783 = vunpack.c.l.b16 %v1761
      %v1784 = vunpack.c.h.b16 %v1761
      %v1785 = vunpack.c.l.b16 %v1762
      %v1786 = vunpack.c.h.b16 %v1762
      %v1787 = vpack.c.b16 %v1771, %v1771
      %v1788 = vpack.c.b16 %v1772, %v1772
      %v1789 = vpack.c.b16 %v1773, %v1773
      %v1790 = vpack.c.b16 %v1774, %v1774
      %v1791 = vpack.c.b16 %v1775, %v1775
      %v1792 = vpack.c.b16 %v1776, %v1776
      %v1793 = vpack.c.b16 %v1777, %v1777
      %v1794 = vpack.c.b16 %v1778, %v1778
      %v1795 = vpack.c.b16 %v1779, %v1779
      %v1796 = vpack.c.b16 %v1780, %v1780
      %v1797 = vpack.c.b16 %v1781, %v1781
      %v1798 = vpack.c.b16 %v1782, %v1782
      %v1799 = vpack.c.b16 %v1783, %v1783
      %v1800 = vpack.c.b16 %v1784, %v1784
      %v1801 = vpack.c.b16 %v1785, %v1785
      %v1802 = vpack.c.b16 %v1786, %v1786
      %1819 = vst [vmem:[%s300 + $0x40] sm:$0xf] %v1787
      %1820 = vst [vmem:[%s300 + $0x44] sm:$0xf] %v1788
      %1821 = vst [vmem:[%s300 + $0x48] sm:$0xf] %v1789
      %1822 = vst [vmem:[%s300 + $0x4c] sm:$0xf] %v1790
      %1823 = vst [vmem:[%s300 + $0x50] sm:$0xf] %v1791
      %1824 = vst [vmem:[%s300 + $0x54] sm:$0xf] %v1792
      %1825 = vst [vmem:[%s300 + $0x58] sm:$0xf] %v1793
      %1826 = vst [vmem:[%s300 + $0x5c] sm:$0xf] %v1794
      %1827 = vst [vmem:[%s300 + $0x60] sm:$0xf] %v1795
      %1828 = vst [vmem:[%s300 + $0x64] sm:$0xf] %v1796
      %1829 = vst [vmem:[%s300 + $0x68] sm:$0xf] %v1797
      %1830 = vst [vmem:[%s300 + $0x6c] sm:$0xf] %v1798
      %1831 = vst [vmem:[%s300 + $0x70] sm:$0xf] %v1799
      %1832 = vst [vmem:[%s300 + $0x74] sm:$0xf] %v1800
      %1833 = vst [vmem:[%s300 + $0x78] sm:$0xf] %v1801
      %1834 = vst [vmem:[%s300 + $0x7c] sm:$0xf] %v1802
      %v1835 = vadd.f32 %v1693, %v1696
      %v1836 = vadd.f32 %v1835, %v1701
      %v1837 = vadd.f32 %v1836, %v1704
      %v1838 = vadd.f32 %v1837, %v1709
      %v1839 = vadd.f32 %v1838, %v1712
      %v1840 = vadd.f32 %v1839, %v1717
      %v1841 = vadd.f32 %v1840, %v1720
      %v1842 = vadd.f32 %v1841, %v1725
      %v1843 = vadd.f32 %v1842, %v1728
      %v1844 = vadd.f32 %v1843, %v1733
      %v1845 = vadd.f32 %v1844, %v1736
      %v1846 = vadd.f32 %v1845, %v1741
      %v1847 = vadd.f32 %v1846, %v1744
      %v1848 = vadd.f32 %v1847, %v1749
      %v1849 = vadd.f32 %v1848, %v1752
      %v1850 = vrot.slane %v1849, 4
      %v1851 = vadd.f32 %v1849, %v1850
      %v1852 = vrot.slane %v1851, 2
      %v1853 = vadd.f32 %v1851, %v1852
      %v1854 = vrot.slane %v1853, 1
      %v1855 = vadd.f32 %v1853, %v1854
      %v1856 = vmul.f32 %v1693, %v1693
      %v1857 = vmul.f32 %v1696, %v1696
      %v1858 = vmul.f32 %v1701, %v1701
      %v1859 = vmul.f32 %v1704, %v1704
      %v1860 = vmul.f32 %v1709, %v1709
      %v1861 = vmul.f32 %v1712, %v1712
      %v1862 = vmul.f32 %v1717, %v1717
      %v1863 = vmul.f32 %v1720, %v1720
      %v1864 = vmul.f32 %v1725, %v1725
      %v1865 = vmul.f32 %v1728, %v1728
      %v1866 = vmul.f32 %v1733, %v1733
      %v1867 = vmul.f32 %v1736, %v1736
      %v1868 = vmul.f32 %v1741, %v1741
      %v1869 = vmul.f32 %v1744, %v1744
      %v1870 = vmul.f32 %v1749, %v1749
      %v1871 = vmul.f32 %v1752, %v1752
      %v1872 = vadd.f32 %v1856, %v1857
      %v1873 = vadd.f32 %v1872, %v1858
      %v1874 = vadd.f32 %v1873, %v1859
      %v1875 = vadd.f32 %v1874, %v1860
      %v1876 = vadd.f32 %v1875, %v1861
      %v1877 = vadd.f32 %v1876, %v1862
      %v1878 = vadd.f32 %v1877, %v1863
      %v1879 = vadd.f32 %v1878, %v1864
      %v1880 = vadd.f32 %v1879, %v1865
      %v1881 = vadd.f32 %v1880, %v1866
      %v1882 = vadd.f32 %v1881, %v1867
      %v1883 = vadd.f32 %v1882, %v1868
      %v1884 = vadd.f32 %v1883, %v1869
      %v1885 = vadd.f32 %v1884, %v1870
      %v1886 = vadd.f32 %v1885, %v1871
      %v1887 = vrot.slane %v1886, 4
      %v1888 = vadd.f32 %v1886, %v1887
      %v1889 = vrot.slane %v1888, 2
      %v1890 = vadd.f32 %v1888, %v1889
      %v1891 = vrot.slane %v1890, 1
      %v1892 = vadd.f32 %v1890, %v1891
      %v1893 = vadd.f32 %v1277, %v1855
      %v1894 = vadd.f32 %v1314, %v1892
      %1895 = vst [vmem:[%s307] sm:$0x1] %v1893
      %1896 = vst [vmem:[%s307 + $0x1] sm:$0x1] %v1894
      %p1897 = scmp.lt.s32.totalorder %s22, 1
      %s1898 = scalar_select %p1897, %s22, 1
      %p1899 = scmp.lt.s32.totalorder %s23, 0
      %s1900 = scalar_select %p1899, %s23, 0
      %s1901 = smul.addr %s1898, 32
      %s1902 = sadd.s32 %s1900, %s1901
      %s1903 = smul.addr %s1902, 4
      %s1904 = scalar_lea.vmem %s5, %s1903
      %p1905 = scmp.lt.s32.totalorder %s22, 1
      %s1906 = scalar_select %p1905, %s22, 1
      %p1907 = scmp.lt.s32.totalorder %s23, 0
      %s1908 = scalar_select %p1907, %s23, 0
      %s1909 = sadd.s32 %s1908, %s1906
      %s1910 = smul.addr %s1909, 2
      %s1911 = scalar_lea.vmem %s6, %s1910
      // Predicated region
      $region41: #{run_chain.14} parent=39 // pred_check
        %p1912 = pneg %p165
      $region42: #{run_chain.14} parent=39 // pred_check_branch
        %1914 = sbr.rel (%p1912) target = $region44
      $region43: #{run_chain.14} parent=39 // pred_region
        _
      $region44: #{run_chain.14} parent=39 // pred_fallthru
        _
      // Predicated region
      $region45: #{run_chain.14} parent=39 // pred_check
        %p1915 = pneg %p193
      $region46: #{run_chain.14} parent=39 // pred_check_branch
        %1917 = sbr.rel (%p1915) target = $region48
      $region47: #{run_chain.14} parent=39 // pred_region
        _
      $region48: #{run_chain.14} parent=39 // pred_fallthru
        _
    $region40: #{run_chain.14} parent=5 // pred_fallthru
      _
    %p1918 = scmp.le.s32.totalorder 2, %s13
    // Predicated region
    $region49: #{run_chain.14} parent=5 // pred_check
      %p1919 = pneg %p1918
    $region50: #{run_chain.14} parent=5 // pred_check_branch
      %1921 = sbr.rel (%p1919) target = $region52
    $region51: #{run_chain.14} parent=5 // pred_region
      %s1922 = ssub.s32 %s13, 2
      // Predicated region
      $region53: #{run_chain.14} parent=51 // pred_check
        %p1923 = pneg %p171
      $region54: #{run_chain.14} parent=51 // pred_check_branch
        %1925 = sbr.rel (%p1923) target = $region56
      $region55: #{run_chain.14} parent=51 // pred_region
        %p1926 = scmp.lt.s32.totalorder %s24, 1
        %s1927 = scalar_select %p1926, %s24, 1
        %p1928 = scmp.lt.s32.totalorder %s25, 0
        %s1929 = scalar_select %p1928, %s25, 0
        %s1930 = smul.addr %s1927, 32
        %s1931 = sadd.s32 %s1929, %s1930
        %s1932 = smul.addr %s1931, 4
        %s1933 = scalar_lea.vmem %s5, %s1932
      $region56: #{run_chain.14} parent=51 // pred_fallthru
        _
      // Predicated region
      $region57: #{run_chain.14} parent=51 // pred_check
        %p1934 = pneg %p199
      $region58: #{run_chain.14} parent=51 // pred_check_branch
        %1936 = sbr.rel (%p1934) target = $region60
      $region59: #{run_chain.14} parent=51 // pred_region
        %p1937 = scmp.lt.s32.totalorder %s24, 1
        %s1938 = scalar_select %p1937, %s24, 1
        %p1939 = scmp.lt.s32.totalorder %s25, 0
        %s1940 = scalar_select %p1939, %s25, 0
        %s1941 = sadd.s32 %s1940, %s1938
        %s1942 = smul.addr %s1941, 2
        %s1943 = scalar_lea.vmem %s6, %s1942
      $region60: #{run_chain.14} parent=51 // pred_fallthru
        _
    $region52: #{run_chain.14} parent=5 // pred_fallthru
      _
  $region6: #{run_chain.14} parent=0 // loop_footer
    %s17 = sadd.s32 1, %s13
  $region7: #{run_chain.14} parent=0 // loop_footer_branch
    %12 = sbr.rel target = $region3
  $region8: #{run_chain.14} parent=0 // loop_exit
    _

// kernel: run_chain.18
$region0: #{run_chain.18}
  #allocation0 [shape = 'u32[]', space=smem, size = 0x4, offset = 0x4, fixed_abs, tag = 'smem constant byte address 0x4 - core index']
  #allocation1 [shape = 'u32[144,128]{1,0:T(1,128)}', space=vmem, size = 0x12000, scoped, tag = 'internal scratch']
  #allocation2 [shape = 'f32[10,24,128]{2,1,0:T(8,128)}', space=vmem, size = 0x1e000, scoped, tag = 'scratch operand']
  %s0 = inlined_call_operand.vmem [shape: bf16[2,8,8,128], index: 0, kind: input, shape index: {}]
  %s1 = inlined_call_operand.vmem [shape: f32[1,1,128], index: 1, kind: input, shape index: {}]
  %s2 = inlined_call_operand.vmem [shape: f32[1,1,128], index: 2, kind: input, shape index: {}]
  %s3 = inlined_call_operand.vmem [shape: f32[9,1,1,128], index: 3, kind: input, shape index: {}]
  %s4 = inlined_call_operand.vmem [shape: bf16[128,128], index: 4, kind: input, shape index: {}]
  %s5 = inlined_call_operand.vmem [shape: bf16[2,64,128], index: 5, kind: output, shape index: {0}]
  %s6 = inlined_call_operand.vmem [shape: f32[2,2,128], index: 6, kind: output, shape index: {1}]
  %7 = xla_tuple %s5, %s6
  %s8 = sld [smem:[#allocation0]]
  $region61: #{run_chain.18} parent=0
    _
  %s10 = ssub.s32 1, %s8
  %s11 = scalar_select 0, %s10, %s8
  loop: start=0, step=1, limit=4
  $region2: #{run_chain.18} parent=0 // loop_pre_header
    _
  $region3: #{run_chain.18} parent=0 // loop_header
    %s13 = sphi 0, %s17
    %p14 = scmp.ge.s32.totalorder %s13, 4
    %s20 = sphi 0, %s32
    %s21 = sphi 0, %s28
    %s22 = sphi 0, %s20
    %s23 = sphi 0, %s21
    %s24 = sphi 0, %s22
    %s25 = sphi 0, %s23
    %s35 = sphi 0, %s37
    %s38 = sphi 0, %s35
    %s39 = sphi 0, %s38
    %s55 = sphi 0, %s39
    %s59 = sphi 0, %s59
    %s61 = sphi 0, %s59
    %s62 = sphi 0, %s61
    %s76 = sphi 0, %s62
    %s80 = sphi 0, %s80
    %s82 = sphi 0, %s80
    %s83 = sphi 0, %s82
    %s97 = sphi 0, %s83
    %s101 = sphi 0, %s101
    %s103 = sphi 0, %s101
    %s104 = sphi 0, %s103
    %s118 = sphi 0, %s104
    %s124 = sphi 0, %s126
    %s127 = sphi 0, %s124
    %s128 = sphi 0, %s127
    %s144 = sphi 0, %s128
    %s152 = sphi 0, %s154
    %s155 = sphi 0, %s152
    %s156 = sphi 0, %s155
    %s172 = sphi 0, %s156
    %s180 = sphi 0, %s182
    %s183 = sphi 0, %s180
    %s184 = sphi 0, %s183
    %s200 = sphi 0, %s184
  $region4: #{run_chain.18} parent=0 // loop_header_branch
    %16 = sbr.rel (%p14) target = $region8
  $region5: #{run_chain.18} parent=0 // loop_body
    %s18 = ssub.s32 %s13, 1
    %s19 = ssub.s32 %s13, 2
    %s26 = sadd.s32 1, %s21
    %p27 = scmp.ge.s32.totalorder %s26, 1
    %s28 = scalar_select %p27, 0, %s26
    %s29 = sadd.s32 1, %s20
    %s30 = scalar_select %p27, %s29, %s20
    %p31 = scmp.ge.s32.totalorder %s30, 2
    %s32 = scalar_select %p31, 0, %s30
    %s33 = ssub.s32 %s20, %s32
    %p34 = scmp.eq.s32.totalorder %s33, 0
    %s36 = sadd.s32 %s35, 1
    %s37 = scalar_select %p34, %s35, %s36
    %p40 = pneg %p34
    %p41 = scmp.eq.s32.totalorder %s13, 1
    %p42 = por %p40, %p41
    %p43 = scmp.ne.s32.totalorder %s35, %s38
    %p44 = scmp.eq.s32.totalorder %s13, 0
    %p45 = por %p43, %p44
    %p46 = scmp.ne.s32.totalorder %s35, %s38
    %p47 = scmp.eq.s32.totalorder %s18, 1
    %p48 = por %p46, %p47
    %p49 = scmp.ne.s32.totalorder %s38, %s39
    %p50 = scmp.eq.s32.totalorder %s18, 0
    %p51 = por %p49, %p50
    %p52 = scmp.ne.s32.totalorder %s38, %s39
    %p53 = scmp.eq.s32.totalorder %s19, 1
    %p54 = por %p52, %p53
    %p56 = scmp.ne.s32.totalorder %s39, %s55
    %p57 = scmp.eq.s32.totalorder %s19, 0
    %p58 = por %p56, %p57
    %s60 = sadd.s32 %s59, 1
    %p63 = scmp.eq.s32.totalorder %s13, 1
    %p64 = scmp.ne.s32.totalorder %s59, %s61
    %p65 = scmp.eq.s32.totalorder %s13, 0
    %p66 = por %p64, %p65
    %p67 = scmp.ne.s32.totalorder %s59, %s61
    %p68 = scmp.eq.s32.totalorder %s18, 1
    %p69 = por %p67, %p68
    %p70 = scmp.ne.s32.totalorder %s61, %s62
    %p71 = scmp.eq.s32.totalorder %s18, 0
    %p72 = por %p70, %p71
    %p73 = scmp.ne.s32.totalorder %s61, %s62
    %p74 = scmp.eq.s32.totalorder %s19, 1
    %p75 = por %p73, %p74
    %p77 = scmp.ne.s32.totalorder %s62, %s76
    %p78 = scmp.eq.s32.totalorder %s19, 0
    %p79 = por %p77, %p78
    %s81 = sadd.s32 %s80, 1
    %p84 = scmp.eq.s32.totalorder %s13, 1
    %p85 = scmp.ne.s32.totalorder %s80, %s82
    %p86 = scmp.eq.s32.totalorder %s13, 0
    %p87 = por %p85, %p86
    %p88 = scmp.ne.s32.totalorder %s80, %s82
    %p89 = scmp.eq.s32.totalorder %s18, 1
    %p90 = por %p88, %p89
    %p91 = scmp.ne.s32.totalorder %s82, %s83
    %p92 = scmp.eq.s32.totalorder %s18, 0
    %p93 = por %p91, %p92
    %p94 = scmp.ne.s32.totalorder %s82, %s83
    %p95 = scmp.eq.s32.totalorder %s19, 1
    %p96 = por %p94, %p95
    %p98 = scmp.ne.s32.totalorder %s83, %s97
    %p99 = scmp.eq.s32.totalorder %s19, 0
    %p100 = por %p98, %p99
    %s102 = sadd.s32 %s101, 1
    %p105 = scmp.eq.s32.totalorder %s13, 1
    %p106 = scmp.ne.s32.totalorder %s101, %s103
    %p107 = scmp.eq.s32.totalorder %s13, 0
    %p108 = por %p106, %p107
    %p109 = scmp.ne.s32.totalorder %s101, %s103
    %p110 = scmp.eq.s32.totalorder %s18, 1
    %p111 = por %p109, %p110
    %p112 = scmp.ne.s32.totalorder %s103, %s104
    %p113 = scmp.eq.s32.totalorder %s18, 0
    %p114 = por %p112, %p113
    %p115 = scmp.ne.s32.totalorder %s103, %s104
    %p116 = scmp.eq.s32.totalorder %s19, 1
    %p117 = por %p115, %p116
    %p119 = scmp.ne.s32.totalorder %s104, %s118
    %p120 = scmp.eq.s32.totalorder %s19, 0
    %p121 = por %p119, %p120
    %s122 = ssub.s32 %s21, %s28
    %p123 = scmp.eq.s32.totalorder %s122, 0
    %s125 = sadd.s32 %s124, 1
    %s126 = scalar_select %p123, %s124, %s125
    %p129 = pneg %p123
    %p130 = scmp.eq.s32.totalorder %s13, 1
    %p131 = por %p129, %p130
    %p132 = scmp.ne.s32.totalorder %s124, %s127
    %p133 = scmp.eq.s32.totalorder %s13, 0
    %p134 = por %p132, %p133
    %p135 = scmp.ne.s32.totalorder %s124, %s127
    %p136 = scmp.eq.s32.totalorder %s18, 1
    %p137 = por %p135, %p136
    %p138 = scmp.ne.s32.totalorder %s127, %s128
    %p139 = scmp.eq.s32.totalorder %s18, 0
    %p140 = por %p138, %p139
    %p141 = scmp.ne.s32.totalorder %s127, %s128
    %p142 = scmp.eq.s32.totalorder %s19, 1
    %p143 = por %p141, %p142
    %p145 = scmp.ne.s32.totalorder %s128, %s144
    %p146 = scmp.eq.s32.totalorder %s19, 0
    %p147 = por %p145, %p146
    %s148 = ssub.s32 %s20, %s32
    %s149 = ssub.s32 %s21, %s28
    %s150 = sor.u32 %s148, %s149
    %p151 = scmp.eq.s32.totalorder %s150, 0
    %s153 = sadd.s32 %s152, 1
    %s154 = scalar_select %p151, %s152, %s153
    %p157 = pneg %p151
    %p158 = scmp.eq.s32.totalorder %s13, 1
    %p159 = por %p157, %p158
    %p160 = scmp.ne.s32.totalorder %s152, %s155
    %p161 = scmp.eq.s32.totalorder %s13, 0
    %p162 = por %p160, %p161
    %p163 = scmp.ne.s32.totalorder %s152, %s155
    %p164 = scmp.eq.s32.totalorder %s18, 1
    %p165 = por %p163, %p164
    %p166 = scmp.ne.s32.totalorder %s155, %s156
    %p167 = scmp.eq.s32.totalorder %s18, 0
    %p168 = por %p166, %p167
    %p169 = scmp.ne.s32.totalorder %s155, %s156
    %p170 = scmp.eq.s32.totalorder %s19, 1
    %p171 = por %p169, %p170
    %p173 = scmp.ne.s32.totalorder %s156, %s172
    %p174 = scmp.eq.s32.totalorder %s19, 0
    %p175 = por %p173, %p174
    %s176 = ssub.s32 %s20, %s32
    %s177 = ssub.s32 %s21, %s28
    %s178 = sor.u32 %s176, %s177
    %p179 = scmp.eq.s32.totalorder %s178, 0
    %s181 = sadd.s32 %s180, 1
    %s182 = scalar_select %p179, %s180, %s181
    %p185 = pneg %p179
    %p186 = scmp.eq.s32.totalorder %s13, 1
    %p187 = por %p185, %p186
    %p188 = scmp.ne.s32.totalorder %s180, %s183
    %p189 = scmp.eq.s32.totalorder %s13, 0
    %p190 = por %p188, %p189
    %p191 = scmp.ne.s32.totalorder %s180, %s183
    %p192 = scmp.eq.s32.totalorder %s18, 1
    %p193 = por %p191, %p192
    %p194 = scmp.ne.s32.totalorder %s183, %s184
    %p195 = scmp.eq.s32.totalorder %s18, 0
    %p196 = por %p194, %p195
    %p197 = scmp.ne.s32.totalorder %s183, %s184
    %p198 = scmp.eq.s32.totalorder %s19, 1
    %p199 = por %p197, %p198
    %p201 = scmp.ne.s32.totalorder %s184, %s200
    %p202 = scmp.eq.s32.totalorder %s19, 0
    %p203 = por %p201, %p202
    %p204 = scmp.le.s32.totalorder 1, %s13
    %p205 = scmp.lt.s32.totalorder %s13, 3
    %p206 = pnand %p204, %p205
    %p207 = pneg %p206
    // Predicated region
    $region9: #{run_chain.18} parent=5 // pred_check
      _
    $region10: #{run_chain.18} parent=5 // pred_check_branch
      %209 = sbr.rel (%p206) target = $region12
    $region11: #{run_chain.18} parent=5 // pred_region
      %s210 = ssub.s32 %s13, 1
      // Predicated region
      $region13: #{run_chain.18} parent=11 // pred_check
        %p211 = pneg %p72
      $region14: #{run_chain.18} parent=11 // pred_check_branch
        %213 = sbr.rel (%p211) target = $region16
      $region15: #{run_chain.18} parent=11 // pred_region
        _
      $region16: #{run_chain.18} parent=11 // pred_fallthru
        _
      // Predicated region
      $region17: #{run_chain.18} parent=11 // pred_check
        %p214 = pneg %p93
      $region18: #{run_chain.18} parent=11 // pred_check_branch
        %216 = sbr.rel (%p214) target = $region20
      $region19: #{run_chain.18} parent=11 // pred_region
        _
      $region20: #{run_chain.18} parent=11 // pred_fallthru
        _
      // Predicated region
      $region21: #{run_chain.18} parent=11 // pred_check
        %p217 = pneg %p114
      $region22: #{run_chain.18} parent=11 // pred_check_branch
        %219 = sbr.rel (%p217) target = $region24
      $region23: #{run_chain.18} parent=11 // pred_region
        _
      $region24: #{run_chain.18} parent=11 // pred_fallthru
        _
      // Predicated region
      $region25: #{run_chain.18} parent=11 // pred_check
        %p220 = pneg %p140
      $region26: #{run_chain.18} parent=11 // pred_check_branch
        %222 = sbr.rel (%p220) target = $region28
      $region27: #{run_chain.18} parent=11 // pred_region
        %p223 = scmp.lt.s32.totalorder %s23, 0
        %s224 = scalar_select %p223, %s23, 0
        %s225 = smul.addr %s224, 4
        %s226 = scalar_lea.vmem %s4, %s225
      $region28: #{run_chain.18} parent=11 // pred_fallthru
        _
    $region12: #{run_chain.18} parent=5 // pred_fallthru
      _
    %p227 = scmp.lt.s32.totalorder %s13, 2
    // Predicated region
    $region29: #{run_chain.18} parent=5 // pred_check
      %p228 = pneg %p227
    $region30: #{run_chain.18} parent=5 // pred_check_branch
      %230 = sbr.rel (%p228) target = $region32
    $region31: #{run_chain.18} parent=5 // pred_region
      // Predicated region
      $region33: #{run_chain.18} parent=31 // pred_check
        %p231 = pneg %p45
      $region34: #{run_chain.18} parent=31 // pred_check_branch
        %233 = sbr.rel (%p231) target = $region36
      $region35: #{run_chain.18} parent=31 // pred_region
        %p234 = scmp.lt.s32.totalorder %s20, 1
        %s235 = scalar_select %p234, %s20, 1
        %s236 = smul.addr %s235, 8
        %s237 = smul.addr %s236, 4
        %s238 = scalar_lea.vmem %s0, %s237
      $region36: #{run_chain.18} parent=31 // pred_fallthru
        _
    $region32: #{run_chain.18} parent=5 // pred_fallthru
      _
    %p239 = scmp.le.s32.totalorder 1, %s13
    %p240 = scmp.lt.s32.totalorder %s13, 3
    %p241 = pnand %p239, %p240
    %p242 = pneg %p241
    // Predicated region
    $region37: #{run_chain.18} parent=5 // pred_check
      _
    $region38: #{run_chain.18} parent=5 // pred_check_branch
      %244 = sbr.rel (%p241) target = $region40
    $region39: #{run_chain.18} parent=5 // pred_region
      %s245 = ssub.s32 %s13, 1
      %p246 = scmp.lt.s32.totalorder %s22, 1
      %s247 = scalar_select %p246, %s22, 1
      %s248 = smul.addr %s247, 8
      %s249 = smul.addr %s248, 4
      %s250 = scalar_lea.vmem %s0, %s249
      %p251 = pneg %p51
      %p252 = pneg %p48
      %p253 = pneg %p72
      %p254 = pneg %p69
      %p255 = pneg %p93
      %p256 = pneg %p90
      %p257 = pneg %p114
      %p258 = pneg %p111
      %p259 = scmp.lt.s32.totalorder %s23, 0
      %s260 = scalar_select %p259, %s23, 0
      %s261 = smul.addr %s260, 4
      %s262 = scalar_lea.vmem %s4, %s261
      %p263 = pneg %p140
      %p264 = pneg %p137
      %p265 = pneg %p168
      %p266 = pneg %p165
      %p267 = scmp.lt.s32.totalorder %s22, 1
      %s268 = scalar_select %p267, %s22, 1
      %p269 = scmp.lt.s32.totalorder %s23, 0
      %s270 = scalar_select %p269, %s23, 0
      %s271 = smul.addr %s268, 8
      %s272 = sadd.s32 %s270, %s271
      %s273 = smul.addr %s272, 4
      %s274 = scalar_lea.vmem %s5, %s273
      %p275 = pneg %p196
      %p276 = pneg %p193
      %p277 = scmp.lt.s32.totalorder %s22, 1
      %s278 = scalar_select %p277, %s22, 1
      %p279 = scmp.lt.s32.totalorder %s23, 0
      %s280 = scalar_select %p279, %s23, 0
      %s281 = sadd.s32 %s280, %s278
      %s282 = smul.addr %s281, 2
      %s283 = scalar_lea.vmem %s6, %s282
      %p284 = scmp.lt.s32.totalorder %s22, 1
      %s285 = scalar_select %p284, %s22, 1
      %s286 = smul.addr %s285, 8
      %s287 = smul.addr %s286, 4
      %s288 = scalar_lea.vmem %s0, %s287
      %p289 = scmp.lt.s32.totalorder %s23, 0
      %s290 = scalar_select %p289, %s23, 0
      %s291 = smul.addr %s290, 4
      %s292 = scalar_lea.vmem %s4, %s291
      %p293 = scmp.lt.s32.totalorder %s22, 1
      %s294 = scalar_select %p293, %s22, 1
      %p295 = scmp.lt.s32.totalorder %s23, 0
      %s296 = scalar_select %p295, %s23, 0
      %s297 = smul.addr %s294, 8
      %s298 = sadd.s32 %s296, %s297
      %s299 = smul.addr %s298, 4
      %s300 = scalar_lea.vmem %s5, %s299
      %p301 = scmp.lt.s32.totalorder %s22, 1
      %s302 = scalar_select %p301, %s22, 1
      %p303 = scmp.lt.s32.totalorder %s23, 0
      %s304 = scalar_select %p303, %s23, 0
      %s305 = sadd.s32 %s304, %s302
      %s306 = smul.addr %s305, 2
      %s307 = scalar_lea.vmem %s6, %s306
      %v309 = vld [vmem:[%s288] sm:$0xf]
      %v310 = vld [vmem:[%s288 + $0x4] sm:$0xf]
      %v311 = vld [vmem:[%s288 + $0x8] sm:$0xf]
      %v312 = vld [vmem:[%s288 + $0xc] sm:$0xf]
      %v313 = vld [vmem:[%s288 + $0x10] sm:$0xf]
      %v314 = vld [vmem:[%s288 + $0x14] sm:$0xf]
      %v315 = vld [vmem:[%s288 + $0x18] sm:$0xf]
      %v316 = vld [vmem:[%s288 + $0x1c] sm:$0xf]
      %v317 = vunpack.c.l.bf16 %v309
      %v318 = vunpack.c.l.bf16 %v310
      %v319 = vunpack.c.l.bf16 %v311
      %v320 = vunpack.c.l.bf16 %v312
      %v321 = vunpack.c.l.bf16 %v313
      %v322 = vunpack.c.l.bf16 %v314
      %v323 = vunpack.c.l.bf16 %v315
      %v324 = vunpack.c.l.bf16 %v316
      %v325 = vld [vmem:[%s1] sm:$0x1]
      %v327 = vlaneseq
      %v328 = vshrl.u32 %v327, 7
      %v329 = vsub.s32 0, %v328
      %v330 = vrot.slane %v325, %v329
      %v332 = vmul.f32 %v317, %v330
      %v333 = vmul.f32 %v318, %v330
      %v334 = vmul.f32 %v319, %v330
      %v335 = vmul.f32 %v320, %v330
      %v336 = vmul.f32 %v321, %v330
      %v337 = vmul.f32 %v322, %v330
      %v338 = vmul.f32 %v323, %v330
      %v339 = vmul.f32 %v324, %v330
      %v340 = vld [vmem:[%s2] sm:$0x1]
      %v342 = vlaneseq
      %v343 = vshrl.u32 %v342, 7
      %v344 = vsub.s32 0, %v343
      %v345 = vrot.slane %v340, %v344
      %v347 = vadd.f32 %v332, %v345
      %v348 = vadd.f32 %v333, %v345
      %v349 = vadd.f32 %v334, %v345
      %v350 = vadd.f32 %v335, %v345
      %v351 = vadd.f32 %v336, %v345
      %v352 = vadd.f32 %v337, %v345
      %v353 = vadd.f32 %v338, %v345
      %v354 = vadd.f32 %v339, %v345
      %v355 = vmax.f32 %v347, 0.0
      %v356 = vmax.f32 %v348, 0.0
      %v357 = vmax.f32 %v349, 0.0
      %v358 = vmax.f32 %v350, 0.0
      %v359 = vmax.f32 %v351, 0.0
      %v360 = vmax.f32 %v352, 0.0
      %v361 = vmax.f32 %v353, 0.0
      %v362 = vmax.f32 %v354, 0.0
      %363 = vst [vmem:[#allocation2] sm:$0xff] 0.0
      %364 = vst [vmem:[#allocation2 + $0x8] sm:$0xff] 0.0
      %365 = vst [vmem:[#allocation2 + $0x10] sm:$0xff] 0.0
      %s366 = scalar_lea.vmem [#allocation2], 216
      %367 = vst [vmem:[%s366] sm:$0xff] 0.0
      %368 = vst [vmem:[%s366 + $0x8] sm:$0xff] 0.0
      %369 = vst [vmem:[%s366 + $0x10] sm:$0xff] 0.0
      %s370 = scalar_lea.vmem [#allocation2], 24
      %371 = vst [vmem:[%s370] sm:$0xff] 0.0
      %372 = vst [vmem:[%s370 + $0x18] sm:$0xff] 0.0
      %373 = vst [vmem:[%s370 + $0x30] sm:$0xff] 0.0
      %374 = vst [vmem:[%s370 + $0x48] sm:$0xff] 0.0
      %375 = vst [vmem:[%s370 + $0x60] sm:$0xff] 0.0
      %376 = vst [vmem:[%s370 + $0x78] sm:$0xff] 0.0
      %377 = vst [vmem:[%s370 + $0x90] sm:$0xff] 0.0
      %378 = vst [vmem:[%s370 + $0xa8] sm:$0xff] 0.0
      %379 = vst [vmem:[%s370 + $0x10] sm:$0xff] 0.0
      %380 = vst [vmem:[%s370 + $0x28] sm:$0xff] 0.0
      %381 = vst [vmem:[%s370 + $0x40] sm:$0xff] 0.0
      %382 = vst [vmem:[%s370 + $0x58] sm:$0xff] 0.0
      %383 = vst [vmem:[%s370 + $0x70] sm:$0xff] 0.0
      %384 = vst [vmem:[%s370 + $0x88] sm:$0xff] 0.0
      %385 = vst [vmem:[%s370 + $0xa0] sm:$0xff] 0.0
      %386 = vst [vmem:[%s370 + $0xb8] sm:$0xff] 0.0
      %387 = vst [vmem:[%s370 + $0x8] sm:$0xff] %v355
      %388 = vst [vmem:[%s370 + $0x20] sm:$0xff] %v356
      %389 = vst [vmem:[%s370 + $0x38] sm:$0xff] %v357
      %390 = vst [vmem:[%s370 + $0x50] sm:$0xff] %v358
      %391 = vst [vmem:[%s370 + $0x68] sm:$0xff] %v359
      %392 = vst [vmem:[%s370 + $0x80] sm:$0xff] %v360
      %393 = vst [vmem:[%s370 + $0x98] sm:$0xff] %v361
      %394 = vst [vmem:[%s370 + $0xb0] sm:$0xff] %v362
      %v395 = vld [vmem:[#allocation2 + $0x7] sm:$0xff]
      %v396 = vld [vmem:[#allocation2 + $0x1f] sm:$0xff]
      %v397 = vld [vmem:[#allocation2 + $0x37] sm:$0xff]
      %v398 = vld [vmem:[#allocation2 + $0x4f] sm:$0xff]
      %v399 = vld [vmem:[#allocation2 + $0x67] sm:$0xff]
      %v400 = vld [vmem:[#allocation2 + $0x7f] sm:$0xff]
      %v401 = vld [vmem:[#allocation2 + $0x97] sm:$0xff]
      %v402 = vld [vmem:[#allocation2 + $0xaf] sm:$0xff]
      %v403 = vld [vmem:[#allocation2 + $0xc7] sm:$0xff]
      %v404 = vld [vmem:[#allocation2 + $0xdf] sm:$0xff]
      %v405 = vld [vmem:[#allocation2 + $0x8] sm:$0xff]
      %v406 = vld [vmem:[#allocation2 + $0x20] sm:$0xff]
      %v407 = vld [vmem:[#allocation2 + $0x38] sm:$0xff]
      %v408 = vld [vmem:[#allocation2 + $0x50] sm:$0xff]
      %v409 = vld [vmem:[#allocation2 + $0x68] sm:$0xff]
      %v410 = vld [vmem:[#allocation2 + $0x80] sm:$0xff]
      %v411 = vld [vmem:[#allocation2 + $0x98] sm:$0xff]
      %v412 = vld [vmem:[#allocation2 + $0xb0] sm:$0xff]
      %v413 = vld [vmem:[#allocation2 + $0xc8] sm:$0xff]
      %v414 = vld [vmem:[#allocation2 + $0xe0] sm:$0xff]
      %v415 = vld [vmem:[#allocation2 + $0x9] sm:$0xff]
      %v416 = vld [vmem:[#allocation2 + $0x21] sm:$0xff]
      %v417 = vld [vmem:[#allocation2 + $0x39] sm:$0xff]
      %v418 = vld [vmem:[#allocation2 + $0x51] sm:$0xff]
      %v419 = vld [vmem:[#allocation2 + $0x69] sm:$0xff]
      %v420 = vld [vmem:[#allocation2 + $0x81] sm:$0xff]
      %v421 = vld [vmem:[#allocation2 + $0x99] sm:$0xff]
      %v422 = vld [vmem:[#allocation2 + $0xb1] sm:$0xff]
      %v423 = vld [vmem:[#allocation2 + $0xc9] sm:$0xff]
      %v424 = vld [vmem:[#allocation2 + $0xe1] sm:$0xff]
      %v425 = vld [vmem:[%s292] sm:$0xf]
      %v426 = vld [vmem:[%s292 + $0x4] sm:$0xf]
      %v427 = vld [vmem:[%s292 + $0x8] sm:$0xf]
      %v428 = vld [vmem:[%s292 + $0xc] sm:$0xf]
      %v429 = vld [vmem:[%s292 + $0x10] sm:$0xf]
      %v430 = vld [vmem:[%s292 + $0x14] sm:$0xf]
      %v431 = vld [vmem:[%s292 + $0x18] sm:$0xf]
      %v432 = vld [vmem:[%s292 + $0x1c] sm:$0xf]
      %v433 = vld [vmem:[%s292 + $0x20] sm:$0xf]
      %v434 = vld [vmem:[%s292 + $0x24] sm:$0xf]
      %v435 = vld [vmem:[%s292 + $0x28] sm:$0xf]
      %v436 = vld [vmem:[%s292 + $0x2c] sm:$0xf]
      %v437 = vld [vmem:[%s292 + $0x30] sm:$0xf]
      %v438 = vld [vmem:[%s292 + $0x34] sm:$0xf]
      %v439 = vld [vmem:[%s292 + $0x38] sm:$0xf]
      %v440 = vld [vmem:[%s292 + $0x3c] sm:$0xf]
      %v441 = vld [vmem:[%s3] sm:$0x1]
      %v443 = vlaneseq
      %v444 = vshrl.u32 %v443, 7
      %v445 = vsub.s32 0, %v444
      %v446 = vrot.slane %v441, %v445
      %v448 = vmul.f32 %v395, %v446
      %v449 = vmul.f32 %v396, %v446
      %v450 = vmul.f32 %v397, %v446
      %v451 = vmul.f32 %v398, %v446
      %v452 = vmul.f32 %v399, %v446
      %v453 = vmul.f32 %v400, %v446
      %v454 = vmul.f32 %v401, %v446
      %v455 = vmul.f32 %v402, %v446
      %s456 = scalar_lea.vmem %s3, 1
      %v457 = vld [vmem:[%s456] sm:$0x1]
      %v459 = vlaneseq
      %v460 = vshrl.u32 %v459, 7
      %v461 = vsub.s32 0, %v460
      %v462 = vrot.slane %v457, %v461
      %v464 = vmul.f32 %v405, %v462
      %v465 = vmul.f32 %v406, %v462
      %v466 = vmul.f32 %v407, %v462
      %v467 = vmul.f32 %v408, %v462
      %v468 = vmul.f32 %v409, %v462
      %v469 = vmul.f32 %v410, %v462
      %v470 = vmul.f32 %v411, %v462
      %v471 = vmul.f32 %v412, %v462
      %v472 = vadd.f32 %v448, %v464
      %v473 = vadd.f32 %v449, %v465
      %v474 = vadd.f32 %v450, %v466
      %v475 = vadd.f32 %v451, %v467
      %v476 = vadd.f32 %v452, %v468
      %v477 = vadd.f32 %v453, %v469
      %v478 = vadd.f32 %v454, %v470
      %v479 = vadd.f32 %v455, %v471
      %s480 = scalar_lea.vmem %s3, 2
      %v481 = vld [vmem:[%s480] sm:$0x1]
      %v483 = vlaneseq
      %v484 = vshrl.u32 %v483, 7
      %v485 = vsub.s32 0, %v484
      %v486 = vrot.slane %v481, %v485
      %v488 = vmul.f32 %v415, %v486
      %v489 = vmul.f32 %v416, %v486
      %v490 = vmul.f32 %v417, %v486
      %v491 = vmul.f32 %v418, %v486
      %v492 = vmul.f32 %v419, %v486
      %v493 = vmul.f32 %v420, %v486
      %v494 = vmul.f32 %v421, %v486
      %v495 = vmul.f32 %v422, %v486
      %s496 = scalar_lea.vmem %s3, 3
      %v497 = vld [vmem:[%s496] sm:$0x1]
      %v499 = vlaneseq
      %v500 = vshrl.u32 %v499, 7
      %v501 = vsub.s32 0, %v500
      %v502 = vrot.slane %v497, %v501
      %v504 = vmul.f32 %v396, %v502
      %v505 = vmul.f32 %v397, %v502
      %v506 = vmul.f32 %v398, %v502
      %v507 = vmul.f32 %v399, %v502
      %v508 = vmul.f32 %v400, %v502
      %v509 = vmul.f32 %v401, %v502
      %v510 = vmul.f32 %v402, %v502
      %v511 = vmul.f32 %v403, %v502
      %v512 = vadd.f32 %v488, %v504
      %v513 = vadd.f32 %v489, %v505
      %v514 = vadd.f32 %v490, %v506
      %v515 = vadd.f32 %v491, %v507
      %v516 = vadd.f32 %v492, %v508
      %v517 = vadd.f32 %v493, %v509
      %v518 = vadd.f32 %v494, %v510
      %v519 = vadd.f32 %v495, %v511
      %v520 = vadd.f32 %v472, %v512
      %v521 = vadd.f32 %v473, %v513
      %v522 = vadd.f32 %v474, %v514
      %v523 = vadd.f32 %v475, %v515
      %v524 = vadd.f32 %v476, %v516
      %v525 = vadd.f32 %v477, %v517
      %v526 = vadd.f32 %v478, %v518
      %v527 = vadd.f32 %v479, %v519
      %s528 = scalar_lea.vmem %s3, 4
      %v529 = vld [vmem:[%s528] sm:$0x1]
      %v531 = vlaneseq
      %v532 = vshrl.u32 %v531, 7
      %v533 = vsub.s32 0, %v532
      %v534 = vrot.slane %v529, %v533
      %v536 = vmul.f32 %v406, %v534
      %v537 = vmul.f32 %v407, %v534
      %v538 = vmul.f32 %v408, %v534
      %v539 = vmul.f32 %v409, %v534
      %v540 = vmul.f32 %v410, %v534
      %v541 = vmul.f32 %v411, %v534
      %v542 = vmul.f32 %v412, %v534
      %v543 = vmul.f32 %v413, %v534
      %s544 = scalar_lea.vmem %s3, 5
      %v545 = vld [vmem:[%s544] sm:$0x1]
      %v547 = vlaneseq
      %v548 = vshrl.u32 %v547, 7
      %v549 = vsub.s32 0, %v548
      %v550 = vrot.slane %v545, %v549
      %v552 = vmul.f32 %v416, %v550
      %v553 = vmul.f32 %v417, %v550
      %v554 = vmul.f32 %v418, %v550
      %v555 = vmul.f32 %v419, %v550
      %v556 = vmul.f32 %v420, %v550
      %v557 = vmul.f32 %v421, %v550
      %v558 = vmul.f32 %v422, %v550
      %v559 = vmul.f32 %v423, %v550
      %v560 = vadd.f32 %v536, %v552
      %v561 = vadd.f32 %v537, %v553
      %v562 = vadd.f32 %v538, %v554
      %v563 = vadd.f32 %v539, %v555
      %v564 = vadd.f32 %v540, %v556
      %v565 = vadd.f32 %v541, %v557
      %v566 = vadd.f32 %v542, %v558
      %v567 = vadd.f32 %v543, %v559
      %v568 = vadd.f32 %v520, %v560
      %v569 = vadd.f32 %v521, %v561
      %v570 = vadd.f32 %v522, %v562
      %v571 = vadd.f32 %v523, %v563
      %v572 = vadd.f32 %v524, %v564
      %v573 = vadd.f32 %v525, %v565
      %v574 = vadd.f32 %v526, %v566
      %v575 = vadd.f32 %v527, %v567
      %s576 = scalar_lea.vmem %s3, 6
      %v577 = vld [vmem:[%s576] sm:$0x1]
      %v579 = vlaneseq
      %v580 = vshrl.u32 %v579, 7
      %v581 = vsub.s32 0, %v580
      %v582 = vrot.slane %v577, %v581
      %v584 = vmul.f32 %v397, %v582
      %v585 = vmul.f32 %v398, %v582
      %v586 = vmul.f32 %v399, %v582
      %v587 = vmul.f32 %v400, %v582
      %v588 = vmul.f32 %v401, %v582
      %v589 = vmul.f32 %v402, %v582
      %v590 = vmul.f32 %v403, %v582
      %v591 = vmul.f32 %v404, %v582
      %s592 = scalar_lea.vmem %s3, 7
      %v593 = vld [vmem:[%s592] sm:$0x1]
      %v595 = vlaneseq
      %v596 = vshrl.u32 %v595, 7
      %v597 = vsub.s32 0, %v596
      %v598 = vrot.slane %v593, %v597
      %v600 = vmul.f32 %v407, %v598
      %v601 = vmul.f32 %v408, %v598
      %v602 = vmul.f32 %v409, %v598
      %v603 = vmul.f32 %v410, %v598
      %v604 = vmul.f32 %v411, %v598
      %v605 = vmul.f32 %v412, %v598
      %v606 = vmul.f32 %v413, %v598
      %v607 = vmul.f32 %v414, %v598
      %v608 = vadd.f32 %v584, %v600
      %v609 = vadd.f32 %v585, %v601
      %v610 = vadd.f32 %v586, %v602
      %v611 = vadd.f32 %v587, %v603
      %v612 = vadd.f32 %v588, %v604
      %v613 = vadd.f32 %v589, %v605
      %v614 = vadd.f32 %v590, %v606
      %v615 = vadd.f32 %v591, %v607
      %v616 = vadd.f32 %v568, %v608
      %v617 = vadd.f32 %v569, %v609
      %v618 = vadd.f32 %v570, %v610
      %v619 = vadd.f32 %v571, %v611
      %v620 = vadd.f32 %v572, %v612
      %v621 = vadd.f32 %v573, %v613
      %v622 = vadd.f32 %v574, %v614
      %v623 = vadd.f32 %v575, %v615
      %s624 = scalar_lea.vmem %s3, 8
      %v625 = vld [vmem:[%s624] sm:$0x1]
      %v627 = vlaneseq
      %v628 = vshrl.u32 %v627, 7
      %v629 = vsub.s32 0, %v628
      %v630 = vrot.slane %v625, %v629
      %v632 = vmul.f32 %v417, %v630
      %v633 = vmul.f32 %v418, %v630
      %v634 = vmul.f32 %v419, %v630
      %v635 = vmul.f32 %v420, %v630
      %v636 = vmul.f32 %v421, %v630
      %v637 = vmul.f32 %v422, %v630
      %v638 = vmul.f32 %v423, %v630
      %v639 = vmul.f32 %v424, %v630
      %v640 = vadd.f32 %v616, %v632
      %v641 = vadd.f32 %v617, %v633
      %v642 = vadd.f32 %v618, %v634
      %v643 = vadd.f32 %v619, %v635
      %v644 = vadd.f32 %v620, %v636
      %v645 = vadd.f32 %v621, %v637
      %v646 = vadd.f32 %v622, %v638
      %v647 = vadd.f32 %v623, %v639
      %v648 = vpack.c.bf16 %v641, %v640
      %v649 = vpack.c.bf16 %v643, %v642
      %v650 = vpack.c.bf16 %v645, %v644
      %v651 = vpack.c.bf16 %v647, %v646
      %v668 = vunpack.c.l.b16 %v425
      %v669 = vunpack.c.l.b16 %v426
      %v670 = vunpack.c.l.b16 %v427
      %v671 = vunpack.c.l.b16 %v428
      %v672 = vunpack.c.l.b16 %v429
      %v673 = vunpack.c.l.b16 %v430
      %v674 = vunpack.c.l.b16 %v431
      %v675 = vunpack.c.l.b16 %v432
      %v676 = vunpack.c.l.b16 %v433
      %v677 = vunpack.c.l.b16 %v434
      %v678 = vunpack.c.l.b16 %v435
      %v679 = vunpack.c.l.b16 %v436
      %v680 = vunpack.c.l.b16 %v437
      %v681 = vunpack.c.l.b16 %v438
      %v682 = vunpack.c.l.b16 %v439
      %v683 = vunpack.c.l.b16 %v440
      %v684 = vpack.c.b16 %v669, %v668
      %v685 = vpack.c.b16 %v671, %v670
      %v686 = vpack.c.b16 %v673, %v672
      %v687 = vpack.c.b16 %v675, %v674
      %v688 = vpack.c.b16 %v677, %v676
      %v689 = vpack.c.b16 %v679, %v678
      %v690 = vpack.c.b16 %v681, %v680
      %v691 = vpack.c.b16 %v683, %v682
      %700 = vmatprep.subr.bf16.mxu0 0
      %701 = vmatpush1.bf16.msra.mxu0 %v691
      %702 = vmatprep.subr.bf16.mxu0 0
      %703 = vmatpush1.bf16.msra.mxu0 %v690
      %704 = vmatprep.subr.bf16.mxu0 0
      %705 = vmatpush1.bf16.msra.mxu0 %v689
      %706 = vmatprep.subr.bf16.mxu0 0
      %707 = vmatpush1.bf16.msra.mxu0 %v688
      %708 = vmatprep.subr.bf16.mxu0 0
      %709 = vmatpush1.bf16.msra.mxu0 %v687
      %710 = vmatprep.subr.bf16.mxu0 0
      %711 = vmatpush1.bf16.msra.mxu0 %v686
      %712 = vmatprep.subr.bf16.mxu0 0
      %713 = vmatpush1.bf16.msra.mxu0 %v685
      %714 = vmatprep.subr.bf16.mxu0 0
      %715 = vmatpush1.bf16.msra.mxu0 %v684
      %716 = vmatprep.subr.bf16.mxu0 0
      %717 = vmatpush2.bf16.msra.mxu0 0
      %718 = vmatprep.subr.bf16.mxu0 0
      %719 = vmatpush2.bf16.msra.mxu0 0
      %720 = vmatprep.subr.bf16.mxu0 0
      %721 = vmatpush2.bf16.msra.mxu0 0
      %722 = vmatprep.subr.bf16.mxu0 0
      %723 = vmatpush2.bf16.msra.mxu0 0
      %724 = vmatprep.subr.bf16.mxu0 0
      %725 = vmatpush2.bf16.msra.mxu0 0
      %726 = vmatprep.subr.bf16.mxu0 0
      %727 = vmatpush2.bf16.msra.mxu0 0
      %728 = vmatprep.subr.bf16.mxu0 0
      %729 = vmatpush2.bf16.msra.mxu0 0
      %730 = vmatprep.subr.bf16.mxu0 0
      %731 = vmatpush2.bf16.msra.mxu0 0
      %732 = vmatprep.mubr.bf16.mxu0 0
      %733 = vmatmul.mubr.bf16.gmra.mxu0 %v648
      %v734 = vpop.f32.mrf.mxu0
      %v735 = vadd.f32 0.0, %v734
      %v736 = vpop.f32.mrf.mxu0
      %v737 = vpop.f32.mrf.mxu0
      %v738 = vadd.f32 0.0, %v737
      %v739 = vpop.f32.mrf.mxu0
      %740 = vmatprep.mubr.bf16.mxu0 0
      %741 = vmatmul.mubr.bf16.gmra.mxu0 %v649
      %v742 = vpop.f32.mrf.mxu0
      %v743 = vadd.f32 0.0, %v742
      %v744 = vpop.f32.mrf.mxu0
      %v745 = vpop.f32.mrf.mxu0
      %v746 = vadd.f32 0.0, %v745
      %v747 = vpop.f32.mrf.mxu0
      %748 = vmatprep.mubr.bf16.mxu0 0
      %749 = vmatmul.mubr.bf16.gmra.mxu0 %v650
      %v750 = vpop.f32.mrf.mxu0
      %v751 = vadd.f32 0.0, %v750
      %v752 = vpop.f32.mrf.mxu0
      %v753 = vpop.f32.mrf.mxu0
      %v754 = vadd.f32 0.0, %v753
      %v755 = vpop.f32.mrf.mxu0
      %756 = vmatprep.mubr.bf16.mxu0 0
      %757 = vmatmul.mubr.bf16.gmra.mxu0 %v651
      %v758 = vpop.f32.mrf.mxu0
      %v759 = vadd.f32 0.0, %v758
      %v760 = vpop.f32.mrf.mxu0
      %v761 = vpop.f32.mrf.mxu0
      %v762 = vadd.f32 0.0, %v761
      %v763 = vpop.f32.mrf.mxu0
      %764 = vdwg.mxu0
      %v765 = vpack.c.bf16 %v738, %v735
      %v766 = vpack.c.bf16 %v746, %v743
      %v767 = vpack.c.bf16 %v754, %v751
      %v768 = vpack.c.bf16 %v762, %v759
      %v773 = vunpack.c.l.b16 %v765
      %v774 = vunpack.c.h.b16 %v765
      %v775 = vunpack.c.l.b16 %v766
      %v776 = vunpack.c.h.b16 %v766
      %v777 = vunpack.c.l.b16 %v767
      %v778 = vunpack.c.h.b16 %v767
      %v779 = vunpack.c.l.b16 %v768
      %v780 = vunpack.c.h.b16 %v768
      %v781 = vpack.c.b16 %v773, %v773
      %v782 = vpack.c.b16 %v774, %v774
      %v783 = vpack.c.b16 %v775, %v775
      %v784 = vpack.c.b16 %v776, %v776
      %v785 = vpack.c.b16 %v777, %v777
      %v786 = vpack.c.b16 %v778, %v778
      %v787 = vpack.c.b16 %v779, %v779
      %v788 = vpack.c.b16 %v780, %v780
      %797 = vst [vmem:[%s300] sm:$0xf] %v781
      %798 = vst [vmem:[%s300 + $0x4] sm:$0xf] %v782
      %799 = vst [vmem:[%s300 + $0x8] sm:$0xf] %v783
      %800 = vst [vmem:[%s300 + $0xc] sm:$0xf] %v784
      %801 = vst [vmem:[%s300 + $0x10] sm:$0xf] %v785
      %802 = vst [vmem:[%s300 + $0x14] sm:$0xf] %v786
      %803 = vst [vmem:[%s300 + $0x18] sm:$0xf] %v787
      %804 = vst [vmem:[%s300 + $0x1c] sm:$0xf] %v788
      %v805 = vadd.f32 %v735, %v738
      %v806 = vadd.f32 %v805, %v743
      %v807 = vadd.f32 %v806, %v746
      %v808 = vadd.f32 %v807, %v751
      %v809 = vadd.f32 %v808, %v754
      %v810 = vadd.f32 %v809, %v759
      %v811 = vadd.f32 %v810, %v762
      %v812 = vrot.slane %v811, 4
      %v813 = vadd.f32 %v811, %v812
      %v814 = vrot.slane %v813, 2
      %v815 = vadd.f32 %v813, %v814
      %v816 = vrot.slane %v815, 1
      %v817 = vadd.f32 %v815, %v816
      %v818 = vmul.f32 %v735, %v735
      %v819 = vmul.f32 %v738, %v738
      %v820 = vmul.f32 %v743, %v743
      %v821 = vmul.f32 %v746, %v746
      %v822 = vmul.f32 %v751, %v751
      %v823 = vmul.f32 %v754, %v754
      %v824 = vmul.f32 %v759, %v759
      %v825 = vmul.f32 %v762, %v762
      %v826 = vadd.f32 %v818, %v819
      %v827 = vadd.f32 %v826, %v820
      %v828 = vadd.f32 %v827, %v821
      %v829 = vadd.f32 %v828, %v822
      %v830 = vadd.f32 %v829, %v823
      %v831 = vadd.f32 %v830, %v824
      %v832 = vadd.f32 %v831, %v825
      %v833 = vrot.slane %v832, 4
      %v834 = vadd.f32 %v832, %v833
      %v835 = vrot.slane %v834, 2
      %v836 = vadd.f32 %v834, %v835
      %v837 = vrot.slane %v836, 1
      %v838 = vadd.f32 %v836, %v837
      %839 = vst [vmem:[%s307] sm:$0x1] %v817
      %840 = vst [vmem:[%s307 + $0x1] sm:$0x1] %v838
      %p841 = scmp.lt.s32.totalorder %s22, 1
      %s842 = scalar_select %p841, %s22, 1
      %p843 = scmp.lt.s32.totalorder %s23, 0
      %s844 = scalar_select %p843, %s23, 0
      %s845 = smul.addr %s842, 8
      %s846 = sadd.s32 %s844, %s845
      %s847 = smul.addr %s846, 4
      %s848 = scalar_lea.vmem %s5, %s847
      %p849 = scmp.lt.s32.totalorder %s22, 1
      %s850 = scalar_select %p849, %s22, 1
      %p851 = scmp.lt.s32.totalorder %s23, 0
      %s852 = scalar_select %p851, %s23, 0
      %s853 = sadd.s32 %s852, %s850
      %s854 = smul.addr %s853, 2
      %s855 = scalar_lea.vmem %s6, %s854
      // Predicated region
      $region41: #{run_chain.18} parent=39 // pred_check
        %p856 = pneg %p165
      $region42: #{run_chain.18} parent=39 // pred_check_branch
        %858 = sbr.rel (%p856) target = $region44
      $region43: #{run_chain.18} parent=39 // pred_region
        _
      $region44: #{run_chain.18} parent=39 // pred_fallthru
        _
      // Predicated region
      $region45: #{run_chain.18} parent=39 // pred_check
        %p859 = pneg %p193
      $region46: #{run_chain.18} parent=39 // pred_check_branch
        %861 = sbr.rel (%p859) target = $region48
      $region47: #{run_chain.18} parent=39 // pred_region
        _
      $region48: #{run_chain.18} parent=39 // pred_fallthru
        _
    $region40: #{run_chain.18} parent=5 // pred_fallthru
      _
    %p862 = scmp.le.s32.totalorder 2, %s13
    // Predicated region
    $region49: #{run_chain.18} parent=5 // pred_check
      %p863 = pneg %p862
    $region50: #{run_chain.18} parent=5 // pred_check_branch
      %865 = sbr.rel (%p863) target = $region52
    $region51: #{run_chain.18} parent=5 // pred_region
      %s866 = ssub.s32 %s13, 2
      // Predicated region
      $region53: #{run_chain.18} parent=51 // pred_check
        %p867 = pneg %p171
      $region54: #{run_chain.18} parent=51 // pred_check_branch
        %869 = sbr.rel (%p867) target = $region56
      $region55: #{run_chain.18} parent=51 // pred_region
        %p870 = scmp.lt.s32.totalorder %s24, 1
        %s871 = scalar_select %p870, %s24, 1
        %p872 = scmp.lt.s32.totalorder %s25, 0
        %s873 = scalar_select %p872, %s25, 0
        %s874 = smul.addr %s871, 8
        %s875 = sadd.s32 %s873, %s874
        %s876 = smul.addr %s875, 4
        %s877 = scalar_lea.vmem %s5, %s876
      $region56: #{run_chain.18} parent=51 // pred_fallthru
        _
      // Predicated region
      $region57: #{run_chain.18} parent=51 // pred_check
        %p878 = pneg %p199
      $region58: #{run_chain.18} parent=51 // pred_check_branch
        %880 = sbr.rel (%p878) target = $region60
      $region59: #{run_chain.18} parent=51 // pred_region
        %p881 = scmp.lt.s32.totalorder %s24, 1
        %s882 = scalar_select %p881, %s24, 1
        %p883 = scmp.lt.s32.totalorder %s25, 0
        %s884 = scalar_select %p883, %s25, 0
        %s885 = sadd.s32 %s884, %s882
        %s886 = smul.addr %s885, 2
        %s887 = scalar_lea.vmem %s6, %s886
      $region60: #{run_chain.18} parent=51 // pred_fallthru
        _
    $region52: #{run_chain.18} parent=5 // pred_fallthru
      _
  $region6: #{run_chain.18} parent=0 // loop_footer
    %s17 = sadd.s32 1, %s13
  $region7: #{run_chain.18} parent=0 // loop_footer_branch
    %12 = sbr.rel target = $region3
  $region8: #{run_chain.18} parent=0 // loop_exit
    _

// kernel: run_chain.23
$region0: #{run_chain.23}
  #allocation0 [shape = 'u32[]', space=smem, size = 0x4, offset = 0x4, fixed_abs, tag = 'smem constant byte address 0x4 - core index']
  #allocation1 [shape = 'u32[144,128]{1,0:T(1,128)}', space=vmem, size = 0x12000, scoped, tag = 'internal scratch']
  #allocation2 [shape = 'f32[10,24,128]{2,1,0:T(8,128)}', space=vmem, size = 0x1e000, scoped, tag = 'scratch operand']
  %s0 = inlined_call_operand.vmem [shape: bf16[2,8,8,128], index: 0, kind: input, shape index: {}]
  %s1 = inlined_call_operand.vmem [shape: f32[1,1,128], index: 1, kind: input, shape index: {}]
  %s2 = inlined_call_operand.vmem [shape: f32[1,1,128], index: 2, kind: input, shape index: {}]
  %s3 = inlined_call_operand.vmem [shape: f32[9,1,1,128], index: 3, kind: input, shape index: {}]
  %s4 = inlined_call_operand.vmem [shape: bf16[128,256], index: 4, kind: input, shape index: {}]
  %s5 = inlined_call_operand.vmem [shape: bf16[2,64,256], index: 5, kind: output, shape index: {0}]
  %s6 = inlined_call_operand.vmem [shape: f32[2,2,256], index: 6, kind: output, shape index: {1}]
  %7 = xla_tuple %s5, %s6
  %s8 = sld [smem:[#allocation0]]
  $region61: #{run_chain.23} parent=0
    _
  %s10 = ssub.s32 1, %s8
  %s11 = scalar_select 0, %s10, %s8
  loop: start=0, step=1, limit=4
  $region2: #{run_chain.23} parent=0 // loop_pre_header
    _
  $region3: #{run_chain.23} parent=0 // loop_header
    %s13 = sphi 0, %s17
    %p14 = scmp.ge.s32.totalorder %s13, 4
    %s20 = sphi 0, %s32
    %s21 = sphi 0, %s28
    %s22 = sphi 0, %s20
    %s23 = sphi 0, %s21
    %s24 = sphi 0, %s22
    %s25 = sphi 0, %s23
    %s35 = sphi 0, %s37
    %s38 = sphi 0, %s35
    %s39 = sphi 0, %s38
    %s55 = sphi 0, %s39
    %s59 = sphi 0, %s59
    %s61 = sphi 0, %s59
    %s62 = sphi 0, %s61
    %s76 = sphi 0, %s62
    %s80 = sphi 0, %s80
    %s82 = sphi 0, %s80
    %s83 = sphi 0, %s82
    %s97 = sphi 0, %s83
    %s101 = sphi 0, %s101
    %s103 = sphi 0, %s101
    %s104 = sphi 0, %s103
    %s118 = sphi 0, %s104
    %s124 = sphi 0, %s126
    %s127 = sphi 0, %s124
    %s128 = sphi 0, %s127
    %s144 = sphi 0, %s128
    %s152 = sphi 0, %s154
    %s155 = sphi 0, %s152
    %s156 = sphi 0, %s155
    %s172 = sphi 0, %s156
    %s180 = sphi 0, %s182
    %s183 = sphi 0, %s180
    %s184 = sphi 0, %s183
    %s200 = sphi 0, %s184
  $region4: #{run_chain.23} parent=0 // loop_header_branch
    %16 = sbr.rel (%p14) target = $region8
  $region5: #{run_chain.23} parent=0 // loop_body
    %s18 = ssub.s32 %s13, 1
    %s19 = ssub.s32 %s13, 2
    %s26 = sadd.s32 1, %s21
    %p27 = scmp.ge.s32.totalorder %s26, 1
    %s28 = scalar_select %p27, 0, %s26
    %s29 = sadd.s32 1, %s20
    %s30 = scalar_select %p27, %s29, %s20
    %p31 = scmp.ge.s32.totalorder %s30, 2
    %s32 = scalar_select %p31, 0, %s30
    %s33 = ssub.s32 %s20, %s32
    %p34 = scmp.eq.s32.totalorder %s33, 0
    %s36 = sadd.s32 %s35, 1
    %s37 = scalar_select %p34, %s35, %s36
    %p40 = pneg %p34
    %p41 = scmp.eq.s32.totalorder %s13, 1
    %p42 = por %p40, %p41
    %p43 = scmp.ne.s32.totalorder %s35, %s38
    %p44 = scmp.eq.s32.totalorder %s13, 0
    %p45 = por %p43, %p44
    %p46 = scmp.ne.s32.totalorder %s35, %s38
    %p47 = scmp.eq.s32.totalorder %s18, 1
    %p48 = por %p46, %p47
    %p49 = scmp.ne.s32.totalorder %s38, %s39
    %p50 = scmp.eq.s32.totalorder %s18, 0
    %p51 = por %p49, %p50
    %p52 = scmp.ne.s32.totalorder %s38, %s39
    %p53 = scmp.eq.s32.totalorder %s19, 1
    %p54 = por %p52, %p53
    %p56 = scmp.ne.s32.totalorder %s39, %s55
    %p57 = scmp.eq.s32.totalorder %s19, 0
    %p58 = por %p56, %p57
    %s60 = sadd.s32 %s59, 1
    %p63 = scmp.eq.s32.totalorder %s13, 1
    %p64 = scmp.ne.s32.totalorder %s59, %s61
    %p65 = scmp.eq.s32.totalorder %s13, 0
    %p66 = por %p64, %p65
    %p67 = scmp.ne.s32.totalorder %s59, %s61
    %p68 = scmp.eq.s32.totalorder %s18, 1
    %p69 = por %p67, %p68
    %p70 = scmp.ne.s32.totalorder %s61, %s62
    %p71 = scmp.eq.s32.totalorder %s18, 0
    %p72 = por %p70, %p71
    %p73 = scmp.ne.s32.totalorder %s61, %s62
    %p74 = scmp.eq.s32.totalorder %s19, 1
    %p75 = por %p73, %p74
    %p77 = scmp.ne.s32.totalorder %s62, %s76
    %p78 = scmp.eq.s32.totalorder %s19, 0
    %p79 = por %p77, %p78
    %s81 = sadd.s32 %s80, 1
    %p84 = scmp.eq.s32.totalorder %s13, 1
    %p85 = scmp.ne.s32.totalorder %s80, %s82
    %p86 = scmp.eq.s32.totalorder %s13, 0
    %p87 = por %p85, %p86
    %p88 = scmp.ne.s32.totalorder %s80, %s82
    %p89 = scmp.eq.s32.totalorder %s18, 1
    %p90 = por %p88, %p89
    %p91 = scmp.ne.s32.totalorder %s82, %s83
    %p92 = scmp.eq.s32.totalorder %s18, 0
    %p93 = por %p91, %p92
    %p94 = scmp.ne.s32.totalorder %s82, %s83
    %p95 = scmp.eq.s32.totalorder %s19, 1
    %p96 = por %p94, %p95
    %p98 = scmp.ne.s32.totalorder %s83, %s97
    %p99 = scmp.eq.s32.totalorder %s19, 0
    %p100 = por %p98, %p99
    %s102 = sadd.s32 %s101, 1
    %p105 = scmp.eq.s32.totalorder %s13, 1
    %p106 = scmp.ne.s32.totalorder %s101, %s103
    %p107 = scmp.eq.s32.totalorder %s13, 0
    %p108 = por %p106, %p107
    %p109 = scmp.ne.s32.totalorder %s101, %s103
    %p110 = scmp.eq.s32.totalorder %s18, 1
    %p111 = por %p109, %p110
    %p112 = scmp.ne.s32.totalorder %s103, %s104
    %p113 = scmp.eq.s32.totalorder %s18, 0
    %p114 = por %p112, %p113
    %p115 = scmp.ne.s32.totalorder %s103, %s104
    %p116 = scmp.eq.s32.totalorder %s19, 1
    %p117 = por %p115, %p116
    %p119 = scmp.ne.s32.totalorder %s104, %s118
    %p120 = scmp.eq.s32.totalorder %s19, 0
    %p121 = por %p119, %p120
    %s122 = ssub.s32 %s21, %s28
    %p123 = scmp.eq.s32.totalorder %s122, 0
    %s125 = sadd.s32 %s124, 1
    %s126 = scalar_select %p123, %s124, %s125
    %p129 = pneg %p123
    %p130 = scmp.eq.s32.totalorder %s13, 1
    %p131 = por %p129, %p130
    %p132 = scmp.ne.s32.totalorder %s124, %s127
    %p133 = scmp.eq.s32.totalorder %s13, 0
    %p134 = por %p132, %p133
    %p135 = scmp.ne.s32.totalorder %s124, %s127
    %p136 = scmp.eq.s32.totalorder %s18, 1
    %p137 = por %p135, %p136
    %p138 = scmp.ne.s32.totalorder %s127, %s128
    %p139 = scmp.eq.s32.totalorder %s18, 0
    %p140 = por %p138, %p139
    %p141 = scmp.ne.s32.totalorder %s127, %s128
    %p142 = scmp.eq.s32.totalorder %s19, 1
    %p143 = por %p141, %p142
    %p145 = scmp.ne.s32.totalorder %s128, %s144
    %p146 = scmp.eq.s32.totalorder %s19, 0
    %p147 = por %p145, %p146
    %s148 = ssub.s32 %s20, %s32
    %s149 = ssub.s32 %s21, %s28
    %s150 = sor.u32 %s148, %s149
    %p151 = scmp.eq.s32.totalorder %s150, 0
    %s153 = sadd.s32 %s152, 1
    %s154 = scalar_select %p151, %s152, %s153
    %p157 = pneg %p151
    %p158 = scmp.eq.s32.totalorder %s13, 1
    %p159 = por %p157, %p158
    %p160 = scmp.ne.s32.totalorder %s152, %s155
    %p161 = scmp.eq.s32.totalorder %s13, 0
    %p162 = por %p160, %p161
    %p163 = scmp.ne.s32.totalorder %s152, %s155
    %p164 = scmp.eq.s32.totalorder %s18, 1
    %p165 = por %p163, %p164
    %p166 = scmp.ne.s32.totalorder %s155, %s156
    %p167 = scmp.eq.s32.totalorder %s18, 0
    %p168 = por %p166, %p167
    %p169 = scmp.ne.s32.totalorder %s155, %s156
    %p170 = scmp.eq.s32.totalorder %s19, 1
    %p171 = por %p169, %p170
    %p173 = scmp.ne.s32.totalorder %s156, %s172
    %p174 = scmp.eq.s32.totalorder %s19, 0
    %p175 = por %p173, %p174
    %s176 = ssub.s32 %s20, %s32
    %s177 = ssub.s32 %s21, %s28
    %s178 = sor.u32 %s176, %s177
    %p179 = scmp.eq.s32.totalorder %s178, 0
    %s181 = sadd.s32 %s180, 1
    %s182 = scalar_select %p179, %s180, %s181
    %p185 = pneg %p179
    %p186 = scmp.eq.s32.totalorder %s13, 1
    %p187 = por %p185, %p186
    %p188 = scmp.ne.s32.totalorder %s180, %s183
    %p189 = scmp.eq.s32.totalorder %s13, 0
    %p190 = por %p188, %p189
    %p191 = scmp.ne.s32.totalorder %s180, %s183
    %p192 = scmp.eq.s32.totalorder %s18, 1
    %p193 = por %p191, %p192
    %p194 = scmp.ne.s32.totalorder %s183, %s184
    %p195 = scmp.eq.s32.totalorder %s18, 0
    %p196 = por %p194, %p195
    %p197 = scmp.ne.s32.totalorder %s183, %s184
    %p198 = scmp.eq.s32.totalorder %s19, 1
    %p199 = por %p197, %p198
    %p201 = scmp.ne.s32.totalorder %s184, %s200
    %p202 = scmp.eq.s32.totalorder %s19, 0
    %p203 = por %p201, %p202
    %p204 = scmp.le.s32.totalorder 1, %s13
    %p205 = scmp.lt.s32.totalorder %s13, 3
    %p206 = pnand %p204, %p205
    %p207 = pneg %p206
    // Predicated region
    $region9: #{run_chain.23} parent=5 // pred_check
      _
    $region10: #{run_chain.23} parent=5 // pred_check_branch
      %209 = sbr.rel (%p206) target = $region12
    $region11: #{run_chain.23} parent=5 // pred_region
      %s210 = ssub.s32 %s13, 1
      // Predicated region
      $region13: #{run_chain.23} parent=11 // pred_check
        %p211 = pneg %p72
      $region14: #{run_chain.23} parent=11 // pred_check_branch
        %213 = sbr.rel (%p211) target = $region16
      $region15: #{run_chain.23} parent=11 // pred_region
        _
      $region16: #{run_chain.23} parent=11 // pred_fallthru
        _
      // Predicated region
      $region17: #{run_chain.23} parent=11 // pred_check
        %p214 = pneg %p93
      $region18: #{run_chain.23} parent=11 // pred_check_branch
        %216 = sbr.rel (%p214) target = $region20
      $region19: #{run_chain.23} parent=11 // pred_region
        _
      $region20: #{run_chain.23} parent=11 // pred_fallthru
        _
      // Predicated region
      $region21: #{run_chain.23} parent=11 // pred_check
        %p217 = pneg %p114
      $region22: #{run_chain.23} parent=11 // pred_check_branch
        %219 = sbr.rel (%p217) target = $region24
      $region23: #{run_chain.23} parent=11 // pred_region
        _
      $region24: #{run_chain.23} parent=11 // pred_fallthru
        _
      // Predicated region
      $region25: #{run_chain.23} parent=11 // pred_check
        %p220 = pneg %p140
      $region26: #{run_chain.23} parent=11 // pred_check_branch
        %222 = sbr.rel (%p220) target = $region28
      $region27: #{run_chain.23} parent=11 // pred_region
        %s223 = smul.u32 2, %s23
        %p224 = scmp.lt.s32.totalorder %s223, 1
        %s225 = scalar_select %p224, %s223, 1
        %s226 = smul.addr %s225, 4
        %s227 = scalar_lea.vmem %s4, %s226
        %s228 = smul.u32 2, %s23
      $region28: #{run_chain.23} parent=11 // pred_fallthru
        _
    $region12: #{run_chain.23} parent=5 // pred_fallthru
      _
    %p229 = scmp.lt.s32.totalorder %s13, 2
    // Predicated region
    $region29: #{run_chain.23} parent=5 // pred_check
      %p230 = pneg %p229
    $region30: #{run_chain.23} parent=5 // pred_check_branch
      %232 = sbr.rel (%p230) target = $region32
    $region31: #{run_chain.23} parent=5 // pred_region
      // Predicated region
      $region33: #{run_chain.23} parent=31 // pred_check
        %p233 = pneg %p45
      $region34: #{run_chain.23} parent=31 // pred_check_branch
        %235 = sbr.rel (%p233) target = $region36
      $region35: #{run_chain.23} parent=31 // pred_region
        %p236 = scmp.lt.s32.totalorder %s20, 1
        %s237 = scalar_select %p236, %s20, 1
        %s238 = smul.addr %s237, 8
        %s239 = smul.addr %s238, 4
        %s240 = scalar_lea.vmem %s0, %s239
      $region36: #{run_chain.23} parent=31 // pred_fallthru
        _
    $region32: #{run_chain.23} parent=5 // pred_fallthru
      _
    %p241 = scmp.le.s32.totalorder 1, %s13
    %p242 = scmp.lt.s32.totalorder %s13, 3
    %p243 = pnand %p241, %p242
    %p244 = pneg %p243
    // Predicated region
    $region37: #{run_chain.23} parent=5 // pred_check
      _
    $region38: #{run_chain.23} parent=5 // pred_check_branch
      %246 = sbr.rel (%p243) target = $region40
    $region39: #{run_chain.23} parent=5 // pred_region
      %s247 = ssub.s32 %s13, 1
      %p248 = scmp.lt.s32.totalorder %s22, 1
      %s249 = scalar_select %p248, %s22, 1
      %s250 = smul.addr %s249, 8
      %s251 = smul.addr %s250, 4
      %s252 = scalar_lea.vmem %s0, %s251
      %p253 = pneg %p51
      %p254 = pneg %p48
      %p255 = pneg %p72
      %p256 = pneg %p69
      %p257 = pneg %p93
      %p258 = pneg %p90
      %p259 = pneg %p114
      %p260 = pneg %p111
      %s261 = smul.u32 2, %s23
      %p262 = scmp.lt.s32.totalorder %s261, 1
      %s263 = scalar_select %p262, %s261, 1
      %s264 = smul.addr %s263, 4
      %s265 = scalar_lea.vmem %s4, %s264
      %p266 = pneg %p140
      %p267 = pneg %p137
      %p268 = pneg %p168
      %p269 = pneg %p165
      %s270 = smul.u32 2, %s23
      %p271 = scmp.lt.s32.totalorder %s22, 1
      %s272 = scalar_select %p271, %s22, 1
      %p273 = scmp.lt.s32.totalorder %s270, 1
      %s274 = scalar_select %p273, %s270, 1
      %s275 = smul.addr %s272, 16
      %s276 = sadd.s32 %s274, %s275
      %s277 = smul.addr %s276, 4
      %s278 = scalar_lea.vmem %s5, %s277
      %p279 = pneg %p196
      %p280 = pneg %p193
      %s281 = smul.u32 2, %s23
      %p282 = scmp.lt.s32.totalorder %s22, 1
      %s283 = scalar_select %p282, %s22, 1
      %p284 = scmp.lt.s32.totalorder %s281, 1
      %s285 = scalar_select %p284, %s281, 1
      %s286 = smul.addr %s283, 2
      %s287 = sadd.s32 %s285, %s286
      %s288 = smul.addr %s287, 2
      %s289 = scalar_lea.vmem %s6, %s288
      %p290 = scmp.lt.s32.totalorder %s22, 1
      %s291 = scalar_select %p290, %s22, 1
      %s292 = smul.addr %s291, 8
      %s293 = smul.addr %s292, 4
      %s294 = scalar_lea.vmem %s0, %s293
      %s295 = smul.u32 2, %s23
      %p296 = scmp.lt.s32.totalorder %s295, 1
      %s297 = scalar_select %p296, %s295, 1
      %s298 = smul.addr %s297, 4
      %s299 = scalar_lea.vmem %s4, %s298
      %s300 = smul.u32 2, %s23
      %s301 = smul.u32 2, %s23
      %p302 = scmp.lt.s32.totalorder %s22, 1
      %s303 = scalar_select %p302, %s22, 1
      %p304 = scmp.lt.s32.totalorder %s301, 1
      %s305 = scalar_select %p304, %s301, 1
      %s306 = smul.addr %s303, 16
      %s307 = sadd.s32 %s305, %s306
      %s308 = smul.addr %s307, 4
      %s309 = scalar_lea.vmem %s5, %s308
      %s310 = smul.u32 2, %s23
      %s311 = smul.u32 2, %s23
      %p312 = scmp.lt.s32.totalorder %s22, 1
      %s313 = scalar_select %p312, %s22, 1
      %p314 = scmp.lt.s32.totalorder %s311, 1
      %s315 = scalar_select %p314, %s311, 1
      %s316 = smul.addr %s313, 2
      %s317 = sadd.s32 %s315, %s316
      %s318 = smul.addr %s317, 2
      %s319 = scalar_lea.vmem %s6, %s318
      %s320 = smul.u32 2, %s23
      %v322 = vld [vmem:[%s294] sm:$0xf]
      %v323 = vld [vmem:[%s294 + $0x4] sm:$0xf]
      %v324 = vld [vmem:[%s294 + $0x8] sm:$0xf]
      %v325 = vld [vmem:[%s294 + $0xc] sm:$0xf]
      %v326 = vld [vmem:[%s294 + $0x10] sm:$0xf]
      %v327 = vld [vmem:[%s294 + $0x14] sm:$0xf]
      %v328 = vld [vmem:[%s294 + $0x18] sm:$0xf]
      %v329 = vld [vmem:[%s294 + $0x1c] sm:$0xf]
      %v330 = vunpack.c.l.bf16 %v322
      %v331 = vunpack.c.l.bf16 %v323
      %v332 = vunpack.c.l.bf16 %v324
      %v333 = vunpack.c.l.bf16 %v325
      %v334 = vunpack.c.l.bf16 %v326
      %v335 = vunpack.c.l.bf16 %v327
      %v336 = vunpack.c.l.bf16 %v328
      %v337 = vunpack.c.l.bf16 %v329
      %v338 = vld [vmem:[%s1] sm:$0x1]
      %v340 = vlaneseq
      %v341 = vshrl.u32 %v340, 7
      %v342 = vsub.s32 0, %v341
      %v343 = vrot.slane %v338, %v342
      %v345 = vmul.f32 %v330, %v343
      %v346 = vmul.f32 %v331, %v343
      %v347 = vmul.f32 %v332, %v343
      %v348 = vmul.f32 %v333, %v343
      %v349 = vmul.f32 %v334, %v343
      %v350 = vmul.f32 %v335, %v343
      %v351 = vmul.f32 %v336, %v343
      %v352 = vmul.f32 %v337, %v343
      %v353 = vld [vmem:[%s2] sm:$0x1]
      %v355 = vlaneseq
      %v356 = vshrl.u32 %v355, 7
      %v357 = vsub.s32 0, %v356
      %v358 = vrot.slane %v353, %v357
      %v360 = vadd.f32 %v345, %v358
      %v361 = vadd.f32 %v346, %v358
      %v362 = vadd.f32 %v347, %v358
      %v363 = vadd.f32 %v348, %v358
      %v364 = vadd.f32 %v349, %v358
      %v365 = vadd.f32 %v350, %v358
      %v366 = vadd.f32 %v351, %v358
      %v367 = vadd.f32 %v352, %v358
      %v368 = vmax.f32 %v360, 0.0
      %v369 = vmax.f32 %v361, 0.0
      %v370 = vmax.f32 %v362, 0.0
      %v371 = vmax.f32 %v363, 0.0
      %v372 = vmax.f32 %v364, 0.0
      %v373 = vmax.f32 %v365, 0.0
      %v374 = vmax.f32 %v366, 0.0
      %v375 = vmax.f32 %v367, 0.0
      %376 = vst [vmem:[#allocation2] sm:$0xff] 0.0
      %377 = vst [vmem:[#allocation2 + $0x8] sm:$0xff] 0.0
      %378 = vst [vmem:[#allocation2 + $0x10] sm:$0xff] 0.0
      %s379 = scalar_lea.vmem [#allocation2], 216
      %380 = vst [vmem:[%s379] sm:$0xff] 0.0
      %381 = vst [vmem:[%s379 + $0x8] sm:$0xff] 0.0
      %382 = vst [vmem:[%s379 + $0x10] sm:$0xff] 0.0
      %s383 = scalar_lea.vmem [#allocation2], 24
      %384 = vst [vmem:[%s383] sm:$0xff] 0.0
      %385 = vst [vmem:[%s383 + $0x18] sm:$0xff] 0.0
      %386 = vst [vmem:[%s383 + $0x30] sm:$0xff] 0.0
      %387 = vst [vmem:[%s383 + $0x48] sm:$0xff] 0.0
      %388 = vst [vmem:[%s383 + $0x60] sm:$0xff] 0.0
      %389 = vst [vmem:[%s383 + $0x78] sm:$0xff] 0.0
      %390 = vst [vmem:[%s383 + $0x90] sm:$0xff] 0.0
      %391 = vst [vmem:[%s383 + $0xa8] sm:$0xff] 0.0
      %392 = vst [vmem:[%s383 + $0x10] sm:$0xff] 0.0
      %393 = vst [vmem:[%s383 + $0x28] sm:$0xff] 0.0
      %394 = vst [vmem:[%s383 + $0x40] sm:$0xff] 0.0
      %395 = vst [vmem:[%s383 + $0x58] sm:$0xff] 0.0
      %396 = vst [vmem:[%s383 + $0x70] sm:$0xff] 0.0
      %397 = vst [vmem:[%s383 + $0x88] sm:$0xff] 0.0
      %398 = vst [vmem:[%s383 + $0xa0] sm:$0xff] 0.0
      %399 = vst [vmem:[%s383 + $0xb8] sm:$0xff] 0.0
      %400 = vst [vmem:[%s383 + $0x8] sm:$0xff] %v368
      %401 = vst [vmem:[%s383 + $0x20] sm:$0xff] %v369
      %402 = vst [vmem:[%s383 + $0x38] sm:$0xff] %v370
      %403 = vst [vmem:[%s383 + $0x50] sm:$0xff] %v371
      %404 = vst [vmem:[%s383 + $0x68] sm:$0xff] %v372
      %405 = vst [vmem:[%s383 + $0x80] sm:$0xff] %v373
      %406 = vst [vmem:[%s383 + $0x98] sm:$0xff] %v374
      %407 = vst [vmem:[%s383 + $0xb0] sm:$0xff] %v375
      %v408 = vld [vmem:[#allocation2 + $0x7] sm:$0xff]
      %v409 = vld [vmem:[#allocation2 + $0x1f] sm:$0xff]
      %v410 = vld [vmem:[#allocation2 + $0x37] sm:$0xff]
      %v411 = vld [vmem:[#allocation2 + $0x4f] sm:$0xff]
      %v412 = vld [vmem:[#allocation2 + $0x67] sm:$0xff]
      %v413 = vld [vmem:[#allocation2 + $0x7f] sm:$0xff]
      %v414 = vld [vmem:[#allocation2 + $0x97] sm:$0xff]
      %v415 = vld [vmem:[#allocation2 + $0xaf] sm:$0xff]
      %v416 = vld [vmem:[#allocation2 + $0xc7] sm:$0xff]
      %v417 = vld [vmem:[#allocation2 + $0xdf] sm:$0xff]
      %v418 = vld [vmem:[#allocation2 + $0x8] sm:$0xff]
      %v419 = vld [vmem:[#allocation2 + $0x20] sm:$0xff]
      %v420 = vld [vmem:[#allocation2 + $0x38] sm:$0xff]
      %v421 = vld [vmem:[#allocation2 + $0x50] sm:$0xff]
      %v422 = vld [vmem:[#allocation2 + $0x68] sm:$0xff]
      %v423 = vld [vmem:[#allocation2 + $0x80] sm:$0xff]
      %v424 = vld [vmem:[#allocation2 + $0x98] sm:$0xff]
      %v425 = vld [vmem:[#allocation2 + $0xb0] sm:$0xff]
      %v426 = vld [vmem:[#allocation2 + $0xc8] sm:$0xff]
      %v427 = vld [vmem:[#allocation2 + $0xe0] sm:$0xff]
      %v428 = vld [vmem:[#allocation2 + $0x9] sm:$0xff]
      %v429 = vld [vmem:[#allocation2 + $0x21] sm:$0xff]
      %v430 = vld [vmem:[#allocation2 + $0x39] sm:$0xff]
      %v431 = vld [vmem:[#allocation2 + $0x51] sm:$0xff]
      %v432 = vld [vmem:[#allocation2 + $0x69] sm:$0xff]
      %v433 = vld [vmem:[#allocation2 + $0x81] sm:$0xff]
      %v434 = vld [vmem:[#allocation2 + $0x99] sm:$0xff]
      %v435 = vld [vmem:[#allocation2 + $0xb1] sm:$0xff]
      %v436 = vld [vmem:[#allocation2 + $0xc9] sm:$0xff]
      %v437 = vld [vmem:[#allocation2 + $0xe1] sm:$0xff]
      %v438 = vld [vmem:[%s299] sm:$0xff]
      %v439 = vld [vmem:[%s299 + $0x8] sm:$0xff]
      %v440 = vld [vmem:[%s299 + $0x10] sm:$0xff]
      %v441 = vld [vmem:[%s299 + $0x18] sm:$0xff]
      %v442 = vld [vmem:[%s299 + $0x20] sm:$0xff]
      %v443 = vld [vmem:[%s299 + $0x28] sm:$0xff]
      %v444 = vld [vmem:[%s299 + $0x30] sm:$0xff]
      %v445 = vld [vmem:[%s299 + $0x38] sm:$0xff]
      %v446 = vld [vmem:[%s299 + $0x40] sm:$0xff]
      %v447 = vld [vmem:[%s299 + $0x48] sm:$0xff]
      %v448 = vld [vmem:[%s299 + $0x50] sm:$0xff]
      %v449 = vld [vmem:[%s299 + $0x58] sm:$0xff]
      %v450 = vld [vmem:[%s299 + $0x60] sm:$0xff]
      %v451 = vld [vmem:[%s299 + $0x68] sm:$0xff]
      %v452 = vld [vmem:[%s299 + $0x70] sm:$0xff]
      %v453 = vld [vmem:[%s299 + $0x78] sm:$0xff]
      %v454 = vld [vmem:[%s3] sm:$0x1]
      %v456 = vlaneseq
      %v457 = vshrl.u32 %v456, 7
      %v458 = vsub.s32 0, %v457
      %v459 = vrot.slane %v454, %v458
      %v461 = vmul.f32 %v408, %v459
      %v462 = vmul.f32 %v409, %v459
      %v463 = vmul.f32 %v410, %v459
      %v464 = vmul.f32 %v411, %v459
      %v465 = vmul.f32 %v412, %v459
      %v466 = vmul.f32 %v413, %v459
      %v467 = vmul.f32 %v414, %v459
      %v468 = vmul.f32 %v415, %v459
      %s469 = scalar_lea.vmem %s3, 1
      %v470 = vld [vmem:[%s469] sm:$0x1]
      %v472 = vlaneseq
      %v473 = vshrl.u32 %v472, 7
      %v474 = vsub.s32 0, %v473
      %v475 = vrot.slane %v470, %v474
      %v477 = vmul.f32 %v418, %v475
      %v478 = vmul.f32 %v419, %v475
      %v479 = vmul.f32 %v420, %v475
      %v480 = vmul.f32 %v421, %v475
      %v481 = vmul.f32 %v422, %v475
      %v482 = vmul.f32 %v423, %v475
      %v483 = vmul.f32 %v424, %v475
      %v484 = vmul.f32 %v425, %v475
      %v485 = vadd.f32 %v461, %v477
      %v486 = vadd.f32 %v462, %v478
      %v487 = vadd.f32 %v463, %v479
      %v488 = vadd.f32 %v464, %v480
      %v489 = vadd.f32 %v465, %v481
      %v490 = vadd.f32 %v466, %v482
      %v491 = vadd.f32 %v467, %v483
      %v492 = vadd.f32 %v468, %v484
      %s493 = scalar_lea.vmem %s3, 2
      %v494 = vld [vmem:[%s493] sm:$0x1]
      %v496 = vlaneseq
      %v497 = vshrl.u32 %v496, 7
      %v498 = vsub.s32 0, %v497
      %v499 = vrot.slane %v494, %v498
      %v501 = vmul.f32 %v428, %v499
      %v502 = vmul.f32 %v429, %v499
      %v503 = vmul.f32 %v430, %v499
      %v504 = vmul.f32 %v431, %v499
      %v505 = vmul.f32 %v432, %v499
      %v506 = vmul.f32 %v433, %v499
      %v507 = vmul.f32 %v434, %v499
      %v508 = vmul.f32 %v435, %v499
      %s509 = scalar_lea.vmem %s3, 3
      %v510 = vld [vmem:[%s509] sm:$0x1]
      %v512 = vlaneseq
      %v513 = vshrl.u32 %v512, 7
      %v514 = vsub.s32 0, %v513
      %v515 = vrot.slane %v510, %v514
      %v517 = vmul.f32 %v409, %v515
      %v518 = vmul.f32 %v410, %v515
      %v519 = vmul.f32 %v411, %v515
      %v520 = vmul.f32 %v412, %v515
      %v521 = vmul.f32 %v413, %v515
      %v522 = vmul.f32 %v414, %v515
      %v523 = vmul.f32 %v415, %v515
      %v524 = vmul.f32 %v416, %v515
      %v525 = vadd.f32 %v501, %v517
      %v526 = vadd.f32 %v502, %v518
      %v527 = vadd.f32 %v503, %v519
      %v528 = vadd.f32 %v504, %v520
      %v529 = vadd.f32 %v505, %v521
      %v530 = vadd.f32 %v506, %v522
      %v531 = vadd.f32 %v507, %v523
      %v532 = vadd.f32 %v508, %v524
      %v533 = vadd.f32 %v485, %v525
      %v534 = vadd.f32 %v486, %v526
      %v535 = vadd.f32 %v487, %v527
      %v536 = vadd.f32 %v488, %v528
      %v537 = vadd.f32 %v489, %v529
      %v538 = vadd.f32 %v490, %v530
      %v539 = vadd.f32 %v491, %v531
      %v540 = vadd.f32 %v492, %v532
      %s541 = scalar_lea.vmem %s3, 4
      %v542 = vld [vmem:[%s541] sm:$0x1]
      %v544 = vlaneseq
      %v545 = vshrl.u32 %v544, 7
      %v546 = vsub.s32 0, %v545
      %v547 = vrot.slane %v542, %v546
      %v549 = vmul.f32 %v419, %v547
      %v550 = vmul.f32 %v420, %v547
      %v551 = vmul.f32 %v421, %v547
      %v552 = vmul.f32 %v422, %v547
      %v553 = vmul.f32 %v423, %v547
      %v554 = vmul.f32 %v424, %v547
      %v555 = vmul.f32 %v425, %v547
      %v556 = vmul.f32 %v426, %v547
      %s557 = scalar_lea.vmem %s3, 5
      %v558 = vld [vmem:[%s557] sm:$0x1]
      %v560 = vlaneseq
      %v561 = vshrl.u32 %v560, 7
      %v562 = vsub.s32 0, %v561
      %v563 = vrot.slane %v558, %v562
      %v565 = vmul.f32 %v429, %v563
      %v566 = vmul.f32 %v430, %v563
      %v567 = vmul.f32 %v431, %v563
      %v568 = vmul.f32 %v432, %v563
      %v569 = vmul.f32 %v433, %v563
      %v570 = vmul.f32 %v434, %v563
      %v571 = vmul.f32 %v435, %v563
      %v572 = vmul.f32 %v436, %v563
      %v573 = vadd.f32 %v549, %v565
      %v574 = vadd.f32 %v550, %v566
      %v575 = vadd.f32 %v551, %v567
      %v576 = vadd.f32 %v552, %v568
      %v577 = vadd.f32 %v553, %v569
      %v578 = vadd.f32 %v554, %v570
      %v579 = vadd.f32 %v555, %v571
      %v580 = vadd.f32 %v556, %v572
      %v581 = vadd.f32 %v533, %v573
      %v582 = vadd.f32 %v534, %v574
      %v583 = vadd.f32 %v535, %v575
      %v584 = vadd.f32 %v536, %v576
      %v585 = vadd.f32 %v537, %v577
      %v586 = vadd.f32 %v538, %v578
      %v587 = vadd.f32 %v539, %v579
      %v588 = vadd.f32 %v540, %v580
      %s589 = scalar_lea.vmem %s3, 6
      %v590 = vld [vmem:[%s589] sm:$0x1]
      %v592 = vlaneseq
      %v593 = vshrl.u32 %v592, 7
      %v594 = vsub.s32 0, %v593
      %v595 = vrot.slane %v590, %v594
      %v597 = vmul.f32 %v410, %v595
      %v598 = vmul.f32 %v411, %v595
      %v599 = vmul.f32 %v412, %v595
      %v600 = vmul.f32 %v413, %v595
      %v601 = vmul.f32 %v414, %v595
      %v602 = vmul.f32 %v415, %v595
      %v603 = vmul.f32 %v416, %v595
      %v604 = vmul.f32 %v417, %v595
      %s605 = scalar_lea.vmem %s3, 7
      %v606 = vld [vmem:[%s605] sm:$0x1]
      %v608 = vlaneseq
      %v609 = vshrl.u32 %v608, 7
      %v610 = vsub.s32 0, %v609
      %v611 = vrot.slane %v606, %v610
      %v613 = vmul.f32 %v420, %v611
      %v614 = vmul.f32 %v421, %v611
      %v615 = vmul.f32 %v422, %v611
      %v616 = vmul.f32 %v423, %v611
      %v617 = vmul.f32 %v424, %v611
      %v618 = vmul.f32 %v425, %v611
      %v619 = vmul.f32 %v426, %v611
      %v620 = vmul.f32 %v427, %v611
      %v621 = vadd.f32 %v597, %v613
      %v622 = vadd.f32 %v598, %v614
      %v623 = vadd.f32 %v599, %v615
      %v624 = vadd.f32 %v600, %v616
      %v625 = vadd.f32 %v601, %v617
      %v626 = vadd.f32 %v602, %v618
      %v627 = vadd.f32 %v603, %v619
      %v628 = vadd.f32 %v604, %v620
      %v629 = vadd.f32 %v581, %v621
      %v630 = vadd.f32 %v582, %v622
      %v631 = vadd.f32 %v583, %v623
      %v632 = vadd.f32 %v584, %v624
      %v633 = vadd.f32 %v585, %v625
      %v634 = vadd.f32 %v586, %v626
      %v635 = vadd.f32 %v587, %v627
      %v636 = vadd.f32 %v588, %v628
      %s637 = scalar_lea.vmem %s3, 8
      %v638 = vld [vmem:[%s637] sm:$0x1]
      %v640 = vlaneseq
      %v641 = vshrl.u32 %v640, 7
      %v642 = vsub.s32 0, %v641
      %v643 = vrot.slane %v638, %v642
      %v645 = vmul.f32 %v430, %v643
      %v646 = vmul.f32 %v431, %v643
      %v647 = vmul.f32 %v432, %v643
      %v648 = vmul.f32 %v433, %v643
      %v649 = vmul.f32 %v434, %v643
      %v650 = vmul.f32 %v435, %v643
      %v651 = vmul.f32 %v436, %v643
      %v652 = vmul.f32 %v437, %v643
      %v653 = vadd.f32 %v629, %v645
      %v654 = vadd.f32 %v630, %v646
      %v655 = vadd.f32 %v631, %v647
      %v656 = vadd.f32 %v632, %v648
      %v657 = vadd.f32 %v633, %v649
      %v658 = vadd.f32 %v634, %v650
      %v659 = vadd.f32 %v635, %v651
      %v660 = vadd.f32 %v636, %v652
      %v661 = vpack.c.bf16 %v654, %v653
      %v662 = vpack.c.bf16 %v656, %v655
      %v663 = vpack.c.bf16 %v658, %v657
      %v664 = vpack.c.bf16 %v660, %v659
      %v681 = vunpack.c.l.b16 %v438
      %v682 = vunpack.c.h.b16 %v438
      %v683 = vunpack.c.l.b16 %v439
      %v684 = vunpack.c.h.b16 %v439
      %v685 = vunpack.c.l.b16 %v440
      %v686 = vunpack.c.h.b16 %v440
      %v687 = vunpack.c.l.b16 %v441
      %v688 = vunpack.c.h.b16 %v441
      %v689 = vunpack.c.l.b16 %v442
      %v690 = vunpack.c.h.b16 %v442
      %v691 = vunpack.c.l.b16 %v443
      %v692 = vunpack.c.h.b16 %v443
      %v693 = vunpack.c.l.b16 %v444
      %v694 = vunpack.c.h.b16 %v444
      %v695 = vunpack.c.l.b16 %v445
      %v696 = vunpack.c.h.b16 %v445
      %v697 = vunpack.c.l.b16 %v446
      %v698 = vunpack.c.h.b16 %v446
      %v699 = vunpack.c.l.b16 %v447
      %v700 = vunpack.c.h.b16 %v447
      %v701 = vunpack.c.l.b16 %v448
      %v702 = vunpack.c.h.b16 %v448
      %v703 = vunpack.c.l.b16 %v449
      %v704 = vunpack.c.h.b16 %v449
      %v705 = vunpack.c.l.b16 %v450
      %v706 = vunpack.c.h.b16 %v450
      %v707 = vunpack.c.l.b16 %v451
      %v708 = vunpack.c.h.b16 %v451
      %v709 = vunpack.c.l.b16 %v452
      %v710 = vunpack.c.h.b16 %v452
      %v711 = vunpack.c.l.b16 %v453
      %v712 = vunpack.c.h.b16 %v453
      %v713 = vpack.c.b16 %v683, %v681
      %v714 = vpack.c.b16 %v684, %v682
      %v715 = vpack.c.b16 %v687, %v685
      %v716 = vpack.c.b16 %v688, %v686
      %v717 = vpack.c.b16 %v691, %v689
      %v718 = vpack.c.b16 %v692, %v690
      %v719 = vpack.c.b16 %v695, %v693
      %v720 = vpack.c.b16 %v696, %v694
      %v721 = vpack.c.b16 %v699, %v697
      %v722 = vpack.c.b16 %v700, %v698
      %v723 = vpack.c.b16 %v703, %v701
      %v724 = vpack.c.b16 %v704, %v702
      %v725 = vpack.c.b16 %v707, %v705
      %v726 = vpack.c.b16 %v708, %v706
      %v727 = vpack.c.b16 %v711, %v709
      %v728 = vpack.c.b16 %v712, %v710
      %745 = vmatprep.subr.bf16.mxu0 %v728
      %746 = vmatpush1.bf16.msra.mxu0 %v727
      %747 = vmatprep.subr.bf16.mxu0 %v726
      %748 = vmatpush1.bf16.msra.mxu0 %v725
      %749 = vmatprep.subr.bf16.mxu0 %v724
      %750 = vmatpush1.bf16.msra.mxu0 %v723
      %751 = vmatprep.subr.bf16.mxu0 %v722
      %752 = vmatpush1.bf16.msra.mxu0 %v721
      %753 = vmatprep.subr.bf16.mxu0 %v720
      %754 = vmatpush1.bf16.msra.mxu0 %v719
      %755 = vmatprep.subr.bf16.mxu0 %v718
      %756 = vmatpush1.bf16.msra.mxu0 %v717
      %757 = vmatprep.subr.bf16.mxu0 %v716
      %758 = vmatpush1.bf16.msra.mxu0 %v715
      %759 = vmatprep.subr.bf16.mxu0 %v714
      %760 = vmatpush1.bf16.msra.mxu0 %v713
      %761 = vmatprep.subr.bf16.mxu0 0
      %762 = vmatpush2.bf16.msra.mxu0 0
      %763 = vmatprep.subr.bf16.mxu0 0
      %764 = vmatpush2.bf16.msra.mxu0 0
      %765 = vmatprep.subr.bf16.mxu0 0
      %766 = vmatpush2.bf16.msra.mxu0 0
      %767 = vmatprep.subr.bf16.mxu0 0
      %768 = vmatpush2.bf16.msra.mxu0 0
      %769 = vmatprep.subr.bf16.mxu0 0
      %770 = vmatpush2.bf16.msra.mxu0 0
      %771 = vmatprep.subr.bf16.mxu0 0
      %772 = vmatpush2.bf16.msra.mxu0 0
      %773 = vmatprep.subr.bf16.mxu0 0
      %774 = vmatpush2.bf16.msra.mxu0 0
      %775 = vmatprep.subr.bf16.mxu0 0
      %776 = vmatpush2.bf16.msra.mxu0 0
      %777 = vmatprep.mubr.bf16.mxu0 0
      %778 = vmatmul.mubr.bf16.gmra.mxu0 %v661
      %v779 = vpop.f32.mrf.mxu0
      %v780 = vadd.f32 0.0, %v779
      %v781 = vpop.f32.mrf.mxu0
      %v782 = vadd.f32 0.0, %v781
      %v783 = vpop.f32.mrf.mxu0
      %v784 = vadd.f32 0.0, %v783
      %v785 = vpop.f32.mrf.mxu0
      %v786 = vadd.f32 0.0, %v785
      %787 = vmatprep.mubr.bf16.mxu0 0
      %788 = vmatmul.mubr.bf16.gmra.mxu0 %v662
      %v789 = vpop.f32.mrf.mxu0
      %v790 = vadd.f32 0.0, %v789
      %v791 = vpop.f32.mrf.mxu0
      %v792 = vadd.f32 0.0, %v791
      %v793 = vpop.f32.mrf.mxu0
      %v794 = vadd.f32 0.0, %v793
      %v795 = vpop.f32.mrf.mxu0
      %v796 = vadd.f32 0.0, %v795
      %797 = vmatprep.mubr.bf16.mxu0 0
      %798 = vmatmul.mubr.bf16.gmra.mxu0 %v663
      %v799 = vpop.f32.mrf.mxu0
      %v800 = vadd.f32 0.0, %v799
      %v801 = vpop.f32.mrf.mxu0
      %v802 = vadd.f32 0.0, %v801
      %v803 = vpop.f32.mrf.mxu0
      %v804 = vadd.f32 0.0, %v803
      %v805 = vpop.f32.mrf.mxu0
      %v806 = vadd.f32 0.0, %v805
      %807 = vmatprep.mubr.bf16.mxu0 0
      %808 = vmatmul.mubr.bf16.gmra.mxu0 %v664
      %v809 = vpop.f32.mrf.mxu0
      %v810 = vadd.f32 0.0, %v809
      %v811 = vpop.f32.mrf.mxu0
      %v812 = vadd.f32 0.0, %v811
      %v813 = vpop.f32.mrf.mxu0
      %v814 = vadd.f32 0.0, %v813
      %v815 = vpop.f32.mrf.mxu0
      %v816 = vadd.f32 0.0, %v815
      %817 = vdwg.mxu0
      %v818 = vpack.c.bf16 %v784, %v780
      %v819 = vpack.c.bf16 %v786, %v782
      %v820 = vpack.c.bf16 %v794, %v790
      %v821 = vpack.c.bf16 %v796, %v792
      %v822 = vpack.c.bf16 %v804, %v800
      %v823 = vpack.c.bf16 %v806, %v802
      %v824 = vpack.c.bf16 %v814, %v810
      %v825 = vpack.c.bf16 %v816, %v812
      %v834 = vunpack.c.l.b16 %v818
      %v835 = vunpack.c.l.b16 %v819
      %v836 = vunpack.c.h.b16 %v818
      %v837 = vunpack.c.h.b16 %v819
      %v838 = vunpack.c.l.b16 %v820
      %v839 = vunpack.c.l.b16 %v821
      %v840 = vunpack.c.h.b16 %v820
      %v841 = vunpack.c.h.b16 %v821
      %v842 = vunpack.c.l.b16 %v822
      %v843 = vunpack.c.l.b16 %v823
      %v844 = vunpack.c.h.b16 %v822
      %v845 = vunpack.c.h.b16 %v823
      %v846 = vunpack.c.l.b16 %v824
      %v847 = vunpack.c.l.b16 %v825
      %v848 = vunpack.c.h.b16 %v824
      %v849 = vunpack.c.h.b16 %v825
      %v850 = vpack.c.b16 %v835, %v834
      %v851 = vpack.c.b16 %v837, %v836
      %v852 = vpack.c.b16 %v839, %v838
      %v853 = vpack.c.b16 %v841, %v840
      %v854 = vpack.c.b16 %v843, %v842
      %v855 = vpack.c.b16 %v845, %v844
      %v856 = vpack.c.b16 %v847, %v846
      %v857 = vpack.c.b16 %v849, %v848
      %866 = vst [vmem:[%s309] sm:$0xff] %v850
      %867 = vst [vmem:[%s309 + $0x8] sm:$0xff] %v851
      %868 = vst [vmem:[%s309 + $0x10] sm:$0xff] %v852
      %869 = vst [vmem:[%s309 + $0x18] sm:$0xff] %v853
      %870 = vst [vmem:[%s309 + $0x20] sm:$0xff] %v854
      %871 = vst [vmem:[%s309 + $0x28] sm:$0xff] %v855
      %872 = vst [vmem:[%s309 + $0x30] sm:$0xff] %v856
      %873 = vst [vmem:[%s309 + $0x38] sm:$0xff] %v857
      %v874 = vadd.f32 %v780, %v784
      %v875 = vadd.f32 %v874, %v790
      %v876 = vadd.f32 %v875, %v794
      %v877 = vadd.f32 %v876, %v800
      %v878 = vadd.f32 %v877, %v804
      %v879 = vadd.f32 %v878, %v810
      %v880 = vadd.f32 %v879, %v814
      %v881 = vrot.slane %v880, 4
      %v882 = vadd.f32 %v880, %v881
      %v883 = vrot.slane %v882, 2
      %v884 = vadd.f32 %v882, %v883
      %v885 = vrot.slane %v884, 1
      %v886 = vadd.f32 %v884, %v885
      %v887 = vadd.f32 %v782, %v786
      %v888 = vadd.f32 %v887, %v792
      %v889 = vadd.f32 %v888, %v796
      %v890 = vadd.f32 %v889, %v802
      %v891 = vadd.f32 %v890, %v806
      %v892 = vadd.f32 %v891, %v812
      %v893 = vadd.f32 %v892, %v816
      %v894 = vrot.slane %v893, 4
      %v895 = vadd.f32 %v893, %v894
      %v896 = vrot.slane %v895, 2
      %v897 = vadd.f32 %v895, %v896
      %v898 = vrot.slane %v897, 1
      %v899 = vadd.f32 %v897, %v898
      %v900 = vmul.f32 %v780, %v780
      %v901 = vmul.f32 %v782, %v782
      %v902 = vmul.f32 %v784, %v784
      %v903 = vmul.f32 %v786, %v786
      %v904 = vmul.f32 %v790, %v790
      %v905 = vmul.f32 %v792, %v792
      %v906 = vmul.f32 %v794, %v794
      %v907 = vmul.f32 %v796, %v796
      %v908 = vmul.f32 %v800, %v800
      %v909 = vmul.f32 %v802, %v802
      %v910 = vmul.f32 %v804, %v804
      %v911 = vmul.f32 %v806, %v806
      %v912 = vmul.f32 %v810, %v810
      %v913 = vmul.f32 %v812, %v812
      %v914 = vmul.f32 %v814, %v814
      %v915 = vmul.f32 %v816, %v816
      %v916 = vadd.f32 %v900, %v902
      %v917 = vadd.f32 %v916, %v904
      %v918 = vadd.f32 %v917, %v906
      %v919 = vadd.f32 %v918, %v908
      %v920 = vadd.f32 %v919, %v910
      %v921 = vadd.f32 %v920, %v912
      %v922 = vadd.f32 %v921, %v914
      %v923 = vrot.slane %v922, 4
      %v924 = vadd.f32 %v922, %v923
      %v925 = vrot.slane %v924, 2
      %v926 = vadd.f32 %v924, %v925
      %v927 = vrot.slane %v926, 1
      %v928 = vadd.f32 %v926, %v927
      %v929 = vadd.f32 %v901, %v903
      %v930 = vadd.f32 %v929, %v905
      %v931 = vadd.f32 %v930, %v907
      %v932 = vadd.f32 %v931, %v909
      %v933 = vadd.f32 %v932, %v911
      %v934 = vadd.f32 %v933, %v913
      %v935 = vadd.f32 %v934, %v915
      %v936 = vrot.slane %v935, 4
      %v937 = vadd.f32 %v935, %v936
      %v938 = vrot.slane %v937, 2
      %v939 = vadd.f32 %v937, %v938
      %v940 = vrot.slane %v939, 1
      %v941 = vadd.f32 %v939, %v940
      %v944 = vcombine.low %v886, %v899
      %v946 = vunpack.c.l.s4 1966171168
      %v947 = vunpack.c.0.s8 %v946
      %v948 = vlaneseq
      %v949 = vshrl.u32 %v948, 7
      %v950 = vsub.s32 %v947, %v949
      %v951 = vrot.slane %v944, %v950
      %v953 = vunpack.c.l.s4 1966171168
      %v954 = vunpack.c.0.s8 %v953
      %v955 = vlaneseq
      %v956 = vshrl.u32 %v955, 7
      %v957 = vsub.s32 %v954, %v956
      %v958 = vrot.slane %v951, %v957
      %v960 = vlaneseq
      %vm961 = vcmp.ge.s32.totalorder %v960, 0
      %vm962 = vcmp.lt.s32.totalorder %v960, 256
      %vm963 = vmand %vm961, %vm962
      %964 = vst.msk [vmem:[%s319] ss:$2 sm:$0x3] %vm963, %v958
      %v967 = vcombine.low %v928, %v941
      %v969 = vunpack.c.l.s4 1966171168
      %v970 = vunpack.c.0.s8 %v969
      %v971 = vlaneseq
      %v972 = vshrl.u32 %v971, 7
      %v973 = vsub.s32 %v970, %v972
      %v974 = vrot.slane %v967, %v973
      %v976 = vunpack.c.l.s4 1966171168
      %v977 = vunpack.c.0.s8 %v976
      %v978 = vlaneseq
      %v979 = vshrl.u32 %v978, 7
      %v980 = vsub.s32 %v977, %v979
      %v981 = vrot.slane %v974, %v980
      %s983 = scalar_lea.vmem %s319, 1
      %984 = vst.msk [vmem:[%s983] ss:$2 sm:$0x3] %vm963, %v981
      %s985 = smul.u32 2, %s23
      %p986 = scmp.lt.s32.totalorder %s22, 1
      %s987 = scalar_select %p986, %s22, 1
      %p988 = scmp.lt.s32.totalorder %s985, 1
      %s989 = scalar_select %p988, %s985, 1
      %s990 = smul.addr %s987, 16
      %s991 = sadd.s32 %s989, %s990
      %s992 = smul.addr %s991, 4
      %s993 = scalar_lea.vmem %s5, %s992
      %s994 = smul.u32 2, %s23
      %p995 = scmp.lt.s32.totalorder %s22, 1
      %s996 = scalar_select %p995, %s22, 1
      %p997 = scmp.lt.s32.totalorder %s994, 1
      %s998 = scalar_select %p997, %s994, 1
      %s999 = smul.addr %s996, 2
      %s1000 = sadd.s32 %s998, %s999
      %s1001 = smul.addr %s1000, 2
      %s1002 = scalar_lea.vmem %s6, %s1001
      // Predicated region
      $region41: #{run_chain.23} parent=39 // pred_check
        %p1003 = pneg %p165
      $region42: #{run_chain.23} parent=39 // pred_check_branch
        %1005 = sbr.rel (%p1003) target = $region44
      $region43: #{run_chain.23} parent=39 // pred_region
        %s1006 = smul.u32 2, %s23
      $region44: #{run_chain.23} parent=39 // pred_fallthru
        _
      // Predicated region
      $region45: #{run_chain.23} parent=39 // pred_check
        %p1007 = pneg %p193
      $region46: #{run_chain.23} parent=39 // pred_check_branch
        %1009 = sbr.rel (%p1007) target = $region48
      $region47: #{run_chain.23} parent=39 // pred_region
        %s1010 = smul.u32 2, %s23
      $region48: #{run_chain.23} parent=39 // pred_fallthru
        _
    $region40: #{run_chain.23} parent=5 // pred_fallthru
      _
    %p1011 = scmp.le.s32.totalorder 2, %s13
    // Predicated region
    $region49: #{run_chain.23} parent=5 // pred_check
      %p1012 = pneg %p1011
    $region50: #{run_chain.23} parent=5 // pred_check_branch
      %1014 = sbr.rel (%p1012) target = $region52
    $region51: #{run_chain.23} parent=5 // pred_region
      %s1015 = ssub.s32 %s13, 2
      // Predicated region
      $region53: #{run_chain.23} parent=51 // pred_check
        %p1016 = pneg %p171
      $region54: #{run_chain.23} parent=51 // pred_check_branch
        %1018 = sbr.rel (%p1016) target = $region56
      $region55: #{run_chain.23} parent=51 // pred_region
        %s1019 = smul.u32 2, %s25
        %p1020 = scmp.lt.s32.totalorder %s24, 1
        %s1021 = scalar_select %p1020, %s24, 1
        %p1022 = scmp.lt.s32.totalorder %s1019, 1
        %s1023 = scalar_select %p1022, %s1019, 1
        %s1024 = smul.addr %s1021, 16
        %s1025 = sadd.s32 %s1023, %s1024
        %s1026 = smul.addr %s1025, 4
        %s1027 = scalar_lea.vmem %s5, %s1026
      $region56: #{run_chain.23} parent=51 // pred_fallthru
        _
      // Predicated region
      $region57: #{run_chain.23} parent=51 // pred_check
        %p1028 = pneg %p199
      $region58: #{run_chain.23} parent=51 // pred_check_branch
        %1030 = sbr.rel (%p1028) target = $region60
      $region59: #{run_chain.23} parent=51 // pred_region
        %s1031 = smul.u32 2, %s25
        %p1032 = scmp.lt.s32.totalorder %s24, 1
        %s1033 = scalar_select %p1032, %s24, 1
        %p1034 = scmp.lt.s32.totalorder %s1031, 1
        %s1035 = scalar_select %p1034, %s1031, 1
        %s1036 = smul.addr %s1033, 2
        %s1037 = sadd.s32 %s1035, %s1036
        %s1038 = smul.addr %s1037, 2
        %s1039 = scalar_lea.vmem %s6, %s1038
      $region60: #{run_chain.23} parent=51 // pred_fallthru
        _
    $region52: #{run_chain.23} parent=5 // pred_fallthru
      _
  $region6: #{run_chain.23} parent=0 // loop_footer
    %s17 = sadd.s32 1, %s13
  $region7: #{run_chain.23} parent=0 // loop_footer_branch
    %12 = sbr.rel target = $region3
  $region8: #{run_chain.23} parent=0 // loop_exit
    _

// kernel: run_chain.25
$region0: #{run_chain.25}
  #allocation0 [shape = 'u32[]', space=smem, size = 0x4, offset = 0x4, fixed_abs, tag = 'smem constant byte address 0x4 - core index']
  #allocation1 [shape = 'u32[144,128]{1,0:T(1,128)}', space=vmem, size = 0x12000, scoped, tag = 'internal scratch']
  %s0 = inlined_call_operand.vmem [shape: bf16[128,256], index: 0, kind: input, shape index: {}]
  %s1 = inlined_call_operand.vmem [shape: f32[1,256], index: 1, kind: input, shape index: {}]
  %s2 = inlined_call_operand.vmem [shape: f32[1,256], index: 2, kind: input, shape index: {}]
  %s3 = inlined_call_operand.vmem [shape: bf16[128,256], index: 3, kind: input, shape index: {}]
  %s4 = inlined_call_operand.vmem [shape: f32[1,256], index: 4, kind: input, shape index: {}]
  %s5 = inlined_call_operand.vmem [shape: f32[1,256], index: 5, kind: input, shape index: {}]
  %s6 = inlined_call_operand.vmem [shape: bf16[128,256], index: 6, kind: output, shape index: {}]
  %s7 = sld [smem:[#allocation0]]
  $region34: #{run_chain.25} parent=0
    _
  %s9 = ssub.s32 1, %s7
  %s10 = scalar_select 0, %s9, %s7
  // Predicated region
  $region2: #{run_chain.25} parent=0 // pred_check
    _
  $region3: #{run_chain.25} parent=0 // pred_check_branch
    %12 = sbr.rel (0) target = $region5
  $region4: #{run_chain.25} parent=0 // pred_region
    _
  $region5: #{run_chain.25} parent=0 // pred_fallthru
    _
  // Predicated region
  $region6: #{run_chain.25} parent=0 // pred_check
    _
  $region7: #{run_chain.25} parent=0 // pred_check_branch
    %14 = sbr.rel (0) target = $region9
  $region8: #{run_chain.25} parent=0 // pred_region
    _
  $region9: #{run_chain.25} parent=0 // pred_fallthru
    _
  // Predicated region
  $region10: #{run_chain.25} parent=0 // pred_check
    _
  $region11: #{run_chain.25} parent=0 // pred_check_branch
    %16 = sbr.rel (0) target = $region13
  $region12: #{run_chain.25} parent=0 // pred_region
    _
  $region13: #{run_chain.25} parent=0 // pred_fallthru
    _
  // Predicated region
  $region14: #{run_chain.25} parent=0 // pred_check
    _
  $region15: #{run_chain.25} parent=0 // pred_check_branch
    %18 = sbr.rel (0) target = $region17
  $region16: #{run_chain.25} parent=0 // pred_region
    _
  $region17: #{run_chain.25} parent=0 // pred_fallthru
    _
  // Predicated region
  $region18: #{run_chain.25} parent=0 // pred_check
    _
  $region19: #{run_chain.25} parent=0 // pred_check_branch
    %20 = sbr.rel (0) target = $region21
  $region20: #{run_chain.25} parent=0 // pred_region
    _
  $region21: #{run_chain.25} parent=0 // pred_fallthru
    _
  // Predicated region
  $region22: #{run_chain.25} parent=0 // pred_check
    _
  $region23: #{run_chain.25} parent=0 // pred_check_branch
    %22 = sbr.rel (0) target = $region25
  $region24: #{run_chain.25} parent=0 // pred_region
    _
  $region25: #{run_chain.25} parent=0 // pred_fallthru
    _
  %v23 = vld [vmem:[%s0] sm:$0xff]
  %v24 = vld [vmem:[%s0 + $0x8] sm:$0xff]
  %v25 = vld [vmem:[%s0 + $0x10] sm:$0xff]
  %v26 = vld [vmem:[%s0 + $0x18] sm:$0xff]
  %v27 = vld [vmem:[%s0 + $0x20] sm:$0xff]
  %v28 = vld [vmem:[%s0 + $0x28] sm:$0xff]
  %v29 = vld [vmem:[%s0 + $0x30] sm:$0xff]
  %v30 = vld [vmem:[%s0 + $0x38] sm:$0xff]
  %v31 = vld [vmem:[%s0 + $0x40] sm:$0xff]
  %v32 = vld [vmem:[%s0 + $0x48] sm:$0xff]
  %v33 = vld [vmem:[%s0 + $0x50] sm:$0xff]
  %v34 = vld [vmem:[%s0 + $0x58] sm:$0xff]
  %v35 = vld [vmem:[%s0 + $0x60] sm:$0xff]
  %v36 = vld [vmem:[%s0 + $0x68] sm:$0xff]
  %v37 = vld [vmem:[%s0 + $0x70] sm:$0xff]
  %v38 = vld [vmem:[%s0 + $0x78] sm:$0xff]
  %v39 = vunpack.c.l.bf16 %v23
  %v40 = vunpack.c.h.bf16 %v23
  %v41 = vunpack.c.l.bf16 %v24
  %v42 = vunpack.c.h.bf16 %v24
  %v43 = vunpack.c.l.bf16 %v25
  %v44 = vunpack.c.h.bf16 %v25
  %v45 = vunpack.c.l.bf16 %v26
  %v46 = vunpack.c.h.bf16 %v26
  %v47 = vunpack.c.l.bf16 %v27
  %v48 = vunpack.c.h.bf16 %v27
  %v49 = vunpack.c.l.bf16 %v28
  %v50 = vunpack.c.h.bf16 %v28
  %v51 = vunpack.c.l.bf16 %v29
  %v52 = vunpack.c.h.bf16 %v29
  %v53 = vunpack.c.l.bf16 %v30
  %v54 = vunpack.c.h.bf16 %v30
  %v55 = vunpack.c.l.bf16 %v31
  %v56 = vunpack.c.h.bf16 %v31
  %v57 = vunpack.c.l.bf16 %v32
  %v58 = vunpack.c.h.bf16 %v32
  %v59 = vunpack.c.l.bf16 %v33
  %v60 = vunpack.c.h.bf16 %v33
  %v61 = vunpack.c.l.bf16 %v34
  %v62 = vunpack.c.h.bf16 %v34
  %v63 = vunpack.c.l.bf16 %v35
  %v64 = vunpack.c.h.bf16 %v35
  %v65 = vunpack.c.l.bf16 %v36
  %v66 = vunpack.c.h.bf16 %v36
  %v67 = vunpack.c.l.bf16 %v37
  %v68 = vunpack.c.h.bf16 %v37
  %v69 = vunpack.c.l.bf16 %v38
  %v70 = vunpack.c.h.bf16 %v38
  %v71 = vld [vmem:[%s1] sm:$0x3]
  %v73 = vlaneseq
  %v74 = vshrl.u32 %v73, 7
  %v75 = vsub.s32 0, %v74
  %v76 = vrot.slane %v71, %v75
  %v77 = vlaneseq
  %v78 = vshrl.u32 %v77, 7
  %v79 = vsub.s32 1, %v78
  %v80 = vrot.slane %v71, %v79
  %v83 = vmul.f32 %v39, %v76
  %v84 = vmul.f32 %v40, %v80
  %v85 = vmul.f32 %v41, %v76
  %v86 = vmul.f32 %v42, %v80
  %v87 = vmul.f32 %v43, %v76
  %v88 = vmul.f32 %v44, %v80
  %v89 = vmul.f32 %v45, %v76
  %v90 = vmul.f32 %v46, %v80
  %v91 = vmul.f32 %v47, %v76
  %v92 = vmul.f32 %v48, %v80
  %v93 = vmul.f32 %v49, %v76
  %v94 = vmul.f32 %v50, %v80
  %v95 = vmul.f32 %v51, %v76
  %v96 = vmul.f32 %v52, %v80
  %v97 = vmul.f32 %v53, %v76
  %v98 = vmul.f32 %v54, %v80
  %v99 = vmul.f32 %v55, %v76
  %v100 = vmul.f32 %v56, %v80
  %v101 = vmul.f32 %v57, %v76
  %v102 = vmul.f32 %v58, %v80
  %v103 = vmul.f32 %v59, %v76
  %v104 = vmul.f32 %v60, %v80
  %v105 = vmul.f32 %v61, %v76
  %v106 = vmul.f32 %v62, %v80
  %v107 = vmul.f32 %v63, %v76
  %v108 = vmul.f32 %v64, %v80
  %v109 = vmul.f32 %v65, %v76
  %v110 = vmul.f32 %v66, %v80
  %v111 = vmul.f32 %v67, %v76
  %v112 = vmul.f32 %v68, %v80
  %v113 = vmul.f32 %v69, %v76
  %v114 = vmul.f32 %v70, %v80
  %v115 = vld [vmem:[%s2] sm:$0x3]
  %v117 = vlaneseq
  %v118 = vshrl.u32 %v117, 7
  %v119 = vsub.s32 0, %v118
  %v120 = vrot.slane %v115, %v119
  %v121 = vlaneseq
  %v122 = vshrl.u32 %v121, 7
  %v123 = vsub.s32 1, %v122
  %v124 = vrot.slane %v115, %v123
  %v127 = vadd.f32 %v83, %v120
  %v128 = vadd.f32 %v84, %v124
  %v129 = vadd.f32 %v85, %v120
  %v130 = vadd.f32 %v86, %v124
  %v131 = vadd.f32 %v87, %v120
  %v132 = vadd.f32 %v88, %v124
  %v133 = vadd.f32 %v89, %v120
  %v134 = vadd.f32 %v90, %v124
  %v135 = vadd.f32 %v91, %v120
  %v136 = vadd.f32 %v92, %v124
  %v137 = vadd.f32 %v93, %v120
  %v138 = vadd.f32 %v94, %v124
  %v139 = vadd.f32 %v95, %v120
  %v140 = vadd.f32 %v96, %v124
  %v141 = vadd.f32 %v97, %v120
  %v142 = vadd.f32 %v98, %v124
  %v143 = vadd.f32 %v99, %v120
  %v144 = vadd.f32 %v100, %v124
  %v145 = vadd.f32 %v101, %v120
  %v146 = vadd.f32 %v102, %v124
  %v147 = vadd.f32 %v103, %v120
  %v148 = vadd.f32 %v104, %v124
  %v149 = vadd.f32 %v105, %v120
  %v150 = vadd.f32 %v106, %v124
  %v151 = vadd.f32 %v107, %v120
  %v152 = vadd.f32 %v108, %v124
  %v153 = vadd.f32 %v109, %v120
  %v154 = vadd.f32 %v110, %v124
  %v155 = vadd.f32 %v111, %v120
  %v156 = vadd.f32 %v112, %v124
  %v157 = vadd.f32 %v113, %v120
  %v158 = vadd.f32 %v114, %v124
  %v159 = vld [vmem:[%s3] sm:$0xff]
  %v160 = vld [vmem:[%s3 + $0x8] sm:$0xff]
  %v161 = vld [vmem:[%s3 + $0x10] sm:$0xff]
  %v162 = vld [vmem:[%s3 + $0x18] sm:$0xff]
  %v163 = vld [vmem:[%s3 + $0x20] sm:$0xff]
  %v164 = vld [vmem:[%s3 + $0x28] sm:$0xff]
  %v165 = vld [vmem:[%s3 + $0x30] sm:$0xff]
  %v166 = vld [vmem:[%s3 + $0x38] sm:$0xff]
  %v167 = vld [vmem:[%s3 + $0x40] sm:$0xff]
  %v168 = vld [vmem:[%s3 + $0x48] sm:$0xff]
  %v169 = vld [vmem:[%s3 + $0x50] sm:$0xff]
  %v170 = vld [vmem:[%s3 + $0x58] sm:$0xff]
  %v171 = vld [vmem:[%s3 + $0x60] sm:$0xff]
  %v172 = vld [vmem:[%s3 + $0x68] sm:$0xff]
  %v173 = vld [vmem:[%s3 + $0x70] sm:$0xff]
  %v174 = vld [vmem:[%s3 + $0x78] sm:$0xff]
  %v175 = vunpack.c.l.bf16 %v159
  %v176 = vunpack.c.h.bf16 %v159
  %v177 = vunpack.c.l.bf16 %v160
  %v178 = vunpack.c.h.bf16 %v160
  %v179 = vunpack.c.l.bf16 %v161
  %v180 = vunpack.c.h.bf16 %v161
  %v181 = vunpack.c.l.bf16 %v162
  %v182 = vunpack.c.h.bf16 %v162
  %v183 = vunpack.c.l.bf16 %v163
  %v184 = vunpack.c.h.bf16 %v163
  %v185 = vunpack.c.l.bf16 %v164
  %v186 = vunpack.c.h.bf16 %v164
  %v187 = vunpack.c.l.bf16 %v165
  %v188 = vunpack.c.h.bf16 %v165
  %v189 = vunpack.c.l.bf16 %v166
  %v190 = vunpack.c.h.bf16 %v166
  %v191 = vunpack.c.l.bf16 %v167
  %v192 = vunpack.c.h.bf16 %v167
  %v193 = vunpack.c.l.bf16 %v168
  %v194 = vunpack.c.h.bf16 %v168
  %v195 = vunpack.c.l.bf16 %v169
  %v196 = vunpack.c.h.bf16 %v169
  %v197 = vunpack.c.l.bf16 %v170
  %v198 = vunpack.c.h.bf16 %v170
  %v199 = vunpack.c.l.bf16 %v171
  %v200 = vunpack.c.h.bf16 %v171
  %v201 = vunpack.c.l.bf16 %v172
  %v202 = vunpack.c.h.bf16 %v172
  %v203 = vunpack.c.l.bf16 %v173
  %v204 = vunpack.c.h.bf16 %v173
  %v205 = vunpack.c.l.bf16 %v174
  %v206 = vunpack.c.h.bf16 %v174
  %v207 = vld [vmem:[%s4] sm:$0x3]
  %v209 = vlaneseq
  %v210 = vshrl.u32 %v209, 7
  %v211 = vsub.s32 0, %v210
  %v212 = vrot.slane %v207, %v211
  %v213 = vlaneseq
  %v214 = vshrl.u32 %v213, 7
  %v215 = vsub.s32 1, %v214
  %v216 = vrot.slane %v207, %v215
  %v219 = vmul.f32 %v175, %v212
  %v220 = vmul.f32 %v176, %v216
  %v221 = vmul.f32 %v177, %v212
  %v222 = vmul.f32 %v178, %v216
  %v223 = vmul.f32 %v179, %v212
  %v224 = vmul.f32 %v180, %v216
  %v225 = vmul.f32 %v181, %v212
  %v226 = vmul.f32 %v182, %v216
  %v227 = vmul.f32 %v183, %v212
  %v228 = vmul.f32 %v184, %v216
  %v229 = vmul.f32 %v185, %v212
  %v230 = vmul.f32 %v186, %v216
  %v231 = vmul.f32 %v187, %v212
  %v232 = vmul.f32 %v188, %v216
  %v233 = vmul.f32 %v189, %v212
  %v234 = vmul.f32 %v190, %v216
  %v235 = vmul.f32 %v191, %v212
  %v236 = vmul.f32 %v192, %v216
  %v237 = vmul.f32 %v193, %v212
  %v238 = vmul.f32 %v194, %v216
  %v239 = vmul.f32 %v195, %v212
  %v240 = vmul.f32 %v196, %v216
  %v241 = vmul.f32 %v197, %v212
  %v242 = vmul.f32 %v198, %v216
  %v243 = vmul.f32 %v199, %v212
  %v244 = vmul.f32 %v200, %v216
  %v245 = vmul.f32 %v201, %v212
  %v246 = vmul.f32 %v202, %v216
  %v247 = vmul.f32 %v203, %v212
  %v248 = vmul.f32 %v204, %v216
  %v249 = vmul.f32 %v205, %v212
  %v250 = vmul.f32 %v206, %v216
  %v251 = vld [vmem:[%s5] sm:$0x3]
  %v253 = vlaneseq
  %v254 = vshrl.u32 %v253, 7
  %v255 = vsub.s32 0, %v254
  %v256 = vrot.slane %v251, %v255
  %v257 = vlaneseq
  %v258 = vshrl.u32 %v257, 7
  %v259 = vsub.s32 1, %v258
  %v260 = vrot.slane %v251, %v259
  %v263 = vadd.f32 %v219, %v256
  %v264 = vadd.f32 %v220, %v260
  %v265 = vadd.f32 %v221, %v256
  %v266 = vadd.f32 %v222, %v260
  %v267 = vadd.f32 %v223, %v256
  %v268 = vadd.f32 %v224, %v260
  %v269 = vadd.f32 %v225, %v256
  %v270 = vadd.f32 %v226, %v260
  %v271 = vadd.f32 %v227, %v256
  %v272 = vadd.f32 %v228, %v260
  %v273 = vadd.f32 %v229, %v256
  %v274 = vadd.f32 %v230, %v260
  %v275 = vadd.f32 %v231, %v256
  %v276 = vadd.f32 %v232, %v260
  %v277 = vadd.f32 %v233, %v256
  %v278 = vadd.f32 %v234, %v260
  %v279 = vadd.f32 %v235, %v256
  %v280 = vadd.f32 %v236, %v260
  %v281 = vadd.f32 %v237, %v256
  %v282 = vadd.f32 %v238, %v260
  %v283 = vadd.f32 %v239, %v256
  %v284 = vadd.f32 %v240, %v260
  %v285 = vadd.f32 %v241, %v256
  %v286 = vadd.f32 %v242, %v260
  %v287 = vadd.f32 %v243, %v256
  %v288 = vadd.f32 %v244, %v260
  %v289 = vadd.f32 %v245, %v256
  %v290 = vadd.f32 %v246, %v260
  %v291 = vadd.f32 %v247, %v256
  %v292 = vadd.f32 %v248, %v260
  %v293 = vadd.f32 %v249, %v256
  %v294 = vadd.f32 %v250, %v260
  %v295 = vadd.f32 %v127, %v263
  %v296 = vadd.f32 %v128, %v264
  %v297 = vadd.f32 %v129, %v265
  %v298 = vadd.f32 %v130, %v266
  %v299 = vadd.f32 %v131, %v267
  %v300 = vadd.f32 %v132, %v268
  %v301 = vadd.f32 %v133, %v269
  %v302 = vadd.f32 %v134, %v270
  %v303 = vadd.f32 %v135, %v271
  %v304 = vadd.f32 %v136, %v272
  %v305 = vadd.f32 %v137, %v273
  %v306 = vadd.f32 %v138, %v274
  %v307 = vadd.f32 %v139, %v275
  %v308 = vadd.f32 %v140, %v276
  %v309 = vadd.f32 %v141, %v277
  %v310 = vadd.f32 %v142, %v278
  %v311 = vadd.f32 %v143, %v279
  %v312 = vadd.f32 %v144, %v280
  %v313 = vadd.f32 %v145, %v281
  %v314 = vadd.f32 %v146, %v282
  %v315 = vadd.f32 %v147, %v283
  %v316 = vadd.f32 %v148, %v284
  %v317 = vadd.f32 %v149, %v285
  %v318 = vadd.f32 %v150, %v286
  %v319 = vadd.f32 %v151, %v287
  %v320 = vadd.f32 %v152, %v288
  %v321 = vadd.f32 %v153, %v289
  %v322 = vadd.f32 %v154, %v290
  %v323 = vadd.f32 %v155, %v291
  %v324 = vadd.f32 %v156, %v292
  %v325 = vadd.f32 %v157, %v293
  %v326 = vadd.f32 %v158, %v294
  %v327 = vpack.c.bf16 %v297, %v295
  %v328 = vpack.c.bf16 %v298, %v296
  %v329 = vpack.c.bf16 %v301, %v299
  %v330 = vpack.c.bf16 %v302, %v300
  %v331 = vpack.c.bf16 %v305, %v303
  %v332 = vpack.c.bf16 %v306, %v304
  %v333 = vpack.c.bf16 %v309, %v307
  %v334 = vpack.c.bf16 %v310, %v308
  %v335 = vpack.c.bf16 %v313, %v311
  %v336 = vpack.c.bf16 %v314, %v312
  %v337 = vpack.c.bf16 %v317, %v315
  %v338 = vpack.c.bf16 %v318, %v316
  %v339 = vpack.c.bf16 %v321, %v319
  %v340 = vpack.c.bf16 %v322, %v320
  %v341 = vpack.c.bf16 %v325, %v323
  %v342 = vpack.c.bf16 %v326, %v324
  %v359 = vunpack.c.l.b16 %v327
  %v360 = vunpack.c.l.b16 %v328
  %v361 = vunpack.c.h.b16 %v327
  %v362 = vunpack.c.h.b16 %v328
  %v363 = vunpack.c.l.b16 %v329
  %v364 = vunpack.c.l.b16 %v330
  %v365 = vunpack.c.h.b16 %v329
  %v366 = vunpack.c.h.b16 %v330
  %v367 = vunpack.c.l.b16 %v331
  %v368 = vunpack.c.l.b16 %v332
  %v369 = vunpack.c.h.b16 %v331
  %v370 = vunpack.c.h.b16 %v332
  %v371 = vunpack.c.l.b16 %v333
  %v372 = vunpack.c.l.b16 %v334
  %v373 = vunpack.c.h.b16 %v333
  %v374 = vunpack.c.h.b16 %v334
  %v375 = vunpack.c.l.b16 %v335
  %v376 = vunpack.c.l.b16 %v336
  %v377 = vunpack.c.h.b16 %v335
  %v378 = vunpack.c.h.b16 %v336
  %v379 = vunpack.c.l.b16 %v337
  %v380 = vunpack.c.l.b16 %v338
  %v381 = vunpack.c.h.b16 %v337
  %v382 = vunpack.c.h.b16 %v338
  %v383 = vunpack.c.l.b16 %v339
  %v384 = vunpack.c.l.b16 %v340
  %v385 = vunpack.c.h.b16 %v339
  %v386 = vunpack.c.h.b16 %v340
  %v387 = vunpack.c.l.b16 %v341
  %v388 = vunpack.c.l.b16 %v342
  %v389 = vunpack.c.h.b16 %v341
  %v390 = vunpack.c.h.b16 %v342
  %v391 = vpack.c.b16 %v360, %v359
  %v392 = vpack.c.b16 %v362, %v361
  %v393 = vpack.c.b16 %v364, %v363
  %v394 = vpack.c.b16 %v366, %v365
  %v395 = vpack.c.b16 %v368, %v367
  %v396 = vpack.c.b16 %v370, %v369
  %v397 = vpack.c.b16 %v372, %v371
  %v398 = vpack.c.b16 %v374, %v373
  %v399 = vpack.c.b16 %v376, %v375
  %v400 = vpack.c.b16 %v378, %v377
  %v401 = vpack.c.b16 %v380, %v379
  %v402 = vpack.c.b16 %v382, %v381
  %v403 = vpack.c.b16 %v384, %v383
  %v404 = vpack.c.b16 %v386, %v385
  %v405 = vpack.c.b16 %v388, %v387
  %v406 = vpack.c.b16 %v390, %v389
  %423 = vst [vmem:[%s6] sm:$0xff] %v391
  %424 = vst [vmem:[%s6 + $0x8] sm:$0xff] %v392
  %425 = vst [vmem:[%s6 + $0x10] sm:$0xff] %v393
  %426 = vst [vmem:[%s6 + $0x18] sm:$0xff] %v394
  %427 = vst [vmem:[%s6 + $0x20] sm:$0xff] %v395
  %428 = vst [vmem:[%s6 + $0x28] sm:$0xff] %v396
  %429 = vst [vmem:[%s6 + $0x30] sm:$0xff] %v397
  %430 = vst [vmem:[%s6 + $0x38] sm:$0xff] %v398
  %431 = vst [vmem:[%s6 + $0x40] sm:$0xff] %v399
  %432 = vst [vmem:[%s6 + $0x48] sm:$0xff] %v400
  %433 = vst [vmem:[%s6 + $0x50] sm:$0xff] %v401
  %434 = vst [vmem:[%s6 + $0x58] sm:$0xff] %v402
  %435 = vst [vmem:[%s6 + $0x60] sm:$0xff] %v403
  %436 = vst [vmem:[%s6 + $0x68] sm:$0xff] %v404
  %437 = vst [vmem:[%s6 + $0x70] sm:$0xff] %v405
  %438 = vst [vmem:[%s6 + $0x78] sm:$0xff] %v406
  // Predicated region
  $region26: #{run_chain.25} parent=0 // pred_check
    _
  $region27: #{run_chain.25} parent=0 // pred_check_branch
    %440 = sbr.rel (0) target = $region29
  $region28: #{run_chain.25} parent=0 // pred_region
    _
  $region29: #{run_chain.25} parent=0 // pred_fallthru
    _
  // Predicated region
  $region30: #{run_chain.25} parent=0 // pred_check
    _
  $region31: #{run_chain.25} parent=0 // pred_check_branch
    %442 = sbr.rel (0) target = $region33
  $region32: #{run_chain.25} parent=0 // pred_region
    _
  $region33: #{run_chain.25} parent=0 // pred_fallthru
    _

// kernel: run_chain.24
$region0: #{run_chain.24}
  #allocation0 [shape = 'u32[]', space=smem, size = 0x4, offset = 0x4, fixed_abs, tag = 'smem constant byte address 0x4 - core index']
  #allocation1 [shape = 'u32[144,128]{1,0:T(1,128)}', space=vmem, size = 0x12000, scoped, tag = 'internal scratch']
  #allocation2 [shape = 'f32[128,256]{1,0:T(8,128)}', space=vmem, size = 0x20000, scoped, tag = 'scratch operand']
  %s0 = inlined_call_operand.vmem [shape: bf16[128,128], index: 0, kind: input, shape index: {}]
  %s1 = inlined_call_operand.vmem [shape: bf16[128,256], index: 1, kind: input, shape index: {}]
  %s2 = inlined_call_operand.vmem [shape: bf16[128,256], index: 2, kind: output, shape index: {0}]
  %s3 = inlined_call_operand.vmem [shape: f32[1,2,256], index: 3, kind: output, shape index: {1}]
  %4 = xla_tuple %s2, %s3
  %s5 = sld [smem:[#allocation0]]
  $region34: #{run_chain.24} parent=0
    _
  %s7 = ssub.s32 1, %s5
  %s8 = scalar_select 0, %s7, %s5
  // Predicated region
  $region2: #{run_chain.24} parent=0 // pred_check
    _
  $region3: #{run_chain.24} parent=0 // pred_check_branch
    %10 = sbr.rel (0) target = $region5
  $region4: #{run_chain.24} parent=0 // pred_region
    _
  $region5: #{run_chain.24} parent=0 // pred_fallthru
    _
  // Predicated region
  $region6: #{run_chain.24} parent=0 // pred_check
    _
  $region7: #{run_chain.24} parent=0 // pred_check_branch
    %12 = sbr.rel (0) target = $region9
  $region8: #{run_chain.24} parent=0 // pred_region
    _
  $region9: #{run_chain.24} parent=0 // pred_fallthru
    _
  %p14 = scmp.eq.s32.totalorder 0, 0
  // Predicated region
  $region10: #{run_chain.24} parent=0 // pred_check
    %p15 = pneg %p14
  $region11: #{run_chain.24} parent=0 // pred_check_branch
    %17 = sbr.rel (%p15) target = $region13
  $region12: #{run_chain.24} parent=0 // pred_region
    %18 = vst [vmem:[#allocation2] sm:$0xff] 0.0
    %19 = vst [vmem:[#allocation2 + $0x8] sm:$0xff] 0.0
    %20 = vst [vmem:[#allocation2 + $0x10] sm:$0xff] 0.0
    %21 = vst [vmem:[#allocation2 + $0x18] sm:$0xff] 0.0
    %22 = vst [vmem:[#allocation2 + $0x20] sm:$0xff] 0.0
    %23 = vst [vmem:[#allocation2 + $0x28] sm:$0xff] 0.0
    %24 = vst [vmem:[#allocation2 + $0x30] sm:$0xff] 0.0
    %25 = vst [vmem:[#allocation2 + $0x38] sm:$0xff] 0.0
    %26 = vst [vmem:[#allocation2 + $0x40] sm:$0xff] 0.0
    %27 = vst [vmem:[#allocation2 + $0x48] sm:$0xff] 0.0
    %28 = vst [vmem:[#allocation2 + $0x50] sm:$0xff] 0.0
    %29 = vst [vmem:[#allocation2 + $0x58] sm:$0xff] 0.0
    %30 = vst [vmem:[#allocation2 + $0x60] sm:$0xff] 0.0
    %31 = vst [vmem:[#allocation2 + $0x68] sm:$0xff] 0.0
    %32 = vst [vmem:[#allocation2 + $0x70] sm:$0xff] 0.0
    %33 = vst [vmem:[#allocation2 + $0x78] sm:$0xff] 0.0
    %34 = vst [vmem:[#allocation2 + $0x80] sm:$0xff] 0.0
    %35 = vst [vmem:[#allocation2 + $0x88] sm:$0xff] 0.0
    %36 = vst [vmem:[#allocation2 + $0x90] sm:$0xff] 0.0
    %37 = vst [vmem:[#allocation2 + $0x98] sm:$0xff] 0.0
    %38 = vst [vmem:[#allocation2 + $0xa0] sm:$0xff] 0.0
    %39 = vst [vmem:[#allocation2 + $0xa8] sm:$0xff] 0.0
    %40 = vst [vmem:[#allocation2 + $0xb0] sm:$0xff] 0.0
    %41 = vst [vmem:[#allocation2 + $0xb8] sm:$0xff] 0.0
    %42 = vst [vmem:[#allocation2 + $0xc0] sm:$0xff] 0.0
    %43 = vst [vmem:[#allocation2 + $0xc8] sm:$0xff] 0.0
    %44 = vst [vmem:[#allocation2 + $0xd0] sm:$0xff] 0.0
    %45 = vst [vmem:[#allocation2 + $0xd8] sm:$0xff] 0.0
    %46 = vst [vmem:[#allocation2 + $0xe0] sm:$0xff] 0.0
    %47 = vst [vmem:[#allocation2 + $0xe8] sm:$0xff] 0.0
    %48 = vst [vmem:[#allocation2 + $0xf0] sm:$0xff] 0.0
    %49 = vst [vmem:[#allocation2 + $0xf8] sm:$0xff] 0.0
  $region13: #{run_chain.24} parent=0 // pred_fallthru
    _
  %v50 = vld [vmem:[#allocation2] sm:$0xff]
  %v51 = vld [vmem:[#allocation2 + $0x8] sm:$0xff]
  %v52 = vld [vmem:[#allocation2 + $0x10] sm:$0xff]
  %v53 = vld [vmem:[#allocation2 + $0x18] sm:$0xff]
  %v54 = vld [vmem:[#allocation2 + $0x20] sm:$0xff]
  %v55 = vld [vmem:[#allocation2 + $0x28] sm:$0xff]
  %v56 = vld [vmem:[#allocation2 + $0x30] sm:$0xff]
  %v57 = vld [vmem:[#allocation2 + $0x38] sm:$0xff]
  %v58 = vld [vmem:[#allocation2 + $0x40] sm:$0xff]
  %v59 = vld [vmem:[#allocation2 + $0x48] sm:$0xff]
  %v60 = vld [vmem:[#allocation2 + $0x50] sm:$0xff]
  %v61 = vld [vmem:[#allocation2 + $0x58] sm:$0xff]
  %v62 = vld [vmem:[#allocation2 + $0x60] sm:$0xff]
  %v63 = vld [vmem:[#allocation2 + $0x68] sm:$0xff]
  %v64 = vld [vmem:[#allocation2 + $0x70] sm:$0xff]
  %v65 = vld [vmem:[#allocation2 + $0x78] sm:$0xff]
  %v66 = vld [vmem:[#allocation2 + $0x80] sm:$0xff]
  %v67 = vld [vmem:[#allocation2 + $0x88] sm:$0xff]
  %v68 = vld [vmem:[#allocation2 + $0x90] sm:$0xff]
  %v69 = vld [vmem:[#allocation2 + $0x98] sm:$0xff]
  %v70 = vld [vmem:[#allocation2 + $0xa0] sm:$0xff]
  %v71 = vld [vmem:[#allocation2 + $0xa8] sm:$0xff]
  %v72 = vld [vmem:[#allocation2 + $0xb0] sm:$0xff]
  %v73 = vld [vmem:[#allocation2 + $0xb8] sm:$0xff]
  %v74 = vld [vmem:[#allocation2 + $0xc0] sm:$0xff]
  %v75 = vld [vmem:[#allocation2 + $0xc8] sm:$0xff]
  %v76 = vld [vmem:[#allocation2 + $0xd0] sm:$0xff]
  %v77 = vld [vmem:[#allocation2 + $0xd8] sm:$0xff]
  %v78 = vld [vmem:[#allocation2 + $0xe0] sm:$0xff]
  %v79 = vld [vmem:[#allocation2 + $0xe8] sm:$0xff]
  %v80 = vld [vmem:[#allocation2 + $0xf0] sm:$0xff]
  %v81 = vld [vmem:[#allocation2 + $0xf8] sm:$0xff]
  %v82 = vld [vmem:[%s0] sm:$0xf]
  %v83 = vld [vmem:[%s0 + $0x4] sm:$0xf]
  %v84 = vld [vmem:[%s0 + $0x8] sm:$0xf]
  %v85 = vld [vmem:[%s0 + $0xc] sm:$0xf]
  %v86 = vld [vmem:[%s0 + $0x10] sm:$0xf]
  %v87 = vld [vmem:[%s0 + $0x14] sm:$0xf]
  %v88 = vld [vmem:[%s0 + $0x18] sm:$0xf]
  %v89 = vld [vmem:[%s0 + $0x1c] sm:$0xf]
  %v90 = vld [vmem:[%s0 + $0x20] sm:$0xf]
  %v91 = vld [vmem:[%s0 + $0x24] sm:$0xf]
  %v92 = vld [vmem:[%s0 + $0x28] sm:$0xf]
  %v93 = vld [vmem:[%s0 + $0x2c] sm:$0xf]
  %v94 = vld [vmem:[%s0 + $0x30] sm:$0xf]
  %v95 = vld [vmem:[%s0 + $0x34] sm:$0xf]
  %v96 = vld [vmem:[%s0 + $0x38] sm:$0xf]
  %v97 = vld [vmem:[%s0 + $0x3c] sm:$0xf]
  %v98 = vld [vmem:[%s1] sm:$0xff]
  %v99 = vld [vmem:[%s1 + $0x8] sm:$0xff]
  %v100 = vld [vmem:[%s1 + $0x10] sm:$0xff]
  %v101 = vld [vmem:[%s1 + $0x18] sm:$0xff]
  %v102 = vld [vmem:[%s1 + $0x20] sm:$0xff]
  %v103 = vld [vmem:[%s1 + $0x28] sm:$0xff]
  %v104 = vld [vmem:[%s1 + $0x30] sm:$0xff]
  %v105 = vld [vmem:[%s1 + $0x38] sm:$0xff]
  %v106 = vld [vmem:[%s1 + $0x40] sm:$0xff]
  %v107 = vld [vmem:[%s1 + $0x48] sm:$0xff]
  %v108 = vld [vmem:[%s1 + $0x50] sm:$0xff]
  %v109 = vld [vmem:[%s1 + $0x58] sm:$0xff]
  %v110 = vld [vmem:[%s1 + $0x60] sm:$0xff]
  %v111 = vld [vmem:[%s1 + $0x68] sm:$0xff]
  %v112 = vld [vmem:[%s1 + $0x70] sm:$0xff]
  %v113 = vld [vmem:[%s1 + $0x78] sm:$0xff]
  %v130 = vunpack.c.l.b16 %v82
  %v131 = vunpack.c.l.b16 %v83
  %v132 = vunpack.c.l.b16 %v84
  %v133 = vunpack.c.l.b16 %v85
  %v134 = vunpack.c.l.b16 %v86
  %v135 = vunpack.c.l.b16 %v87
  %v136 = vunpack.c.l.b16 %v88
  %v137 = vunpack.c.l.b16 %v89
  %v138 = vunpack.c.l.b16 %v90
  %v139 = vunpack.c.l.b16 %v91
  %v140 = vunpack.c.l.b16 %v92
  %v141 = vunpack.c.l.b16 %v93
  %v142 = vunpack.c.l.b16 %v94
  %v143 = vunpack.c.l.b16 %v95
  %v144 = vunpack.c.l.b16 %v96
  %v145 = vunpack.c.l.b16 %v97
  %v146 = vpack.c.b16 %v131, %v130
  %v147 = vpack.c.b16 %v133, %v132
  %v148 = vpack.c.b16 %v135, %v134
  %v149 = vpack.c.b16 %v137, %v136
  %v150 = vpack.c.b16 %v139, %v138
  %v151 = vpack.c.b16 %v141, %v140
  %v152 = vpack.c.b16 %v143, %v142
  %v153 = vpack.c.b16 %v145, %v144
  %v178 = vunpack.c.l.b16 %v98
  %v179 = vunpack.c.h.b16 %v98
  %v180 = vunpack.c.l.b16 %v99
  %v181 = vunpack.c.h.b16 %v99
  %v182 = vunpack.c.l.b16 %v100
  %v183 = vunpack.c.h.b16 %v100
  %v184 = vunpack.c.l.b16 %v101
  %v185 = vunpack.c.h.b16 %v101
  %v186 = vunpack.c.l.b16 %v102
  %v187 = vunpack.c.h.b16 %v102
  %v188 = vunpack.c.l.b16 %v103
  %v189 = vunpack.c.h.b16 %v103
  %v190 = vunpack.c.l.b16 %v104
  %v191 = vunpack.c.h.b16 %v104
  %v192 = vunpack.c.l.b16 %v105
  %v193 = vunpack.c.h.b16 %v105
  %v194 = vunpack.c.l.b16 %v106
  %v195 = vunpack.c.h.b16 %v106
  %v196 = vunpack.c.l.b16 %v107
  %v197 = vunpack.c.h.b16 %v107
  %v198 = vunpack.c.l.b16 %v108
  %v199 = vunpack.c.h.b16 %v108
  %v200 = vunpack.c.l.b16 %v109
  %v201 = vunpack.c.h.b16 %v109
  %v202 = vunpack.c.l.b16 %v110
  %v203 = vunpack.c.h.b16 %v110
  %v204 = vunpack.c.l.b16 %v111
  %v205 = vunpack.c.h.b16 %v111
  %v206 = vunpack.c.l.b16 %v112
  %v207 = vunpack.c.h.b16 %v112
  %v208 = vunpack.c.l.b16 %v113
  %v209 = vunpack.c.h.b16 %v113
  %v210 = vpack.c.b16 %v180, %v178
  %v211 = vpack.c.b16 %v181, %v179
  %v212 = vpack.c.b16 %v184, %v182
  %v213 = vpack.c.b16 %v185, %v183
  %v214 = vpack.c.b16 %v188, %v186
  %v215 = vpack.c.b16 %v189, %v187
  %v216 = vpack.c.b16 %v192, %v190
  %v217 = vpack.c.b16 %v193, %v191
  %v218 = vpack.c.b16 %v196, %v194
  %v219 = vpack.c.b16 %v197, %v195
  %v220 = vpack.c.b16 %v200, %v198
  %v221 = vpack.c.b16 %v201, %v199
  %v222 = vpack.c.b16 %v204, %v202
  %v223 = vpack.c.b16 %v205, %v203
  %v224 = vpack.c.b16 %v208, %v206
  %v225 = vpack.c.b16 %v209, %v207
  %242 = vmatprep.subr.bf16.mxu0 %v225
  %243 = vmatpush1.bf16.msra.mxu0 %v224
  %244 = vmatprep.subr.bf16.mxu0 %v223
  %245 = vmatpush1.bf16.msra.mxu0 %v222
  %246 = vmatprep.subr.bf16.mxu0 %v221
  %247 = vmatpush1.bf16.msra.mxu0 %v220
  %248 = vmatprep.subr.bf16.mxu0 %v219
  %249 = vmatpush1.bf16.msra.mxu0 %v218
  %250 = vmatprep.subr.bf16.mxu0 %v217
  %251 = vmatpush1.bf16.msra.mxu0 %v216
  %252 = vmatprep.subr.bf16.mxu0 %v215
  %253 = vmatpush1.bf16.msra.mxu0 %v214
  %254 = vmatprep.subr.bf16.mxu0 %v213
  %255 = vmatpush1.bf16.msra.mxu0 %v212
  %256 = vmatprep.subr.bf16.mxu0 %v211
  %257 = vmatpush1.bf16.msra.mxu0 %v210
  %258 = vmatprep.subr.bf16.mxu0 0
  %259 = vmatpush2.bf16.msra.mxu0 0
  %260 = vmatprep.subr.bf16.mxu0 0
  %261 = vmatpush2.bf16.msra.mxu0 0
  %262 = vmatprep.subr.bf16.mxu0 0
  %263 = vmatpush2.bf16.msra.mxu0 0
  %264 = vmatprep.subr.bf16.mxu0 0
  %265 = vmatpush2.bf16.msra.mxu0 0
  %266 = vmatprep.subr.bf16.mxu0 0
  %267 = vmatpush2.bf16.msra.mxu0 0
  %268 = vmatprep.subr.bf16.mxu0 0
  %269 = vmatpush2.bf16.msra.mxu0 0
  %270 = vmatprep.subr.bf16.mxu0 0
  %271 = vmatpush2.bf16.msra.mxu0 0
  %272 = vmatprep.subr.bf16.mxu0 0
  %273 = vmatpush2.bf16.msra.mxu0 0
  %274 = vmatprep.mubr.bf16.mxu0 0
  %275 = vmatmul.mubr.bf16.gmra.mxu0 %v146
  %v276 = vpop.f32.mrf.mxu0
  %v277 = vadd.f32 0.0, %v276
  %v278 = vpop.f32.mrf.mxu0
  %v279 = vadd.f32 0.0, %v278
  %v280 = vpop.f32.mrf.mxu0
  %v281 = vadd.f32 0.0, %v280
  %v282 = vpop.f32.mrf.mxu0
  %v283 = vadd.f32 0.0, %v282
  %284 = vmatprep.mubr.bf16.mxu0 0
  %285 = vmatmul.mubr.bf16.gmra.mxu0 %v147
  %v286 = vpop.f32.mrf.mxu0
  %v287 = vadd.f32 0.0, %v286
  %v288 = vpop.f32.mrf.mxu0
  %v289 = vadd.f32 0.0, %v288
  %v290 = vpop.f32.mrf.mxu0
  %v291 = vadd.f32 0.0, %v290
  %v292 = vpop.f32.mrf.mxu0
  %v293 = vadd.f32 0.0, %v292
  %294 = vmatprep.mubr.bf16.mxu0 0
  %295 = vmatmul.mubr.bf16.gmra.mxu0 %v148
  %v296 = vpop.f32.mrf.mxu0
  %v297 = vadd.f32 0.0, %v296
  %v298 = vpop.f32.mrf.mxu0
  %v299 = vadd.f32 0.0, %v298
  %v300 = vpop.f32.mrf.mxu0
  %v301 = vadd.f32 0.0, %v300
  %v302 = vpop.f32.mrf.mxu0
  %v303 = vadd.f32 0.0, %v302
  %304 = vmatprep.mubr.bf16.mxu0 0
  %305 = vmatmul.mubr.bf16.gmra.mxu0 %v149
  %v306 = vpop.f32.mrf.mxu0
  %v307 = vadd.f32 0.0, %v306
  %v308 = vpop.f32.mrf.mxu0
  %v309 = vadd.f32 0.0, %v308
  %v310 = vpop.f32.mrf.mxu0
  %v311 = vadd.f32 0.0, %v310
  %v312 = vpop.f32.mrf.mxu0
  %v313 = vadd.f32 0.0, %v312
  %314 = vmatprep.mubr.bf16.mxu0 0
  %315 = vmatmul.mubr.bf16.gmra.mxu0 %v150
  %v316 = vpop.f32.mrf.mxu0
  %v317 = vadd.f32 0.0, %v316
  %v318 = vpop.f32.mrf.mxu0
  %v319 = vadd.f32 0.0, %v318
  %v320 = vpop.f32.mrf.mxu0
  %v321 = vadd.f32 0.0, %v320
  %v322 = vpop.f32.mrf.mxu0
  %v323 = vadd.f32 0.0, %v322
  %324 = vmatprep.mubr.bf16.mxu0 0
  %325 = vmatmul.mubr.bf16.gmra.mxu0 %v151
  %v326 = vpop.f32.mrf.mxu0
  %v327 = vadd.f32 0.0, %v326
  %v328 = vpop.f32.mrf.mxu0
  %v329 = vadd.f32 0.0, %v328
  %v330 = vpop.f32.mrf.mxu0
  %v331 = vadd.f32 0.0, %v330
  %v332 = vpop.f32.mrf.mxu0
  %v333 = vadd.f32 0.0, %v332
  %334 = vmatprep.mubr.bf16.mxu0 0
  %335 = vmatmul.mubr.bf16.gmra.mxu0 %v152
  %v336 = vpop.f32.mrf.mxu0
  %v337 = vadd.f32 0.0, %v336
  %v338 = vpop.f32.mrf.mxu0
  %v339 = vadd.f32 0.0, %v338
  %v340 = vpop.f32.mrf.mxu0
  %v341 = vadd.f32 0.0, %v340
  %v342 = vpop.f32.mrf.mxu0
  %v343 = vadd.f32 0.0, %v342
  %344 = vmatprep.mubr.bf16.mxu0 0
  %345 = vmatmul.mubr.bf16.gmra.mxu0 %v153
  %v346 = vpop.f32.mrf.mxu0
  %v347 = vadd.f32 0.0, %v346
  %v348 = vpop.f32.mrf.mxu0
  %v349 = vadd.f32 0.0, %v348
  %v350 = vpop.f32.mrf.mxu0
  %v351 = vadd.f32 0.0, %v350
  %v352 = vpop.f32.mrf.mxu0
  %v353 = vadd.f32 0.0, %v352
  %354 = vdwg.mxu0
  %v355 = vadd.f32 %v50, %v277
  %v356 = vadd.f32 %v51, %v279
  %v357 = vadd.f32 %v52, %v281
  %v358 = vadd.f32 %v53, %v283
  %v359 = vadd.f32 %v54, %v287
  %v360 = vadd.f32 %v55, %v289
  %v361 = vadd.f32 %v56, %v291
  %v362 = vadd.f32 %v57, %v293
  %v363 = vadd.f32 %v58, %v297
  %v364 = vadd.f32 %v59, %v299
  %v365 = vadd.f32 %v60, %v301
  %v366 = vadd.f32 %v61, %v303
  %v367 = vadd.f32 %v62, %v307
  %v368 = vadd.f32 %v63, %v309
  %v369 = vadd.f32 %v64, %v311
  %v370 = vadd.f32 %v65, %v313
  %v371 = vadd.f32 %v66, %v317
  %v372 = vadd.f32 %v67, %v319
  %v373 = vadd.f32 %v68, %v321
  %v374 = vadd.f32 %v69, %v323
  %v375 = vadd.f32 %v70, %v327
  %v376 = vadd.f32 %v71, %v329
  %v377 = vadd.f32 %v72, %v331
  %v378 = vadd.f32 %v73, %v333
  %v379 = vadd.f32 %v74, %v337
  %v380 = vadd.f32 %v75, %v339
  %v381 = vadd.f32 %v76, %v341
  %v382 = vadd.f32 %v77, %v343
  %v383 = vadd.f32 %v78, %v347
  %v384 = vadd.f32 %v79, %v349
  %v385 = vadd.f32 %v80, %v351
  %v386 = vadd.f32 %v81, %v353
  %387 = vst [vmem:[#allocation2] sm:$0xff] %v355
  %388 = vst [vmem:[#allocation2 + $0x8] sm:$0xff] %v356
  %389 = vst [vmem:[#allocation2 + $0x10] sm:$0xff] %v357
  %390 = vst [vmem:[#allocation2 + $0x18] sm:$0xff] %v358
  %391 = vst [vmem:[#allocation2 + $0x20] sm:$0xff] %v359
  %392 = vst [vmem:[#allocation2 + $0x28] sm:$0xff] %v360
  %393 = vst [vmem:[#allocation2 + $0x30] sm:$0xff] %v361
  %394 = vst [vmem:[#allocation2 + $0x38] sm:$0xff] %v362
  %395 = vst [vmem:[#allocation2 + $0x40] sm:$0xff] %v363
  %396 = vst [vmem:[#allocation2 + $0x48] sm:$0xff] %v364
  %397 = vst [vmem:[#allocation2 + $0x50] sm:$0xff] %v365
  %398 = vst [vmem:[#allocation2 + $0x58] sm:$0xff] %v366
  %399 = vst [vmem:[#allocation2 + $0x60] sm:$0xff] %v367
  %400 = vst [vmem:[#allocation2 + $0x68] sm:$0xff] %v368
  %401 = vst [vmem:[#allocation2 + $0x70] sm:$0xff] %v369
  %402 = vst [vmem:[#allocation2 + $0x78] sm:$0xff] %v370
  %403 = vst [vmem:[#allocation2 + $0x80] sm:$0xff] %v371
  %404 = vst [vmem:[#allocation2 + $0x88] sm:$0xff] %v372
  %405 = vst [vmem:[#allocation2 + $0x90] sm:$0xff] %v373
  %406 = vst [vmem:[#allocation2 + $0x98] sm:$0xff] %v374
  %407 = vst [vmem:[#allocation2 + $0xa0] sm:$0xff] %v375
  %408 = vst [vmem:[#allocation2 + $0xa8] sm:$0xff] %v376
  %409 = vst [vmem:[#allocation2 + $0xb0] sm:$0xff] %v377
  %410 = vst [vmem:[#allocation2 + $0xb8] sm:$0xff] %v378
  %411 = vst [vmem:[#allocation2 + $0xc0] sm:$0xff] %v379
  %412 = vst [vmem:[#allocation2 + $0xc8] sm:$0xff] %v380
  %413 = vst [vmem:[#allocation2 + $0xd0] sm:$0xff] %v381
  %414 = vst [vmem:[#allocation2 + $0xd8] sm:$0xff] %v382
  %415 = vst [vmem:[#allocation2 + $0xe0] sm:$0xff] %v383
  %416 = vst [vmem:[#allocation2 + $0xe8] sm:$0xff] %v384
  %417 = vst [vmem:[#allocation2 + $0xf0] sm:$0xff] %v385
  %418 = vst [vmem:[#allocation2 + $0xf8] sm:$0xff] %v386
  // Predicated region
  $region14: #{run_chain.24} parent=0 // pred_check
    %p419 = pneg %p14
  $region15: #{run_chain.24} parent=0 // pred_check_branch
    %421 = sbr.rel (%p419) target = $region17
  $region16: #{run_chain.24} parent=0 // pred_region
    %v422 = vld [vmem:[#allocation2] sm:$0xff]
    %v423 = vld [vmem:[#allocation2 + $0x8] sm:$0xff]
    %v424 = vld [vmem:[#allocation2 + $0x10] sm:$0xff]
    %v425 = vld [vmem:[#allocation2 + $0x18] sm:$0xff]
    %v426 = vld [vmem:[#allocation2 + $0x20] sm:$0xff]
    %v427 = vld [vmem:[#allocation2 + $0x28] sm:$0xff]
    %v428 = vld [vmem:[#allocation2 + $0x30] sm:$0xff]
    %v429 = vld [vmem:[#allocation2 + $0x38] sm:$0xff]
    %v430 = vld [vmem:[#allocation2 + $0x40] sm:$0xff]
    %v431 = vld [vmem:[#allocation2 + $0x48] sm:$0xff]
    %v432 = vld [vmem:[#allocation2 + $0x50] sm:$0xff]
    %v433 = vld [vmem:[#allocation2 + $0x58] sm:$0xff]
    %v434 = vld [vmem:[#allocation2 + $0x60] sm:$0xff]
    %v435 = vld [vmem:[#allocation2 + $0x68] sm:$0xff]
    %v436 = vld [vmem:[#allocation2 + $0x70] sm:$0xff]
    %v437 = vld [vmem:[#allocation2 + $0x78] sm:$0xff]
    %v438 = vld [vmem:[#allocation2 + $0x80] sm:$0xff]
    %v439 = vld [vmem:[#allocation2 + $0x88] sm:$0xff]
    %v440 = vld [vmem:[#allocation2 + $0x90] sm:$0xff]
    %v441 = vld [vmem:[#allocation2 + $0x98] sm:$0xff]
    %v442 = vld [vmem:[#allocation2 + $0xa0] sm:$0xff]
    %v443 = vld [vmem:[#allocation2 + $0xa8] sm:$0xff]
    %v444 = vld [vmem:[#allocation2 + $0xb0] sm:$0xff]
    %v445 = vld [vmem:[#allocation2 + $0xb8] sm:$0xff]
    %v446 = vld [vmem:[#allocation2 + $0xc0] sm:$0xff]
    %v447 = vld [vmem:[#allocation2 + $0xc8] sm:$0xff]
    %v448 = vld [vmem:[#allocation2 + $0xd0] sm:$0xff]
    %v449 = vld [vmem:[#allocation2 + $0xd8] sm:$0xff]
    %v450 = vld [vmem:[#allocation2 + $0xe0] sm:$0xff]
    %v451 = vld [vmem:[#allocation2 + $0xe8] sm:$0xff]
    %v452 = vld [vmem:[#allocation2 + $0xf0] sm:$0xff]
    %v453 = vld [vmem:[#allocation2 + $0xf8] sm:$0xff]
    %v454 = vpack.c.bf16 %v424, %v422
    %v455 = vpack.c.bf16 %v425, %v423
    %v456 = vpack.c.bf16 %v428, %v426
    %v457 = vpack.c.bf16 %v429, %v427
    %v458 = vpack.c.bf16 %v432, %v430
    %v459 = vpack.c.bf16 %v433, %v431
    %v460 = vpack.c.bf16 %v436, %v434
    %v461 = vpack.c.bf16 %v437, %v435
    %v462 = vpack.c.bf16 %v440, %v438
    %v463 = vpack.c.bf16 %v441, %v439
    %v464 = vpack.c.bf16 %v444, %v442
    %v465 = vpack.c.bf16 %v445, %v443
    %v466 = vpack.c.bf16 %v448, %v446
    %v467 = vpack.c.bf16 %v449, %v447
    %v468 = vpack.c.bf16 %v452, %v450
    %v469 = vpack.c.bf16 %v453, %v451
    %v486 = vunpack.c.l.b16 %v454
    %v487 = vunpack.c.l.b16 %v455
    %v488 = vunpack.c.h.b16 %v454
    %v489 = vunpack.c.h.b16 %v455
    %v490 = vunpack.c.l.b16 %v456
    %v491 = vunpack.c.l.b16 %v457
    %v492 = vunpack.c.h.b16 %v456
    %v493 = vunpack.c.h.b16 %v457
    %v494 = vunpack.c.l.b16 %v458
    %v495 = vunpack.c.l.b16 %v459
    %v496 = vunpack.c.h.b16 %v458
    %v497 = vunpack.c.h.b16 %v459
    %v498 = vunpack.c.l.b16 %v460
    %v499 = vunpack.c.l.b16 %v461
    %v500 = vunpack.c.h.b16 %v460
    %v501 = vunpack.c.h.b16 %v461
    %v502 = vunpack.c.l.b16 %v462
    %v503 = vunpack.c.l.b16 %v463
    %v504 = vunpack.c.h.b16 %v462
    %v505 = vunpack.c.h.b16 %v463
    %v506 = vunpack.c.l.b16 %v464
    %v507 = vunpack.c.l.b16 %v465
    %v508 = vunpack.c.h.b16 %v464
    %v509 = vunpack.c.h.b16 %v465
    %v510 = vunpack.c.l.b16 %v466
    %v511 = vunpack.c.l.b16 %v467
    %v512 = vunpack.c.h.b16 %v466
    %v513 = vunpack.c.h.b16 %v467
    %v514 = vunpack.c.l.b16 %v468
    %v515 = vunpack.c.l.b16 %v469
    %v516 = vunpack.c.h.b16 %v468
    %v517 = vunpack.c.h.b16 %v469
    %v518 = vpack.c.b16 %v487, %v486
    %v519 = vpack.c.b16 %v489, %v488
    %v520 = vpack.c.b16 %v491, %v490
    %v521 = vpack.c.b16 %v493, %v492
    %v522 = vpack.c.b16 %v495, %v494
    %v523 = vpack.c.b16 %v497, %v496
    %v524 = vpack.c.b16 %v499, %v498
    %v525 = vpack.c.b16 %v501, %v500
    %v526 = vpack.c.b16 %v503, %v502
    %v527 = vpack.c.b16 %v505, %v504
    %v528 = vpack.c.b16 %v507, %v506
    %v529 = vpack.c.b16 %v509, %v508
    %v530 = vpack.c.b16 %v511, %v510
    %v531 = vpack.c.b16 %v513, %v512
    %v532 = vpack.c.b16 %v515, %v514
    %v533 = vpack.c.b16 %v517, %v516
    %550 = vst [vmem:[%s2] sm:$0xff] %v518
    %551 = vst [vmem:[%s2 + $0x8] sm:$0xff] %v519
    %552 = vst [vmem:[%s2 + $0x10] sm:$0xff] %v520
    %553 = vst [vmem:[%s2 + $0x18] sm:$0xff] %v521
    %554 = vst [vmem:[%s2 + $0x20] sm:$0xff] %v522
    %555 = vst [vmem:[%s2 + $0x28] sm:$0xff] %v523
    %556 = vst [vmem:[%s2 + $0x30] sm:$0xff] %v524
    %557 = vst [vmem:[%s2 + $0x38] sm:$0xff] %v525
    %558 = vst [vmem:[%s2 + $0x40] sm:$0xff] %v526
    %559 = vst [vmem:[%s2 + $0x48] sm:$0xff] %v527
    %560 = vst [vmem:[%s2 + $0x50] sm:$0xff] %v528
    %561 = vst [vmem:[%s2 + $0x58] sm:$0xff] %v529
    %562 = vst [vmem:[%s2 + $0x60] sm:$0xff] %v530
    %563 = vst [vmem:[%s2 + $0x68] sm:$0xff] %v531
    %564 = vst [vmem:[%s2 + $0x70] sm:$0xff] %v532
    %565 = vst [vmem:[%s2 + $0x78] sm:$0xff] %v533
    %v566 = vadd.f32 %v422, %v424
    %v567 = vadd.f32 %v566, %v426
    %v568 = vadd.f32 %v567, %v428
    %v569 = vadd.f32 %v568, %v430
    %v570 = vadd.f32 %v569, %v432
    %v571 = vadd.f32 %v570, %v434
    %v572 = vadd.f32 %v571, %v436
    %v573 = vadd.f32 %v572, %v438
    %v574 = vadd.f32 %v573, %v440
    %v575 = vadd.f32 %v574, %v442
    %v576 = vadd.f32 %v575, %v444
    %v577 = vadd.f32 %v576, %v446
    %v578 = vadd.f32 %v577, %v448
    %v579 = vadd.f32 %v578, %v450
    %v580 = vadd.f32 %v579, %v452
    %v581 = vrot.slane %v580, 4
    %v582 = vadd.f32 %v580, %v581
    %v583 = vrot.slane %v582, 2
    %v584 = vadd.f32 %v582, %v583
    %v585 = vrot.slane %v584, 1
    %v586 = vadd.f32 %v584, %v585
    %v587 = vadd.f32 %v423, %v425
    %v588 = vadd.f32 %v587, %v427
    %v589 = vadd.f32 %v588, %v429
    %v590 = vadd.f32 %v589, %v431
    %v591 = vadd.f32 %v590, %v433
    %v592 = vadd.f32 %v591, %v435
    %v593 = vadd.f32 %v592, %v437
    %v594 = vadd.f32 %v593, %v439
    %v595 = vadd.f32 %v594, %v441
    %v596 = vadd.f32 %v595, %v443
    %v597 = vadd.f32 %v596, %v445
    %v598 = vadd.f32 %v597, %v447
    %v599 = vadd.f32 %v598, %v449
    %v600 = vadd.f32 %v599, %v451
    %v601 = vadd.f32 %v600, %v453
    %v602 = vrot.slane %v601, 4
    %v603 = vadd.f32 %v601, %v602
    %v604 = vrot.slane %v603, 2
    %v605 = vadd.f32 %v603, %v604
    %v606 = vrot.slane %v605, 1
    %v607 = vadd.f32 %v605, %v606
    %v610 = vcombine.low %v586, %v607
    %v612 = vunpack.c.l.s4 1966171168
    %v613 = vunpack.c.0.s8 %v612
    %v614 = vlaneseq
    %v615 = vshrl.u32 %v614, 7
    %v616 = vsub.s32 %v613, %v615
    %v617 = vrot.slane %v610, %v616
    %v619 = vunpack.c.l.s4 1966171168
    %v620 = vunpack.c.0.s8 %v619
    %v621 = vlaneseq
    %v622 = vshrl.u32 %v621, 7
    %v623 = vsub.s32 %v620, %v622
    %v624 = vrot.slane %v617, %v623
    %v626 = vlaneseq
    %vm627 = vcmp.ge.s32.totalorder %v626, 0
    %vm628 = vcmp.lt.s32.totalorder %v626, 256
    %vm629 = vmand %vm627, %vm628
    %630 = vst.msk [vmem:[%s3] ss:$2 sm:$0x3] %vm629, %v624
    %v631 = vmul.f32 %v422, %v422
    %v632 = vmul.f32 %v423, %v423
    %v633 = vmul.f32 %v424, %v424
    %v634 = vmul.f32 %v425, %v425
    %v635 = vmul.f32 %v426, %v426
    %v636 = vmul.f32 %v427, %v427
    %v637 = vmul.f32 %v428, %v428
    %v638 = vmul.f32 %v429, %v429
    %v639 = vmul.f32 %v430, %v430
    %v640 = vmul.f32 %v431, %v431
    %v641 = vmul.f32 %v432, %v432
    %v642 = vmul.f32 %v433, %v433
    %v643 = vmul.f32 %v434, %v434
    %v644 = vmul.f32 %v435, %v435
    %v645 = vmul.f32 %v436, %v436
    %v646 = vmul.f32 %v437, %v437
    %v647 = vmul.f32 %v438, %v438
    %v648 = vmul.f32 %v439, %v439
    %v649 = vmul.f32 %v440, %v440
    %v650 = vmul.f32 %v441, %v441
    %v651 = vmul.f32 %v442, %v442
    %v652 = vmul.f32 %v443, %v443
    %v653 = vmul.f32 %v444, %v444
    %v654 = vmul.f32 %v445, %v445
    %v655 = vmul.f32 %v446, %v446
    %v656 = vmul.f32 %v447, %v447
    %v657 = vmul.f32 %v448, %v448
    %v658 = vmul.f32 %v449, %v449
    %v659 = vmul.f32 %v450, %v450
    %v660 = vmul.f32 %v451, %v451
    %v661 = vmul.f32 %v452, %v452
    %v662 = vmul.f32 %v453, %v453
    %v663 = vadd.f32 %v631, %v633
    %v664 = vadd.f32 %v663, %v635
    %v665 = vadd.f32 %v664, %v637
    %v666 = vadd.f32 %v665, %v639
    %v667 = vadd.f32 %v666, %v641
    %v668 = vadd.f32 %v667, %v643
    %v669 = vadd.f32 %v668, %v645
    %v670 = vadd.f32 %v669, %v647
    %v671 = vadd.f32 %v670, %v649
    %v672 = vadd.f32 %v671, %v651
    %v673 = vadd.f32 %v672, %v653
    %v674 = vadd.f32 %v673, %v655
    %v675 = vadd.f32 %v674, %v657
    %v676 = vadd.f32 %v675, %v659
    %v677 = vadd.f32 %v676, %v661
    %v678 = vrot.slane %v677, 4
    %v679 = vadd.f32 %v677, %v678
    %v680 = vrot.slane %v679, 2
    %v681 = vadd.f32 %v679, %v680
    %v682 = vrot.slane %v681, 1
    %v683 = vadd.f32 %v681, %v682
    %v684 = vadd.f32 %v632, %v634
    %v685 = vadd.f32 %v684, %v636
    %v686 = vadd.f32 %v685, %v638
    %v687 = vadd.f32 %v686, %v640
    %v688 = vadd.f32 %v687, %v642
    %v689 = vadd.f32 %v688, %v644
    %v690 = vadd.f32 %v689, %v646
    %v691 = vadd.f32 %v690, %v648
    %v692 = vadd.f32 %v691, %v650
    %v693 = vadd.f32 %v692, %v652
    %v694 = vadd.f32 %v693, %v654
    %v695 = vadd.f32 %v694, %v656
    %v696 = vadd.f32 %v695, %v658
    %v697 = vadd.f32 %v696, %v660
    %v698 = vadd.f32 %v697, %v662
    %v699 = vrot.slane %v698, 4
    %v700 = vadd.f32 %v698, %v699
    %v701 = vrot.slane %v700, 2
    %v702 = vadd.f32 %v700, %v701
    %v703 = vrot.slane %v702, 1
    %v704 = vadd.f32 %v702, %v703
    %v707 = vcombine.low %v683, %v704
    %v709 = vunpack.c.l.s4 1966171168
    %v710 = vunpack.c.0.s8 %v709
    %v711 = vlaneseq
    %v712 = vshrl.u32 %v711, 7
    %v713 = vsub.s32 %v710, %v712
    %v714 = vrot.slane %v707, %v713
    %v716 = vunpack.c.l.s4 1966171168
    %v717 = vunpack.c.0.s8 %v716
    %v718 = vlaneseq
    %v719 = vshrl.u32 %v718, 7
    %v720 = vsub.s32 %v717, %v719
    %v721 = vrot.slane %v714, %v720
    %s723 = scalar_lea.vmem %s3, 1
    %724 = vst.msk [vmem:[%s723] ss:$2 sm:$0x3] %vm629, %v721
  $region17: #{run_chain.24} parent=0 // pred_fallthru
    _
  // Predicated region
  $region18: #{run_chain.24} parent=0 // pred_check
    _
  $region19: #{run_chain.24} parent=0 // pred_check_branch
    %726 = sbr.rel (0) target = $region21
  $region20: #{run_chain.24} parent=0 // pred_region
    _
  $region21: #{run_chain.24} parent=0 // pred_fallthru
    _
  // Predicated region
  $region22: #{run_chain.24} parent=0 // pred_check
    _
  $region23: #{run_chain.24} parent=0 // pred_check_branch
    %728 = sbr.rel (0) target = $region25
  $region24: #{run_chain.24} parent=0 // pred_region
    _
  $region25: #{run_chain.24} parent=0 // pred_fallthru
    _
  // Predicated region
  $region26: #{run_chain.24} parent=0 // pred_check
    _
  $region27: #{run_chain.24} parent=0 // pred_check_branch
    %730 = sbr.rel (0) target = $region29
  $region28: #{run_chain.24} parent=0 // pred_region
    _
  $region29: #{run_chain.24} parent=0 // pred_fallthru
    _
  // Predicated region
  $region30: #{run_chain.24} parent=0 // pred_check
    _
  $region31: #{run_chain.24} parent=0 // pred_check_branch
    %732 = sbr.rel (0) target = $region33
  $region32: #{run_chain.24} parent=0 // pred_region
    _
  $region33: #{run_chain.24} parent=0 // pred_fallthru
    _

</llo_original>
